<compile_context>
chip_gen: v5e
topology: v5e:2x2
jax: 0.10.0
libtpu: 0.0.40
codegen_flags: <defaults>
</compile_context>

<pallas_src>
import functools

import jax
import jax.numpy as jnp
from jax import lax
from jax.experimental import pallas as pl
from jax.experimental.pallas import tpu as pltpu

HEAD_ORDER = ("hm", "wh", "reg")


def _round_up(x, m):
    return ((x + m - 1) // m) * m


# ---------------------------------------------------------------------------
# The fused Pallas kernel (one grid step == one image)
# ---------------------------------------------------------------------------
def _centernet_fused_kernel(cols1_ref, mask_ref, w1_ref, b1_ref, w2_ref, b2_ref,
                            wd_ref, bd_ref, wh_ref, bh_ref, wo_ref, bo_ref,
                            out_ref, a1_ref, a2_ref, d_ref, *, gw, margin):
    """Whole CenterNet forward for one image.

    Spatial bookkeeping: after the two stride-2 convs everything lives on 8x8 "plane"
    grids; a 16x16 activation is stored as its four (row-parity, col-parity) phase
    planes.  Each plane is kept zero-padded on a (gw x gw) grid (gw = 8 + 2), flattened
    row-major to gr = gw*gw rows inside a (2*margin + gr)-row f32 VMEM buffer, so every
    conv tap is a static shifted row-slice of that buffer feeding one MXU matmul
    (bf16 x bf16 -> f32 accumulate).  The pad ring / margins are kept exactly zero,
    which implements the convolution zero-padding for free.
    """
    f32, bf16 = jnp.float32, jnp.bfloat16
    gr = gw * gw
    m = margin
    mask = mask_ref[...]                      # (gr, 1): 1 on plane interior, 0 on ring

    # Zero the padded plane buffers (pad ring + margins must be exact zeros).
    a1_ref[...] = jnp.zeros(a1_ref.shape, f32)
    a2_ref[...] = jnp.zeros(a2_ref.shape, f32)
    d_ref[...] = jnp.zeros(d_ref.shape, f32)

    # ---- features[0]: 3x3 / stride-2 conv + ReLU (input patches come pre-gathered,
    # one gr-row block per output phase plane).
    for ph in range(4):
        a1 = jnp.dot(cols1_ref[0, ph], w1_ref[...], preferred_element_type=f32)
        a1_ref[ph, m:m + gr, :] = jnp.maximum(a1 + b1_ref[...], 0.0) * mask

    # ---- features[1]: 3x3 / stride-2 conv + ReLU on the phase-decomposed conv1 output.
    # Tap (ky,kx) reads phase plane (py,px) at block offset (offy,offx) in {-1,0}:
    #   2*q + k - 1 = 2*(q + off) + p.
    acc2 = jnp.zeros((gr, w2_ref.shape[2]), f32)
    for ky in range(3):
        py, offy = (ky - 1) % 2, (ky - 1) // 2
        for kx in range(3):
            px, offx = (kx - 1) % 2, (kx - 1) // 2
            off = offy * gw + offx
            tap = a1_ref[py * 2 + px, m + off:m + off + gr, :].astype(bf16)
            acc2 = acc2 + jnp.dot(tap, w2_ref[ky * 3 + kx], preferred_element_type=f32)
    a2_ref[m:m + gr, :] = jnp.maximum(acc2 + b2_ref[...], 0.0) * mask

    # ---- deconv_layers: ConvTranspose2d(4,4, s=2, p=1) + ReLU.  Each output phase
    # (py,px) is a 2x2-tap conv over the 8x8 input plane (tap weights packed per phase):
    #   2*y + a - 1 = 2*q + p  with  y = q + (iy-1+p),  a = 3 - 2*iy - p.
    for py in range(2):
        for px in range(2):
            ph = py * 2 + px
            accd = jnp.zeros((gr, wd_ref.shape[2]), f32)
            for iy in range(2):
                for ix in range(2):
                    off = (iy - 1 + py) * gw + (ix - 1 + px)
                    tap = a2_ref[m + off:m + off + gr, :].astype(bf16)
                    accd = accd + jnp.dot(tap, wd_ref[(ph * 2 + iy) * 2 + ix],
                                          preferred_element_type=f32)
            d_ref[ph, m:m + gr, :] = jnp.maximum(accd + bd_ref[...], 0.0) * mask

    # ---- heads: fused 3x3 conv (all heads concatenated -> 3*head_conv ch) + ReLU,
    # then the block-diagonal 1x1 conv, computed per output phase plane.
    for sy in range(2):
        for sx in range(2):
            acch = jnp.zeros((gr, wh_ref.shape[2]), f32)
            for ry in range(3):
                ty = sy + ry - 1
                py, offy = ty % 2, ty // 2
                for rx in range(3):
                    tx = sx + rx - 1
                    px, offx = tx % 2, tx // 2
                    off = offy * gw + offx
                    tap = d_ref[py * 2 + px, m + off:m + off + gr, :].astype(bf16)
                    acch = acch + jnp.dot(tap, wh_ref[ry * 3 + rx],
                                          preferred_element_type=f32)
            h = jnp.maximum(acch + bh_ref[...], 0.0).astype(bf16)
            o = jnp.dot(h, wo_ref[...], preferred_element_type=f32) + bo_ref[...]
            out_ref[0, sy * 2 + sx, :, :] = o.astype(out_ref.dtype)


# ---------------------------------------------------------------------------
# One-time weight packing (PyTorch layouts in, bf16 tap-major matrices out)
# ---------------------------------------------------------------------------
def pack_centernet_params(raw, head_conv):
    bf16, f32 = jnp.bfloat16, jnp.float32

    def conv_mat(w):     # (Cout,Cin,kh,kw) -> (kh*kw*Cin, Cout) for im2col matmul
        co, ci, kh, kw = w.shape
        return jnp.transpose(w, (2, 3, 1, 0)).reshape(kh * kw * ci, co).astype(bf16)

    def conv_taps(w):    # (Cout,Cin,kh,kw) -> (kh*kw, Cin, Cout) for per-tap matmuls
        co, ci, kh, kw = w.shape
        return jnp.transpose(w, (2, 3, 1, 0)).reshape(kh * kw, ci, co).astype(bf16)

    def bias_row(b):
        return b.reshape(1, -1).astype(f32)

    f0, f1 = raw["features"]
    p = {
        "w1": conv_mat(f0["w"]), "b1": bias_row(f0["b"]),
        "w2": conv_taps(f1["w"]), "b2": bias_row(f1["b"]),
    }

    # ConvTranspose2d(4,4,s=2,p=1) -> per-output-phase 2x2-tap conv weights.
    wd_raw = raw["deconv"]["w"]                              # (Cin, Cout, 4, 4)
    taps = []
    for py in range(2):
        for px in range(2):
            for iy in range(2):
                for ix in range(2):
                    taps.append(wd_raw[:, :, 3 - 2 * iy - py, 3 - 2 * ix - px])
    p["wd"] = jnp.stack(taps, axis=0).astype(bf16)           # (16, Cin, Cout)
    p["bd"] = bias_row(raw["deconv"]["b"])

    # Fused head 3x3 conv (heads concatenated along Cout) + block-diagonal 1x1.
    w1_cat = jnp.concatenate([raw["heads"][n]["w1"] for n in HEAD_ORDER], axis=0)
    b1_cat = jnp.concatenate([raw["heads"][n]["b1"] for n in HEAD_ORDER], axis=0)
    p["wh"] = conv_taps(w1_cat)                              # (9, Cin, 3*head_conv)
    p["bh"] = bias_row(b1_cat)

    outs = [raw["heads"][n]["w2"].shape[0] for n in HEAD_ORDER]
    n_out = sum(outs)
    wo = jnp.zeros((len(HEAD_ORDER) * head_conv, n_out), f32)
    bo = jnp.zeros((n_out,), f32)
    slices, r, c = {}, 0, 0
    for n, oc in zip(HEAD_ORDER, outs):
        w2 = raw["heads"][n]["w2"].reshape(oc, head_conv)
        wo = wo.at[r:r + head_conv, c:c + oc].set(w2.T)
        bo = bo.at[c:c + oc].set(raw["heads"][n]["b2"])
        slices[n] = (c, oc)
        r += head_conv
        c += oc
    p["wo"] = wo.astype(bf16)
    p["bo"] = bias_row(bo)
    p["slices"] = slices
    return p


# ---------------------------------------------------------------------------
# Forward wrapper: one pallas_call, tiny XLA prologue/epilogue on the raw I/O only
# ---------------------------------------------------------------------------
def centernet_forward(packed, x_nchw):
    N, Cin, H, W = x_nchw.shape
    assert Cin == 3 and H == W and H % 4 == 0
    P = H // 4                       # coarsest (plane) spatial size
    GW = P + 2                       # padded plane grid width
    GR = GW * GW                     # rows per flattened padded plane
    MARGIN = _round_up(GW + 1, 8)    # zero margin so all shifted slices stay in-bounds
    BUF = GR + 2 * MARGIN
    C1 = packed["w1"].shape[1]
    C2 = packed["w2"].shape[2]
    n_out = packed["wo"].shape[1]

    # TODO(synk): the raw-input im2col below (and the de-phase/NCHW epilogue) are the
    # only remaining XLA glue; they act on <50 KB tensors and fuse with the HBM I/O.
    x = jnp.transpose(x_nchw, (0, 2, 3, 1)).astype(jnp.float32)
    xpad = jnp.pad(x, ((0, 0), (1, 1), (1, 1), (0, 0)))
    cols = jnp.concatenate(
        [xpad[:, ky:ky + H:2, kx:kx + W:2, :] for ky in range(3) for kx in range(3)],
        axis=-1)                                              # (N, H/2, W/2, 27)
    cols = cols.reshape(N, P, 2, P, 2, 27).transpose(0, 2, 4, 1, 3, 5)
    cols = jnp.pad(cols, ((0, 0), (0, 0), (0, 0), (1, 1), (1, 1), (0, 0)))
    cols1 = cols.reshape(N, 4, GR, 27).astype(jnp.bfloat16)   # phase-major padded grid

    r = jnp.arange(GW)
    inner = (r >= 1) & (r <= GW - 2)
    mask = (inner[:, None] & inner[None, :]).astype(jnp.float32).reshape(GR, 1)

    def const_spec(a):
        zeros = (0,) * a.ndim
        return pl.BlockSpec(a.shape, lambda n, _z=zeros: _z)

    kernel = functools.partial(_centernet_fused_kernel, gw=GW, margin=MARGIN)
    out = pl.pallas_call(
        kernel,
        out_shape=jax.ShapeDtypeStruct((N, 4, GR, n_out), jnp.float32),
        grid=(N,),
        in_specs=[
            pl.BlockSpec((1, 4, GR, 27), lambda n: (n, 0, 0, 0)),
            const_spec(mask),
            const_spec(packed["w1"]), const_spec(packed["b1"]),
            const_spec(packed["w2"]), const_spec(packed["b2"]),
            const_spec(packed["wd"]), const_spec(packed["bd"]),
            const_spec(packed["wh"]), const_spec(packed["bh"]),
            const_spec(packed["wo"]), const_spec(packed["bo"]),
        ],
        out_specs=pl.BlockSpec((1, 4, GR, n_out), lambda n: (n, 0, 0, 0)),
        scratch_shapes=[
            pltpu.VMEM((4, BUF, C1), jnp.float32),   # conv1 output phase planes
            pltpu.VMEM((BUF, C2), jnp.float32),      # conv2 output plane
            pltpu.VMEM((4, BUF, C2), jnp.float32),   # deconv output phase planes
        ],
        compiler_params=pltpu.CompilerParams(dimension_semantics=("parallel",)),
    )(cols1, mask, packed["w1"], packed["b1"], packed["w2"], packed["b2"],
      packed["wd"], packed["bd"], packed["wh"], packed["bh"],
      packed["wo"], packed["bo"])

    # Epilogue: drop the pad ring, undo the phase decomposition, split heads (NCHW).
    y = out.reshape(N, 2, 2, GW, GW, n_out)[:, :, :, 1:1 + P, 1:1 + P, :]
    y = jnp.transpose(y, (0, 3, 1, 4, 2, 5)).reshape(N, 2 * P, 2 * P, n_out)
    res = {}
    for name, (off, oc) in packed["slices"].items():
        res[name] = jnp.transpose(y[..., off:off + oc], (0, 3, 1, 2))
    return res


# ---------------------------------------------------------------------------
# Pure-XLA reference (same bf16 operand rounding) for numerical validation
# ---------------------------------------------------------------------------
def _ref_conv2d(x, w, bias, stride, pad, relu):
    xb = x.astype(jnp.bfloat16).astype(jnp.float32)
    wb = w.astype(jnp.bfloat16).astype(jnp.float32)
    out = lax.conv_general_dilated(
        xb, jnp.transpose(wb, (2, 3, 1, 0)), (stride, stride),
        [(pad, pad), (pad, pad)], dimension_numbers=("NHWC", "HWIO", "NHWC"),
        precision=lax.Precision.HIGHEST)
    out = out + bias.reshape(1, 1, 1, -1)
    return jnp.maximum(out, 0.0) if relu else out


def _ref_conv_transpose_4x4_s2_p1(x, w, bias, relu):
    # Direct PyTorch ConvTranspose2d(k=4, s=2, p=1) semantics.  x (N,H,W,Cin), w (Cin,Cout,4,4).
    xb = x.astype(jnp.bfloat16).astype(jnp.float32)
    wb = w.astype(jnp.bfloat16).astype(jnp.float32)
    N, H, W, _ = x.shape
    Cout = w.shape[1]
    canvas = jnp.zeros((N, 2 * H + 2, 2 * W + 2, Cout), jnp.float32)
    for a in range(4):
        for kb in range(4):
            contrib = jnp.einsum("nhwc,cd->nhwd", xb, wb[:, :, a, kb],
                                 precision=lax.Precision.HIGHEST)
            canvas = canvas.at[:, a:a + 2 * H:2, kb:kb + 2 * W:2, :].add(contrib)
    out = canvas[:, 1:1 + 2 * H, 1:1 + 2 * W, :] + bias.reshape(1, 1, 1, -1)
    return jnp.maximum(out, 0.0) if relu else out


def centernet_reference(raw, x_nchw):
    x = jnp.transpose(x_nchw, (0, 2, 3, 1)).astype(jnp.float32)
    for layer in raw["features"]:
        x = _ref_conv2d(x, layer["w"], layer["b"], 2, 1, True)
    x = _ref_conv_transpose_4x4_s2_p1(x, raw["deconv"]["w"], raw["deconv"]["b"], True)
    res = {}
    for name in HEAD_ORDER:
        h = _ref_conv2d(x, raw["heads"][name]["w1"], raw["heads"][name]["b1"], 1, 1, True)
        o = _ref_conv2d(h, raw["heads"][name]["w2"], raw["heads"][name]["b2"], 1, 0, False)
        res[name] = jnp.transpose(o, (0, 3, 1, 2))
    return res


# ---------------------------------------------------------------------------
# Synthetic parameterization (PyTorch layouts for raw weights)
# ---------------------------------------------------------------------------
def init_centernet_params(key, classes=4, head_conv=32):
    c_in, c1, c2, c3 = 3, 16, 32, 32
    ks = jax.random.split(key, 16)

    def w_init(k, shape):
        fan_in = 1
        for d in shape[1:]:
            fan_in *= d
        return jax.random.normal(k, shape, jnp.float32) * (1.0 / jnp.sqrt(fan_in))

    params = {
        "features": [
            {"w": w_init(ks[0], (c1, c_in, 3, 3)), "b": jnp.zeros((c1,), jnp.float32)},
            {"w": w_init(ks[1], (c2, c1, 3, 3)), "b": jnp.zeros((c2,), jnp.float32)},
        ],
        "deconv": {"w": w_init(ks[2], (c2, c3, 4, 4)), "b": jnp.zeros((c3,), jnp.float32)},
        "heads": {},
    }
    head_defs = {"hm": classes, "wh": 2, "reg": 2}
    for idx, (name, out_ch) in enumerate(head_defs.items()):
        kw1, kw2 = ks[3 + 2 * idx], ks[4 + 2 * idx]
        b2 = (jnp.full((out_ch,), -2.19, jnp.float32) if name == "hm"
              else jnp.zeros((out_ch,), jnp.float32))
        params["heads"][name] = {
            "w1": w_init(kw1, (head_conv, c3, 3, 3)),
            "b1": jnp.zeros((head_conv,), jnp.float32),
            "w2": w_init(kw2, (out_ch, head_conv, 1, 1)),
            "b2": b2,
        }
    return params


if __name__ == "__main__":
    key = jax.random.PRNGKey(0)
    k_param, k_x = jax.random.split(key)

    head_conv, classes = 32, 4
    raw_params = init_centernet_params(k_param, classes=classes, head_conv=head_conv)
    packed = pack_centernet_params(raw_params, head_conv=head_conv)   # one-time packing

    x = jax.random.normal(k_x, (2, 3, 32, 32), jnp.float32)           # NCHW input

    fwd = jax.jit(lambda xx: centernet_forward(packed, xx))
    outs = fwd(x)
    outs = jax.tree_util.tree_map(jax.block_until_ready, outs)

    assert outs["hm"].shape == (2, classes, 16, 16)
    assert outs["wh"].shape == (2, 2, 16, 16)
    assert outs["reg"].shape == (2, 2, 16, 16)

    # Numerical validation against a pure-XLA reference of the same (bf16-weight) forward
    # (also validates the ConvTranspose -> phase-conv decomposition at all borders).
    ref = centernet_reference(raw_params, x)
    for name in HEAD_ORDER:
        err = float(jnp.max(jnp.abs(outs[name] - ref[name])))
        if not err < 5e-2:
            raise AssertionError(f"{name}: max abs error vs reference = {err}")

    print("KERNEL_OK")
</pallas_src>

<mosaic_0001>
module attributes {stable_mosaic.version = 11 : i64} {
  func.func @_centernet_fused_kernel(%arg0: i32, %arg1: memref<1x4x100x27xbf16, #tpu.memory_space<vmem>>, %arg2: memref<100x1xf32, #tpu.memory_space<vmem>>, %arg3: memref<27x16xbf16, #tpu.memory_space<vmem>>, %arg4: memref<1x16xf32, #tpu.memory_space<vmem>>, %arg5: memref<9x16x32xbf16, #tpu.memory_space<vmem>>, %arg6: memref<1x32xf32, #tpu.memory_space<vmem>>, %arg7: memref<16x32x32xbf16, #tpu.memory_space<vmem>>, %arg8: memref<1x32xf32, #tpu.memory_space<vmem>>, %arg9: memref<9x32x96xbf16, #tpu.memory_space<vmem>>, %arg10: memref<1x96xf32, #tpu.memory_space<vmem>>, %arg11: memref<96x8xbf16, #tpu.memory_space<vmem>>, %arg12: memref<1x8xf32, #tpu.memory_space<vmem>>, %arg13: memref<1x4x100x8xf32, #tpu.memory_space<vmem>>, %arg14: memref<4x132x16xf32, #tpu.memory_space<vmem>>, %arg15: memref<132x32xf32, #tpu.memory_space<vmem>>, %arg16: memref<4x132x32xf32, #tpu.memory_space<vmem>>) attributes {dimension_semantics = [#tpu.dimension_semantics<parallel>], iteration_bounds = array<i64: 2>, scalar_prefetch = 0 : i64, scratch_operands = 3 : i64, tpu.core_type = #tpu.core_type<tc>, window_params = [{transform_indices = @transform_0, window_bounds = array<i64: 1, 4, 100, 27>}, {pipeline_mode = #tpu.pipeline_mode<synchronous>, transform_indices = @transform_1, window_bounds = array<i64: 100, 1>}, {pipeline_mode = #tpu.pipeline_mode<synchronous>, transform_indices = @transform_2, window_bounds = array<i64: 27, 16>}, {pipeline_mode = #tpu.pipeline_mode<synchronous>, transform_indices = @transform_3, window_bounds = array<i64: 1, 16>}, {pipeline_mode = #tpu.pipeline_mode<synchronous>, transform_indices = @transform_4, window_bounds = array<i64: 9, 16, 32>}, {pipeline_mode = #tpu.pipeline_mode<synchronous>, transform_indices = @transform_5, window_bounds = array<i64: 1, 32>}, {pipeline_mode = #tpu.pipeline_mode<synchronous>, transform_indices = @transform_6, window_bounds = array<i64: 16, 32, 32>}, {pipeline_mode = #tpu.pipeline_mode<synchronous>, transform_indices = @transform_7, window_bounds = array<i64: 1, 32>}, {pipeline_mode = #tpu.pipeline_mode<synchronous>, transform_indices = @transform_8, window_bounds = array<i64: 9, 32, 96>}, {pipeline_mode = #tpu.pipeline_mode<synchronous>, transform_indices = @transform_9, window_bounds = array<i64: 1, 96>}, {pipeline_mode = #tpu.pipeline_mode<synchronous>, transform_indices = @transform_10, window_bounds = array<i64: 96, 8>}, {pipeline_mode = #tpu.pipeline_mode<synchronous>, transform_indices = @transform_11, window_bounds = array<i64: 1, 8>}, {transform_indices = @transform_12, window_bounds = array<i64: 1, 4, 100, 8>}]} {
    %c0 = arith.constant 0 : index
    %c0_0 = arith.constant 0 : index
    %0 = vector.load %arg2[%c0, %c0_0] : memref<100x1xf32, #tpu.memory_space<vmem>>, vector<100x1xf32>
    %cst = arith.constant 0.000000e+00 : f32
    %1 = vector.broadcast %cst : f32 to vector<4x132x16xf32>
    %c0_1 = arith.constant 0 : index
    %c0_2 = arith.constant 0 : index
    %c0_3 = arith.constant 0 : index
    %2 = vector.load %arg14[%c0_1, %c0_2, %c0_3] : memref<4x132x16xf32, #tpu.memory_space<vmem>>, vector<4x132x16xf32>
    tpu.vector_store %arg14[%c0_1, %c0_2, %c0_3], %1 {strides = array<i32>} : memref<4x132x16xf32, #tpu.memory_space<vmem>>, vector<4x132x16xf32>,
    %cst_4 = arith.constant 0.000000e+00 : f32
    %3 = vector.broadcast %cst_4 : f32 to vector<132x32xf32>
    %c0_5 = arith.constant 0 : index
    %c0_6 = arith.constant 0 : index
    %4 = vector.load %arg15[%c0_5, %c0_6] : memref<132x32xf32, #tpu.memory_space<vmem>>, vector<132x32xf32>
    tpu.vector_store %arg15[%c0_5, %c0_6], %3 {strides = array<i32>} : memref<132x32xf32, #tpu.memory_space<vmem>>, vector<132x32xf32>,
    %cst_7 = arith.constant 0.000000e+00 : f32
    %5 = vector.broadcast %cst_7 : f32 to vector<4x132x32xf32>
    %c0_8 = arith.constant 0 : index
    %c0_9 = arith.constant 0 : index
    %c0_10 = arith.constant 0 : index
    %6 = vector.load %arg16[%c0_8, %c0_9, %c0_10] : memref<4x132x32xf32, #tpu.memory_space<vmem>>, vector<4x132x32xf32>
    tpu.vector_store %arg16[%c0_8, %c0_9, %c0_10], %5 {strides = array<i32>} : memref<4x132x32xf32, #tpu.memory_space<vmem>>, vector<4x132x32xf32>,
    %c0_11 = arith.constant 0 : index
    %c0_12 = arith.constant 0 : index
    %c0_13 = arith.constant 0 : index
    %c0_14 = arith.constant 0 : index
    %7 = vector.load %arg1[%c0_11, %c0_12, %c0_13, %c0_14] : memref<1x4x100x27xbf16, #tpu.memory_space<vmem>>, vector<1x1x100x27xbf16>
    %8 = vector.shape_cast %7 : vector<1x1x100x27xbf16> to vector<100x27xbf16>
    %c0_15 = arith.constant 0 : index
    %c0_16 = arith.constant 0 : index
    %9 = vector.load %arg3[%c0_15, %c0_16] : memref<27x16xbf16, #tpu.memory_space<vmem>>, vector<27x16xbf16>
    %cst_17 = arith.constant dense<0.000000e+00> : vector<100x16xf32>
    %10 = tpu.matmul %8, %9, %cst_17 {dimension_numbers = #tpu.dot_dimension_numbers<[1], [0], [0], [1], [0, 0, 1, 1], [], []>} : vector<100x27xbf16>, vector<27x16xbf16>, vector<100x16xf32> -> vector<100x16xf32>
    %c0_18 = arith.constant 0 : index
    %c0_19 = arith.constant 0 : index
    %11 = vector.load %arg4[%c0_18, %c0_19] : memref<1x16xf32, #tpu.memory_space<vmem>>, vector<1x16xf32>
    %12 = vector.broadcast %11 : vector<1x16xf32> to vector<100x16xf32>
    %13 = arith.addf %10, %12 : vector<100x16xf32>
    %cst_20 = arith.constant 0.000000e+00 : f32
    %14 = vector.broadcast %cst_20 : f32 to vector<100x16xf32>
    %15 = arith.maximumf %13, %14 : vector<100x16xf32>
    %16 = vector.broadcast %0 : vector<100x1xf32> to vector<100x16xf32>
    %17 = arith.mulf %15, %16 : vector<100x16xf32>
    %c0_21 = arith.constant 0 : index
    %c16 = arith.constant 16 : index
    %c0_22 = arith.constant 0 : index
    %18 = vector.load %arg14[%c0_21, %c16, %c0_22] : memref<4x132x16xf32, #tpu.memory_space<vmem>>, vector<1x100x16xf32>
    %19 = vector.shape_cast %18 : vector<1x100x16xf32> to vector<100x16xf32>
    %20 = vector.shape_cast %17 : vector<100x16xf32> to vector<1x100x16xf32>
    tpu.vector_store %arg14[%c0_21, %c16, %c0_22], %20 {strides = array<i32>} : memref<4x132x16xf32, #tpu.memory_space<vmem>>, vector<1x100x16xf32>,
    %c0_23 = arith.constant 0 : index
    %c1 = arith.constant 1 : index
    %c0_24 = arith.constant 0 : index
    %c0_25 = arith.constant 0 : index
    %21 = vector.load %arg1[%c0_23, %c1, %c0_24, %c0_25] : memref<1x4x100x27xbf16, #tpu.memory_space<vmem>>, vector<1x1x100x27xbf16>
    %22 = vector.shape_cast %21 : vector<1x1x100x27xbf16> to vector<100x27xbf16>
    %c0_26 = arith.constant 0 : index
    %c0_27 = arith.constant 0 : index
    %23 = vector.load %arg3[%c0_26, %c0_27] : memref<27x16xbf16, #tpu.memory_space<vmem>>, vector<27x16xbf16>
    %cst_28 = arith.constant dense<0.000000e+00> : vector<100x16xf32>
    %24 = tpu.matmul %22, %23, %cst_28 {dimension_numbers = #tpu.dot_dimension_numbers<[1], [0], [0], [1], [0, 0, 1, 1], [], []>} : vector<100x27xbf16>, vector<27x16xbf16>, vector<100x16xf32> -> vector<100x16xf32>
    %c0_29 = arith.constant 0 : index
    %c0_30 = arith.constant 0 : index
    %25 = vector.load %arg4[%c0_29, %c0_30] : memref<1x16xf32, #tpu.memory_space<vmem>>, vector<1x16xf32>
    %26 = vector.broadcast %25 : vector<1x16xf32> to vector<100x16xf32>
    %27 = arith.addf %24, %26 : vector<100x16xf32>
    %cst_31 = arith.constant 0.000000e+00 : f32
    %28 = vector.broadcast %cst_31 : f32 to vector<100x16xf32>
    %29 = arith.maximumf %27, %28 : vector<100x16xf32>
    %30 = vector.broadcast %0 : vector<100x1xf32> to vector<100x16xf32>
    %31 = arith.mulf %29, %30 : vector<100x16xf32>
    %c1_32 = arith.constant 1 : index
    %c16_33 = arith.constant 16 : index
    %c0_34 = arith.constant 0 : index
    %32 = vector.load %arg14[%c1_32, %c16_33, %c0_34] : memref<4x132x16xf32, #tpu.memory_space<vmem>>, vector<1x100x16xf32>
    %33 = vector.shape_cast %32 : vector<1x100x16xf32> to vector<100x16xf32>
    %34 = vector.shape_cast %31 : vector<100x16xf32> to vector<1x100x16xf32>
    tpu.vector_store %arg14[%c1_32, %c16_33, %c0_34], %34 {strides = array<i32>} : memref<4x132x16xf32, #tpu.memory_space<vmem>>, vector<1x100x16xf32>,
    %c0_35 = arith.constant 0 : index
    %c2 = arith.constant 2 : index
    %c0_36 = arith.constant 0 : index
    %c0_37 = arith.constant 0 : index
    %35 = vector.load %arg1[%c0_35, %c2, %c0_36, %c0_37] : memref<1x4x100x27xbf16, #tpu.memory_space<vmem>>, vector<1x1x100x27xbf16>
    %36 = vector.shape_cast %35 : vector<1x1x100x27xbf16> to vector<100x27xbf16>
    %c0_38 = arith.constant 0 : index
    %c0_39 = arith.constant 0 : index
    %37 = vector.load %arg3[%c0_38, %c0_39] : memref<27x16xbf16, #tpu.memory_space<vmem>>, vector<27x16xbf16>
    %cst_40 = arith.constant dense<0.000000e+00> : vector<100x16xf32>
    %38 = tpu.matmul %36, %37, %cst_40 {dimension_numbers = #tpu.dot_dimension_numbers<[1], [0], [0], [1], [0, 0, 1, 1], [], []>} : vector<100x27xbf16>, vector<27x16xbf16>, vector<100x16xf32> -> vector<100x16xf32>
    %c0_41 = arith.constant 0 : index
    %c0_42 = arith.constant 0 : index
    %39 = vector.load %arg4[%c0_41, %c0_42] : memref<1x16xf32, #tpu.memory_space<vmem>>, vector<1x16xf32>
    %40 = vector.broadcast %39 : vector<1x16xf32> to vector<100x16xf32>
    %41 = arith.addf %38, %40 : vector<100x16xf32>
    %cst_43 = arith.constant 0.000000e+00 : f32
    %42 = vector.broadcast %cst_43 : f32 to vector<100x16xf32>
    %43 = arith.maximumf %41, %42 : vector<100x16xf32>
    %44 = vector.broadcast %0 : vector<100x1xf32> to vector<100x16xf32>
    %45 = arith.mulf %43, %44 : vector<100x16xf32>
    %c2_44 = arith.constant 2 : index
    %c16_45 = arith.constant 16 : index
    %c0_46 = arith.constant 0 : index
    %46 = vector.load %arg14[%c2_44, %c16_45, %c0_46] : memref<4x132x16xf32, #tpu.memory_space<vmem>>, vector<1x100x16xf32>
    %47 = vector.shape_cast %46 : vector<1x100x16xf32> to vector<100x16xf32>
    %48 = vector.shape_cast %45 : vector<100x16xf32> to vector<1x100x16xf32>
    tpu.vector_store %arg14[%c2_44, %c16_45, %c0_46], %48 {strides = array<i32>} : memref<4x132x16xf32, #tpu.memory_space<vmem>>, vector<1x100x16xf32>,
    %c0_47 = arith.constant 0 : index
    %c3 = arith.constant 3 : index
    %c0_48 = arith.constant 0 : index
    %c0_49 = arith.constant 0 : index
    %49 = vector.load %arg1[%c0_47, %c3, %c0_48, %c0_49] : memref<1x4x100x27xbf16, #tpu.memory_space<vmem>>, vector<1x1x100x27xbf16>
    %50 = vector.shape_cast %49 : vector<1x1x100x27xbf16> to vector<100x27xbf16>
    %c0_50 = arith.constant 0 : index
    %c0_51 = arith.constant 0 : index
    %51 = vector.load %arg3[%c0_50, %c0_51] : memref<27x16xbf16, #tpu.memory_space<vmem>>, vector<27x16xbf16>
    %cst_52 = arith.constant dense<0.000000e+00> : vector<100x16xf32>
    %52 = tpu.matmul %50, %51, %cst_52 {dimension_numbers = #tpu.dot_dimension_numbers<[1], [0], [0], [1], [0, 0, 1, 1], [], []>} : vector<100x27xbf16>, vector<27x16xbf16>, vector<100x16xf32> -> vector<100x16xf32>
    %c0_53 = arith.constant 0 : index
    %c0_54 = arith.constant 0 : index
    %53 = vector.load %arg4[%c0_53, %c0_54] : memref<1x16xf32, #tpu.memory_space<vmem>>, vector<1x16xf32>
    %54 = vector.broadcast %53 : vector<1x16xf32> to vector<100x16xf32>
    %55 = arith.addf %52, %54 : vector<100x16xf32>
    %cst_55 = arith.constant 0.000000e+00 : f32
    %56 = vector.broadcast %cst_55 : f32 to vector<100x16xf32>
    %57 = arith.maximumf %55, %56 : vector<100x16xf32>
    %58 = vector.broadcast %0 : vector<100x1xf32> to vector<100x16xf32>
    %59 = arith.mulf %57, %58 : vector<100x16xf32>
    %c3_56 = arith.constant 3 : index
    %c16_57 = arith.constant 16 : index
    %c0_58 = arith.constant 0 : index
    %60 = vector.load %arg14[%c3_56, %c16_57, %c0_58] : memref<4x132x16xf32, #tpu.memory_space<vmem>>, vector<1x100x16xf32>
    %61 = vector.shape_cast %60 : vector<1x100x16xf32> to vector<100x16xf32>
    %62 = vector.shape_cast %59 : vector<100x16xf32> to vector<1x100x16xf32>
    tpu.vector_store %arg14[%c3_56, %c16_57, %c0_58], %62 {strides = array<i32>} : memref<4x132x16xf32, #tpu.memory_space<vmem>>, vector<1x100x16xf32>,
    %cst_59 = arith.constant 0.000000e+00 : f32
    %63 = vector.broadcast %cst_59 : f32 to vector<100x32xf32>
    %c3_60 = arith.constant 3 : index
    %c5 = arith.constant 5 : index
    %c0_61 = arith.constant 0 : index
    %64 = vector.load %arg14[%c3_60, %c5, %c0_61] : memref<4x132x16xf32, #tpu.memory_space<vmem>>, vector<1x100x16xf32>
    %65 = vector.shape_cast %64 : vector<1x100x16xf32> to vector<100x16xf32>
    %66 = arith.truncf %65 : vector<100x16xf32> to vector<100x16xbf16>
    %c0_62 = arith.constant 0 : index
    %c0_63 = arith.constant 0 : index
    %c0_64 = arith.constant 0 : index
    %67 = vector.load %arg5[%c0_62, %c0_63, %c0_64] : memref<9x16x32xbf16, #tpu.memory_space<vmem>>, vector<1x16x32xbf16>
    %68 = vector.shape_cast %67 : vector<1x16x32xbf16> to vector<16x32xbf16>
    %cst_65 = arith.constant dense<0.000000e+00> : vector<100x32xf32>
    %69 = tpu.matmul %66, %68, %cst_65 {dimension_numbers = #tpu.dot_dimension_numbers<[1], [0], [0], [1], [0, 0, 1, 1], [], []>} : vector<100x16xbf16>, vector<16x32xbf16>, vector<100x32xf32> -> vector<100x32xf32>
    %70 = arith.addf %63, %69 : vector<100x32xf32>
    %c2_66 = arith.constant 2 : index
    %c6 = arith.constant 6 : index
    %c0_67 = arith.constant 0 : index
    %71 = vector.load %arg14[%c2_66, %c6, %c0_67] : memref<4x132x16xf32, #tpu.memory_space<vmem>>, vector<1x100x16xf32>
    %72 = vector.shape_cast %71 : vector<1x100x16xf32> to vector<100x16xf32>
    %73 = arith.truncf %72 : vector<100x16xf32> to vector<100x16xbf16>
    %c1_68 = arith.constant 1 : index
    %c0_69 = arith.constant 0 : index
    %c0_70 = arith.constant 0 : index
    %74 = vector.load %arg5[%c1_68, %c0_69, %c0_70] : memref<9x16x32xbf16, #tpu.memory_space<vmem>>, vector<1x16x32xbf16>
    %75 = vector.shape_cast %74 : vector<1x16x32xbf16> to vector<16x32xbf16>
    %cst_71 = arith.constant dense<0.000000e+00> : vector<100x32xf32>
    %76 = tpu.matmul %73, %75, %cst_71 {dimension_numbers = #tpu.dot_dimension_numbers<[1], [0], [0], [1], [0, 0, 1, 1], [], []>} : vector<100x16xbf16>, vector<16x32xbf16>, vector<100x32xf32> -> vector<100x32xf32>
    %77 = arith.addf %70, %76 : vector<100x32xf32>
    %c3_72 = arith.constant 3 : index
    %c6_73 = arith.constant 6 : index
    %c0_74 = arith.constant 0 : index
    %78 = vector.load %arg14[%c3_72, %c6_73, %c0_74] : memref<4x132x16xf32, #tpu.memory_space<vmem>>, vector<1x100x16xf32>
    %79 = vector.shape_cast %78 : vector<1x100x16xf32> to vector<100x16xf32>
    %80 = arith.truncf %79 : vector<100x16xf32> to vector<100x16xbf16>
    %c2_75 = arith.constant 2 : index
    %c0_76 = arith.constant 0 : index
    %c0_77 = arith.constant 0 : index
    %81 = vector.load %arg5[%c2_75, %c0_76, %c0_77] : memref<9x16x32xbf16, #tpu.memory_space<vmem>>, vector<1x16x32xbf16>
    %82 = vector.shape_cast %81 : vector<1x16x32xbf16> to vector<16x32xbf16>
    %cst_78 = arith.constant dense<0.000000e+00> : vector<100x32xf32>
    %83 = tpu.matmul %80, %82, %cst_78 {dimension_numbers = #tpu.dot_dimension_numbers<[1], [0], [0], [1], [0, 0, 1, 1], [], []>} : vector<100x16xbf16>, vector<16x32xbf16>, vector<100x32xf32> -> vector<100x32xf32>
    %84 = arith.addf %77, %83 : vector<100x32xf32>
    %c1_79 = arith.constant 1 : index
    %c15 = arith.constant 15 : index
    %c0_80 = arith.constant 0 : index
    %85 = vector.load %arg14[%c1_79, %c15, %c0_80] : memref<4x132x16xf32, #tpu.memory_space<vmem>>, vector<1x100x16xf32>
    %86 = vector.shape_cast %85 : vector<1x100x16xf32> to vector<100x16xf32>
    %87 = arith.truncf %86 : vector<100x16xf32> to vector<100x16xbf16>
    %c3_81 = arith.constant 3 : index
    %c0_82 = arith.constant 0 : index
    %c0_83 = arith.constant 0 : index
    %88 = vector.load %arg5[%c3_81, %c0_82, %c0_83] : memref<9x16x32xbf16, #tpu.memory_space<vmem>>, vector<1x16x32xbf16>
    %89 = vector.shape_cast %88 : vector<1x16x32xbf16> to vector<16x32xbf16>
    %cst_84 = arith.constant dense<0.000000e+00> : vector<100x32xf32>
    %90 = tpu.matmul %87, %89, %cst_84 {dimension_numbers = #tpu.dot_dimension_numbers<[1], [0], [0], [1], [0, 0, 1, 1], [], []>} : vector<100x16xbf16>, vector<16x32xbf16>, vector<100x32xf32> -> vector<100x32xf32>
    %91 = arith.addf %84, %90 : vector<100x32xf32>
    %c0_85 = arith.constant 0 : index
    %c16_86 = arith.constant 16 : index
    %c0_87 = arith.constant 0 : index
    %92 = vector.load %arg14[%c0_85, %c16_86, %c0_87] : memref<4x132x16xf32, #tpu.memory_space<vmem>>, vector<1x100x16xf32>
    %93 = vector.shape_cast %92 : vector<1x100x16xf32> to vector<100x16xf32>
    %94 = arith.truncf %93 : vector<100x16xf32> to vector<100x16xbf16>
    %c4 = arith.constant 4 : index
    %c0_88 = arith.constant 0 : index
    %c0_89 = arith.constant 0 : index
    %95 = vector.load %arg5[%c4, %c0_88, %c0_89] : memref<9x16x32xbf16, #tpu.memory_space<vmem>>, vector<1x16x32xbf16>
    %96 = vector.shape_cast %95 : vector<1x16x32xbf16> to vector<16x32xbf16>
    %cst_90 = arith.constant dense<0.000000e+00> : vector<100x32xf32>
    %97 = tpu.matmul %94, %96, %cst_90 {dimension_numbers = #tpu.dot_dimension_numbers<[1], [0], [0], [1], [0, 0, 1, 1], [], []>} : vector<100x16xbf16>, vector<16x32xbf16>, vector<100x32xf32> -> vector<100x32xf32>
    %98 = arith.addf %91, %97 : vector<100x32xf32>
    %c1_91 = arith.constant 1 : index
    %c16_92 = arith.constant 16 : index
    %c0_93 = arith.constant 0 : index
    %99 = vector.load %arg14[%c1_91, %c16_92, %c0_93] : memref<4x132x16xf32, #tpu.memory_space<vmem>>, vector<1x100x16xf32>
    %100 = vector.shape_cast %99 : vector<1x100x16xf32> to vector<100x16xf32>
    %101 = arith.truncf %100 : vector<100x16xf32> to vector<100x16xbf16>
    %c5_94 = arith.constant 5 : index
    %c0_95 = arith.constant 0 : index
    %c0_96 = arith.constant 0 : index
    %102 = vector.load %arg5[%c5_94, %c0_95, %c0_96] : memref<9x16x32xbf16, #tpu.memory_space<vmem>>, vector<1x16x32xbf16>
    %103 = vector.shape_cast %102 : vector<1x16x32xbf16> to vector<16x32xbf16>
    %cst_97 = arith.constant dense<0.000000e+00> : vector<100x32xf32>
    %104 = tpu.matmul %101, %103, %cst_97 {dimension_numbers = #tpu.dot_dimension_numbers<[1], [0], [0], [1], [0, 0, 1, 1], [], []>} : vector<100x16xbf16>, vector<16x32xbf16>, vector<100x32xf32> -> vector<100x32xf32>
    %105 = arith.addf %98, %104 : vector<100x32xf32>
    %c3_98 = arith.constant 3 : index
    %c15_99 = arith.constant 15 : index
    %c0_100 = arith.constant 0 : index
    %106 = vector.load %arg14[%c3_98, %c15_99, %c0_100] : memref<4x132x16xf32, #tpu.memory_space<vmem>>, vector<1x100x16xf32>
    %107 = vector.shape_cast %106 : vector<1x100x16xf32> to vector<100x16xf32>
    %108 = arith.truncf %107 : vector<100x16xf32> to vector<100x16xbf16>
    %c6_101 = arith.constant 6 : index
    %c0_102 = arith.constant 0 : index
    %c0_103 = arith.constant 0 : index
    %109 = vector.load %arg5[%c6_101, %c0_102, %c0_103] : memref<9x16x32xbf16, #tpu.memory_space<vmem>>, vector<1x16x32xbf16>
    %110 = vector.shape_cast %109 : vector<1x16x32xbf16> to vector<16x32xbf16>
    %cst_104 = arith.constant dense<0.000000e+00> : vector<100x32xf32>
    %111 = tpu.matmul %108, %110, %cst_104 {dimension_numbers = #tpu.dot_dimension_numbers<[1], [0], [0], [1], [0, 0, 1, 1], [], []>} : vector<100x16xbf16>, vector<16x32xbf16>, vector<100x32xf32> -> vector<100x32xf32>
    %112 = arith.addf %105, %111 : vector<100x32xf32>
    %c2_105 = arith.constant 2 : index
    %c16_106 = arith.constant 16 : index
    %c0_107 = arith.constant 0 : index
    %113 = vector.load %arg14[%c2_105, %c16_106, %c0_107] : memref<4x132x16xf32, #tpu.memory_space<vmem>>, vector<1x100x16xf32>
    %114 = vector.shape_cast %113 : vector<1x100x16xf32> to vector<100x16xf32>
    %115 = arith.truncf %114 : vector<100x16xf32> to vector<100x16xbf16>
    %c7 = arith.constant 7 : index
    %c0_108 = arith.constant 0 : index
    %c0_109 = arith.constant 0 : index
    %116 = vector.load %arg5[%c7, %c0_108, %c0_109] : memref<9x16x32xbf16, #tpu.memory_space<vmem>>, vector<1x16x32xbf16>
    %117 = vector.shape_cast %116 : vector<1x16x32xbf16> to vector<16x32xbf16>
    %cst_110 = arith.constant dense<0.000000e+00> : vector<100x32xf32>
    %118 = tpu.matmul %115, %117, %cst_110 {dimension_numbers = #tpu.dot_dimension_numbers<[1], [0], [0], [1], [0, 0, 1, 1], [], []>} : vector<100x16xbf16>, vector<16x32xbf16>, vector<100x32xf32> -> vector<100x32xf32>
    %119 = arith.addf %112, %118 : vector<100x32xf32>
    %c3_111 = arith.constant 3 : index
    %c16_112 = arith.constant 16 : index
    %c0_113 = arith.constant 0 : index
    %120 = vector.load %arg14[%c3_111, %c16_112, %c0_113] : memref<4x132x16xf32, #tpu.memory_space<vmem>>, vector<1x100x16xf32>
    %121 = vector.shape_cast %120 : vector<1x100x16xf32> to vector<100x16xf32>
    %122 = arith.truncf %121 : vector<100x16xf32> to vector<100x16xbf16>
    %c8 = arith.constant 8 : index
    %c0_114 = arith.constant 0 : index
    %c0_115 = arith.constant 0 : index
    %123 = vector.load %arg5[%c8, %c0_114, %c0_115] : memref<9x16x32xbf16, #tpu.memory_space<vmem>>, vector<1x16x32xbf16>
    %124 = vector.shape_cast %123 : vector<1x16x32xbf16> to vector<16x32xbf16>
    %cst_116 = arith.constant dense<0.000000e+00> : vector<100x32xf32>
    %125 = tpu.matmul %122, %124, %cst_116 {dimension_numbers = #tpu.dot_dimension_numbers<[1], [0], [0], [1], [0, 0, 1, 1], [], []>} : vector<100x16xbf16>, vector<16x32xbf16>, vector<100x32xf32> -> vector<100x32xf32>
    %126 = arith.addf %119, %125 : vector<100x32xf32>
    %c0_117 = arith.constant 0 : index
    %c0_118 = arith.constant 0 : index
    %127 = vector.load %arg6[%c0_117, %c0_118] : memref<1x32xf32, #tpu.memory_space<vmem>>, vector<1x32xf32>
    %128 = vector.broadcast %127 : vector<1x32xf32> to vector<100x32xf32>
    %129 = arith.addf %126, %128 : vector<100x32xf32>
    %cst_119 = arith.constant 0.000000e+00 : f32
    %130 = vector.broadcast %cst_119 : f32 to vector<100x32xf32>
    %131 = arith.maximumf %129, %130 : vector<100x32xf32>
    %132 = vector.broadcast %0 : vector<100x1xf32> to vector<100x32xf32>
    %133 = arith.mulf %131, %132 : vector<100x32xf32>
    %c16_120 = arith.constant 16 : index
    %c0_121 = arith.constant 0 : index
    %134 = vector.load %arg15[%c16_120, %c0_121] : memref<132x32xf32, #tpu.memory_space<vmem>>, vector<100x32xf32>
    tpu.vector_store %arg15[%c16_120, %c0_121], %133 {strides = array<i32>} : memref<132x32xf32, #tpu.memory_space<vmem>>, vector<100x32xf32>,
    %cst_122 = arith.constant 0.000000e+00 : f32
    %135 = vector.broadcast %cst_122 : f32 to vector<100x32xf32>
    %c5_123 = arith.constant 5 : index
    %c0_124 = arith.constant 0 : index
    %136 = vector.load %arg15[%c5_123, %c0_124] : memref<132x32xf32, #tpu.memory_space<vmem>>, vector<100x32xf32>
    %137 = arith.truncf %136 : vector<100x32xf32> to vector<100x32xbf16>
    %c0_125 = arith.constant 0 : index
    %c0_126 = arith.constant 0 : index
    %c0_127 = arith.constant 0 : index
    %138 = vector.load %arg7[%c0_125, %c0_126, %c0_127] : memref<16x32x32xbf16, #tpu.memory_space<vmem>>, vector<1x32x32xbf16>
    %139 = vector.shape_cast %138 : vector<1x32x32xbf16> to vector<32x32xbf16>
    %cst_128 = arith.constant dense<0.000000e+00> : vector<100x32xf32>
    %140 = tpu.matmul %137, %139, %cst_128 {dimension_numbers = #tpu.dot_dimension_numbers<[1], [0], [0], [1], [0, 0, 1, 1], [], []>} : vector<100x32xbf16>, vector<32x32xbf16>, vector<100x32xf32> -> vector<100x32xf32>
    %141 = arith.addf %135, %140 : vector<100x32xf32>
    %c6_129 = arith.constant 6 : index
    %c0_130 = arith.constant 0 : index
    %142 = vector.load %arg15[%c6_129, %c0_130] : memref<132x32xf32, #tpu.memory_space<vmem>>, vector<100x32xf32>
    %143 = arith.truncf %142 : vector<100x32xf32> to vector<100x32xbf16>
    %c1_131 = arith.constant 1 : index
    %c0_132 = arith.constant 0 : index
    %c0_133 = arith.constant 0 : index
    %144 = vector.load %arg7[%c1_131, %c0_132, %c0_133] : memref<16x32x32xbf16, #tpu.memory_space<vmem>>, vector<1x32x32xbf16>
    %145 = vector.shape_cast %144 : vector<1x32x32xbf16> to vector<32x32xbf16>
    %cst_134 = arith.constant dense<0.000000e+00> : vector<100x32xf32>
    %146 = tpu.matmul %143, %145, %cst_134 {dimension_numbers = #tpu.dot_dimension_numbers<[1], [0], [0], [1], [0, 0, 1, 1], [], []>} : vector<100x32xbf16>, vector<32x32xbf16>, vector<100x32xf32> -> vector<100x32xf32>
    %147 = arith.addf %141, %146 : vector<100x32xf32>
    %c15_135 = arith.constant 15 : index
    %c0_136 = arith.constant 0 : index
    %148 = vector.load %arg15[%c15_135, %c0_136] : memref<132x32xf32, #tpu.memory_space<vmem>>, vector<100x32xf32>
    %149 = arith.truncf %148 : vector<100x32xf32> to vector<100x32xbf16>
    %c2_137 = arith.constant 2 : index
    %c0_138 = arith.constant 0 : index
    %c0_139 = arith.constant 0 : index
    %150 = vector.load %arg7[%c2_137, %c0_138, %c0_139] : memref<16x32x32xbf16, #tpu.memory_space<vmem>>, vector<1x32x32xbf16>
    %151 = vector.shape_cast %150 : vector<1x32x32xbf16> to vector<32x32xbf16>
    %cst_140 = arith.constant dense<0.000000e+00> : vector<100x32xf32>
    %152 = tpu.matmul %149, %151, %cst_140 {dimension_numbers = #tpu.dot_dimension_numbers<[1], [0], [0], [1], [0, 0, 1, 1], [], []>} : vector<100x32xbf16>, vector<32x32xbf16>, vector<100x32xf32> -> vector<100x32xf32>
    %153 = arith.addf %147, %152 : vector<100x32xf32>
    %c16_141 = arith.constant 16 : index
    %c0_142 = arith.constant 0 : index
    %154 = vector.load %arg15[%c16_141, %c0_142] : memref<132x32xf32, #tpu.memory_space<vmem>>, vector<100x32xf32>
    %155 = arith.truncf %154 : vector<100x32xf32> to vector<100x32xbf16>
    %c3_143 = arith.constant 3 : index
    %c0_144 = arith.constant 0 : index
    %c0_145 = arith.constant 0 : index
    %156 = vector.load %arg7[%c3_143, %c0_144, %c0_145] : memref<16x32x32xbf16, #tpu.memory_space<vmem>>, vector<1x32x32xbf16>
    %157 = vector.shape_cast %156 : vector<1x32x32xbf16> to vector<32x32xbf16>
    %cst_146 = arith.constant dense<0.000000e+00> : vector<100x32xf32>
    %158 = tpu.matmul %155, %157, %cst_146 {dimension_numbers = #tpu.dot_dimension_numbers<[1], [0], [0], [1], [0, 0, 1, 1], [], []>} : vector<100x32xbf16>, vector<32x32xbf16>, vector<100x32xf32> -> vector<100x32xf32>
    %159 = arith.addf %153, %158 : vector<100x32xf32>
    %c0_147 = arith.constant 0 : index
    %c0_148 = arith.constant 0 : index
    %160 = vector.load %arg8[%c0_147, %c0_148] : memref<1x32xf32, #tpu.memory_space<vmem>>, vector<1x32xf32>
    %161 = vector.broadcast %160 : vector<1x32xf32> to vector<100x32xf32>
    %162 = arith.addf %159, %161 : vector<100x32xf32>
    %cst_149 = arith.constant 0.000000e+00 : f32
    %163 = vector.broadcast %cst_149 : f32 to vector<100x32xf32>
    %164 = arith.maximumf %162, %163 : vector<100x32xf32>
    %165 = vector.broadcast %0 : vector<100x1xf32> to vector<100x32xf32>
    %166 = arith.mulf %164, %165 : vector<100x32xf32>
    %c0_150 = arith.constant 0 : index
    %c16_151 = arith.constant 16 : index
    %c0_152 = arith.constant 0 : index
    %167 = vector.load %arg16[%c0_150, %c16_151, %c0_152] : memref<4x132x32xf32, #tpu.memory_space<vmem>>, vector<1x100x32xf32>
    %168 = vector.shape_cast %167 : vector<1x100x32xf32> to vector<100x32xf32>
    %169 = vector.shape_cast %166 : vector<100x32xf32> to vector<1x100x32xf32>
    tpu.vector_store %arg16[%c0_150, %c16_151, %c0_152], %169 {strides = array<i32>} : memref<4x132x32xf32, #tpu.memory_space<vmem>>, vector<1x100x32xf32>,
    %cst_153 = arith.constant 0.000000e+00 : f32
    %170 = vector.broadcast %cst_153 : f32 to vector<100x32xf32>
    %c6_154 = arith.constant 6 : index
    %c0_155 = arith.constant 0 : index
    %171 = vector.load %arg15[%c6_154, %c0_155] : memref<132x32xf32, #tpu.memory_space<vmem>>, vector<100x32xf32>
    %172 = arith.truncf %171 : vector<100x32xf32> to vector<100x32xbf16>
    %c4_156 = arith.constant 4 : index
    %c0_157 = arith.constant 0 : index
    %c0_158 = arith.constant 0 : index
    %173 = vector.load %arg7[%c4_156, %c0_157, %c0_158] : memref<16x32x32xbf16, #tpu.memory_space<vmem>>, vector<1x32x32xbf16>
    %174 = vector.shape_cast %173 : vector<1x32x32xbf16> to vector<32x32xbf16>
    %cst_159 = arith.constant dense<0.000000e+00> : vector<100x32xf32>
    %175 = tpu.matmul %172, %174, %cst_159 {dimension_numbers = #tpu.dot_dimension_numbers<[1], [0], [0], [1], [0, 0, 1, 1], [], []>} : vector<100x32xbf16>, vector<32x32xbf16>, vector<100x32xf32> -> vector<100x32xf32>
    %176 = arith.addf %170, %175 : vector<100x32xf32>
    %c7_160 = arith.constant 7 : index
    %c0_161 = arith.constant 0 : index
    %177 = vector.load %arg15[%c7_160, %c0_161] : memref<132x32xf32, #tpu.memory_space<vmem>>, vector<100x32xf32>
    %178 = arith.truncf %177 : vector<100x32xf32> to vector<100x32xbf16>
    %c5_162 = arith.constant 5 : index
    %c0_163 = arith.constant 0 : index
    %c0_164 = arith.constant 0 : index
    %179 = vector.load %arg7[%c5_162, %c0_163, %c0_164] : memref<16x32x32xbf16, #tpu.memory_space<vmem>>, vector<1x32x32xbf16>
    %180 = vector.shape_cast %179 : vector<1x32x32xbf16> to vector<32x32xbf16>
    %cst_165 = arith.constant dense<0.000000e+00> : vector<100x32xf32>
    %181 = tpu.matmul %178, %180, %cst_165 {dimension_numbers = #tpu.dot_dimension_numbers<[1], [0], [0], [1], [0, 0, 1, 1], [], []>} : vector<100x32xbf16>, vector<32x32xbf16>, vector<100x32xf32> -> vector<100x32xf32>
    %182 = arith.addf %176, %181 : vector<100x32xf32>
    %c16_166 = arith.constant 16 : index
    %c0_167 = arith.constant 0 : index
    %183 = vector.load %arg15[%c16_166, %c0_167] : memref<132x32xf32, #tpu.memory_space<vmem>>, vector<100x32xf32>
    %184 = arith.truncf %183 : vector<100x32xf32> to vector<100x32xbf16>
    %c6_168 = arith.constant 6 : index
    %c0_169 = arith.constant 0 : index
    %c0_170 = arith.constant 0 : index
    %185 = vector.load %arg7[%c6_168, %c0_169, %c0_170] : memref<16x32x32xbf16, #tpu.memory_space<vmem>>, vector<1x32x32xbf16>
    %186 = vector.shape_cast %185 : vector<1x32x32xbf16> to vector<32x32xbf16>
    %cst_171 = arith.constant dense<0.000000e+00> : vector<100x32xf32>
    %187 = tpu.matmul %184, %186, %cst_171 {dimension_numbers = #tpu.dot_dimension_numbers<[1], [0], [0], [1], [0, 0, 1, 1], [], []>} : vector<100x32xbf16>, vector<32x32xbf16>, vector<100x32xf32> -> vector<100x32xf32>
    %188 = arith.addf %182, %187 : vector<100x32xf32>
    %c17 = arith.constant 17 : index
    %c0_172 = arith.constant 0 : index
    %189 = vector.load %arg15[%c17, %c0_172] : memref<132x32xf32, #tpu.memory_space<vmem>>, vector<100x32xf32>
    %190 = arith.truncf %189 : vector<100x32xf32> to vector<100x32xbf16>
    %c7_173 = arith.constant 7 : index
    %c0_174 = arith.constant 0 : index
    %c0_175 = arith.constant 0 : index
    %191 = vector.load %arg7[%c7_173, %c0_174, %c0_175] : memref<16x32x32xbf16, #tpu.memory_space<vmem>>, vector<1x32x32xbf16>
    %192 = vector.shape_cast %191 : vector<1x32x32xbf16> to vector<32x32xbf16>
    %cst_176 = arith.constant dense<0.000000e+00> : vector<100x32xf32>
    %193 = tpu.matmul %190, %192, %cst_176 {dimension_numbers = #tpu.dot_dimension_numbers<[1], [0], [0], [1], [0, 0, 1, 1], [], []>} : vector<100x32xbf16>, vector<32x32xbf16>, vector<100x32xf32> -> vector<100x32xf32>
    %194 = arith.addf %188, %193 : vector<100x32xf32>
    %c0_177 = arith.constant 0 : index
    %c0_178 = arith.constant 0 : index
    %195 = vector.load %arg8[%c0_177, %c0_178] : memref<1x32xf32, #tpu.memory_space<vmem>>, vector<1x32xf32>
    %196 = vector.broadcast %195 : vector<1x32xf32> to vector<100x32xf32>
    %197 = arith.addf %194, %196 : vector<100x32xf32>
    %cst_179 = arith.constant 0.000000e+00 : f32
    %198 = vector.broadcast %cst_179 : f32 to vector<100x32xf32>
    %199 = arith.maximumf %197, %198 : vector<100x32xf32>
    %200 = vector.broadcast %0 : vector<100x1xf32> to vector<100x32xf32>
    %201 = arith.mulf %199, %200 : vector<100x32xf32>
    %c1_180 = arith.constant 1 : index
    %c16_181 = arith.constant 16 : index
    %c0_182 = arith.constant 0 : index
    %202 = vector.load %arg16[%c1_180, %c16_181, %c0_182] : memref<4x132x32xf32, #tpu.memory_space<vmem>>, vector<1x100x32xf32>
    %203 = vector.shape_cast %202 : vector<1x100x32xf32> to vector<100x32xf32>
    %204 = vector.shape_cast %201 : vector<100x32xf32> to vector<1x100x32xf32>
    tpu.vector_store %arg16[%c1_180, %c16_181, %c0_182], %204 {strides = array<i32>} : memref<4x132x32xf32, #tpu.memory_space<vmem>>, vector<1x100x32xf32>,
    %cst_183 = arith.constant 0.000000e+00 : f32
    %205 = vector.broadcast %cst_183 : f32 to vector<100x32xf32>
    %c15_184 = arith.constant 15 : index
    %c0_185 = arith.constant 0 : index
    %206 = vector.load %arg15[%c15_184, %c0_185] : memref<132x32xf32, #tpu.memory_space<vmem>>, vector<100x32xf32>
    %207 = arith.truncf %206 : vector<100x32xf32> to vector<100x32xbf16>
    %c8_186 = arith.constant 8 : index
    %c0_187 = arith.constant 0 : index
    %c0_188 = arith.constant 0 : index
    %208 = vector.load %arg7[%c8_186, %c0_187, %c0_188] : memref<16x32x32xbf16, #tpu.memory_space<vmem>>, vector<1x32x32xbf16>
    %209 = vector.shape_cast %208 : vector<1x32x32xbf16> to vector<32x32xbf16>
    %cst_189 = arith.constant dense<0.000000e+00> : vector<100x32xf32>
    %210 = tpu.matmul %207, %209, %cst_189 {dimension_numbers = #tpu.dot_dimension_numbers<[1], [0], [0], [1], [0, 0, 1, 1], [], []>} : vector<100x32xbf16>, vector<32x32xbf16>, vector<100x32xf32> -> vector<100x32xf32>
    %211 = arith.addf %205, %210 : vector<100x32xf32>
    %c16_190 = arith.constant 16 : index
    %c0_191 = arith.constant 0 : index
    %212 = vector.load %arg15[%c16_190, %c0_191] : memref<132x32xf32, #tpu.memory_space<vmem>>, vector<100x32xf32>
    %213 = arith.truncf %212 : vector<100x32xf32> to vector<100x32xbf16>
    %c9 = arith.constant 9 : index
    %c0_192 = arith.constant 0 : index
    %c0_193 = arith.constant 0 : index
    %214 = vector.load %arg7[%c9, %c0_192, %c0_193] : memref<16x32x32xbf16, #tpu.memory_space<vmem>>, vector<1x32x32xbf16>
    %215 = vector.shape_cast %214 : vector<1x32x32xbf16> to vector<32x32xbf16>
    %cst_194 = arith.constant dense<0.000000e+00> : vector<100x32xf32>
    %216 = tpu.matmul %213, %215, %cst_194 {dimension_numbers = #tpu.dot_dimension_numbers<[1], [0], [0], [1], [0, 0, 1, 1], [], []>} : vector<100x32xbf16>, vector<32x32xbf16>, vector<100x32xf32> -> vector<100x32xf32>
    %217 = arith.addf %211, %216 : vector<100x32xf32>
    %c25 = arith.constant 25 : index
    %c0_195 = arith.constant 0 : index
    %218 = vector.load %arg15[%c25, %c0_195] : memref<132x32xf32, #tpu.memory_space<vmem>>, vector<100x32xf32>
    %219 = arith.truncf %218 : vector<100x32xf32> to vector<100x32xbf16>
    %c10 = arith.constant 10 : index
    %c0_196 = arith.constant 0 : index
    %c0_197 = arith.constant 0 : index
    %220 = vector.load %arg7[%c10, %c0_196, %c0_197] : memref<16x32x32xbf16, #tpu.memory_space<vmem>>, vector<1x32x32xbf16>
    %221 = vector.shape_cast %220 : vector<1x32x32xbf16> to vector<32x32xbf16>
    %cst_198 = arith.constant dense<0.000000e+00> : vector<100x32xf32>
    %222 = tpu.matmul %219, %221, %cst_198 {dimension_numbers = #tpu.dot_dimension_numbers<[1], [0], [0], [1], [0, 0, 1, 1], [], []>} : vector<100x32xbf16>, vector<32x32xbf16>, vector<100x32xf32> -> vector<100x32xf32>
    %223 = arith.addf %217, %222 : vector<100x32xf32>
    %c26 = arith.constant 26 : index
    %c0_199 = arith.constant 0 : index
    %224 = vector.load %arg15[%c26, %c0_199] : memref<132x32xf32, #tpu.memory_space<vmem>>, vector<100x32xf32>
    %225 = arith.truncf %224 : vector<100x32xf32> to vector<100x32xbf16>
    %c11 = arith.constant 11 : index
    %c0_200 = arith.constant 0 : index
    %c0_201 = arith.constant 0 : index
    %226 = vector.load %arg7[%c11, %c0_200, %c0_201] : memref<16x32x32xbf16, #tpu.memory_space<vmem>>, vector<1x32x32xbf16>
    %227 = vector.shape_cast %226 : vector<1x32x32xbf16> to vector<32x32xbf16>
    %cst_202 = arith.constant dense<0.000000e+00> : vector<100x32xf32>
    %228 = tpu.matmul %225, %227, %cst_202 {dimension_numbers = #tpu.dot_dimension_numbers<[1], [0], [0], [1], [0, 0, 1, 1], [], []>} : vector<100x32xbf16>, vector<32x32xbf16>, vector<100x32xf32> -> vector<100x32xf32>
    %229 = arith.addf %223, %228 : vector<100x32xf32>
    %c0_203 = arith.constant 0 : index
    %c0_204 = arith.constant 0 : index
    %230 = vector.load %arg8[%c0_203, %c0_204] : memref<1x32xf32, #tpu.memory_space<vmem>>, vector<1x32xf32>
    %231 = vector.broadcast %230 : vector<1x32xf32> to vector<100x32xf32>
    %232 = arith.addf %229, %231 : vector<100x32xf32>
    %cst_205 = arith.constant 0.000000e+00 : f32
    %233 = vector.broadcast %cst_205 : f32 to vector<100x32xf32>
    %234 = arith.maximumf %232, %233 : vector<100x32xf32>
    %235 = vector.broadcast %0 : vector<100x1xf32> to vector<100x32xf32>
    %236 = arith.mulf %234, %235 : vector<100x32xf32>
    %c2_206 = arith.constant 2 : index
    %c16_207 = arith.constant 16 : index
    %c0_208 = arith.constant 0 : index
    %237 = vector.load %arg16[%c2_206, %c16_207, %c0_208] : memref<4x132x32xf32, #tpu.memory_space<vmem>>, vector<1x100x32xf32>
    %238 = vector.shape_cast %237 : vector<1x100x32xf32> to vector<100x32xf32>
    %239 = vector.shape_cast %236 : vector<100x32xf32> to vector<1x100x32xf32>
    tpu.vector_store %arg16[%c2_206, %c16_207, %c0_208], %239 {strides = array<i32>} : memref<4x132x32xf32, #tpu.memory_space<vmem>>, vector<1x100x32xf32>,
    %cst_209 = arith.constant 0.000000e+00 : f32
    %240 = vector.broadcast %cst_209 : f32 to vector<100x32xf32>
    %c16_210 = arith.constant 16 : index
    %c0_211 = arith.constant 0 : index
    %241 = vector.load %arg15[%c16_210, %c0_211] : memref<132x32xf32, #tpu.memory_space<vmem>>, vector<100x32xf32>
    %242 = arith.truncf %241 : vector<100x32xf32> to vector<100x32xbf16>
    %c12 = arith.constant 12 : index
    %c0_212 = arith.constant 0 : index
    %c0_213 = arith.constant 0 : index
    %243 = vector.load %arg7[%c12, %c0_212, %c0_213] : memref<16x32x32xbf16, #tpu.memory_space<vmem>>, vector<1x32x32xbf16>
    %244 = vector.shape_cast %243 : vector<1x32x32xbf16> to vector<32x32xbf16>
    %cst_214 = arith.constant dense<0.000000e+00> : vector<100x32xf32>
    %245 = tpu.matmul %242, %244, %cst_214 {dimension_numbers = #tpu.dot_dimension_numbers<[1], [0], [0], [1], [0, 0, 1, 1], [], []>} : vector<100x32xbf16>, vector<32x32xbf16>, vector<100x32xf32> -> vector<100x32xf32>
    %246 = arith.addf %240, %245 : vector<100x32xf32>
    %c17_215 = arith.constant 17 : index
    %c0_216 = arith.constant 0 : index
    %247 = vector.load %arg15[%c17_215, %c0_216] : memref<132x32xf32, #tpu.memory_space<vmem>>, vector<100x32xf32>
    %248 = arith.truncf %247 : vector<100x32xf32> to vector<100x32xbf16>
    %c13 = arith.constant 13 : index
    %c0_217 = arith.constant 0 : index
    %c0_218 = arith.constant 0 : index
    %249 = vector.load %arg7[%c13, %c0_217, %c0_218] : memref<16x32x32xbf16, #tpu.memory_space<vmem>>, vector<1x32x32xbf16>
    %250 = vector.shape_cast %249 : vector<1x32x32xbf16> to vector<32x32xbf16>
    %cst_219 = arith.constant dense<0.000000e+00> : vector<100x32xf32>
    %251 = tpu.matmul %248, %250, %cst_219 {dimension_numbers = #tpu.dot_dimension_numbers<[1], [0], [0], [1], [0, 0, 1, 1], [], []>} : vector<100x32xbf16>, vector<32x32xbf16>, vector<100x32xf32> -> vector<100x32xf32>
    %252 = arith.addf %246, %251 : vector<100x32xf32>
    %c26_220 = arith.constant 26 : index
    %c0_221 = arith.constant 0 : index
    %253 = vector.load %arg15[%c26_220, %c0_221] : memref<132x32xf32, #tpu.memory_space<vmem>>, vector<100x32xf32>
    %254 = arith.truncf %253 : vector<100x32xf32> to vector<100x32xbf16>
    %c14 = arith.constant 14 : index
    %c0_222 = arith.constant 0 : index
    %c0_223 = arith.constant 0 : index
    %255 = vector.load %arg7[%c14, %c0_222, %c0_223] : memref<16x32x32xbf16, #tpu.memory_space<vmem>>, vector<1x32x32xbf16>
    %256 = vector.shape_cast %255 : vector<1x32x32xbf16> to vector<32x32xbf16>
    %cst_224 = arith.constant dense<0.000000e+00> : vector<100x32xf32>
    %257 = tpu.matmul %254, %256, %cst_224 {dimension_numbers = #tpu.dot_dimension_numbers<[1], [0], [0], [1], [0, 0, 1, 1], [], []>} : vector<100x32xbf16>, vector<32x32xbf16>, vector<100x32xf32> -> vector<100x32xf32>
    %258 = arith.addf %252, %257 : vector<100x32xf32>
    %c27 = arith.constant 27 : index
    %c0_225 = arith.constant 0 : index
    %259 = vector.load %arg15[%c27, %c0_225] : memref<132x32xf32, #tpu.memory_space<vmem>>, vector<100x32xf32>
    %260 = arith.truncf %259 : vector<100x32xf32> to vector<100x32xbf16>
    %c15_226 = arith.constant 15 : index
    %c0_227 = arith.constant 0 : index
    %c0_228 = arith.constant 0 : index
    %261 = vector.load %arg7[%c15_226, %c0_227, %c0_228] : memref<16x32x32xbf16, #tpu.memory_space<vmem>>, vector<1x32x32xbf16>
    %262 = vector.shape_cast %261 : vector<1x32x32xbf16> to vector<32x32xbf16>
    %cst_229 = arith.constant dense<0.000000e+00> : vector<100x32xf32>
    %263 = tpu.matmul %260, %262, %cst_229 {dimension_numbers = #tpu.dot_dimension_numbers<[1], [0], [0], [1], [0, 0, 1, 1], [], []>} : vector<100x32xbf16>, vector<32x32xbf16>, vector<100x32xf32> -> vector<100x32xf32>
    %264 = arith.addf %258, %263 : vector<100x32xf32>
    %c0_230 = arith.constant 0 : index
    %c0_231 = arith.constant 0 : index
    %265 = vector.load %arg8[%c0_230, %c0_231] : memref<1x32xf32, #tpu.memory_space<vmem>>, vector<1x32xf32>
    %266 = vector.broadcast %265 : vector<1x32xf32> to vector<100x32xf32>
    %267 = arith.addf %264, %266 : vector<100x32xf32>
    %cst_232 = arith.constant 0.000000e+00 : f32
    %268 = vector.broadcast %cst_232 : f32 to vector<100x32xf32>
    %269 = arith.maximumf %267, %268 : vector<100x32xf32>
    %270 = vector.broadcast %0 : vector<100x1xf32> to vector<100x32xf32>
    %271 = arith.mulf %269, %270 : vector<100x32xf32>
    %c3_233 = arith.constant 3 : index
    %c16_234 = arith.constant 16 : index
    %c0_235 = arith.constant 0 : index
    %272 = vector.load %arg16[%c3_233, %c16_234, %c0_235] : memref<4x132x32xf32, #tpu.memory_space<vmem>>, vector<1x100x32xf32>
    %273 = vector.shape_cast %272 : vector<1x100x32xf32> to vector<100x32xf32>
    %274 = vector.shape_cast %271 : vector<100x32xf32> to vector<1x100x32xf32>
    tpu.vector_store %arg16[%c3_233, %c16_234, %c0_235], %274 {strides = array<i32>} : memref<4x132x32xf32, #tpu.memory_space<vmem>>, vector<1x100x32xf32>,
    %cst_236 = arith.constant 0.000000e+00 : f32
    %275 = vector.broadcast %cst_236 : f32 to vector<100x96xf32>
    %c3_237 = arith.constant 3 : index
    %c5_238 = arith.constant 5 : index
    %c0_239 = arith.constant 0 : index
    %276 = vector.load %arg16[%c3_237, %c5_238, %c0_239] : memref<4x132x32xf32, #tpu.memory_space<vmem>>, vector<1x100x32xf32>
    %277 = vector.shape_cast %276 : vector<1x100x32xf32> to vector<100x32xf32>
    %278 = arith.truncf %277 : vector<100x32xf32> to vector<100x32xbf16>
    %c0_240 = arith.constant 0 : index
    %c0_241 = arith.constant 0 : index
    %c0_242 = arith.constant 0 : index
    %279 = vector.load %arg9[%c0_240, %c0_241, %c0_242] : memref<9x32x96xbf16, #tpu.memory_space<vmem>>, vector<1x32x96xbf16>
    %280 = vector.shape_cast %279 : vector<1x32x96xbf16> to vector<32x96xbf16>
    %cst_243 = arith.constant dense<0.000000e+00> : vector<100x96xf32>
    %281 = tpu.matmul %278, %280, %cst_243 {dimension_numbers = #tpu.dot_dimension_numbers<[1], [0], [0], [1], [0, 0, 1, 1], [], []>} : vector<100x32xbf16>, vector<32x96xbf16>, vector<100x96xf32> -> vector<100x96xf32>
    %282 = arith.addf %275, %281 : vector<100x96xf32>
    %c2_244 = arith.constant 2 : index
    %c6_245 = arith.constant 6 : index
    %c0_246 = arith.constant 0 : index
    %283 = vector.load %arg16[%c2_244, %c6_245, %c0_246] : memref<4x132x32xf32, #tpu.memory_space<vmem>>, vector<1x100x32xf32>
    %284 = vector.shape_cast %283 : vector<1x100x32xf32> to vector<100x32xf32>
    %285 = arith.truncf %284 : vector<100x32xf32> to vector<100x32xbf16>
    %c1_247 = arith.constant 1 : index
    %c0_248 = arith.constant 0 : index
    %c0_249 = arith.constant 0 : index
    %286 = vector.load %arg9[%c1_247, %c0_248, %c0_249] : memref<9x32x96xbf16, #tpu.memory_space<vmem>>, vector<1x32x96xbf16>
    %287 = vector.shape_cast %286 : vector<1x32x96xbf16> to vector<32x96xbf16>
    %cst_250 = arith.constant dense<0.000000e+00> : vector<100x96xf32>
    %288 = tpu.matmul %285, %287, %cst_250 {dimension_numbers = #tpu.dot_dimension_numbers<[1], [0], [0], [1], [0, 0, 1, 1], [], []>} : vector<100x32xbf16>, vector<32x96xbf16>, vector<100x96xf32> -> vector<100x96xf32>
    %289 = arith.addf %282, %288 : vector<100x96xf32>
    %c3_251 = arith.constant 3 : index
    %c6_252 = arith.constant 6 : index
    %c0_253 = arith.constant 0 : index
    %290 = vector.load %arg16[%c3_251, %c6_252, %c0_253] : memref<4x132x32xf32, #tpu.memory_space<vmem>>, vector<1x100x32xf32>
    %291 = vector.shape_cast %290 : vector<1x100x32xf32> to vector<100x32xf32>
    %292 = arith.truncf %291 : vector<100x32xf32> to vector<100x32xbf16>
    %c2_254 = arith.constant 2 : index
    %c0_255 = arith.constant 0 : index
    %c0_256 = arith.constant 0 : index
    %293 = vector.load %arg9[%c2_254, %c0_255, %c0_256] : memref<9x32x96xbf16, #tpu.memory_space<vmem>>, vector<1x32x96xbf16>
    %294 = vector.shape_cast %293 : vector<1x32x96xbf16> to vector<32x96xbf16>
    %cst_257 = arith.constant dense<0.000000e+00> : vector<100x96xf32>
    %295 = tpu.matmul %292, %294, %cst_257 {dimension_numbers = #tpu.dot_dimension_numbers<[1], [0], [0], [1], [0, 0, 1, 1], [], []>} : vector<100x32xbf16>, vector<32x96xbf16>, vector<100x96xf32> -> vector<100x96xf32>
    %296 = arith.addf %289, %295 : vector<100x96xf32>
    %c1_258 = arith.constant 1 : index
    %c15_259 = arith.constant 15 : index
    %c0_260 = arith.constant 0 : index
    %297 = vector.load %arg16[%c1_258, %c15_259, %c0_260] : memref<4x132x32xf32, #tpu.memory_space<vmem>>, vector<1x100x32xf32>
    %298 = vector.shape_cast %297 : vector<1x100x32xf32> to vector<100x32xf32>
    %299 = arith.truncf %298 : vector<100x32xf32> to vector<100x32xbf16>
    %c3_261 = arith.constant 3 : index
    %c0_262 = arith.constant 0 : index
    %c0_263 = arith.constant 0 : index
    %300 = vector.load %arg9[%c3_261, %c0_262, %c0_263] : memref<9x32x96xbf16, #tpu.memory_space<vmem>>, vector<1x32x96xbf16>
    %301 = vector.shape_cast %300 : vector<1x32x96xbf16> to vector<32x96xbf16>
    %cst_264 = arith.constant dense<0.000000e+00> : vector<100x96xf32>
    %302 = tpu.matmul %299, %301, %cst_264 {dimension_numbers = #tpu.dot_dimension_numbers<[1], [0], [0], [1], [0, 0, 1, 1], [], []>} : vector<100x32xbf16>, vector<32x96xbf16>, vector<100x96xf32> -> vector<100x96xf32>
    %303 = arith.addf %296, %302 : vector<100x96xf32>
    %c0_265 = arith.constant 0 : index
    %c16_266 = arith.constant 16 : index
    %c0_267 = arith.constant 0 : index
    %304 = vector.load %arg16[%c0_265, %c16_266, %c0_267] : memref<4x132x32xf32, #tpu.memory_space<vmem>>, vector<1x100x32xf32>
    %305 = vector.shape_cast %304 : vector<1x100x32xf32> to vector<100x32xf32>
    %306 = arith.truncf %305 : vector<100x32xf32> to vector<100x32xbf16>
    %c4_268 = arith.constant 4 : index
    %c0_269 = arith.constant 0 : index
    %c0_270 = arith.constant 0 : index
    %307 = vector.load %arg9[%c4_268, %c0_269, %c0_270] : memref<9x32x96xbf16, #tpu.memory_space<vmem>>, vector<1x32x96xbf16>
    %308 = vector.shape_cast %307 : vector<1x32x96xbf16> to vector<32x96xbf16>
    %cst_271 = arith.constant dense<0.000000e+00> : vector<100x96xf32>
    %309 = tpu.matmul %306, %308, %cst_271 {dimension_numbers = #tpu.dot_dimension_numbers<[1], [0], [0], [1], [0, 0, 1, 1], [], []>} : vector<100x32xbf16>, vector<32x96xbf16>, vector<100x96xf32> -> vector<100x96xf32>
    %310 = arith.addf %303, %309 : vector<100x96xf32>
    %c1_272 = arith.constant 1 : index
    %c16_273 = arith.constant 16 : index
    %c0_274 = arith.constant 0 : index
    %311 = vector.load %arg16[%c1_272, %c16_273, %c0_274] : memref<4x132x32xf32, #tpu.memory_space<vmem>>, vector<1x100x32xf32>
    %312 = vector.shape_cast %311 : vector<1x100x32xf32> to vector<100x32xf32>
    %313 = arith.truncf %312 : vector<100x32xf32> to vector<100x32xbf16>
    %c5_275 = arith.constant 5 : index
    %c0_276 = arith.constant 0 : index
    %c0_277 = arith.constant 0 : index
    %314 = vector.load %arg9[%c5_275, %c0_276, %c0_277] : memref<9x32x96xbf16, #tpu.memory_space<vmem>>, vector<1x32x96xbf16>
    %315 = vector.shape_cast %314 : vector<1x32x96xbf16> to vector<32x96xbf16>
    %cst_278 = arith.constant dense<0.000000e+00> : vector<100x96xf32>
    %316 = tpu.matmul %313, %315, %cst_278 {dimension_numbers = #tpu.dot_dimension_numbers<[1], [0], [0], [1], [0, 0, 1, 1], [], []>} : vector<100x32xbf16>, vector<32x96xbf16>, vector<100x96xf32> -> vector<100x96xf32>
    %317 = arith.addf %310, %316 : vector<100x96xf32>
    %c3_279 = arith.constant 3 : index
    %c15_280 = arith.constant 15 : index
    %c0_281 = arith.constant 0 : index
    %318 = vector.load %arg16[%c3_279, %c15_280, %c0_281] : memref<4x132x32xf32, #tpu.memory_space<vmem>>, vector<1x100x32xf32>
    %319 = vector.shape_cast %318 : vector<1x100x32xf32> to vector<100x32xf32>
    %320 = arith.truncf %319 : vector<100x32xf32> to vector<100x32xbf16>
    %c6_282 = arith.constant 6 : index
    %c0_283 = arith.constant 0 : index
    %c0_284 = arith.constant 0 : index
    %321 = vector.load %arg9[%c6_282, %c0_283, %c0_284] : memref<9x32x96xbf16, #tpu.memory_space<vmem>>, vector<1x32x96xbf16>
    %322 = vector.shape_cast %321 : vector<1x32x96xbf16> to vector<32x96xbf16>
    %cst_285 = arith.constant dense<0.000000e+00> : vector<100x96xf32>
    %323 = tpu.matmul %320, %322, %cst_285 {dimension_numbers = #tpu.dot_dimension_numbers<[1], [0], [0], [1], [0, 0, 1, 1], [], []>} : vector<100x32xbf16>, vector<32x96xbf16>, vector<100x96xf32> -> vector<100x96xf32>
    %324 = arith.addf %317, %323 : vector<100x96xf32>
    %c2_286 = arith.constant 2 : index
    %c16_287 = arith.constant 16 : index
    %c0_288 = arith.constant 0 : index
    %325 = vector.load %arg16[%c2_286, %c16_287, %c0_288] : memref<4x132x32xf32, #tpu.memory_space<vmem>>, vector<1x100x32xf32>
    %326 = vector.shape_cast %325 : vector<1x100x32xf32> to vector<100x32xf32>
    %327 = arith.truncf %326 : vector<100x32xf32> to vector<100x32xbf16>
    %c7_289 = arith.constant 7 : index
    %c0_290 = arith.constant 0 : index
    %c0_291 = arith.constant 0 : index
    %328 = vector.load %arg9[%c7_289, %c0_290, %c0_291] : memref<9x32x96xbf16, #tpu.memory_space<vmem>>, vector<1x32x96xbf16>
    %329 = vector.shape_cast %328 : vector<1x32x96xbf16> to vector<32x96xbf16>
    %cst_292 = arith.constant dense<0.000000e+00> : vector<100x96xf32>
    %330 = tpu.matmul %327, %329, %cst_292 {dimension_numbers = #tpu.dot_dimension_numbers<[1], [0], [0], [1], [0, 0, 1, 1], [], []>} : vector<100x32xbf16>, vector<32x96xbf16>, vector<100x96xf32> -> vector<100x96xf32>
    %331 = arith.addf %324, %330 : vector<100x96xf32>
    %c3_293 = arith.constant 3 : index
    %c16_294 = arith.constant 16 : index
    %c0_295 = arith.constant 0 : index
    %332 = vector.load %arg16[%c3_293, %c16_294, %c0_295] : memref<4x132x32xf32, #tpu.memory_space<vmem>>, vector<1x100x32xf32>
    %333 = vector.shape_cast %332 : vector<1x100x32xf32> to vector<100x32xf32>
    %334 = arith.truncf %333 : vector<100x32xf32> to vector<100x32xbf16>
    %c8_296 = arith.constant 8 : index
    %c0_297 = arith.constant 0 : index
    %c0_298 = arith.constant 0 : index
    %335 = vector.load %arg9[%c8_296, %c0_297, %c0_298] : memref<9x32x96xbf16, #tpu.memory_space<vmem>>, vector<1x32x96xbf16>
    %336 = vector.shape_cast %335 : vector<1x32x96xbf16> to vector<32x96xbf16>
    %cst_299 = arith.constant dense<0.000000e+00> : vector<100x96xf32>
    %337 = tpu.matmul %334, %336, %cst_299 {dimension_numbers = #tpu.dot_dimension_numbers<[1], [0], [0], [1], [0, 0, 1, 1], [], []>} : vector<100x32xbf16>, vector<32x96xbf16>, vector<100x96xf32> -> vector<100x96xf32>
    %338 = arith.addf %331, %337 : vector<100x96xf32>
    %c0_300 = arith.constant 0 : index
    %c0_301 = arith.constant 0 : index
    %339 = vector.load %arg10[%c0_300, %c0_301] : memref<1x96xf32, #tpu.memory_space<vmem>>, vector<1x96xf32>
    %340 = vector.broadcast %339 : vector<1x96xf32> to vector<100x96xf32>
    %341 = arith.addf %338, %340 : vector<100x96xf32>
    %cst_302 = arith.constant 0.000000e+00 : f32
    %342 = vector.broadcast %cst_302 : f32 to vector<100x96xf32>
    %343 = arith.maximumf %341, %342 : vector<100x96xf32>
    %344 = arith.truncf %343 : vector<100x96xf32> to vector<100x96xbf16>
    %c0_303 = arith.constant 0 : index
    %c0_304 = arith.constant 0 : index
    %345 = vector.load %arg11[%c0_303, %c0_304] : memref<96x8xbf16, #tpu.memory_space<vmem>>, vector<96x8xbf16>
    %cst_305 = arith.constant dense<0.000000e+00> : vector<100x8xf32>
    %346 = tpu.matmul %344, %345, %cst_305 {dimension_numbers = #tpu.dot_dimension_numbers<[1], [0], [0], [1], [0, 0, 1, 1], [], []>} : vector<100x96xbf16>, vector<96x8xbf16>, vector<100x8xf32> -> vector<100x8xf32>
    %c0_306 = arith.constant 0 : index
    %c0_307 = arith.constant 0 : index
    %347 = vector.load %arg12[%c0_306, %c0_307] : memref<1x8xf32, #tpu.memory_space<vmem>>, vector<1x8xf32>
    %348 = vector.broadcast %347 : vector<1x8xf32> to vector<100x8xf32>
    %349 = arith.addf %346, %348 : vector<100x8xf32>
    %c0_308 = arith.constant 0 : index
    %c0_309 = arith.constant 0 : index
    %c0_310 = arith.constant 0 : index
    %c0_311 = arith.constant 0 : index
    %350 = vector.load %arg13[%c0_308, %c0_309, %c0_310, %c0_311] : memref<1x4x100x8xf32, #tpu.memory_space<vmem>>, vector<1x1x100x8xf32>
    %351 = vector.shape_cast %350 : vector<1x1x100x8xf32> to vector<100x8xf32>
    %352 = vector.shape_cast %349 : vector<100x8xf32> to vector<1x1x100x8xf32>
    tpu.vector_store %arg13[%c0_308, %c0_309, %c0_310, %c0_311], %352 {strides = array<i32>} : memref<1x4x100x8xf32, #tpu.memory_space<vmem>>, vector<1x1x100x8xf32>,
    %cst_312 = arith.constant 0.000000e+00 : f32
    %353 = vector.broadcast %cst_312 : f32 to vector<100x96xf32>
    %c2_313 = arith.constant 2 : index
    %c6_314 = arith.constant 6 : index
    %c0_315 = arith.constant 0 : index
    %354 = vector.load %arg16[%c2_313, %c6_314, %c0_315] : memref<4x132x32xf32, #tpu.memory_space<vmem>>, vector<1x100x32xf32>
    %355 = vector.shape_cast %354 : vector<1x100x32xf32> to vector<100x32xf32>
    %356 = arith.truncf %355 : vector<100x32xf32> to vector<100x32xbf16>
    %c0_316 = arith.constant 0 : index
    %c0_317 = arith.constant 0 : index
    %c0_318 = arith.constant 0 : index
    %357 = vector.load %arg9[%c0_316, %c0_317, %c0_318] : memref<9x32x96xbf16, #tpu.memory_space<vmem>>, vector<1x32x96xbf16>
    %358 = vector.shape_cast %357 : vector<1x32x96xbf16> to vector<32x96xbf16>
    %cst_319 = arith.constant dense<0.000000e+00> : vector<100x96xf32>
    %359 = tpu.matmul %356, %358, %cst_319 {dimension_numbers = #tpu.dot_dimension_numbers<[1], [0], [0], [1], [0, 0, 1, 1], [], []>} : vector<100x32xbf16>, vector<32x96xbf16>, vector<100x96xf32> -> vector<100x96xf32>
    %360 = arith.addf %353, %359 : vector<100x96xf32>
    %c3_320 = arith.constant 3 : index
    %c6_321 = arith.constant 6 : index
    %c0_322 = arith.constant 0 : index
    %361 = vector.load %arg16[%c3_320, %c6_321, %c0_322] : memref<4x132x32xf32, #tpu.memory_space<vmem>>, vector<1x100x32xf32>
    %362 = vector.shape_cast %361 : vector<1x100x32xf32> to vector<100x32xf32>
    %363 = arith.truncf %362 : vector<100x32xf32> to vector<100x32xbf16>
    %c1_323 = arith.constant 1 : index
    %c0_324 = arith.constant 0 : index
    %c0_325 = arith.constant 0 : index
    %364 = vector.load %arg9[%c1_323, %c0_324, %c0_325] : memref<9x32x96xbf16, #tpu.memory_space<vmem>>, vector<1x32x96xbf16>
    %365 = vector.shape_cast %364 : vector<1x32x96xbf16> to vector<32x96xbf16>
    %cst_326 = arith.constant dense<0.000000e+00> : vector<100x96xf32>
    %366 = tpu.matmul %363, %365, %cst_326 {dimension_numbers = #tpu.dot_dimension_numbers<[1], [0], [0], [1], [0, 0, 1, 1], [], []>} : vector<100x32xbf16>, vector<32x96xbf16>, vector<100x96xf32> -> vector<100x96xf32>
    %367 = arith.addf %360, %366 : vector<100x96xf32>
    %c2_327 = arith.constant 2 : index
    %c7_328 = arith.constant 7 : index
    %c0_329 = arith.constant 0 : index
    %368 = vector.load %arg16[%c2_327, %c7_328, %c0_329] : memref<4x132x32xf32, #tpu.memory_space<vmem>>, vector<1x100x32xf32>
    %369 = vector.shape_cast %368 : vector<1x100x32xf32> to vector<100x32xf32>
    %370 = arith.truncf %369 : vector<100x32xf32> to vector<100x32xbf16>
    %c2_330 = arith.constant 2 : index
    %c0_331 = arith.constant 0 : index
    %c0_332 = arith.constant 0 : index
    %371 = vector.load %arg9[%c2_330, %c0_331, %c0_332] : memref<9x32x96xbf16, #tpu.memory_space<vmem>>, vector<1x32x96xbf16>
    %372 = vector.shape_cast %371 : vector<1x32x96xbf16> to vector<32x96xbf16>
    %cst_333 = arith.constant dense<0.000000e+00> : vector<100x96xf32>
    %373 = tpu.matmul %370, %372, %cst_333 {dimension_numbers = #tpu.dot_dimension_numbers<[1], [0], [0], [1], [0, 0, 1, 1], [], []>} : vector<100x32xbf16>, vector<32x96xbf16>, vector<100x96xf32> -> vector<100x96xf32>
    %374 = arith.addf %367, %373 : vector<100x96xf32>
    %c0_334 = arith.constant 0 : index
    %c16_335 = arith.constant 16 : index
    %c0_336 = arith.constant 0 : index
    %375 = vector.load %arg16[%c0_334, %c16_335, %c0_336] : memref<4x132x32xf32, #tpu.memory_space<vmem>>, vector<1x100x32xf32>
    %376 = vector.shape_cast %375 : vector<1x100x32xf32> to vector<100x32xf32>
    %377 = arith.truncf %376 : vector<100x32xf32> to vector<100x32xbf16>
    %c3_337 = arith.constant 3 : index
    %c0_338 = arith.constant 0 : index
    %c0_339 = arith.constant 0 : index
    %378 = vector.load %arg9[%c3_337, %c0_338, %c0_339] : memref<9x32x96xbf16, #tpu.memory_space<vmem>>, vector<1x32x96xbf16>
    %379 = vector.shape_cast %378 : vector<1x32x96xbf16> to vector<32x96xbf16>
    %cst_340 = arith.constant dense<0.000000e+00> : vector<100x96xf32>
    %380 = tpu.matmul %377, %379, %cst_340 {dimension_numbers = #tpu.dot_dimension_numbers<[1], [0], [0], [1], [0, 0, 1, 1], [], []>} : vector<100x32xbf16>, vector<32x96xbf16>, vector<100x96xf32> -> vector<100x96xf32>
    %381 = arith.addf %374, %380 : vector<100x96xf32>
    %c1_341 = arith.constant 1 : index
    %c16_342 = arith.constant 16 : index
    %c0_343 = arith.constant 0 : index
    %382 = vector.load %arg16[%c1_341, %c16_342, %c0_343] : memref<4x132x32xf32, #tpu.memory_space<vmem>>, vector<1x100x32xf32>
    %383 = vector.shape_cast %382 : vector<1x100x32xf32> to vector<100x32xf32>
    %384 = arith.truncf %383 : vector<100x32xf32> to vector<100x32xbf16>
    %c4_344 = arith.constant 4 : index
    %c0_345 = arith.constant 0 : index
    %c0_346 = arith.constant 0 : index
    %385 = vector.load %arg9[%c4_344, %c0_345, %c0_346] : memref<9x32x96xbf16, #tpu.memory_space<vmem>>, vector<1x32x96xbf16>
    %386 = vector.shape_cast %385 : vector<1x32x96xbf16> to vector<32x96xbf16>
    %cst_347 = arith.constant dense<0.000000e+00> : vector<100x96xf32>
    %387 = tpu.matmul %384, %386, %cst_347 {dimension_numbers = #tpu.dot_dimension_numbers<[1], [0], [0], [1], [0, 0, 1, 1], [], []>} : vector<100x32xbf16>, vector<32x96xbf16>, vector<100x96xf32> -> vector<100x96xf32>
    %388 = arith.addf %381, %387 : vector<100x96xf32>
    %c0_348 = arith.constant 0 : index
    %c17_349 = arith.constant 17 : index
    %c0_350 = arith.constant 0 : index
    %389 = vector.load %arg16[%c0_348, %c17_349, %c0_350] : memref<4x132x32xf32, #tpu.memory_space<vmem>>, vector<1x100x32xf32>
    %390 = vector.shape_cast %389 : vector<1x100x32xf32> to vector<100x32xf32>
    %391 = arith.truncf %390 : vector<100x32xf32> to vector<100x32xbf16>
    %c5_351 = arith.constant 5 : index
    %c0_352 = arith.constant 0 : index
    %c0_353 = arith.constant 0 : index
    %392 = vector.load %arg9[%c5_351, %c0_352, %c0_353] : memref<9x32x96xbf16, #tpu.memory_space<vmem>>, vector<1x32x96xbf16>
    %393 = vector.shape_cast %392 : vector<1x32x96xbf16> to vector<32x96xbf16>
    %cst_354 = arith.constant dense<0.000000e+00> : vector<100x96xf32>
    %394 = tpu.matmul %391, %393, %cst_354 {dimension_numbers = #tpu.dot_dimension_numbers<[1], [0], [0], [1], [0, 0, 1, 1], [], []>} : vector<100x32xbf16>, vector<32x96xbf16>, vector<100x96xf32> -> vector<100x96xf32>
    %395 = arith.addf %388, %394 : vector<100x96xf32>
    %c2_355 = arith.constant 2 : index
    %c16_356 = arith.constant 16 : index
    %c0_357 = arith.constant 0 : index
    %396 = vector.load %arg16[%c2_355, %c16_356, %c0_357] : memref<4x132x32xf32, #tpu.memory_space<vmem>>, vector<1x100x32xf32>
    %397 = vector.shape_cast %396 : vector<1x100x32xf32> to vector<100x32xf32>
    %398 = arith.truncf %397 : vector<100x32xf32> to vector<100x32xbf16>
    %c6_358 = arith.constant 6 : index
    %c0_359 = arith.constant 0 : index
    %c0_360 = arith.constant 0 : index
    %399 = vector.load %arg9[%c6_358, %c0_359, %c0_360] : memref<9x32x96xbf16, #tpu.memory_space<vmem>>, vector<1x32x96xbf16>
    %400 = vector.shape_cast %399 : vector<1x32x96xbf16> to vector<32x96xbf16>
    %cst_361 = arith.constant dense<0.000000e+00> : vector<100x96xf32>
    %401 = tpu.matmul %398, %400, %cst_361 {dimension_numbers = #tpu.dot_dimension_numbers<[1], [0], [0], [1], [0, 0, 1, 1], [], []>} : vector<100x32xbf16>, vector<32x96xbf16>, vector<100x96xf32> -> vector<100x96xf32>
    %402 = arith.addf %395, %401 : vector<100x96xf32>
    %c3_362 = arith.constant 3 : index
    %c16_363 = arith.constant 16 : index
    %c0_364 = arith.constant 0 : index
    %403 = vector.load %arg16[%c3_362, %c16_363, %c0_364] : memref<4x132x32xf32, #tpu.memory_space<vmem>>, vector<1x100x32xf32>
    %404 = vector.shape_cast %403 : vector<1x100x32xf32> to vector<100x32xf32>
    %405 = arith.truncf %404 : vector<100x32xf32> to vector<100x32xbf16>
    %c7_365 = arith.constant 7 : index
    %c0_366 = arith.constant 0 : index
    %c0_367 = arith.constant 0 : index
    %406 = vector.load %arg9[%c7_365, %c0_366, %c0_367] : memref<9x32x96xbf16, #tpu.memory_space<vmem>>, vector<1x32x96xbf16>
    %407 = vector.shape_cast %406 : vector<1x32x96xbf16> to vector<32x96xbf16>
    %cst_368 = arith.constant dense<0.000000e+00> : vector<100x96xf32>
    %408 = tpu.matmul %405, %407, %cst_368 {dimension_numbers = #tpu.dot_dimension_numbers<[1], [0], [0], [1], [0, 0, 1, 1], [], []>} : vector<100x32xbf16>, vector<32x96xbf16>, vector<100x96xf32> -> vector<100x96xf32>
    %409 = arith.addf %402, %408 : vector<100x96xf32>
    %c2_369 = arith.constant 2 : index
    %c17_370 = arith.constant 17 : index
    %c0_371 = arith.constant 0 : index
    %410 = vector.load %arg16[%c2_369, %c17_370, %c0_371] : memref<4x132x32xf32, #tpu.memory_space<vmem>>, vector<1x100x32xf32>
    %411 = vector.shape_cast %410 : vector<1x100x32xf32> to vector<100x32xf32>
    %412 = arith.truncf %411 : vector<100x32xf32> to vector<100x32xbf16>
    %c8_372 = arith.constant 8 : index
    %c0_373 = arith.constant 0 : index
    %c0_374 = arith.constant 0 : index
    %413 = vector.load %arg9[%c8_372, %c0_373, %c0_374] : memref<9x32x96xbf16, #tpu.memory_space<vmem>>, vector<1x32x96xbf16>
    %414 = vector.shape_cast %413 : vector<1x32x96xbf16> to vector<32x96xbf16>
    %cst_375 = arith.constant dense<0.000000e+00> : vector<100x96xf32>
    %415 = tpu.matmul %412, %414, %cst_375 {dimension_numbers = #tpu.dot_dimension_numbers<[1], [0], [0], [1], [0, 0, 1, 1], [], []>} : vector<100x32xbf16>, vector<32x96xbf16>, vector<100x96xf32> -> vector<100x96xf32>
    %416 = arith.addf %409, %415 : vector<100x96xf32>
    %c0_376 = arith.constant 0 : index
    %c0_377 = arith.constant 0 : index
    %417 = vector.load %arg10[%c0_376, %c0_377] : memref<1x96xf32, #tpu.memory_space<vmem>>, vector<1x96xf32>
    %418 = vector.broadcast %417 : vector<1x96xf32> to vector<100x96xf32>
    %419 = arith.addf %416, %418 : vector<100x96xf32>
    %cst_378 = arith.constant 0.000000e+00 : f32
    %420 = vector.broadcast %cst_378 : f32 to vector<100x96xf32>
    %421 = arith.maximumf %419, %420 : vector<100x96xf32>
    %422 = arith.truncf %421 : vector<100x96xf32> to vector<100x96xbf16>
    %c0_379 = arith.constant 0 : index
    %c0_380 = arith.constant 0 : index
    %423 = vector.load %arg11[%c0_379, %c0_380] : memref<96x8xbf16, #tpu.memory_space<vmem>>, vector<96x8xbf16>
    %cst_381 = arith.constant dense<0.000000e+00> : vector<100x8xf32>
    %424 = tpu.matmul %422, %423, %cst_381 {dimension_numbers = #tpu.dot_dimension_numbers<[1], [0], [0], [1], [0, 0, 1, 1], [], []>} : vector<100x96xbf16>, vector<96x8xbf16>, vector<100x8xf32> -> vector<100x8xf32>
    %c0_382 = arith.constant 0 : index
    %c0_383 = arith.constant 0 : index
    %425 = vector.load %arg12[%c0_382, %c0_383] : memref<1x8xf32, #tpu.memory_space<vmem>>, vector<1x8xf32>
    %426 = vector.broadcast %425 : vector<1x8xf32> to vector<100x8xf32>
    %427 = arith.addf %424, %426 : vector<100x8xf32>
    %c0_384 = arith.constant 0 : index
    %c1_385 = arith.constant 1 : index
    %c0_386 = arith.constant 0 : index
    %c0_387 = arith.constant 0 : index
    %428 = vector.load %arg13[%c0_384, %c1_385, %c0_386, %c0_387] : memref<1x4x100x8xf32, #tpu.memory_space<vmem>>, vector<1x1x100x8xf32>
    %429 = vector.shape_cast %428 : vector<1x1x100x8xf32> to vector<100x8xf32>
    %430 = vector.shape_cast %427 : vector<100x8xf32> to vector<1x1x100x8xf32>
    tpu.vector_store %arg13[%c0_384, %c1_385, %c0_386, %c0_387], %430 {strides = array<i32>} : memref<1x4x100x8xf32, #tpu.memory_space<vmem>>, vector<1x1x100x8xf32>,
    %cst_388 = arith.constant 0.000000e+00 : f32
    %431 = vector.broadcast %cst_388 : f32 to vector<100x96xf32>
    %c1_389 = arith.constant 1 : index
    %c15_390 = arith.constant 15 : index
    %c0_391 = arith.constant 0 : index
    %432 = vector.load %arg16[%c1_389, %c15_390, %c0_391] : memref<4x132x32xf32, #tpu.memory_space<vmem>>, vector<1x100x32xf32>
    %433 = vector.shape_cast %432 : vector<1x100x32xf32> to vector<100x32xf32>
    %434 = arith.truncf %433 : vector<100x32xf32> to vector<100x32xbf16>
    %c0_392 = arith.constant 0 : index
    %c0_393 = arith.constant 0 : index
    %c0_394 = arith.constant 0 : index
    %435 = vector.load %arg9[%c0_392, %c0_393, %c0_394] : memref<9x32x96xbf16, #tpu.memory_space<vmem>>, vector<1x32x96xbf16>
    %436 = vector.shape_cast %435 : vector<1x32x96xbf16> to vector<32x96xbf16>
    %cst_395 = arith.constant dense<0.000000e+00> : vector<100x96xf32>
    %437 = tpu.matmul %434, %436, %cst_395 {dimension_numbers = #tpu.dot_dimension_numbers<[1], [0], [0], [1], [0, 0, 1, 1], [], []>} : vector<100x32xbf16>, vector<32x96xbf16>, vector<100x96xf32> -> vector<100x96xf32>
    %438 = arith.addf %431, %437 : vector<100x96xf32>
    %c0_396 = arith.constant 0 : index
    %c16_397 = arith.constant 16 : index
    %c0_398 = arith.constant 0 : index
    %439 = vector.load %arg16[%c0_396, %c16_397, %c0_398] : memref<4x132x32xf32, #tpu.memory_space<vmem>>, vector<1x100x32xf32>
    %440 = vector.shape_cast %439 : vector<1x100x32xf32> to vector<100x32xf32>
    %441 = arith.truncf %440 : vector<100x32xf32> to vector<100x32xbf16>
    %c1_399 = arith.constant 1 : index
    %c0_400 = arith.constant 0 : index
    %c0_401 = arith.constant 0 : index
    %442 = vector.load %arg9[%c1_399, %c0_400, %c0_401] : memref<9x32x96xbf16, #tpu.memory_space<vmem>>, vector<1x32x96xbf16>
    %443 = vector.shape_cast %442 : vector<1x32x96xbf16> to vector<32x96xbf16>
    %cst_402 = arith.constant dense<0.000000e+00> : vector<100x96xf32>
    %444 = tpu.matmul %441, %443, %cst_402 {dimension_numbers = #tpu.dot_dimension_numbers<[1], [0], [0], [1], [0, 0, 1, 1], [], []>} : vector<100x32xbf16>, vector<32x96xbf16>, vector<100x96xf32> -> vector<100x96xf32>
    %445 = arith.addf %438, %444 : vector<100x96xf32>
    %c1_403 = arith.constant 1 : index
    %c16_404 = arith.constant 16 : index
    %c0_405 = arith.constant 0 : index
    %446 = vector.load %arg16[%c1_403, %c16_404, %c0_405] : memref<4x132x32xf32, #tpu.memory_space<vmem>>, vector<1x100x32xf32>
    %447 = vector.shape_cast %446 : vector<1x100x32xf32> to vector<100x32xf32>
    %448 = arith.truncf %447 : vector<100x32xf32> to vector<100x32xbf16>
    %c2_406 = arith.constant 2 : index
    %c0_407 = arith.constant 0 : index
    %c0_408 = arith.constant 0 : index
    %449 = vector.load %arg9[%c2_406, %c0_407, %c0_408] : memref<9x32x96xbf16, #tpu.memory_space<vmem>>, vector<1x32x96xbf16>
    %450 = vector.shape_cast %449 : vector<1x32x96xbf16> to vector<32x96xbf16>
    %cst_409 = arith.constant dense<0.000000e+00> : vector<100x96xf32>
    %451 = tpu.matmul %448, %450, %cst_409 {dimension_numbers = #tpu.dot_dimension_numbers<[1], [0], [0], [1], [0, 0, 1, 1], [], []>} : vector<100x32xbf16>, vector<32x96xbf16>, vector<100x96xf32> -> vector<100x96xf32>
    %452 = arith.addf %445, %451 : vector<100x96xf32>
    %c3_410 = arith.constant 3 : index
    %c15_411 = arith.constant 15 : index
    %c0_412 = arith.constant 0 : index
    %453 = vector.load %arg16[%c3_410, %c15_411, %c0_412] : memref<4x132x32xf32, #tpu.memory_space<vmem>>, vector<1x100x32xf32>
    %454 = vector.shape_cast %453 : vector<1x100x32xf32> to vector<100x32xf32>
    %455 = arith.truncf %454 : vector<100x32xf32> to vector<100x32xbf16>
    %c3_413 = arith.constant 3 : index
    %c0_414 = arith.constant 0 : index
    %c0_415 = arith.constant 0 : index
    %456 = vector.load %arg9[%c3_413, %c0_414, %c0_415] : memref<9x32x96xbf16, #tpu.memory_space<vmem>>, vector<1x32x96xbf16>
    %457 = vector.shape_cast %456 : vector<1x32x96xbf16> to vector<32x96xbf16>
    %cst_416 = arith.constant dense<0.000000e+00> : vector<100x96xf32>
    %458 = tpu.matmul %455, %457, %cst_416 {dimension_numbers = #tpu.dot_dimension_numbers<[1], [0], [0], [1], [0, 0, 1, 1], [], []>} : vector<100x32xbf16>, vector<32x96xbf16>, vector<100x96xf32> -> vector<100x96xf32>
    %459 = arith.addf %452, %458 : vector<100x96xf32>
    %c2_417 = arith.constant 2 : index
    %c16_418 = arith.constant 16 : index
    %c0_419 = arith.constant 0 : index
    %460 = vector.load %arg16[%c2_417, %c16_418, %c0_419] : memref<4x132x32xf32, #tpu.memory_space<vmem>>, vector<1x100x32xf32>
    %461 = vector.shape_cast %460 : vector<1x100x32xf32> to vector<100x32xf32>
    %462 = arith.truncf %461 : vector<100x32xf32> to vector<100x32xbf16>
    %c4_420 = arith.constant 4 : index
    %c0_421 = arith.constant 0 : index
    %c0_422 = arith.constant 0 : index
    %463 = vector.load %arg9[%c4_420, %c0_421, %c0_422] : memref<9x32x96xbf16, #tpu.memory_space<vmem>>, vector<1x32x96xbf16>
    %464 = vector.shape_cast %463 : vector<1x32x96xbf16> to vector<32x96xbf16>
    %cst_423 = arith.constant dense<0.000000e+00> : vector<100x96xf32>
    %465 = tpu.matmul %462, %464, %cst_423 {dimension_numbers = #tpu.dot_dimension_numbers<[1], [0], [0], [1], [0, 0, 1, 1], [], []>} : vector<100x32xbf16>, vector<32x96xbf16>, vector<100x96xf32> -> vector<100x96xf32>
    %466 = arith.addf %459, %465 : vector<100x96xf32>
    %c3_424 = arith.constant 3 : index
    %c16_425 = arith.constant 16 : index
    %c0_426 = arith.constant 0 : index
    %467 = vector.load %arg16[%c3_424, %c16_425, %c0_426] : memref<4x132x32xf32, #tpu.memory_space<vmem>>, vector<1x100x32xf32>
    %468 = vector.shape_cast %467 : vector<1x100x32xf32> to vector<100x32xf32>
    %469 = arith.truncf %468 : vector<100x32xf32> to vector<100x32xbf16>
    %c5_427 = arith.constant 5 : index
    %c0_428 = arith.constant 0 : index
    %c0_429 = arith.constant 0 : index
    %470 = vector.load %arg9[%c5_427, %c0_428, %c0_429] : memref<9x32x96xbf16, #tpu.memory_space<vmem>>, vector<1x32x96xbf16>
    %471 = vector.shape_cast %470 : vector<1x32x96xbf16> to vector<32x96xbf16>
    %cst_430 = arith.constant dense<0.000000e+00> : vector<100x96xf32>
    %472 = tpu.matmul %469, %471, %cst_430 {dimension_numbers = #tpu.dot_dimension_numbers<[1], [0], [0], [1], [0, 0, 1, 1], [], []>} : vector<100x32xbf16>, vector<32x96xbf16>, vector<100x96xf32> -> vector<100x96xf32>
    %473 = arith.addf %466, %472 : vector<100x96xf32>
    %c1_431 = arith.constant 1 : index
    %c25_432 = arith.constant 25 : index
    %c0_433 = arith.constant 0 : index
    %474 = vector.load %arg16[%c1_431, %c25_432, %c0_433] : memref<4x132x32xf32, #tpu.memory_space<vmem>>, vector<1x100x32xf32>
    %475 = vector.shape_cast %474 : vector<1x100x32xf32> to vector<100x32xf32>
    %476 = arith.truncf %475 : vector<100x32xf32> to vector<100x32xbf16>
    %c6_434 = arith.constant 6 : index
    %c0_435 = arith.constant 0 : index
    %c0_436 = arith.constant 0 : index
    %477 = vector.load %arg9[%c6_434, %c0_435, %c0_436] : memref<9x32x96xbf16, #tpu.memory_space<vmem>>, vector<1x32x96xbf16>
    %478 = vector.shape_cast %477 : vector<1x32x96xbf16> to vector<32x96xbf16>
    %cst_437 = arith.constant dense<0.000000e+00> : vector<100x96xf32>
    %479 = tpu.matmul %476, %478, %cst_437 {dimension_numbers = #tpu.dot_dimension_numbers<[1], [0], [0], [1], [0, 0, 1, 1], [], []>} : vector<100x32xbf16>, vector<32x96xbf16>, vector<100x96xf32> -> vector<100x96xf32>
    %480 = arith.addf %473, %479 : vector<100x96xf32>
    %c0_438 = arith.constant 0 : index
    %c26_439 = arith.constant 26 : index
    %c0_440 = arith.constant 0 : index
    %481 = vector.load %arg16[%c0_438, %c26_439, %c0_440] : memref<4x132x32xf32, #tpu.memory_space<vmem>>, vector<1x100x32xf32>
    %482 = vector.shape_cast %481 : vector<1x100x32xf32> to vector<100x32xf32>
    %483 = arith.truncf %482 : vector<100x32xf32> to vector<100x32xbf16>
    %c7_441 = arith.constant 7 : index
    %c0_442 = arith.constant 0 : index
    %c0_443 = arith.constant 0 : index
    %484 = vector.load %arg9[%c7_441, %c0_442, %c0_443] : memref<9x32x96xbf16, #tpu.memory_space<vmem>>, vector<1x32x96xbf16>
    %485 = vector.shape_cast %484 : vector<1x32x96xbf16> to vector<32x96xbf16>
    %cst_444 = arith.constant dense<0.000000e+00> : vector<100x96xf32>
    %486 = tpu.matmul %483, %485, %cst_444 {dimension_numbers = #tpu.dot_dimension_numbers<[1], [0], [0], [1], [0, 0, 1, 1], [], []>} : vector<100x32xbf16>, vector<32x96xbf16>, vector<100x96xf32> -> vector<100x96xf32>
    %487 = arith.addf %480, %486 : vector<100x96xf32>
    %c1_445 = arith.constant 1 : index
    %c26_446 = arith.constant 26 : index
    %c0_447 = arith.constant 0 : index
    %488 = vector.load %arg16[%c1_445, %c26_446, %c0_447] : memref<4x132x32xf32, #tpu.memory_space<vmem>>, vector<1x100x32xf32>
    %489 = vector.shape_cast %488 : vector<1x100x32xf32> to vector<100x32xf32>
    %490 = arith.truncf %489 : vector<100x32xf32> to vector<100x32xbf16>
    %c8_448 = arith.constant 8 : index
    %c0_449 = arith.constant 0 : index
    %c0_450 = arith.constant 0 : index
    %491 = vector.load %arg9[%c8_448, %c0_449, %c0_450] : memref<9x32x96xbf16, #tpu.memory_space<vmem>>, vector<1x32x96xbf16>
    %492 = vector.shape_cast %491 : vector<1x32x96xbf16> to vector<32x96xbf16>
    %cst_451 = arith.constant dense<0.000000e+00> : vector<100x96xf32>
    %493 = tpu.matmul %490, %492, %cst_451 {dimension_numbers = #tpu.dot_dimension_numbers<[1], [0], [0], [1], [0, 0, 1, 1], [], []>} : vector<100x32xbf16>, vector<32x96xbf16>, vector<100x96xf32> -> vector<100x96xf32>
    %494 = arith.addf %487, %493 : vector<100x96xf32>
    %c0_452 = arith.constant 0 : index
    %c0_453 = arith.constant 0 : index
    %495 = vector.load %arg10[%c0_452, %c0_453] : memref<1x96xf32, #tpu.memory_space<vmem>>, vector<1x96xf32>
    %496 = vector.broadcast %495 : vector<1x96xf32> to vector<100x96xf32>
    %497 = arith.addf %494, %496 : vector<100x96xf32>
    %cst_454 = arith.constant 0.000000e+00 : f32
    %498 = vector.broadcast %cst_454 : f32 to vector<100x96xf32>
    %499 = arith.maximumf %497, %498 : vector<100x96xf32>
    %500 = arith.truncf %499 : vector<100x96xf32> to vector<100x96xbf16>
    %c0_455 = arith.constant 0 : index
    %c0_456 = arith.constant 0 : index
    %501 = vector.load %arg11[%c0_455, %c0_456] : memref<96x8xbf16, #tpu.memory_space<vmem>>, vector<96x8xbf16>
    %cst_457 = arith.constant dense<0.000000e+00> : vector<100x8xf32>
    %502 = tpu.matmul %500, %501, %cst_457 {dimension_numbers = #tpu.dot_dimension_numbers<[1], [0], [0], [1], [0, 0, 1, 1], [], []>} : vector<100x96xbf16>, vector<96x8xbf16>, vector<100x8xf32> -> vector<100x8xf32>
    %c0_458 = arith.constant 0 : index
    %c0_459 = arith.constant 0 : index
    %503 = vector.load %arg12[%c0_458, %c0_459] : memref<1x8xf32, #tpu.memory_space<vmem>>, vector<1x8xf32>
    %504 = vector.broadcast %503 : vector<1x8xf32> to vector<100x8xf32>
    %505 = arith.addf %502, %504 : vector<100x8xf32>
    %c0_460 = arith.constant 0 : index
    %c2_461 = arith.constant 2 : index
    %c0_462 = arith.constant 0 : index
    %c0_463 = arith.constant 0 : index
    %506 = vector.load %arg13[%c0_460, %c2_461, %c0_462, %c0_463] : memref<1x4x100x8xf32, #tpu.memory_space<vmem>>, vector<1x1x100x8xf32>
    %507 = vector.shape_cast %506 : vector<1x1x100x8xf32> to vector<100x8xf32>
    %508 = vector.shape_cast %505 : vector<100x8xf32> to vector<1x1x100x8xf32>
    tpu.vector_store %arg13[%c0_460, %c2_461, %c0_462, %c0_463], %508 {strides = array<i32>} : memref<1x4x100x8xf32, #tpu.memory_space<vmem>>, vector<1x1x100x8xf32>,
    %cst_464 = arith.constant 0.000000e+00 : f32
    %509 = vector.broadcast %cst_464 : f32 to vector<100x96xf32>
    %c0_465 = arith.constant 0 : index
    %c16_466 = arith.constant 16 : index
    %c0_467 = arith.constant 0 : index
    %510 = vector.load %arg16[%c0_465, %c16_466, %c0_467] : memref<4x132x32xf32, #tpu.memory_space<vmem>>, vector<1x100x32xf32>
    %511 = vector.shape_cast %510 : vector<1x100x32xf32> to vector<100x32xf32>
    %512 = arith.truncf %511 : vector<100x32xf32> to vector<100x32xbf16>
    %c0_468 = arith.constant 0 : index
    %c0_469 = arith.constant 0 : index
    %c0_470 = arith.constant 0 : index
    %513 = vector.load %arg9[%c0_468, %c0_469, %c0_470] : memref<9x32x96xbf16, #tpu.memory_space<vmem>>, vector<1x32x96xbf16>
    %514 = vector.shape_cast %513 : vector<1x32x96xbf16> to vector<32x96xbf16>
    %cst_471 = arith.constant dense<0.000000e+00> : vector<100x96xf32>
    %515 = tpu.matmul %512, %514, %cst_471 {dimension_numbers = #tpu.dot_dimension_numbers<[1], [0], [0], [1], [0, 0, 1, 1], [], []>} : vector<100x32xbf16>, vector<32x96xbf16>, vector<100x96xf32> -> vector<100x96xf32>
    %516 = arith.addf %509, %515 : vector<100x96xf32>
    %c1_472 = arith.constant 1 : index
    %c16_473 = arith.constant 16 : index
    %c0_474 = arith.constant 0 : index
    %517 = vector.load %arg16[%c1_472, %c16_473, %c0_474] : memref<4x132x32xf32, #tpu.memory_space<vmem>>, vector<1x100x32xf32>
    %518 = vector.shape_cast %517 : vector<1x100x32xf32> to vector<100x32xf32>
    %519 = arith.truncf %518 : vector<100x32xf32> to vector<100x32xbf16>
    %c1_475 = arith.constant 1 : index
    %c0_476 = arith.constant 0 : index
    %c0_477 = arith.constant 0 : index
    %520 = vector.load %arg9[%c1_475, %c0_476, %c0_477] : memref<9x32x96xbf16, #tpu.memory_space<vmem>>, vector<1x32x96xbf16>
    %521 = vector.shape_cast %520 : vector<1x32x96xbf16> to vector<32x96xbf16>
    %cst_478 = arith.constant dense<0.000000e+00> : vector<100x96xf32>
    %522 = tpu.matmul %519, %521, %cst_478 {dimension_numbers = #tpu.dot_dimension_numbers<[1], [0], [0], [1], [0, 0, 1, 1], [], []>} : vector<100x32xbf16>, vector<32x96xbf16>, vector<100x96xf32> -> vector<100x96xf32>
    %523 = arith.addf %516, %522 : vector<100x96xf32>
    %c0_479 = arith.constant 0 : index
    %c17_480 = arith.constant 17 : index
    %c0_481 = arith.constant 0 : index
    %524 = vector.load %arg16[%c0_479, %c17_480, %c0_481] : memref<4x132x32xf32, #tpu.memory_space<vmem>>, vector<1x100x32xf32>
    %525 = vector.shape_cast %524 : vector<1x100x32xf32> to vector<100x32xf32>
    %526 = arith.truncf %525 : vector<100x32xf32> to vector<100x32xbf16>
    %c2_482 = arith.constant 2 : index
    %c0_483 = arith.constant 0 : index
    %c0_484 = arith.constant 0 : index
    %527 = vector.load %arg9[%c2_482, %c0_483, %c0_484] : memref<9x32x96xbf16, #tpu.memory_space<vmem>>, vector<1x32x96xbf16>
    %528 = vector.shape_cast %527 : vector<1x32x96xbf16> to vector<32x96xbf16>
    %cst_485 = arith.constant dense<0.000000e+00> : vector<100x96xf32>
    %529 = tpu.matmul %526, %528, %cst_485 {dimension_numbers = #tpu.dot_dimension_numbers<[1], [0], [0], [1], [0, 0, 1, 1], [], []>} : vector<100x32xbf16>, vector<32x96xbf16>, vector<100x96xf32> -> vector<100x96xf32>
    %530 = arith.addf %523, %529 : vector<100x96xf32>
    %c2_486 = arith.constant 2 : index
    %c16_487 = arith.constant 16 : index
    %c0_488 = arith.constant 0 : index
    %531 = vector.load %arg16[%c2_486, %c16_487, %c0_488] : memref<4x132x32xf32, #tpu.memory_space<vmem>>, vector<1x100x32xf32>
    %532 = vector.shape_cast %531 : vector<1x100x32xf32> to vector<100x32xf32>
    %533 = arith.truncf %532 : vector<100x32xf32> to vector<100x32xbf16>
    %c3_489 = arith.constant 3 : index
    %c0_490 = arith.constant 0 : index
    %c0_491 = arith.constant 0 : index
    %534 = vector.load %arg9[%c3_489, %c0_490, %c0_491] : memref<9x32x96xbf16, #tpu.memory_space<vmem>>, vector<1x32x96xbf16>
    %535 = vector.shape_cast %534 : vector<1x32x96xbf16> to vector<32x96xbf16>
    %cst_492 = arith.constant dense<0.000000e+00> : vector<100x96xf32>
    %536 = tpu.matmul %533, %535, %cst_492 {dimension_numbers = #tpu.dot_dimension_numbers<[1], [0], [0], [1], [0, 0, 1, 1], [], []>} : vector<100x32xbf16>, vector<32x96xbf16>, vector<100x96xf32> -> vector<100x96xf32>
    %537 = arith.addf %530, %536 : vector<100x96xf32>
    %c3_493 = arith.constant 3 : index
    %c16_494 = arith.constant 16 : index
    %c0_495 = arith.constant 0 : index
    %538 = vector.load %arg16[%c3_493, %c16_494, %c0_495] : memref<4x132x32xf32, #tpu.memory_space<vmem>>, vector<1x100x32xf32>
    %539 = vector.shape_cast %538 : vector<1x100x32xf32> to vector<100x32xf32>
    %540 = arith.truncf %539 : vector<100x32xf32> to vector<100x32xbf16>
    %c4_496 = arith.constant 4 : index
    %c0_497 = arith.constant 0 : index
    %c0_498 = arith.constant 0 : index
    %541 = vector.load %arg9[%c4_496, %c0_497, %c0_498] : memref<9x32x96xbf16, #tpu.memory_space<vmem>>, vector<1x32x96xbf16>
    %542 = vector.shape_cast %541 : vector<1x32x96xbf16> to vector<32x96xbf16>
    %cst_499 = arith.constant dense<0.000000e+00> : vector<100x96xf32>
    %543 = tpu.matmul %540, %542, %cst_499 {dimension_numbers = #tpu.dot_dimension_numbers<[1], [0], [0], [1], [0, 0, 1, 1], [], []>} : vector<100x32xbf16>, vector<32x96xbf16>, vector<100x96xf32> -> vector<100x96xf32>
    %544 = arith.addf %537, %543 : vector<100x96xf32>
    %c2_500 = arith.constant 2 : index
    %c17_501 = arith.constant 17 : index
    %c0_502 = arith.constant 0 : index
    %545 = vector.load %arg16[%c2_500, %c17_501, %c0_502] : memref<4x132x32xf32, #tpu.memory_space<vmem>>, vector<1x100x32xf32>
    %546 = vector.shape_cast %545 : vector<1x100x32xf32> to vector<100x32xf32>
    %547 = arith.truncf %546 : vector<100x32xf32> to vector<100x32xbf16>
    %c5_503 = arith.constant 5 : index
    %c0_504 = arith.constant 0 : index
    %c0_505 = arith.constant 0 : index
    %548 = vector.load %arg9[%c5_503, %c0_504, %c0_505] : memref<9x32x96xbf16, #tpu.memory_space<vmem>>, vector<1x32x96xbf16>
    %549 = vector.shape_cast %548 : vector<1x32x96xbf16> to vector<32x96xbf16>
    %cst_506 = arith.constant dense<0.000000e+00> : vector<100x96xf32>
    %550 = tpu.matmul %547, %549, %cst_506 {dimension_numbers = #tpu.dot_dimension_numbers<[1], [0], [0], [1], [0, 0, 1, 1], [], []>} : vector<100x32xbf16>, vector<32x96xbf16>, vector<100x96xf32> -> vector<100x96xf32>
    %551 = arith.addf %544, %550 : vector<100x96xf32>
    %c0_507 = arith.constant 0 : index
    %c26_508 = arith.constant 26 : index
    %c0_509 = arith.constant 0 : index
    %552 = vector.load %arg16[%c0_507, %c26_508, %c0_509] : memref<4x132x32xf32, #tpu.memory_space<vmem>>, vector<1x100x32xf32>
    %553 = vector.shape_cast %552 : vector<1x100x32xf32> to vector<100x32xf32>
    %554 = arith.truncf %553 : vector<100x32xf32> to vector<100x32xbf16>
    %c6_510 = arith.constant 6 : index
    %c0_511 = arith.constant 0 : index
    %c0_512 = arith.constant 0 : index
    %555 = vector.load %arg9[%c6_510, %c0_511, %c0_512] : memref<9x32x96xbf16, #tpu.memory_space<vmem>>, vector<1x32x96xbf16>
    %556 = vector.shape_cast %555 : vector<1x32x96xbf16> to vector<32x96xbf16>
    %cst_513 = arith.constant dense<0.000000e+00> : vector<100x96xf32>
    %557 = tpu.matmul %554, %556, %cst_513 {dimension_numbers = #tpu.dot_dimension_numbers<[1], [0], [0], [1], [0, 0, 1, 1], [], []>} : vector<100x32xbf16>, vector<32x96xbf16>, vector<100x96xf32> -> vector<100x96xf32>
    %558 = arith.addf %551, %557 : vector<100x96xf32>
    %c1_514 = arith.constant 1 : index
    %c26_515 = arith.constant 26 : index
    %c0_516 = arith.constant 0 : index
    %559 = vector.load %arg16[%c1_514, %c26_515, %c0_516] : memref<4x132x32xf32, #tpu.memory_space<vmem>>, vector<1x100x32xf32>
    %560 = vector.shape_cast %559 : vector<1x100x32xf32> to vector<100x32xf32>
    %561 = arith.truncf %560 : vector<100x32xf32> to vector<100x32xbf16>
    %c7_517 = arith.constant 7 : index
    %c0_518 = arith.constant 0 : index
    %c0_519 = arith.constant 0 : index
    %562 = vector.load %arg9[%c7_517, %c0_518, %c0_519] : memref<9x32x96xbf16, #tpu.memory_space<vmem>>, vector<1x32x96xbf16>
    %563 = vector.shape_cast %562 : vector<1x32x96xbf16> to vector<32x96xbf16>
    %cst_520 = arith.constant dense<0.000000e+00> : vector<100x96xf32>
    %564 = tpu.matmul %561, %563, %cst_520 {dimension_numbers = #tpu.dot_dimension_numbers<[1], [0], [0], [1], [0, 0, 1, 1], [], []>} : vector<100x32xbf16>, vector<32x96xbf16>, vector<100x96xf32> -> vector<100x96xf32>
    %565 = arith.addf %558, %564 : vector<100x96xf32>
    %c0_521 = arith.constant 0 : index
    %c27_522 = arith.constant 27 : index
    %c0_523 = arith.constant 0 : index
    %566 = vector.load %arg16[%c0_521, %c27_522, %c0_523] : memref<4x132x32xf32, #tpu.memory_space<vmem>>, vector<1x100x32xf32>
    %567 = vector.shape_cast %566 : vector<1x100x32xf32> to vector<100x32xf32>
    %568 = arith.truncf %567 : vector<100x32xf32> to vector<100x32xbf16>
    %c8_524 = arith.constant 8 : index
    %c0_525 = arith.constant 0 : index
    %c0_526 = arith.constant 0 : index
    %569 = vector.load %arg9[%c8_524, %c0_525, %c0_526] : memref<9x32x96xbf16, #tpu.memory_space<vmem>>, vector<1x32x96xbf16>
    %570 = vector.shape_cast %569 : vector<1x32x96xbf16> to vector<32x96xbf16>
    %cst_527 = arith.constant dense<0.000000e+00> : vector<100x96xf32>
    %571 = tpu.matmul %568, %570, %cst_527 {dimension_numbers = #tpu.dot_dimension_numbers<[1], [0], [0], [1], [0, 0, 1, 1], [], []>} : vector<100x32xbf16>, vector<32x96xbf16>, vector<100x96xf32> -> vector<100x96xf32>
    %572 = arith.addf %565, %571 : vector<100x96xf32>
    %c0_528 = arith.constant 0 : index
    %c0_529 = arith.constant 0 : index
    %573 = vector.load %arg10[%c0_528, %c0_529] : memref<1x96xf32, #tpu.memory_space<vmem>>, vector<1x96xf32>
    %574 = vector.broadcast %573 : vector<1x96xf32> to vector<100x96xf32>
    %575 = arith.addf %572, %574 : vector<100x96xf32>
    %cst_530 = arith.constant 0.000000e+00 : f32
    %576 = vector.broadcast %cst_530 : f32 to vector<100x96xf32>
    %577 = arith.maximumf %575, %576 : vector<100x96xf32>
    %578 = arith.truncf %577 : vector<100x96xf32> to vector<100x96xbf16>
    %c0_531 = arith.constant 0 : index
    %c0_532 = arith.constant 0 : index
    %579 = vector.load %arg11[%c0_531, %c0_532] : memref<96x8xbf16, #tpu.memory_space<vmem>>, vector<96x8xbf16>
    %cst_533 = arith.constant dense<0.000000e+00> : vector<100x8xf32>
    %580 = tpu.matmul %578, %579, %cst_533 {dimension_numbers = #tpu.dot_dimension_numbers<[1], [0], [0], [1], [0, 0, 1, 1], [], []>} : vector<100x96xbf16>, vector<96x8xbf16>, vector<100x8xf32> -> vector<100x8xf32>
    %c0_534 = arith.constant 0 : index
    %c0_535 = arith.constant 0 : index
    %581 = vector.load %arg12[%c0_534, %c0_535] : memref<1x8xf32, #tpu.memory_space<vmem>>, vector<1x8xf32>
    %582 = vector.broadcast %581 : vector<1x8xf32> to vector<100x8xf32>
    %583 = arith.addf %580, %582 : vector<100x8xf32>
    %c0_536 = arith.constant 0 : index
    %c3_537 = arith.constant 3 : index
    %c0_538 = arith.constant 0 : index
    %c0_539 = arith.constant 0 : index
    %584 = vector.load %arg13[%c0_536, %c3_537, %c0_538, %c0_539] : memref<1x4x100x8xf32, #tpu.memory_space<vmem>>, vector<1x1x100x8xf32>
    %585 = vector.shape_cast %584 : vector<1x1x100x8xf32> to vector<100x8xf32>
    %586 = vector.shape_cast %583 : vector<100x8xf32> to vector<1x1x100x8xf32>
    tpu.vector_store %arg13[%c0_536, %c3_537, %c0_538, %c0_539], %586 {strides = array<i32>} : memref<1x4x100x8xf32, #tpu.memory_space<vmem>>, vector<1x1x100x8xf32>,
    return
  }
  func.func @transform_0(%arg0: i32) -> (i32, i32, i32, i32) {
    %c0_i32 = arith.constant 0 : i32
    %c0_i32_0 = arith.constant 0 : i32
    %c0_i32_1 = arith.constant 0 : i32
    %c0_i32_2 = arith.constant 0 : i32
    return %arg0, %c0_i32, %c0_i32_0, %c0_i32_1 : i32, i32, i32, i32
  }
  func.func @transform_1(%arg0: i32) -> (i32, i32) {
    %c0_i32 = arith.constant 0 : i32
    %c0_i32_0 = arith.constant 0 : i32
    %c0_i32_1 = arith.constant 0 : i32
    return %c0_i32, %c0_i32_0 : i32, i32
  }
  func.func @transform_2(%arg0: i32) -> (i32, i32) {
    %c0_i32 = arith.constant 0 : i32
    %c0_i32_0 = arith.constant 0 : i32
    %c0_i32_1 = arith.constant 0 : i32
    return %c0_i32, %c0_i32_0 : i32, i32
  }
  func.func @transform_3(%arg0: i32) -> (i32, i32) {
    %c0_i32 = arith.constant 0 : i32
    %c0_i32_0 = arith.constant 0 : i32
    %c0_i32_1 = arith.constant 0 : i32
    return %c0_i32, %c0_i32_0 : i32, i32
  }
  func.func @transform_4(%arg0: i32) -> (i32, i32, i32) {
    %c0_i32 = arith.constant 0 : i32
    %c0_i32_0 = arith.constant 0 : i32
    %c0_i32_1 = arith.constant 0 : i32
    %c0_i32_2 = arith.constant 0 : i32
    return %c0_i32, %c0_i32_0, %c0_i32_1 : i32, i32, i32
  }
  func.func @transform_5(%arg0: i32) -> (i32, i32) {
    %c0_i32 = arith.constant 0 : i32
    %c0_i32_0 = arith.constant 0 : i32
    %c0_i32_1 = arith.constant 0 : i32
    return %c0_i32, %c0_i32_0 : i32, i32
  }
  func.func @transform_6(%arg0: i32) -> (i32, i32, i32) {
    %c0_i32 = arith.constant 0 : i32
    %c0_i32_0 = arith.constant 0 : i32
    %c0_i32_1 = arith.constant 0 : i32
    %c0_i32_2 = arith.constant 0 : i32
    return %c0_i32, %c0_i32_0, %c0_i32_1 : i32, i32, i32
  }
  func.func @transform_7(%arg0: i32) -> (i32, i32) {
    %c0_i32 = arith.constant 0 : i32
    %c0_i32_0 = arith.constant 0 : i32
    %c0_i32_1 = arith.constant 0 : i32
    return %c0_i32, %c0_i32_0 : i32, i32
  }
  func.func @transform_8(%arg0: i32) -> (i32, i32, i32) {
    %c0_i32 = arith.constant 0 : i32
    %c0_i32_0 = arith.constant 0 : i32
    %c0_i32_1 = arith.constant 0 : i32
    %c0_i32_2 = arith.constant 0 : i32
    return %c0_i32, %c0_i32_0, %c0_i32_1 : i32, i32, i32
  }
  func.func @transform_9(%arg0: i32) -> (i32, i32) {
    %c0_i32 = arith.constant 0 : i32
    %c0_i32_0 = arith.constant 0 : i32
    %c0_i32_1 = arith.constant 0 : i32
    return %c0_i32, %c0_i32_0 : i32, i32
  }
  func.func @transform_10(%arg0: i32) -> (i32, i32) {
    %c0_i32 = arith.constant 0 : i32
    %c0_i32_0 = arith.constant 0 : i32
    %c0_i32_1 = arith.constant 0 : i32
    return %c0_i32, %c0_i32_0 : i32, i32
  }
  func.func @transform_11(%arg0: i32) -> (i32, i32) {
    %c0_i32 = arith.constant 0 : i32
    %c0_i32_0 = arith.constant 0 : i32
    %c0_i32_1 = arith.constant 0 : i32
    return %c0_i32, %c0_i32_0 : i32, i32
  }
  func.func @transform_12(%arg0: i32) -> (i32, i32, i32, i32) {
    %c0_i32 = arith.constant 0 : i32
    %c0_i32_0 = arith.constant 0 : i32
    %c0_i32_1 = arith.constant 0 : i32
    %c0_i32_2 = arith.constant 0 : i32
    return %arg0, %c0_i32, %c0_i32_0, %c0_i32_1 : i32, i32, i32, i32
  }
}

</mosaic_0001>

<llo_original>
// kernel: _lambda_.1
$region0: #{_lambda_.1}
  #allocation0 [shape = 'u32[]', space=smem, size = 0x4, offset = 0x4, fixed_abs, tag = 'smem constant byte address 0x4 - core index']
  #allocation1 [shape = 'u32[72,128]{1,0:T(1,128)}', space=vmem, size = 0x9000, scoped, tag = 'internal scratch']
  #allocation2 [shape = 'f32[4,132,16]{2,1,0:T(8,128)}', space=vmem, size = 0x44000, scoped, tag = 'scratch operand']
  #allocation3 [shape = 'f32[132,32]{1,0:T(8,128)}', space=vmem, size = 0x11000, scoped, tag = 'scratch operand']
  #allocation4 [shape = 'f32[4,132,32]{2,1,0:T(8,128)}', space=vmem, size = 0x44000, scoped, tag = 'scratch operand']
  %s0 = inlined_call_operand.vmem [shape: bf16[2,4,100,27], index: 0, kind: input, shape index: {}]
  %s1 = inlined_call_operand.vmem [shape: f32[100,1], index: 1, kind: input, shape index: {}]
  %s2 = inlined_call_operand.vmem [shape: bf16[27,16], index: 2, kind: input, shape index: {}]
  %s3 = inlined_call_operand.vmem [shape: f32[1,16], index: 3, kind: input, shape index: {}]
  %s4 = inlined_call_operand.vmem [shape: bf16[9,16,32], index: 4, kind: input, shape index: {}]
  %s5 = inlined_call_operand.vmem [shape: f32[1,32], index: 5, kind: input, shape index: {}, may-alias: {5,7}]
  %s6 = inlined_call_operand.vmem [shape: bf16[16,32,32], index: 6, kind: input, shape index: {}]
  %s7 = inlined_call_operand.vmem [shape: f32[1,32], index: 7, kind: input, shape index: {}, may-alias: {5,7}]
  %s8 = inlined_call_operand.vmem [shape: bf16[9,32,96], index: 8, kind: input, shape index: {}]
  %s9 = inlined_call_operand.vmem [shape: f32[1,96], index: 9, kind: input, shape index: {}]
  %s10 = inlined_call_operand.vmem [shape: bf16[96,8], index: 10, kind: input, shape index: {}]
  %s11 = inlined_call_operand.vmem [shape: f32[1,8], index: 11, kind: input, shape index: {}]
  %s12 = inlined_call_operand.vmem [shape: f32[2,4,100,8], index: 12, kind: output, shape index: {}]
  %s13 = sld [smem:[#allocation0]]
  $region81: #{_lambda_.1} parent=0
    _
  %s15 = ssub.s32 1, %s13
  %s16 = scalar_select 0, %s15, %s13
  loop: start=0, step=1, limit=4
  $region2: #{_lambda_.1} parent=0 // loop_pre_header
    _
  $region3: #{_lambda_.1} parent=0 // loop_header
    %s18 = sphi 0, %s22
    %p19 = scmp.ge.s32.totalorder %s18, 4
    %s28 = sphi 0, %s30
    %s31 = sphi 0, %s28
    %s32 = sphi 0, %s31
    %s48 = sphi 0, %s32
    %s52 = sphi 0, %s52
    %s54 = sphi 0, %s52
    %s55 = sphi 0, %s54
    %s69 = sphi 0, %s55
    %s73 = sphi 0, %s73
    %s75 = sphi 0, %s73
    %s76 = sphi 0, %s75
    %s90 = sphi 0, %s76
    %s94 = sphi 0, %s94
    %s96 = sphi 0, %s94
    %s97 = sphi 0, %s96
    %s111 = sphi 0, %s97
    %s115 = sphi 0, %s115
    %s117 = sphi 0, %s115
    %s118 = sphi 0, %s117
    %s132 = sphi 0, %s118
    %s136 = sphi 0, %s136
    %s138 = sphi 0, %s136
    %s139 = sphi 0, %s138
    %s153 = sphi 0, %s139
    %s157 = sphi 0, %s157
    %s159 = sphi 0, %s157
    %s160 = sphi 0, %s159
    %s174 = sphi 0, %s160
    %s178 = sphi 0, %s178
    %s180 = sphi 0, %s178
    %s181 = sphi 0, %s180
    %s195 = sphi 0, %s181
    %s199 = sphi 0, %s199
    %s201 = sphi 0, %s199
    %s202 = sphi 0, %s201
    %s216 = sphi 0, %s202
    %s220 = sphi 0, %s220
    %s222 = sphi 0, %s220
    %s223 = sphi 0, %s222
    %s237 = sphi 0, %s223
    %s241 = sphi 0, %s241
    %s243 = sphi 0, %s241
    %s244 = sphi 0, %s243
    %s258 = sphi 0, %s244
    %s262 = sphi 0, %s262
    %s264 = sphi 0, %s262
    %s265 = sphi 0, %s264
    %s279 = sphi 0, %s265
    %s285 = sphi 0, %s287
    %s288 = sphi 0, %s285
    %s289 = sphi 0, %s288
    %s305 = sphi 0, %s289
  $region4: #{_lambda_.1} parent=0 // loop_header_branch
    %21 = sbr.rel (%p19) target = $region8
  $region5: #{_lambda_.1} parent=0 // loop_body
    %s23 = ssub.s32 %s18, 1
    %s24 = ssub.s32 %s18, 2
    %s25 = sadd.s32 %s18, 1
    %s26 = ssub.s32 %s18, %s25
    %p27 = scmp.eq.s32.totalorder %s26, 0
    %s29 = sadd.s32 %s28, 1
    %s30 = scalar_select %p27, %s28, %s29
    %p33 = pneg %p27
    %p34 = scmp.eq.s32.totalorder %s18, 1
    %p35 = por %p33, %p34
    %p36 = scmp.ne.s32.totalorder %s28, %s31
    %p37 = scmp.eq.s32.totalorder %s18, 0
    %p38 = por %p36, %p37
    %p39 = scmp.ne.s32.totalorder %s28, %s31
    %p40 = scmp.eq.s32.totalorder %s23, 1
    %p41 = por %p39, %p40
    %p42 = scmp.ne.s32.totalorder %s31, %s32
    %p43 = scmp.eq.s32.totalorder %s23, 0
    %p44 = por %p42, %p43
    %p45 = scmp.ne.s32.totalorder %s31, %s32
    %p46 = scmp.eq.s32.totalorder %s24, 1
    %p47 = por %p45, %p46
    %p49 = scmp.ne.s32.totalorder %s32, %s48
    %p50 = scmp.eq.s32.totalorder %s24, 0
    %p51 = por %p49, %p50
    %s53 = sadd.s32 %s52, 1
    %p56 = scmp.eq.s32.totalorder %s18, 1
    %p57 = scmp.ne.s32.totalorder %s52, %s54
    %p58 = scmp.eq.s32.totalorder %s18, 0
    %p59 = por %p57, %p58
    %p60 = scmp.ne.s32.totalorder %s52, %s54
    %p61 = scmp.eq.s32.totalorder %s23, 1
    %p62 = por %p60, %p61
    %p63 = scmp.ne.s32.totalorder %s54, %s55
    %p64 = scmp.eq.s32.totalorder %s23, 0
    %p65 = por %p63, %p64
    %p66 = scmp.ne.s32.totalorder %s54, %s55
    %p67 = scmp.eq.s32.totalorder %s24, 1
    %p68 = por %p66, %p67
    %p70 = scmp.ne.s32.totalorder %s55, %s69
    %p71 = scmp.eq.s32.totalorder %s24, 0
    %p72 = por %p70, %p71
    %s74 = sadd.s32 %s73, 1
    %p77 = scmp.eq.s32.totalorder %s18, 1
    %p78 = scmp.ne.s32.totalorder %s73, %s75
    %p79 = scmp.eq.s32.totalorder %s18, 0
    %p80 = por %p78, %p79
    %p81 = scmp.ne.s32.totalorder %s73, %s75
    %p82 = scmp.eq.s32.totalorder %s23, 1
    %p83 = por %p81, %p82
    %p84 = scmp.ne.s32.totalorder %s75, %s76
    %p85 = scmp.eq.s32.totalorder %s23, 0
    %p86 = por %p84, %p85
    %p87 = scmp.ne.s32.totalorder %s75, %s76
    %p88 = scmp.eq.s32.totalorder %s24, 1
    %p89 = por %p87, %p88
    %p91 = scmp.ne.s32.totalorder %s76, %s90
    %p92 = scmp.eq.s32.totalorder %s24, 0
    %p93 = por %p91, %p92
    %s95 = sadd.s32 %s94, 1
    %p98 = scmp.eq.s32.totalorder %s18, 1
    %p99 = scmp.ne.s32.totalorder %s94, %s96
    %p100 = scmp.eq.s32.totalorder %s18, 0
    %p101 = por %p99, %p100
    %p102 = scmp.ne.s32.totalorder %s94, %s96
    %p103 = scmp.eq.s32.totalorder %s23, 1
    %p104 = por %p102, %p103
    %p105 = scmp.ne.s32.totalorder %s96, %s97
    %p106 = scmp.eq.s32.totalorder %s23, 0
    %p107 = por %p105, %p106
    %p108 = scmp.ne.s32.totalorder %s96, %s97
    %p109 = scmp.eq.s32.totalorder %s24, 1
    %p110 = por %p108, %p109
    %p112 = scmp.ne.s32.totalorder %s97, %s111
    %p113 = scmp.eq.s32.totalorder %s24, 0
    %p114 = por %p112, %p113
    %s116 = sadd.s32 %s115, 1
    %p119 = scmp.eq.s32.totalorder %s18, 1
    %p120 = scmp.ne.s32.totalorder %s115, %s117
    %p121 = scmp.eq.s32.totalorder %s18, 0
    %p122 = por %p120, %p121
    %p123 = scmp.ne.s32.totalorder %s115, %s117
    %p124 = scmp.eq.s32.totalorder %s23, 1
    %p125 = por %p123, %p124
    %p126 = scmp.ne.s32.totalorder %s117, %s118
    %p127 = scmp.eq.s32.totalorder %s23, 0
    %p128 = por %p126, %p127
    %p129 = scmp.ne.s32.totalorder %s117, %s118
    %p130 = scmp.eq.s32.totalorder %s24, 1
    %p131 = por %p129, %p130
    %p133 = scmp.ne.s32.totalorder %s118, %s132
    %p134 = scmp.eq.s32.totalorder %s24, 0
    %p135 = por %p133, %p134
    %s137 = sadd.s32 %s136, 1
    %p140 = scmp.eq.s32.totalorder %s18, 1
    %p141 = scmp.ne.s32.totalorder %s136, %s138
    %p142 = scmp.eq.s32.totalorder %s18, 0
    %p143 = por %p141, %p142
    %p144 = scmp.ne.s32.totalorder %s136, %s138
    %p145 = scmp.eq.s32.totalorder %s23, 1
    %p146 = por %p144, %p145
    %p147 = scmp.ne.s32.totalorder %s138, %s139
    %p148 = scmp.eq.s32.totalorder %s23, 0
    %p149 = por %p147, %p148
    %p150 = scmp.ne.s32.totalorder %s138, %s139
    %p151 = scmp.eq.s32.totalorder %s24, 1
    %p152 = por %p150, %p151
    %p154 = scmp.ne.s32.totalorder %s139, %s153
    %p155 = scmp.eq.s32.totalorder %s24, 0
    %p156 = por %p154, %p155
    %s158 = sadd.s32 %s157, 1
    %p161 = scmp.eq.s32.totalorder %s18, 1
    %p162 = scmp.ne.s32.totalorder %s157, %s159
    %p163 = scmp.eq.s32.totalorder %s18, 0
    %p164 = por %p162, %p163
    %p165 = scmp.ne.s32.totalorder %s157, %s159
    %p166 = scmp.eq.s32.totalorder %s23, 1
    %p167 = por %p165, %p166
    %p168 = scmp.ne.s32.totalorder %s159, %s160
    %p169 = scmp.eq.s32.totalorder %s23, 0
    %p170 = por %p168, %p169
    %p171 = scmp.ne.s32.totalorder %s159, %s160
    %p172 = scmp.eq.s32.totalorder %s24, 1
    %p173 = por %p171, %p172
    %p175 = scmp.ne.s32.totalorder %s160, %s174
    %p176 = scmp.eq.s32.totalorder %s24, 0
    %p177 = por %p175, %p176
    %s179 = sadd.s32 %s178, 1
    %p182 = scmp.eq.s32.totalorder %s18, 1
    %p183 = scmp.ne.s32.totalorder %s178, %s180
    %p184 = scmp.eq.s32.totalorder %s18, 0
    %p185 = por %p183, %p184
    %p186 = scmp.ne.s32.totalorder %s178, %s180
    %p187 = scmp.eq.s32.totalorder %s23, 1
    %p188 = por %p186, %p187
    %p189 = scmp.ne.s32.totalorder %s180, %s181
    %p190 = scmp.eq.s32.totalorder %s23, 0
    %p191 = por %p189, %p190
    %p192 = scmp.ne.s32.totalorder %s180, %s181
    %p193 = scmp.eq.s32.totalorder %s24, 1
    %p194 = por %p192, %p193
    %p196 = scmp.ne.s32.totalorder %s181, %s195
    %p197 = scmp.eq.s32.totalorder %s24, 0
    %p198 = por %p196, %p197
    %s200 = sadd.s32 %s199, 1
    %p203 = scmp.eq.s32.totalorder %s18, 1
    %p204 = scmp.ne.s32.totalorder %s199, %s201
    %p205 = scmp.eq.s32.totalorder %s18, 0
    %p206 = por %p204, %p205
    %p207 = scmp.ne.s32.totalorder %s199, %s201
    %p208 = scmp.eq.s32.totalorder %s23, 1
    %p209 = por %p207, %p208
    %p210 = scmp.ne.s32.totalorder %s201, %s202
    %p211 = scmp.eq.s32.totalorder %s23, 0
    %p212 = por %p210, %p211
    %p213 = scmp.ne.s32.totalorder %s201, %s202
    %p214 = scmp.eq.s32.totalorder %s24, 1
    %p215 = por %p213, %p214
    %p217 = scmp.ne.s32.totalorder %s202, %s216
    %p218 = scmp.eq.s32.totalorder %s24, 0
    %p219 = por %p217, %p218
    %s221 = sadd.s32 %s220, 1
    %p224 = scmp.eq.s32.totalorder %s18, 1
    %p225 = scmp.ne.s32.totalorder %s220, %s222
    %p226 = scmp.eq.s32.totalorder %s18, 0
    %p227 = por %p225, %p226
    %p228 = scmp.ne.s32.totalorder %s220, %s222
    %p229 = scmp.eq.s32.totalorder %s23, 1
    %p230 = por %p228, %p229
    %p231 = scmp.ne.s32.totalorder %s222, %s223
    %p232 = scmp.eq.s32.totalorder %s23, 0
    %p233 = por %p231, %p232
    %p234 = scmp.ne.s32.totalorder %s222, %s223
    %p235 = scmp.eq.s32.totalorder %s24, 1
    %p236 = por %p234, %p235
    %p238 = scmp.ne.s32.totalorder %s223, %s237
    %p239 = scmp.eq.s32.totalorder %s24, 0
    %p240 = por %p238, %p239
    %s242 = sadd.s32 %s241, 1
    %p245 = scmp.eq.s32.totalorder %s18, 1
    %p246 = scmp.ne.s32.totalorder %s241, %s243
    %p247 = scmp.eq.s32.totalorder %s18, 0
    %p248 = por %p246, %p247
    %p249 = scmp.ne.s32.totalorder %s241, %s243
    %p250 = scmp.eq.s32.totalorder %s23, 1
    %p251 = por %p249, %p250
    %p252 = scmp.ne.s32.totalorder %s243, %s244
    %p253 = scmp.eq.s32.totalorder %s23, 0
    %p254 = por %p252, %p253
    %p255 = scmp.ne.s32.totalorder %s243, %s244
    %p256 = scmp.eq.s32.totalorder %s24, 1
    %p257 = por %p255, %p256
    %p259 = scmp.ne.s32.totalorder %s244, %s258
    %p260 = scmp.eq.s32.totalorder %s24, 0
    %p261 = por %p259, %p260
    %s263 = sadd.s32 %s262, 1
    %p266 = scmp.eq.s32.totalorder %s18, 1
    %p267 = scmp.ne.s32.totalorder %s262, %s264
    %p268 = scmp.eq.s32.totalorder %s18, 0
    %p269 = por %p267, %p268
    %p270 = scmp.ne.s32.totalorder %s262, %s264
    %p271 = scmp.eq.s32.totalorder %s23, 1
    %p272 = por %p270, %p271
    %p273 = scmp.ne.s32.totalorder %s264, %s265
    %p274 = scmp.eq.s32.totalorder %s23, 0
    %p275 = por %p273, %p274
    %p276 = scmp.ne.s32.totalorder %s264, %s265
    %p277 = scmp.eq.s32.totalorder %s24, 1
    %p278 = por %p276, %p277
    %p280 = scmp.ne.s32.totalorder %s265, %s279
    %p281 = scmp.eq.s32.totalorder %s24, 0
    %p282 = por %p280, %p281
    %s283 = ssub.s32 %s18, %s25
    %p284 = scmp.eq.s32.totalorder %s283, 0
    %s286 = sadd.s32 %s285, 1
    %s287 = scalar_select %p284, %s285, %s286
    %p290 = pneg %p284
    %p291 = scmp.eq.s32.totalorder %s18, 1
    %p292 = por %p290, %p291
    %p293 = scmp.ne.s32.totalorder %s285, %s288
    %p294 = scmp.eq.s32.totalorder %s18, 0
    %p295 = por %p293, %p294
    %p296 = scmp.ne.s32.totalorder %s285, %s288
    %p297 = scmp.eq.s32.totalorder %s23, 1
    %p298 = por %p296, %p297
    %p299 = scmp.ne.s32.totalorder %s288, %s289
    %p300 = scmp.eq.s32.totalorder %s23, 0
    %p301 = por %p299, %p300
    %p302 = scmp.ne.s32.totalorder %s288, %s289
    %p303 = scmp.eq.s32.totalorder %s24, 1
    %p304 = por %p302, %p303
    %p306 = scmp.ne.s32.totalorder %s289, %s305
    %p307 = scmp.eq.s32.totalorder %s24, 0
    %p308 = por %p306, %p307
    %p309 = scmp.le.s32.totalorder 1, %s18
    %p310 = scmp.lt.s32.totalorder %s18, 3
    %p311 = pnand %p309, %p310
    %p312 = pneg %p311
    // Predicated region
    $region9: #{_lambda_.1} parent=5 // pred_check
      _
    $region10: #{_lambda_.1} parent=5 // pred_check_branch
      %314 = sbr.rel (%p311) target = $region12
    $region11: #{_lambda_.1} parent=5 // pred_region
      %s315 = ssub.s32 %s18, 1
      // Predicated region
      $region13: #{_lambda_.1} parent=11 // pred_check
        %p316 = pneg %p65
      $region14: #{_lambda_.1} parent=11 // pred_check_branch
        %318 = sbr.rel (%p316) target = $region16
      $region15: #{_lambda_.1} parent=11 // pred_region
        _
      $region16: #{_lambda_.1} parent=11 // pred_fallthru
        _
      // Predicated region
      $region17: #{_lambda_.1} parent=11 // pred_check
        %p319 = pneg %p86
      $region18: #{_lambda_.1} parent=11 // pred_check_branch
        %321 = sbr.rel (%p319) target = $region20
      $region19: #{_lambda_.1} parent=11 // pred_region
        _
      $region20: #{_lambda_.1} parent=11 // pred_fallthru
        _
      // Predicated region
      $region21: #{_lambda_.1} parent=11 // pred_check
        %p322 = pneg %p107
      $region22: #{_lambda_.1} parent=11 // pred_check_branch
        %324 = sbr.rel (%p322) target = $region24
      $region23: #{_lambda_.1} parent=11 // pred_region
        _
      $region24: #{_lambda_.1} parent=11 // pred_fallthru
        _
      // Predicated region
      $region25: #{_lambda_.1} parent=11 // pred_check
        %p325 = pneg %p128
      $region26: #{_lambda_.1} parent=11 // pred_check_branch
        %327 = sbr.rel (%p325) target = $region28
      $region27: #{_lambda_.1} parent=11 // pred_region
        _
      $region28: #{_lambda_.1} parent=11 // pred_fallthru
        _
      // Predicated region
      $region29: #{_lambda_.1} parent=11 // pred_check
        %p328 = pneg %p149
      $region30: #{_lambda_.1} parent=11 // pred_check_branch
        %330 = sbr.rel (%p328) target = $region32
      $region31: #{_lambda_.1} parent=11 // pred_region
        _
      $region32: #{_lambda_.1} parent=11 // pred_fallthru
        _
      // Predicated region
      $region33: #{_lambda_.1} parent=11 // pred_check
        %p331 = pneg %p170
      $region34: #{_lambda_.1} parent=11 // pred_check_branch
        %333 = sbr.rel (%p331) target = $region36
      $region35: #{_lambda_.1} parent=11 // pred_region
        _
      $region36: #{_lambda_.1} parent=11 // pred_fallthru
        _
      // Predicated region
      $region37: #{_lambda_.1} parent=11 // pred_check
        %p334 = pneg %p191
      $region38: #{_lambda_.1} parent=11 // pred_check_branch
        %336 = sbr.rel (%p334) target = $region40
      $region39: #{_lambda_.1} parent=11 // pred_region
        _
      $region40: #{_lambda_.1} parent=11 // pred_fallthru
        _
      // Predicated region
      $region41: #{_lambda_.1} parent=11 // pred_check
        %p337 = pneg %p212
      $region42: #{_lambda_.1} parent=11 // pred_check_branch
        %339 = sbr.rel (%p337) target = $region44
      $region43: #{_lambda_.1} parent=11 // pred_region
        _
      $region44: #{_lambda_.1} parent=11 // pred_fallthru
        _
      // Predicated region
      $region45: #{_lambda_.1} parent=11 // pred_check
        %p340 = pneg %p233
      $region46: #{_lambda_.1} parent=11 // pred_check_branch
        %342 = sbr.rel (%p340) target = $region48
      $region47: #{_lambda_.1} parent=11 // pred_region
        _
      $region48: #{_lambda_.1} parent=11 // pred_fallthru
        _
      // Predicated region
      $region49: #{_lambda_.1} parent=11 // pred_check
        %p343 = pneg %p254
      $region50: #{_lambda_.1} parent=11 // pred_check_branch
        %345 = sbr.rel (%p343) target = $region52
      $region51: #{_lambda_.1} parent=11 // pred_region
        _
      $region52: #{_lambda_.1} parent=11 // pred_fallthru
        _
      // Predicated region
      $region53: #{_lambda_.1} parent=11 // pred_check
        %p346 = pneg %p275
      $region54: #{_lambda_.1} parent=11 // pred_check_branch
        %348 = sbr.rel (%p346) target = $region56
      $region55: #{_lambda_.1} parent=11 // pred_region
        _
      $region56: #{_lambda_.1} parent=11 // pred_fallthru
        _
    $region12: #{_lambda_.1} parent=5 // pred_fallthru
      _
    %p349 = scmp.lt.s32.totalorder %s18, 2
    // Predicated region
    $region57: #{_lambda_.1} parent=5 // pred_check
      %p350 = pneg %p349
    $region58: #{_lambda_.1} parent=5 // pred_check_branch
      %352 = sbr.rel (%p350) target = $region60
    $region59: #{_lambda_.1} parent=5 // pred_region
      // Predicated region
      $region61: #{_lambda_.1} parent=59 // pred_check
        %p353 = pneg %p38
      $region62: #{_lambda_.1} parent=59 // pred_check_branch
        %355 = sbr.rel (%p353) target = $region64
      $region63: #{_lambda_.1} parent=59 // pred_region
        %p356 = scmp.lt.s32.totalorder %s18, 1
        %s357 = scalar_select %p356, %s18, 1
        %s358 = smul.addr %s357, 52
        %s359 = smul.addr %s358, 4
        %s360 = scalar_lea.vmem %s0, %s359
      $region64: #{_lambda_.1} parent=59 // pred_fallthru
        _
    $region60: #{_lambda_.1} parent=5 // pred_fallthru
      _
    %p361 = scmp.le.s32.totalorder 1, %s18
    %p362 = scmp.lt.s32.totalorder %s18, 3
    %p363 = pnand %p361, %p362
    %p364 = pneg %p363
    // Predicated region
    $region65: #{_lambda_.1} parent=5 // pred_check
      _
    $region66: #{_lambda_.1} parent=5 // pred_check_branch
      %366 = sbr.rel (%p363) target = $region68
    $region67: #{_lambda_.1} parent=5 // pred_region
      %s367 = ssub.s32 %s18, 1
      %p368 = scmp.lt.s32.totalorder %s23, 1
      %s369 = scalar_select %p368, %s23, 1
      %s370 = smul.addr %s369, 52
      %s371 = smul.addr %s370, 4
      %s372 = scalar_lea.vmem %s0, %s371
      %p373 = pneg %p44
      %p374 = pneg %p41
      %p375 = pneg %p65
      %p376 = pneg %p62
      %p377 = pneg %p86
      %p378 = pneg %p83
      %p379 = pneg %p107
      %p380 = pneg %p104
      %p381 = pneg %p128
      %p382 = pneg %p125
      %p383 = pneg %p149
      %p384 = pneg %p146
      %p385 = pneg %p170
      %p386 = pneg %p167
      %p387 = pneg %p191
      %p388 = pneg %p188
      %p389 = pneg %p212
      %p390 = pneg %p209
      %p391 = pneg %p233
      %p392 = pneg %p230
      %p393 = pneg %p254
      %p394 = pneg %p251
      %p395 = pneg %p275
      %p396 = pneg %p272
      %p397 = pneg %p301
      %p398 = pneg %p298
      %p399 = scmp.lt.s32.totalorder %s23, 1
      %s400 = scalar_select %p399, %s23, 1
      %s401 = smul.addr %s400, 52
      %s402 = smul.addr %s401, 8
      %s403 = scalar_lea.vmem %s12, %s402
      %p404 = scmp.lt.s32.totalorder %s23, 1
      %s405 = scalar_select %p404, %s23, 1
      %s406 = smul.addr %s405, 52
      %s407 = smul.addr %s406, 4
      %s408 = scalar_lea.vmem %s0, %s407
      %p409 = scmp.lt.s32.totalorder %s23, 1
      %s410 = scalar_select %p409, %s23, 1
      %s411 = smul.addr %s410, 52
      %s412 = smul.addr %s411, 8
      %s413 = scalar_lea.vmem %s12, %s412
      %v415 = vld [vmem:[%s1] sm:$0xff]
      %v416 = vld [vmem:[%s1 + $0x8] sm:$0xff]
      %v417 = vld [vmem:[%s1 + $0x10] sm:$0xff]
      %v418 = vld [vmem:[%s1 + $0x18] sm:$0xff]
      %v419 = vld [vmem:[%s1 + $0x20] sm:$0xff]
      %v420 = vld [vmem:[%s1 + $0x28] sm:$0xff]
      %v421 = vld [vmem:[%s1 + $0x30] sm:$0xff]
      %v422 = vld [vmem:[%s1 + $0x38] sm:$0xff]
      %v423 = vld [vmem:[%s1 + $0x40] sm:$0xff]
      %v424 = vld [vmem:[%s1 + $0x48] sm:$0xff]
      %v425 = vld [vmem:[%s1 + $0x50] sm:$0xff]
      %v426 = vld [vmem:[%s1 + $0x58] sm:$0xff]
      %v427 = vld [vmem:[%s1 + $0x60] sm:$0xf]
      %vm428 = vcmask 130048
      %429 = vst.msk [vmem:[#allocation2] sm:$0xff] %vm428, 0.0
      %430 = vst.msk [vmem:[#allocation2 + $0x8] sm:$0xff] %vm428, 0.0
      %431 = vst.msk [vmem:[#allocation2 + $0x10] sm:$0xff] %vm428, 0.0
      %432 = vst.msk [vmem:[#allocation2 + $0x18] sm:$0xff] %vm428, 0.0
      %433 = vst.msk [vmem:[#allocation2 + $0x20] sm:$0xff] %vm428, 0.0
      %434 = vst.msk [vmem:[#allocation2 + $0x28] sm:$0xff] %vm428, 0.0
      %435 = vst.msk [vmem:[#allocation2 + $0x30] sm:$0xff] %vm428, 0.0
      %436 = vst.msk [vmem:[#allocation2 + $0x38] sm:$0xff] %vm428, 0.0
      %437 = vst.msk [vmem:[#allocation2 + $0x40] sm:$0xff] %vm428, 0.0
      %438 = vst.msk [vmem:[#allocation2 + $0x48] sm:$0xff] %vm428, 0.0
      %439 = vst.msk [vmem:[#allocation2 + $0x50] sm:$0xff] %vm428, 0.0
      %440 = vst.msk [vmem:[#allocation2 + $0x58] sm:$0xff] %vm428, 0.0
      %441 = vst.msk [vmem:[#allocation2 + $0x60] sm:$0xff] %vm428, 0.0
      %442 = vst.msk [vmem:[#allocation2 + $0x68] sm:$0xff] %vm428, 0.0
      %443 = vst.msk [vmem:[#allocation2 + $0x70] sm:$0xff] %vm428, 0.0
      %444 = vst.msk [vmem:[#allocation2 + $0x78] sm:$0xff] %vm428, 0.0
      %vm445 = vcmask 125952
      %446 = vst.msk [vmem:[#allocation2 + $0x80] sm:$0xf] %vm445, 0.0
      %447 = vst.msk [vmem:[#allocation2 + $0x88] sm:$0xff] %vm428, 0.0
      %448 = vst.msk [vmem:[#allocation2 + $0x90] sm:$0xff] %vm428, 0.0
      %449 = vst.msk [vmem:[#allocation2 + $0x98] sm:$0xff] %vm428, 0.0
      %450 = vst.msk [vmem:[#allocation2 + $0xa0] sm:$0xff] %vm428, 0.0
      %451 = vst.msk [vmem:[#allocation2 + $0xa8] sm:$0xff] %vm428, 0.0
      %452 = vst.msk [vmem:[#allocation2 + $0xb0] sm:$0xff] %vm428, 0.0
      %453 = vst.msk [vmem:[#allocation2 + $0xb8] sm:$0xff] %vm428, 0.0
      %454 = vst.msk [vmem:[#allocation2 + $0xc0] sm:$0xff] %vm428, 0.0
      %455 = vst.msk [vmem:[#allocation2 + $0xc8] sm:$0xff] %vm428, 0.0
      %456 = vst.msk [vmem:[#allocation2 + $0xd0] sm:$0xff] %vm428, 0.0
      %457 = vst.msk [vmem:[#allocation2 + $0xd8] sm:$0xff] %vm428, 0.0
      %458 = vst.msk [vmem:[#allocation2 + $0xe0] sm:$0xff] %vm428, 0.0
      %459 = vst.msk [vmem:[#allocation2 + $0xe8] sm:$0xff] %vm428, 0.0
      %460 = vst.msk [vmem:[#allocation2 + $0xf0] sm:$0xff] %vm428, 0.0
      %461 = vst.msk [vmem:[#allocation2 + $0xf8] sm:$0xff] %vm428, 0.0
      %462 = vst.msk [vmem:[#allocation2 + $0x100] sm:$0xff] %vm428, 0.0
      %463 = vst.msk [vmem:[#allocation2 + $0x108] sm:$0xf] %vm445, 0.0
      %464 = vst.msk [vmem:[#allocation2 + $0x110] sm:$0xff] %vm428, 0.0
      %465 = vst.msk [vmem:[#allocation2 + $0x118] sm:$0xff] %vm428, 0.0
      %466 = vst.msk [vmem:[#allocation2 + $0x120] sm:$0xff] %vm428, 0.0
      %467 = vst.msk [vmem:[#allocation2 + $0x128] sm:$0xff] %vm428, 0.0
      %468 = vst.msk [vmem:[#allocation2 + $0x130] sm:$0xff] %vm428, 0.0
      %469 = vst.msk [vmem:[#allocation2 + $0x138] sm:$0xff] %vm428, 0.0
      %470 = vst.msk [vmem:[#allocation2 + $0x140] sm:$0xff] %vm428, 0.0
      %471 = vst.msk [vmem:[#allocation2 + $0x148] sm:$0xff] %vm428, 0.0
      %472 = vst.msk [vmem:[#allocation2 + $0x150] sm:$0xff] %vm428, 0.0
      %473 = vst.msk [vmem:[#allocation2 + $0x158] sm:$0xff] %vm428, 0.0
      %474 = vst.msk [vmem:[#allocation2 + $0x160] sm:$0xff] %vm428, 0.0
      %475 = vst.msk [vmem:[#allocation2 + $0x168] sm:$0xff] %vm428, 0.0
      %476 = vst.msk [vmem:[#allocation2 + $0x170] sm:$0xff] %vm428, 0.0
      %477 = vst.msk [vmem:[#allocation2 + $0x178] sm:$0xff] %vm428, 0.0
      %478 = vst.msk [vmem:[#allocation2 + $0x180] sm:$0xff] %vm428, 0.0
      %479 = vst.msk [vmem:[#allocation2 + $0x188] sm:$0xff] %vm428, 0.0
      %480 = vst.msk [vmem:[#allocation2 + $0x190] sm:$0xf] %vm445, 0.0
      %481 = vst.msk [vmem:[#allocation2 + $0x198] sm:$0xff] %vm428, 0.0
      %482 = vst.msk [vmem:[#allocation2 + $0x1a0] sm:$0xff] %vm428, 0.0
      %483 = vst.msk [vmem:[#allocation2 + $0x1a8] sm:$0xff] %vm428, 0.0
      %484 = vst.msk [vmem:[#allocation2 + $0x1b0] sm:$0xff] %vm428, 0.0
      %485 = vst.msk [vmem:[#allocation2 + $0x1b8] sm:$0xff] %vm428, 0.0
      %486 = vst.msk [vmem:[#allocation2 + $0x1c0] sm:$0xff] %vm428, 0.0
      %487 = vst.msk [vmem:[#allocation2 + $0x1c8] sm:$0xff] %vm428, 0.0
      %488 = vst.msk [vmem:[#allocation2 + $0x1d0] sm:$0xff] %vm428, 0.0
      %489 = vst.msk [vmem:[#allocation2 + $0x1d8] sm:$0xff] %vm428, 0.0
      %490 = vst.msk [vmem:[#allocation2 + $0x1e0] sm:$0xff] %vm428, 0.0
      %491 = vst.msk [vmem:[#allocation2 + $0x1e8] sm:$0xff] %vm428, 0.0
      %492 = vst.msk [vmem:[#allocation2 + $0x1f0] sm:$0xff] %vm428, 0.0
      %493 = vst.msk [vmem:[#allocation2 + $0x1f8] sm:$0xff] %vm428, 0.0
      %494 = vst.msk [vmem:[#allocation2 + $0x200] sm:$0xff] %vm428, 0.0
      %495 = vst.msk [vmem:[#allocation2 + $0x208] sm:$0xff] %vm428, 0.0
      %496 = vst.msk [vmem:[#allocation2 + $0x210] sm:$0xff] %vm428, 0.0
      %497 = vst.msk [vmem:[#allocation2 + $0x218] sm:$0xf] %vm445, 0.0
      %vm498 = vcmask 261120
      %499 = vst.msk [vmem:[#allocation3] sm:$0xff] %vm498, 0.0
      %500 = vst.msk [vmem:[#allocation3 + $0x8] sm:$0xff] %vm498, 0.0
      %501 = vst.msk [vmem:[#allocation3 + $0x10] sm:$0xff] %vm498, 0.0
      %502 = vst.msk [vmem:[#allocation3 + $0x18] sm:$0xff] %vm498, 0.0
      %503 = vst.msk [vmem:[#allocation3 + $0x20] sm:$0xff] %vm498, 0.0
      %504 = vst.msk [vmem:[#allocation3 + $0x28] sm:$0xff] %vm498, 0.0
      %505 = vst.msk [vmem:[#allocation3 + $0x30] sm:$0xff] %vm498, 0.0
      %506 = vst.msk [vmem:[#allocation3 + $0x38] sm:$0xff] %vm498, 0.0
      %507 = vst.msk [vmem:[#allocation3 + $0x40] sm:$0xff] %vm498, 0.0
      %508 = vst.msk [vmem:[#allocation3 + $0x48] sm:$0xff] %vm498, 0.0
      %509 = vst.msk [vmem:[#allocation3 + $0x50] sm:$0xff] %vm498, 0.0
      %510 = vst.msk [vmem:[#allocation3 + $0x58] sm:$0xff] %vm498, 0.0
      %511 = vst.msk [vmem:[#allocation3 + $0x60] sm:$0xff] %vm498, 0.0
      %512 = vst.msk [vmem:[#allocation3 + $0x68] sm:$0xff] %vm498, 0.0
      %513 = vst.msk [vmem:[#allocation3 + $0x70] sm:$0xff] %vm498, 0.0
      %514 = vst.msk [vmem:[#allocation3 + $0x78] sm:$0xff] %vm498, 0.0
      %vm515 = vcmask 257024
      %516 = vst.msk [vmem:[#allocation3 + $0x80] sm:$0xf] %vm515, 0.0
      %517 = vst.msk [vmem:[#allocation4] sm:$0xff] %vm498, 0.0
      %518 = vst.msk [vmem:[#allocation4 + $0x8] sm:$0xff] %vm498, 0.0
      %519 = vst.msk [vmem:[#allocation4 + $0x10] sm:$0xff] %vm498, 0.0
      %520 = vst.msk [vmem:[#allocation4 + $0x18] sm:$0xff] %vm498, 0.0
      %521 = vst.msk [vmem:[#allocation4 + $0x20] sm:$0xff] %vm498, 0.0
      %522 = vst.msk [vmem:[#allocation4 + $0x28] sm:$0xff] %vm498, 0.0
      %523 = vst.msk [vmem:[#allocation4 + $0x30] sm:$0xff] %vm498, 0.0
      %524 = vst.msk [vmem:[#allocation4 + $0x38] sm:$0xff] %vm498, 0.0
      %525 = vst.msk [vmem:[#allocation4 + $0x40] sm:$0xff] %vm498, 0.0
      %526 = vst.msk [vmem:[#allocation4 + $0x48] sm:$0xff] %vm498, 0.0
      %527 = vst.msk [vmem:[#allocation4 + $0x50] sm:$0xff] %vm498, 0.0
      %528 = vst.msk [vmem:[#allocation4 + $0x58] sm:$0xff] %vm498, 0.0
      %529 = vst.msk [vmem:[#allocation4 + $0x60] sm:$0xff] %vm498, 0.0
      %530 = vst.msk [vmem:[#allocation4 + $0x68] sm:$0xff] %vm498, 0.0
      %531 = vst.msk [vmem:[#allocation4 + $0x70] sm:$0xff] %vm498, 0.0
      %532 = vst.msk [vmem:[#allocation4 + $0x78] sm:$0xff] %vm498, 0.0
      %533 = vst.msk [vmem:[#allocation4 + $0x80] sm:$0xf] %vm515, 0.0
      %534 = vst.msk [vmem:[#allocation4 + $0x88] sm:$0xff] %vm498, 0.0
      %535 = vst.msk [vmem:[#allocation4 + $0x90] sm:$0xff] %vm498, 0.0
      %536 = vst.msk [vmem:[#allocation4 + $0x98] sm:$0xff] %vm498, 0.0
      %537 = vst.msk [vmem:[#allocation4 + $0xa0] sm:$0xff] %vm498, 0.0
      %538 = vst.msk [vmem:[#allocation4 + $0xa8] sm:$0xff] %vm498, 0.0
      %539 = vst.msk [vmem:[#allocation4 + $0xb0] sm:$0xff] %vm498, 0.0
      %540 = vst.msk [vmem:[#allocation4 + $0xb8] sm:$0xff] %vm498, 0.0
      %541 = vst.msk [vmem:[#allocation4 + $0xc0] sm:$0xff] %vm498, 0.0
      %542 = vst.msk [vmem:[#allocation4 + $0xc8] sm:$0xff] %vm498, 0.0
      %543 = vst.msk [vmem:[#allocation4 + $0xd0] sm:$0xff] %vm498, 0.0
      %544 = vst.msk [vmem:[#allocation4 + $0xd8] sm:$0xff] %vm498, 0.0
      %545 = vst.msk [vmem:[#allocation4 + $0xe0] sm:$0xff] %vm498, 0.0
      %546 = vst.msk [vmem:[#allocation4 + $0xe8] sm:$0xff] %vm498, 0.0
      %547 = vst.msk [vmem:[#allocation4 + $0xf0] sm:$0xff] %vm498, 0.0
      %548 = vst.msk [vmem:[#allocation4 + $0xf8] sm:$0xff] %vm498, 0.0
      %549 = vst.msk [vmem:[#allocation4 + $0x100] sm:$0xff] %vm498, 0.0
      %550 = vst.msk [vmem:[#allocation4 + $0x108] sm:$0xf] %vm515, 0.0
      %551 = vst.msk [vmem:[#allocation4 + $0x110] sm:$0xff] %vm498, 0.0
      %552 = vst.msk [vmem:[#allocation4 + $0x118] sm:$0xff] %vm498, 0.0
      %553 = vst.msk [vmem:[#allocation4 + $0x120] sm:$0xff] %vm498, 0.0
      %554 = vst.msk [vmem:[#allocation4 + $0x128] sm:$0xff] %vm498, 0.0
      %555 = vst.msk [vmem:[#allocation4 + $0x130] sm:$0xff] %vm498, 0.0
      %556 = vst.msk [vmem:[#allocation4 + $0x138] sm:$0xff] %vm498, 0.0
      %557 = vst.msk [vmem:[#allocation4 + $0x140] sm:$0xff] %vm498, 0.0
      %558 = vst.msk [vmem:[#allocation4 + $0x148] sm:$0xff] %vm498, 0.0
      %559 = vst.msk [vmem:[#allocation4 + $0x150] sm:$0xff] %vm498, 0.0
      %560 = vst.msk [vmem:[#allocation4 + $0x158] sm:$0xff] %vm498, 0.0
      %561 = vst.msk [vmem:[#allocation4 + $0x160] sm:$0xff] %vm498, 0.0
      %562 = vst.msk [vmem:[#allocation4 + $0x168] sm:$0xff] %vm498, 0.0
      %563 = vst.msk [vmem:[#allocation4 + $0x170] sm:$0xff] %vm498, 0.0
      %564 = vst.msk [vmem:[#allocation4 + $0x178] sm:$0xff] %vm498, 0.0
      %565 = vst.msk [vmem:[#allocation4 + $0x180] sm:$0xff] %vm498, 0.0
      %566 = vst.msk [vmem:[#allocation4 + $0x188] sm:$0xff] %vm498, 0.0
      %567 = vst.msk [vmem:[#allocation4 + $0x190] sm:$0xf] %vm515, 0.0
      %568 = vst.msk [vmem:[#allocation4 + $0x198] sm:$0xff] %vm498, 0.0
      %569 = vst.msk [vmem:[#allocation4 + $0x1a0] sm:$0xff] %vm498, 0.0
      %570 = vst.msk [vmem:[#allocation4 + $0x1a8] sm:$0xff] %vm498, 0.0
      %571 = vst.msk [vmem:[#allocation4 + $0x1b0] sm:$0xff] %vm498, 0.0
      %572 = vst.msk [vmem:[#allocation4 + $0x1b8] sm:$0xff] %vm498, 0.0
      %573 = vst.msk [vmem:[#allocation4 + $0x1c0] sm:$0xff] %vm498, 0.0
      %574 = vst.msk [vmem:[#allocation4 + $0x1c8] sm:$0xff] %vm498, 0.0
      %575 = vst.msk [vmem:[#allocation4 + $0x1d0] sm:$0xff] %vm498, 0.0
      %576 = vst.msk [vmem:[#allocation4 + $0x1d8] sm:$0xff] %vm498, 0.0
      %577 = vst.msk [vmem:[#allocation4 + $0x1e0] sm:$0xff] %vm498, 0.0
      %578 = vst.msk [vmem:[#allocation4 + $0x1e8] sm:$0xff] %vm498, 0.0
      %579 = vst.msk [vmem:[#allocation4 + $0x1f0] sm:$0xff] %vm498, 0.0
      %580 = vst.msk [vmem:[#allocation4 + $0x1f8] sm:$0xff] %vm498, 0.0
      %581 = vst.msk [vmem:[#allocation4 + $0x200] sm:$0xff] %vm498, 0.0
      %582 = vst.msk [vmem:[#allocation4 + $0x208] sm:$0xff] %vm498, 0.0
      %583 = vst.msk [vmem:[#allocation4 + $0x210] sm:$0xff] %vm498, 0.0
      %584 = vst.msk [vmem:[#allocation4 + $0x218] sm:$0xf] %vm515, 0.0
      %v585 = vld [vmem:[%s408] sm:$0xf]
      %v586 = vld [vmem:[%s408 + $0x4] sm:$0xf]
      %v587 = vld [vmem:[%s408 + $0x8] sm:$0xf]
      %v588 = vld [vmem:[%s408 + $0xc] sm:$0xf]
      %v589 = vld [vmem:[%s408 + $0x10] sm:$0xf]
      %v590 = vld [vmem:[%s408 + $0x14] sm:$0xf]
      %v591 = vld [vmem:[%s408 + $0x18] sm:$0xf]
      %v592 = vld [vmem:[%s408 + $0x1c] sm:$0xf]
      %v593 = vld [vmem:[%s408 + $0x20] sm:$0xf]
      %v594 = vld [vmem:[%s408 + $0x24] sm:$0xf]
      %v595 = vld [vmem:[%s408 + $0x28] sm:$0xf]
      %v596 = vld [vmem:[%s408 + $0x2c] sm:$0xf]
      %v597 = vld [vmem:[%s408 + $0x30] sm:$0x3]
      %v598 = vld [vmem:[%s2] sm:$0xf]
      %v599 = vld [vmem:[%s2 + $0x4] sm:$0xf]
      %v600 = vld [vmem:[%s2 + $0x8] sm:$0xf]
      %v601 = vld [vmem:[%s2 + $0xc] sm:$0x3]
      %v602 = vld [vmem:[%s3] sm:$0x1]
      %v604 = vperm.slane %v602, 0
      %v619 = vunpack.c.l.b16 %v585
      %v620 = vunpack.c.l.b16 %v586
      %v621 = vunpack.c.l.b16 %v587
      %v622 = vunpack.c.l.b16 %v588
      %v623 = vunpack.c.l.b16 %v589
      %v624 = vunpack.c.l.b16 %v590
      %v625 = vunpack.c.l.b16 %v591
      %v626 = vunpack.c.l.b16 %v592
      %v627 = vunpack.c.l.b16 %v593
      %v628 = vunpack.c.l.b16 %v594
      %v629 = vunpack.c.l.b16 %v595
      %v630 = vunpack.c.l.b16 %v596
      %v631 = vunpack.c.l.b16 %v597
      %v632 = vpack.c.b16 %v620, %v619
      %v633 = vpack.c.b16 %v622, %v621
      %v634 = vpack.c.b16 %v624, %v623
      %v635 = vpack.c.b16 %v626, %v625
      %v636 = vpack.c.b16 %v628, %v627
      %v637 = vpack.c.b16 %v630, %v629
      %v638 = vpack.c.b16 %v631, %v631
      %v643 = vunpack.c.l.b16 %v598
      %v644 = vunpack.c.l.b16 %v599
      %v645 = vunpack.c.l.b16 %v600
      %v646 = vunpack.c.l.b16 %v601
      %v647 = vpack.c.b16 %v644, %v643
      %v648 = vpack.c.b16 %v646, %v645
      %vm650 = vcmask 220160
      %v652 = vsel %vm650, %v632, 0
      %v655 = vsel %vm650, %v633, 0
      %v658 = vsel %vm650, %v634, 0
      %v661 = vsel %vm650, %v635, 0
      %v664 = vsel %vm650, %v636, 0
      %v667 = vsel %vm650, %v637, 0
      %v670 = vsel %vm650, %v638, 0
      %vm672 = vcmask 1044480
      %vm673 = vcmask 1045504
      %v674 = vsel %vm672, 4294967295, 65535
      %v675 = vsel %vm673, %v674, 0
      %v677 = vand.u32 %v648, %v675
      %679 = vmatpush.bf16.msra.mxu0 0
      %680 = vmatpush.bf16.msra.mxu0 0
      %681 = vmatpush.bf16.msra.mxu0 0
      %682 = vmatpush.bf16.msra.mxu0 0
      %683 = vmatpush.bf16.msra.mxu0 0
      %684 = vmatpush.bf16.msra.mxu0 0
      %685 = vmatpush.bf16.msra.mxu0 %v677
      %686 = vmatpush.bf16.msra.mxu0 %v647
      %687 = vmatmul.bf16.gmra.mxu0 %v652
      %v688 = vpop.f32.mrf.mxu0
      %v689 = vadd.f32 %v604, %v688
      %v690 = vpop.f32.mrf.mxu0
      %v691 = vadd.f32 %v604, %v690
      %692 = vmatmul.bf16.gmra.mxu0 %v655
      %v693 = vpop.f32.mrf.mxu0
      %v694 = vadd.f32 %v604, %v693
      %v695 = vpop.f32.mrf.mxu0
      %v696 = vadd.f32 %v604, %v695
      %697 = vmatmul.bf16.gmra.mxu0 %v658
      %v698 = vpop.f32.mrf.mxu0
      %v699 = vadd.f32 %v604, %v698
      %v700 = vpop.f32.mrf.mxu0
      %v701 = vadd.f32 %v604, %v700
      %702 = vmatmul.bf16.gmra.mxu0 %v661
      %v703 = vpop.f32.mrf.mxu0
      %v704 = vadd.f32 %v604, %v703
      %v705 = vpop.f32.mrf.mxu0
      %v706 = vadd.f32 %v604, %v705
      %707 = vmatmul.bf16.gmra.mxu0 %v664
      %v708 = vpop.f32.mrf.mxu0
      %v709 = vadd.f32 %v604, %v708
      %v710 = vpop.f32.mrf.mxu0
      %v711 = vadd.f32 %v604, %v710
      %712 = vmatmul.bf16.gmra.mxu0 %v667
      %v713 = vpop.f32.mrf.mxu0
      %v714 = vadd.f32 %v604, %v713
      %v715 = vpop.f32.mrf.mxu0
      %v716 = vadd.f32 %v604, %v715
      %717 = vmatmul.bf16.gmra.mxu0 %v670
      %v718 = vpop.f32.mrf.mxu0
      %v719 = vadd.f32 %v604, %v718
      %v720 = vpop.f32.mrf.mxu0
      %721 = vdwg.mxu0
      %v722 = vmax.f32 %v689, 0.0
      %v723 = vmax.f32 %v691, 0.0
      %v724 = vmax.f32 %v694, 0.0
      %v725 = vmax.f32 %v696, 0.0
      %v726 = vmax.f32 %v699, 0.0
      %v727 = vmax.f32 %v701, 0.0
      %v728 = vmax.f32 %v704, 0.0
      %v729 = vmax.f32 %v706, 0.0
      %v730 = vmax.f32 %v709, 0.0
      %v731 = vmax.f32 %v711, 0.0
      %v732 = vmax.f32 %v714, 0.0
      %v733 = vmax.f32 %v716, 0.0
      %v734 = vmax.f32 %v719, 0.0
      %736 = vset.pattern.permute.xlu0 0
      %737 = vperm.xlu0 %736, %v415
      %v738 = vpop.permute.xlu0 %737
      %741 = vset.pattern.permute.xlu0 0
      %742 = vperm.xlu0 %741, %v416
      %v743 = vpop.permute.xlu0 %742
      %746 = vset.pattern.permute.xlu0 0
      %747 = vperm.xlu0 %746, %v417
      %v748 = vpop.permute.xlu0 %747
      %751 = vset.pattern.permute.xlu0 0
      %752 = vperm.xlu0 %751, %v418
      %v753 = vpop.permute.xlu0 %752
      %756 = vset.pattern.permute.xlu0 0
      %757 = vperm.xlu0 %756, %v419
      %v758 = vpop.permute.xlu0 %757
      %761 = vset.pattern.permute.xlu0 0
      %762 = vperm.xlu0 %761, %v420
      %v763 = vpop.permute.xlu0 %762
      %766 = vset.pattern.permute.xlu0 0
      %767 = vperm.xlu0 %766, %v421
      %v768 = vpop.permute.xlu0 %767
      %771 = vset.pattern.permute.xlu0 0
      %772 = vperm.xlu0 %771, %v422
      %v773 = vpop.permute.xlu0 %772
      %776 = vset.pattern.permute.xlu0 0
      %777 = vperm.xlu0 %776, %v423
      %v778 = vpop.permute.xlu0 %777
      %781 = vset.pattern.permute.xlu0 0
      %782 = vperm.xlu0 %781, %v424
      %v783 = vpop.permute.xlu0 %782
      %786 = vset.pattern.permute.xlu0 0
      %787 = vperm.xlu0 %786, %v425
      %v788 = vpop.permute.xlu0 %787
      %791 = vset.pattern.permute.xlu0 0
      %792 = vperm.xlu0 %791, %v426
      %v793 = vpop.permute.xlu0 %792
      %796 = vset.pattern.permute.xlu0 0
      %797 = vperm.xlu0 %796, %v427
      %v798 = vpop.permute.xlu0 %797
      %v800 = vmul.f32 %v722, %v738
      %v801 = vmul.f32 %v723, %v743
      %v802 = vmul.f32 %v724, %v748
      %v803 = vmul.f32 %v725, %v753
      %v804 = vmul.f32 %v726, %v758
      %v805 = vmul.f32 %v727, %v763
      %v806 = vmul.f32 %v728, %v768
      %v807 = vmul.f32 %v729, %v773
      %v808 = vmul.f32 %v730, %v778
      %v809 = vmul.f32 %v731, %v783
      %v810 = vmul.f32 %v732, %v788
      %v811 = vmul.f32 %v733, %v793
      %v812 = vmul.f32 %v734, %v798
      %813 = vst.msk [vmem:[#allocation2 + $0x10] sm:$0xff] %vm428, %v800
      %814 = vst.msk [vmem:[#allocation2 + $0x18] sm:$0xff] %vm428, %v801
      %815 = vst.msk [vmem:[#allocation2 + $0x20] sm:$0xff] %vm428, %v802
      %816 = vst.msk [vmem:[#allocation2 + $0x28] sm:$0xff] %vm428, %v803
      %817 = vst.msk [vmem:[#allocation2 + $0x30] sm:$0xff] %vm428, %v804
      %818 = vst.msk [vmem:[#allocation2 + $0x38] sm:$0xff] %vm428, %v805
      %819 = vst.msk [vmem:[#allocation2 + $0x40] sm:$0xff] %vm428, %v806
      %820 = vst.msk [vmem:[#allocation2 + $0x48] sm:$0xff] %vm428, %v807
      %821 = vst.msk [vmem:[#allocation2 + $0x50] sm:$0xff] %vm428, %v808
      %822 = vst.msk [vmem:[#allocation2 + $0x58] sm:$0xff] %vm428, %v809
      %823 = vst.msk [vmem:[#allocation2 + $0x60] sm:$0xff] %vm428, %v810
      %824 = vst.msk [vmem:[#allocation2 + $0x68] sm:$0xff] %vm428, %v811
      %825 = vst.msk [vmem:[#allocation2 + $0x70] sm:$0xf] %vm445, %v812
      %s826 = scalar_lea.vmem %s408, 52
      %v827 = vld [vmem:[%s826] sm:$0xf]
      %v828 = vld [vmem:[%s826 + $0x4] sm:$0xf]
      %v829 = vld [vmem:[%s826 + $0x8] sm:$0xf]
      %v830 = vld [vmem:[%s826 + $0xc] sm:$0xf]
      %v831 = vld [vmem:[%s826 + $0x10] sm:$0xf]
      %v832 = vld [vmem:[%s826 + $0x14] sm:$0xf]
      %v833 = vld [vmem:[%s826 + $0x18] sm:$0xf]
      %v834 = vld [vmem:[%s826 + $0x1c] sm:$0xf]
      %v835 = vld [vmem:[%s826 + $0x20] sm:$0xf]
      %v836 = vld [vmem:[%s826 + $0x24] sm:$0xf]
      %v837 = vld [vmem:[%s826 + $0x28] sm:$0xf]
      %v838 = vld [vmem:[%s826 + $0x2c] sm:$0xf]
      %v839 = vld [vmem:[%s826 + $0x30] sm:$0x3]
      %v840 = vld [vmem:[%s2] sm:$0xf]
      %v841 = vld [vmem:[%s2 + $0x4] sm:$0xf]
      %v842 = vld [vmem:[%s2 + $0x8] sm:$0xf]
      %v843 = vld [vmem:[%s2 + $0xc] sm:$0x3]
      %v844 = vld [vmem:[%s3] sm:$0x1]
      %v846 = vperm.slane %v844, 0
      %v861 = vunpack.c.l.b16 %v827
      %v862 = vunpack.c.l.b16 %v828
      %v863 = vunpack.c.l.b16 %v829
      %v864 = vunpack.c.l.b16 %v830
      %v865 = vunpack.c.l.b16 %v831
      %v866 = vunpack.c.l.b16 %v832
      %v867 = vunpack.c.l.b16 %v833
      %v868 = vunpack.c.l.b16 %v834
      %v869 = vunpack.c.l.b16 %v835
      %v870 = vunpack.c.l.b16 %v836
      %v871 = vunpack.c.l.b16 %v837
      %v872 = vunpack.c.l.b16 %v838
      %v873 = vunpack.c.l.b16 %v839
      %v874 = vpack.c.b16 %v862, %v861
      %v875 = vpack.c.b16 %v864, %v863
      %v876 = vpack.c.b16 %v866, %v865
      %v877 = vpack.c.b16 %v868, %v867
      %v878 = vpack.c.b16 %v870, %v869
      %v879 = vpack.c.b16 %v872, %v871
      %v880 = vpack.c.b16 %v873, %v873
      %v885 = vunpack.c.l.b16 %v840
      %v886 = vunpack.c.l.b16 %v841
      %v887 = vunpack.c.l.b16 %v842
      %v888 = vunpack.c.l.b16 %v843
      %v889 = vpack.c.b16 %v886, %v885
      %v890 = vpack.c.b16 %v888, %v887
      %v893 = vsel %vm650, %v874, 0
      %v896 = vsel %vm650, %v875, 0
      %v899 = vsel %vm650, %v876, 0
      %v902 = vsel %vm650, %v877, 0
      %v905 = vsel %vm650, %v878, 0
      %v908 = vsel %vm650, %v879, 0
      %v911 = vsel %vm650, %v880, 0
      %v914 = vand.u32 %v890, %v675
      %916 = vmatpush.bf16.msra.mxu0 0
      %917 = vmatpush.bf16.msra.mxu0 0
      %918 = vmatpush.bf16.msra.mxu0 0
      %919 = vmatpush.bf16.msra.mxu0 0
      %920 = vmatpush.bf16.msra.mxu0 0
      %921 = vmatpush.bf16.msra.mxu0 0
      %922 = vmatpush.bf16.msra.mxu0 %v914
      %923 = vmatpush.bf16.msra.mxu0 %v889
      %924 = vmatmul.bf16.gmra.mxu0 %v893
      %v925 = vpop.f32.mrf.mxu0
      %v926 = vadd.f32 %v846, %v925
      %v927 = vpop.f32.mrf.mxu0
      %v928 = vadd.f32 %v846, %v927
      %929 = vmatmul.bf16.gmra.mxu0 %v896
      %v930 = vpop.f32.mrf.mxu0
      %v931 = vadd.f32 %v846, %v930
      %v932 = vpop.f32.mrf.mxu0
      %v933 = vadd.f32 %v846, %v932
      %934 = vmatmul.bf16.gmra.mxu0 %v899
      %v935 = vpop.f32.mrf.mxu0
      %v936 = vadd.f32 %v846, %v935
      %v937 = vpop.f32.mrf.mxu0
      %v938 = vadd.f32 %v846, %v937
      %939 = vmatmul.bf16.gmra.mxu0 %v902
      %v940 = vpop.f32.mrf.mxu0
      %v941 = vadd.f32 %v846, %v940
      %v942 = vpop.f32.mrf.mxu0
      %v943 = vadd.f32 %v846, %v942
      %944 = vmatmul.bf16.gmra.mxu0 %v905
      %v945 = vpop.f32.mrf.mxu0
      %v946 = vadd.f32 %v846, %v945
      %v947 = vpop.f32.mrf.mxu0
      %v948 = vadd.f32 %v846, %v947
      %949 = vmatmul.bf16.gmra.mxu0 %v908
      %v950 = vpop.f32.mrf.mxu0
      %v951 = vadd.f32 %v846, %v950
      %v952 = vpop.f32.mrf.mxu0
      %v953 = vadd.f32 %v846, %v952
      %954 = vmatmul.bf16.gmra.mxu0 %v911
      %v955 = vpop.f32.mrf.mxu0
      %v956 = vadd.f32 %v846, %v955
      %v957 = vpop.f32.mrf.mxu0
      %958 = vdwg.mxu0
      %v959 = vmax.f32 %v926, 0.0
      %v960 = vmax.f32 %v928, 0.0
      %v961 = vmax.f32 %v931, 0.0
      %v962 = vmax.f32 %v933, 0.0
      %v963 = vmax.f32 %v936, 0.0
      %v964 = vmax.f32 %v938, 0.0
      %v965 = vmax.f32 %v941, 0.0
      %v966 = vmax.f32 %v943, 0.0
      %v967 = vmax.f32 %v946, 0.0
      %v968 = vmax.f32 %v948, 0.0
      %v969 = vmax.f32 %v951, 0.0
      %v970 = vmax.f32 %v953, 0.0
      %v971 = vmax.f32 %v956, 0.0
      %v972 = vmul.f32 %v959, %v738
      %v973 = vmul.f32 %v960, %v743
      %v974 = vmul.f32 %v961, %v748
      %v975 = vmul.f32 %v962, %v753
      %v976 = vmul.f32 %v963, %v758
      %v977 = vmul.f32 %v964, %v763
      %v978 = vmul.f32 %v965, %v768
      %v979 = vmul.f32 %v966, %v773
      %v980 = vmul.f32 %v967, %v778
      %v981 = vmul.f32 %v968, %v783
      %v982 = vmul.f32 %v969, %v788
      %v983 = vmul.f32 %v970, %v793
      %v984 = vmul.f32 %v971, %v798
      %s985 = scalar_lea.vmem [#allocation2], 136
      %986 = vst.msk [vmem:[%s985 + $0x10] sm:$0xff] %vm428, %v972
      %987 = vst.msk [vmem:[%s985 + $0x18] sm:$0xff] %vm428, %v973
      %988 = vst.msk [vmem:[%s985 + $0x20] sm:$0xff] %vm428, %v974
      %989 = vst.msk [vmem:[%s985 + $0x28] sm:$0xff] %vm428, %v975
      %990 = vst.msk [vmem:[%s985 + $0x30] sm:$0xff] %vm428, %v976
      %991 = vst.msk [vmem:[%s985 + $0x38] sm:$0xff] %vm428, %v977
      %992 = vst.msk [vmem:[%s985 + $0x40] sm:$0xff] %vm428, %v978
      %993 = vst.msk [vmem:[%s985 + $0x48] sm:$0xff] %vm428, %v979
      %994 = vst.msk [vmem:[%s985 + $0x50] sm:$0xff] %vm428, %v980
      %995 = vst.msk [vmem:[%s985 + $0x58] sm:$0xff] %vm428, %v981
      %996 = vst.msk [vmem:[%s985 + $0x60] sm:$0xff] %vm428, %v982
      %997 = vst.msk [vmem:[%s985 + $0x68] sm:$0xff] %vm428, %v983
      %998 = vst.msk [vmem:[%s985 + $0x70] sm:$0xf] %vm445, %v984
      %s999 = scalar_lea.vmem %s408, 104
      %v1000 = vld [vmem:[%s999] sm:$0xf]
      %v1001 = vld [vmem:[%s999 + $0x4] sm:$0xf]
      %v1002 = vld [vmem:[%s999 + $0x8] sm:$0xf]
      %v1003 = vld [vmem:[%s999 + $0xc] sm:$0xf]
      %v1004 = vld [vmem:[%s999 + $0x10] sm:$0xf]
      %v1005 = vld [vmem:[%s999 + $0x14] sm:$0xf]
      %v1006 = vld [vmem:[%s999 + $0x18] sm:$0xf]
      %v1007 = vld [vmem:[%s999 + $0x1c] sm:$0xf]
      %v1008 = vld [vmem:[%s999 + $0x20] sm:$0xf]
      %v1009 = vld [vmem:[%s999 + $0x24] sm:$0xf]
      %v1010 = vld [vmem:[%s999 + $0x28] sm:$0xf]
      %v1011 = vld [vmem:[%s999 + $0x2c] sm:$0xf]
      %v1012 = vld [vmem:[%s999 + $0x30] sm:$0x3]
      %v1013 = vld [vmem:[%s2] sm:$0xf]
      %v1014 = vld [vmem:[%s2 + $0x4] sm:$0xf]
      %v1015 = vld [vmem:[%s2 + $0x8] sm:$0xf]
      %v1016 = vld [vmem:[%s2 + $0xc] sm:$0x3]
      %v1017 = vld [vmem:[%s3] sm:$0x1]
      %v1019 = vperm.slane %v1017, 0
      %v1034 = vunpack.c.l.b16 %v1000
      %v1035 = vunpack.c.l.b16 %v1001
      %v1036 = vunpack.c.l.b16 %v1002
      %v1037 = vunpack.c.l.b16 %v1003
      %v1038 = vunpack.c.l.b16 %v1004
      %v1039 = vunpack.c.l.b16 %v1005
      %v1040 = vunpack.c.l.b16 %v1006
      %v1041 = vunpack.c.l.b16 %v1007
      %v1042 = vunpack.c.l.b16 %v1008
      %v1043 = vunpack.c.l.b16 %v1009
      %v1044 = vunpack.c.l.b16 %v1010
      %v1045 = vunpack.c.l.b16 %v1011
      %v1046 = vunpack.c.l.b16 %v1012
      %v1047 = vpack.c.b16 %v1035, %v1034
      %v1048 = vpack.c.b16 %v1037, %v1036
      %v1049 = vpack.c.b16 %v1039, %v1038
      %v1050 = vpack.c.b16 %v1041, %v1040
      %v1051 = vpack.c.b16 %v1043, %v1042
      %v1052 = vpack.c.b16 %v1045, %v1044
      %v1053 = vpack.c.b16 %v1046, %v1046
      %v1058 = vunpack.c.l.b16 %v1013
      %v1059 = vunpack.c.l.b16 %v1014
      %v1060 = vunpack.c.l.b16 %v1015
      %v1061 = vunpack.c.l.b16 %v1016
      %v1062 = vpack.c.b16 %v1059, %v1058
      %v1063 = vpack.c.b16 %v1061, %v1060
      %v1066 = vsel %vm650, %v1047, 0
      %v1069 = vsel %vm650, %v1048, 0
      %v1072 = vsel %vm650, %v1049, 0
      %v1075 = vsel %vm650, %v1050, 0
      %v1078 = vsel %vm650, %v1051, 0
      %v1081 = vsel %vm650, %v1052, 0
      %v1084 = vsel %vm650, %v1053, 0
      %v1087 = vand.u32 %v1063, %v675
      %1089 = vmatpush.bf16.msra.mxu0 0
      %1090 = vmatpush.bf16.msra.mxu0 0
      %1091 = vmatpush.bf16.msra.mxu0 0
      %1092 = vmatpush.bf16.msra.mxu0 0
      %1093 = vmatpush.bf16.msra.mxu0 0
      %1094 = vmatpush.bf16.msra.mxu0 0
      %1095 = vmatpush.bf16.msra.mxu0 %v1087
      %1096 = vmatpush.bf16.msra.mxu0 %v1062
      %1097 = vmatmul.bf16.gmra.mxu0 %v1066
      %v1098 = vpop.f32.mrf.mxu0
      %v1099 = vadd.f32 %v1019, %v1098
      %v1100 = vpop.f32.mrf.mxu0
      %v1101 = vadd.f32 %v1019, %v1100
      %1102 = vmatmul.bf16.gmra.mxu0 %v1069
      %v1103 = vpop.f32.mrf.mxu0
      %v1104 = vadd.f32 %v1019, %v1103
      %v1105 = vpop.f32.mrf.mxu0
      %v1106 = vadd.f32 %v1019, %v1105
      %1107 = vmatmul.bf16.gmra.mxu0 %v1072
      %v1108 = vpop.f32.mrf.mxu0
      %v1109 = vadd.f32 %v1019, %v1108
      %v1110 = vpop.f32.mrf.mxu0
      %v1111 = vadd.f32 %v1019, %v1110
      %1112 = vmatmul.bf16.gmra.mxu0 %v1075
      %v1113 = vpop.f32.mrf.mxu0
      %v1114 = vadd.f32 %v1019, %v1113
      %v1115 = vpop.f32.mrf.mxu0
      %v1116 = vadd.f32 %v1019, %v1115
      %1117 = vmatmul.bf16.gmra.mxu0 %v1078
      %v1118 = vpop.f32.mrf.mxu0
      %v1119 = vadd.f32 %v1019, %v1118
      %v1120 = vpop.f32.mrf.mxu0
      %v1121 = vadd.f32 %v1019, %v1120
      %1122 = vmatmul.bf16.gmra.mxu0 %v1081
      %v1123 = vpop.f32.mrf.mxu0
      %v1124 = vadd.f32 %v1019, %v1123
      %v1125 = vpop.f32.mrf.mxu0
      %v1126 = vadd.f32 %v1019, %v1125
      %1127 = vmatmul.bf16.gmra.mxu0 %v1084
      %v1128 = vpop.f32.mrf.mxu0
      %v1129 = vadd.f32 %v1019, %v1128
      %v1130 = vpop.f32.mrf.mxu0
      %1131 = vdwg.mxu0
      %v1132 = vmax.f32 %v1099, 0.0
      %v1133 = vmax.f32 %v1101, 0.0
      %v1134 = vmax.f32 %v1104, 0.0
      %v1135 = vmax.f32 %v1106, 0.0
      %v1136 = vmax.f32 %v1109, 0.0
      %v1137 = vmax.f32 %v1111, 0.0
      %v1138 = vmax.f32 %v1114, 0.0
      %v1139 = vmax.f32 %v1116, 0.0
      %v1140 = vmax.f32 %v1119, 0.0
      %v1141 = vmax.f32 %v1121, 0.0
      %v1142 = vmax.f32 %v1124, 0.0
      %v1143 = vmax.f32 %v1126, 0.0
      %v1144 = vmax.f32 %v1129, 0.0
      %v1145 = vmul.f32 %v1132, %v738
      %v1146 = vmul.f32 %v1133, %v743
      %v1147 = vmul.f32 %v1134, %v748
      %v1148 = vmul.f32 %v1135, %v753
      %v1149 = vmul.f32 %v1136, %v758
      %v1150 = vmul.f32 %v1137, %v763
      %v1151 = vmul.f32 %v1138, %v768
      %v1152 = vmul.f32 %v1139, %v773
      %v1153 = vmul.f32 %v1140, %v778
      %v1154 = vmul.f32 %v1141, %v783
      %v1155 = vmul.f32 %v1142, %v788
      %v1156 = vmul.f32 %v1143, %v793
      %v1157 = vmul.f32 %v1144, %v798
      %s1158 = scalar_lea.vmem [#allocation2], 272
      %1159 = vst.msk [vmem:[%s1158 + $0x10] sm:$0xff] %vm428, %v1145
      %1160 = vst.msk [vmem:[%s1158 + $0x18] sm:$0xff] %vm428, %v1146
      %1161 = vst.msk [vmem:[%s1158 + $0x20] sm:$0xff] %vm428, %v1147
      %1162 = vst.msk [vmem:[%s1158 + $0x28] sm:$0xff] %vm428, %v1148
      %1163 = vst.msk [vmem:[%s1158 + $0x30] sm:$0xff] %vm428, %v1149
      %1164 = vst.msk [vmem:[%s1158 + $0x38] sm:$0xff] %vm428, %v1150
      %1165 = vst.msk [vmem:[%s1158 + $0x40] sm:$0xff] %vm428, %v1151
      %1166 = vst.msk [vmem:[%s1158 + $0x48] sm:$0xff] %vm428, %v1152
      %1167 = vst.msk [vmem:[%s1158 + $0x50] sm:$0xff] %vm428, %v1153
      %1168 = vst.msk [vmem:[%s1158 + $0x58] sm:$0xff] %vm428, %v1154
      %1169 = vst.msk [vmem:[%s1158 + $0x60] sm:$0xff] %vm428, %v1155
      %1170 = vst.msk [vmem:[%s1158 + $0x68] sm:$0xff] %vm428, %v1156
      %1171 = vst.msk [vmem:[%s1158 + $0x70] sm:$0xf] %vm445, %v1157
      %s1172 = scalar_lea.vmem %s408, 156
      %v1173 = vld [vmem:[%s1172] sm:$0xf]
      %v1174 = vld [vmem:[%s1172 + $0x4] sm:$0xf]
      %v1175 = vld [vmem:[%s1172 + $0x8] sm:$0xf]
      %v1176 = vld [vmem:[%s1172 + $0xc] sm:$0xf]
      %v1177 = vld [vmem:[%s1172 + $0x10] sm:$0xf]
      %v1178 = vld [vmem:[%s1172 + $0x14] sm:$0xf]
      %v1179 = vld [vmem:[%s1172 + $0x18] sm:$0xf]
      %v1180 = vld [vmem:[%s1172 + $0x1c] sm:$0xf]
      %v1181 = vld [vmem:[%s1172 + $0x20] sm:$0xf]
      %v1182 = vld [vmem:[%s1172 + $0x24] sm:$0xf]
      %v1183 = vld [vmem:[%s1172 + $0x28] sm:$0xf]
      %v1184 = vld [vmem:[%s1172 + $0x2c] sm:$0xf]
      %v1185 = vld [vmem:[%s1172 + $0x30] sm:$0x3]
      %v1186 = vld [vmem:[%s2] sm:$0xf]
      %v1187 = vld [vmem:[%s2 + $0x4] sm:$0xf]
      %v1188 = vld [vmem:[%s2 + $0x8] sm:$0xf]
      %v1189 = vld [vmem:[%s2 + $0xc] sm:$0x3]
      %v1190 = vld [vmem:[%s3] sm:$0x1]
      %v1192 = vperm.slane %v1190, 0
      %v1207 = vunpack.c.l.b16 %v1173
      %v1208 = vunpack.c.l.b16 %v1174
      %v1209 = vunpack.c.l.b16 %v1175
      %v1210 = vunpack.c.l.b16 %v1176
      %v1211 = vunpack.c.l.b16 %v1177
      %v1212 = vunpack.c.l.b16 %v1178
      %v1213 = vunpack.c.l.b16 %v1179
      %v1214 = vunpack.c.l.b16 %v1180
      %v1215 = vunpack.c.l.b16 %v1181
      %v1216 = vunpack.c.l.b16 %v1182
      %v1217 = vunpack.c.l.b16 %v1183
      %v1218 = vunpack.c.l.b16 %v1184
      %v1219 = vunpack.c.l.b16 %v1185
      %v1220 = vpack.c.b16 %v1208, %v1207
      %v1221 = vpack.c.b16 %v1210, %v1209
      %v1222 = vpack.c.b16 %v1212, %v1211
      %v1223 = vpack.c.b16 %v1214, %v1213
      %v1224 = vpack.c.b16 %v1216, %v1215
      %v1225 = vpack.c.b16 %v1218, %v1217
      %v1226 = vpack.c.b16 %v1219, %v1219
      %v1231 = vunpack.c.l.b16 %v1186
      %v1232 = vunpack.c.l.b16 %v1187
      %v1233 = vunpack.c.l.b16 %v1188
      %v1234 = vunpack.c.l.b16 %v1189
      %v1235 = vpack.c.b16 %v1232, %v1231
      %v1236 = vpack.c.b16 %v1234, %v1233
      %v1239 = vsel %vm650, %v1220, 0
      %v1242 = vsel %vm650, %v1221, 0
      %v1245 = vsel %vm650, %v1222, 0
      %v1248 = vsel %vm650, %v1223, 0
      %v1251 = vsel %vm650, %v1224, 0
      %v1254 = vsel %vm650, %v1225, 0
      %v1257 = vsel %vm650, %v1226, 0
      %v1260 = vand.u32 %v1236, %v675
      %1262 = vmatpush.bf16.msra.mxu0 0
      %1263 = vmatpush.bf16.msra.mxu0 0
      %1264 = vmatpush.bf16.msra.mxu0 0
      %1265 = vmatpush.bf16.msra.mxu0 0
      %1266 = vmatpush.bf16.msra.mxu0 0
      %1267 = vmatpush.bf16.msra.mxu0 0
      %1268 = vmatpush.bf16.msra.mxu0 %v1260
      %1269 = vmatpush.bf16.msra.mxu0 %v1235
      %1270 = vmatmul.bf16.gmra.mxu0 %v1239
      %v1271 = vpop.f32.mrf.mxu0
      %v1272 = vadd.f32 %v1192, %v1271
      %v1273 = vpop.f32.mrf.mxu0
      %v1274 = vadd.f32 %v1192, %v1273
      %1275 = vmatmul.bf16.gmra.mxu0 %v1242
      %v1276 = vpop.f32.mrf.mxu0
      %v1277 = vadd.f32 %v1192, %v1276
      %v1278 = vpop.f32.mrf.mxu0
      %v1279 = vadd.f32 %v1192, %v1278
      %1280 = vmatmul.bf16.gmra.mxu0 %v1245
      %v1281 = vpop.f32.mrf.mxu0
      %v1282 = vadd.f32 %v1192, %v1281
      %v1283 = vpop.f32.mrf.mxu0
      %v1284 = vadd.f32 %v1192, %v1283
      %1285 = vmatmul.bf16.gmra.mxu0 %v1248
      %v1286 = vpop.f32.mrf.mxu0
      %v1287 = vadd.f32 %v1192, %v1286
      %v1288 = vpop.f32.mrf.mxu0
      %v1289 = vadd.f32 %v1192, %v1288
      %1290 = vmatmul.bf16.gmra.mxu0 %v1251
      %v1291 = vpop.f32.mrf.mxu0
      %v1292 = vadd.f32 %v1192, %v1291
      %v1293 = vpop.f32.mrf.mxu0
      %v1294 = vadd.f32 %v1192, %v1293
      %1295 = vmatmul.bf16.gmra.mxu0 %v1254
      %v1296 = vpop.f32.mrf.mxu0
      %v1297 = vadd.f32 %v1192, %v1296
      %v1298 = vpop.f32.mrf.mxu0
      %v1299 = vadd.f32 %v1192, %v1298
      %1300 = vmatmul.bf16.gmra.mxu0 %v1257
      %v1301 = vpop.f32.mrf.mxu0
      %v1302 = vadd.f32 %v1192, %v1301
      %v1303 = vpop.f32.mrf.mxu0
      %1304 = vdwg.mxu0
      %v1305 = vmax.f32 %v1272, 0.0
      %v1306 = vmax.f32 %v1274, 0.0
      %v1307 = vmax.f32 %v1277, 0.0
      %v1308 = vmax.f32 %v1279, 0.0
      %v1309 = vmax.f32 %v1282, 0.0
      %v1310 = vmax.f32 %v1284, 0.0
      %v1311 = vmax.f32 %v1287, 0.0
      %v1312 = vmax.f32 %v1289, 0.0
      %v1313 = vmax.f32 %v1292, 0.0
      %v1314 = vmax.f32 %v1294, 0.0
      %v1315 = vmax.f32 %v1297, 0.0
      %v1316 = vmax.f32 %v1299, 0.0
      %v1317 = vmax.f32 %v1302, 0.0
      %v1318 = vmul.f32 %v1305, %v738
      %v1319 = vmul.f32 %v1306, %v743
      %v1320 = vmul.f32 %v1307, %v748
      %v1321 = vmul.f32 %v1308, %v753
      %v1322 = vmul.f32 %v1309, %v758
      %v1323 = vmul.f32 %v1310, %v763
      %v1324 = vmul.f32 %v1311, %v768
      %v1325 = vmul.f32 %v1312, %v773
      %v1326 = vmul.f32 %v1313, %v778
      %v1327 = vmul.f32 %v1314, %v783
      %v1328 = vmul.f32 %v1315, %v788
      %v1329 = vmul.f32 %v1316, %v793
      %v1330 = vmul.f32 %v1317, %v798
      %s1331 = scalar_lea.vmem [#allocation2], 408
      %1332 = vst.msk [vmem:[%s1331 + $0x10] sm:$0xff] %vm428, %v1318
      %1333 = vst.msk [vmem:[%s1331 + $0x18] sm:$0xff] %vm428, %v1319
      %1334 = vst.msk [vmem:[%s1331 + $0x20] sm:$0xff] %vm428, %v1320
      %1335 = vst.msk [vmem:[%s1331 + $0x28] sm:$0xff] %vm428, %v1321
      %1336 = vst.msk [vmem:[%s1331 + $0x30] sm:$0xff] %vm428, %v1322
      %1337 = vst.msk [vmem:[%s1331 + $0x38] sm:$0xff] %vm428, %v1323
      %1338 = vst.msk [vmem:[%s1331 + $0x40] sm:$0xff] %vm428, %v1324
      %1339 = vst.msk [vmem:[%s1331 + $0x48] sm:$0xff] %vm428, %v1325
      %1340 = vst.msk [vmem:[%s1331 + $0x50] sm:$0xff] %vm428, %v1326
      %1341 = vst.msk [vmem:[%s1331 + $0x58] sm:$0xff] %vm428, %v1327
      %1342 = vst.msk [vmem:[%s1331 + $0x60] sm:$0xff] %vm428, %v1328
      %1343 = vst.msk [vmem:[%s1331 + $0x68] sm:$0xff] %vm428, %v1329
      %1344 = vst.msk [vmem:[%s1331 + $0x70] sm:$0xf] %vm445, %v1330
      %v1345 = vld [vmem:[%s1331 + $0x5] sm:$0xff]
      %v1346 = vld [vmem:[%s1331 + $0xd] sm:$0xff]
      %v1347 = vld [vmem:[%s1331 + $0x15] sm:$0xff]
      %v1348 = vld [vmem:[%s1331 + $0x1d] sm:$0xff]
      %v1349 = vld [vmem:[%s1331 + $0x25] sm:$0xff]
      %v1350 = vld [vmem:[%s1331 + $0x2d] sm:$0xff]
      %v1351 = vld [vmem:[%s1331 + $0x35] sm:$0xff]
      %v1352 = vld [vmem:[%s1331 + $0x3d] sm:$0xff]
      %v1353 = vld [vmem:[%s1331 + $0x45] sm:$0xff]
      %v1354 = vld [vmem:[%s1331 + $0x4d] sm:$0xff]
      %v1355 = vld [vmem:[%s1331 + $0x55] sm:$0xff]
      %v1356 = vld [vmem:[%s1331 + $0x5d] sm:$0xff]
      %v1357 = vld [vmem:[%s1331 + $0x65] sm:$0xf]
      %v1358 = vpack.c.bf16 %v1346, %v1345
      %v1359 = vpack.c.bf16 %v1348, %v1347
      %v1360 = vpack.c.bf16 %v1350, %v1349
      %v1361 = vpack.c.bf16 %v1352, %v1351
      %v1362 = vpack.c.bf16 %v1354, %v1353
      %v1363 = vpack.c.bf16 %v1356, %v1355
      %v1364 = vpack.c.bf16 %v1357, %v1357
      %v1365 = vld [vmem:[%s4] sm:$0xf]
      %v1366 = vld [vmem:[%s4 + $0x4] sm:$0xf]
      %v1367 = vld [vmem:[%s1158 + $0x6] sm:$0xff]
      %v1368 = vld [vmem:[%s1158 + $0xe] sm:$0xff]
      %v1369 = vld [vmem:[%s1158 + $0x16] sm:$0xff]
      %v1370 = vld [vmem:[%s1158 + $0x1e] sm:$0xff]
      %v1371 = vld [vmem:[%s1158 + $0x26] sm:$0xff]
      %v1372 = vld [vmem:[%s1158 + $0x2e] sm:$0xff]
      %v1373 = vld [vmem:[%s1158 + $0x36] sm:$0xff]
      %v1374 = vld [vmem:[%s1158 + $0x3e] sm:$0xff]
      %v1375 = vld [vmem:[%s1158 + $0x46] sm:$0xff]
      %v1376 = vld [vmem:[%s1158 + $0x4e] sm:$0xff]
      %v1377 = vld [vmem:[%s1158 + $0x56] sm:$0xff]
      %v1378 = vld [vmem:[%s1158 + $0x5e] sm:$0xff]
      %v1379 = vld [vmem:[%s1158 + $0x66] sm:$0xf]
      %v1380 = vpack.c.bf16 %v1368, %v1367
      %v1381 = vpack.c.bf16 %v1370, %v1369
      %v1382 = vpack.c.bf16 %v1372, %v1371
      %v1383 = vpack.c.bf16 %v1374, %v1373
      %v1384 = vpack.c.bf16 %v1376, %v1375
      %v1385 = vpack.c.bf16 %v1378, %v1377
      %v1386 = vpack.c.bf16 %v1379, %v1379
      %s1387 = scalar_lea.vmem %s4, 8
      %v1388 = vld [vmem:[%s1387] sm:$0xf]
      %v1389 = vld [vmem:[%s1387 + $0x4] sm:$0xf]
      %v1392 = vunpack.c.l.b16 %v1388
      %v1393 = vunpack.c.l.b16 %v1389
      %v1394 = vpack.c.b16 %v1393, %v1392
      %v1397 = vsel %vm428, %v1380, 0
      %v1400 = vsel %vm428, %v1381, 0
      %v1403 = vsel %vm428, %v1382, 0
      %v1406 = vsel %vm428, %v1383, 0
      %v1409 = vsel %vm428, %v1384, 0
      %v1412 = vsel %vm428, %v1385, 0
      %v1415 = vsel %vm428, %v1386, 0
      %1417 = vmatpush.bf16.msra.mxu0 0
      %1418 = vmatpush.bf16.msra.mxu0 0
      %1419 = vmatpush.bf16.msra.mxu0 0
      %1420 = vmatpush.bf16.msra.mxu0 0
      %1421 = vmatpush.bf16.msra.mxu0 0
      %1422 = vmatpush.bf16.msra.mxu0 0
      %1423 = vmatpush.bf16.msra.mxu0 0
      %1424 = vmatpush.bf16.msra.mxu0 %v1394
      %1425 = vmatmul.bf16.gmra.mxu0 %v1397
      %v1426 = vpop.f32.mrf.mxu0
      %v1427 = vadd.f32 0.0, %v1426
      %v1428 = vpop.f32.mrf.mxu0
      %v1429 = vadd.f32 0.0, %v1428
      %1430 = vmatmul.bf16.gmra.mxu0 %v1400
      %v1431 = vpop.f32.mrf.mxu0
      %v1432 = vadd.f32 0.0, %v1431
      %v1433 = vpop.f32.mrf.mxu0
      %v1434 = vadd.f32 0.0, %v1433
      %1435 = vmatmul.bf16.gmra.mxu0 %v1403
      %v1436 = vpop.f32.mrf.mxu0
      %v1437 = vadd.f32 0.0, %v1436
      %v1438 = vpop.f32.mrf.mxu0
      %v1439 = vadd.f32 0.0, %v1438
      %1440 = vmatmul.bf16.gmra.mxu0 %v1406
      %v1441 = vpop.f32.mrf.mxu0
      %v1442 = vadd.f32 0.0, %v1441
      %v1443 = vpop.f32.mrf.mxu0
      %v1444 = vadd.f32 0.0, %v1443
      %1445 = vmatmul.bf16.gmra.mxu0 %v1409
      %v1446 = vpop.f32.mrf.mxu0
      %v1447 = vadd.f32 0.0, %v1446
      %v1448 = vpop.f32.mrf.mxu0
      %v1449 = vadd.f32 0.0, %v1448
      %1450 = vmatmul.bf16.gmra.mxu0 %v1412
      %v1451 = vpop.f32.mrf.mxu0
      %v1452 = vadd.f32 0.0, %v1451
      %v1453 = vpop.f32.mrf.mxu0
      %v1454 = vadd.f32 0.0, %v1453
      %1455 = vmatmul.bf16.gmra.mxu0 %v1415
      %v1456 = vpop.f32.mrf.mxu0
      %v1457 = vadd.f32 0.0, %v1456
      %v1458 = vpop.f32.mrf.mxu0
      %1459 = vdwg.mxu0
      %v1462 = vunpack.c.l.b16 %v1365
      %v1463 = vunpack.c.l.b16 %v1366
      %v1464 = vpack.c.b16 %v1463, %v1462
      %v1467 = vsel %vm428, %v1358, 0
      %v1470 = vsel %vm428, %v1359, 0
      %v1473 = vsel %vm428, %v1360, 0
      %v1476 = vsel %vm428, %v1361, 0
      %v1479 = vsel %vm428, %v1362, 0
      %v1482 = vsel %vm428, %v1363, 0
      %v1485 = vsel %vm428, %v1364, 0
      %1487 = vmatpush.bf16.msra.mxu0 0
      %1488 = vmatpush.bf16.msra.mxu0 0
      %1489 = vmatpush.bf16.msra.mxu0 0
      %1490 = vmatpush.bf16.msra.mxu0 0
      %1491 = vmatpush.bf16.msra.mxu0 0
      %1492 = vmatpush.bf16.msra.mxu0 0
      %1493 = vmatpush.bf16.msra.mxu0 0
      %1494 = vmatpush.bf16.msra.mxu0 %v1464
      %1495 = vmatmul.bf16.gmra.mxu0 %v1467
      %v1496 = vpop.f32.mrf.mxu0
      %v1497 = vadd.f32 %v1427, %v1496
      %v1498 = vpop.f32.mrf.mxu0
      %v1499 = vadd.f32 %v1429, %v1498
      %1500 = vmatmul.bf16.gmra.mxu0 %v1470
      %v1501 = vpop.f32.mrf.mxu0
      %v1502 = vadd.f32 %v1432, %v1501
      %v1503 = vpop.f32.mrf.mxu0
      %v1504 = vadd.f32 %v1434, %v1503
      %1505 = vmatmul.bf16.gmra.mxu0 %v1473
      %v1506 = vpop.f32.mrf.mxu0
      %v1507 = vadd.f32 %v1437, %v1506
      %v1508 = vpop.f32.mrf.mxu0
      %v1509 = vadd.f32 %v1439, %v1508
      %1510 = vmatmul.bf16.gmra.mxu0 %v1476
      %v1511 = vpop.f32.mrf.mxu0
      %v1512 = vadd.f32 %v1442, %v1511
      %v1513 = vpop.f32.mrf.mxu0
      %v1514 = vadd.f32 %v1444, %v1513
      %1515 = vmatmul.bf16.gmra.mxu0 %v1479
      %v1516 = vpop.f32.mrf.mxu0
      %v1517 = vadd.f32 %v1447, %v1516
      %v1518 = vpop.f32.mrf.mxu0
      %v1519 = vadd.f32 %v1449, %v1518
      %1520 = vmatmul.bf16.gmra.mxu0 %v1482
      %v1521 = vpop.f32.mrf.mxu0
      %v1522 = vadd.f32 %v1452, %v1521
      %v1523 = vpop.f32.mrf.mxu0
      %v1524 = vadd.f32 %v1454, %v1523
      %1525 = vmatmul.bf16.gmra.mxu0 %v1485
      %v1526 = vpop.f32.mrf.mxu0
      %v1527 = vadd.f32 %v1457, %v1526
      %v1528 = vpop.f32.mrf.mxu0
      %1529 = vdwg.mxu0
      %v1530 = vld [vmem:[%s1331 + $0x6] sm:$0xff]
      %v1531 = vld [vmem:[%s1331 + $0xe] sm:$0xff]
      %v1532 = vld [vmem:[%s1331 + $0x16] sm:$0xff]
      %v1533 = vld [vmem:[%s1331 + $0x1e] sm:$0xff]
      %v1534 = vld [vmem:[%s1331 + $0x26] sm:$0xff]
      %v1535 = vld [vmem:[%s1331 + $0x2e] sm:$0xff]
      %v1536 = vld [vmem:[%s1331 + $0x36] sm:$0xff]
      %v1537 = vld [vmem:[%s1331 + $0x3e] sm:$0xff]
      %v1538 = vld [vmem:[%s1331 + $0x46] sm:$0xff]
      %v1539 = vld [vmem:[%s1331 + $0x4e] sm:$0xff]
      %v1540 = vld [vmem:[%s1331 + $0x56] sm:$0xff]
      %v1541 = vld [vmem:[%s1331 + $0x5e] sm:$0xff]
      %v1542 = vld [vmem:[%s1331 + $0x66] sm:$0xf]
      %v1543 = vpack.c.bf16 %v1531, %v1530
      %v1544 = vpack.c.bf16 %v1533, %v1532
      %v1545 = vpack.c.bf16 %v1535, %v1534
      %v1546 = vpack.c.bf16 %v1537, %v1536
      %v1547 = vpack.c.bf16 %v1539, %v1538
      %v1548 = vpack.c.bf16 %v1541, %v1540
      %v1549 = vpack.c.bf16 %v1542, %v1542
      %s1550 = scalar_lea.vmem %s4, 16
      %v1551 = vld [vmem:[%s1550] sm:$0xf]
      %v1552 = vld [vmem:[%s1550 + $0x4] sm:$0xf]
      %v1555 = vunpack.c.l.b16 %v1551
      %v1556 = vunpack.c.l.b16 %v1552
      %v1557 = vpack.c.b16 %v1556, %v1555
      %v1560 = vsel %vm428, %v1543, 0
      %v1563 = vsel %vm428, %v1544, 0
      %v1566 = vsel %vm428, %v1545, 0
      %v1569 = vsel %vm428, %v1546, 0
      %v1572 = vsel %vm428, %v1547, 0
      %v1575 = vsel %vm428, %v1548, 0
      %v1578 = vsel %vm428, %v1549, 0
      %1580 = vmatpush.bf16.msra.mxu0 0
      %1581 = vmatpush.bf16.msra.mxu0 0
      %1582 = vmatpush.bf16.msra.mxu0 0
      %1583 = vmatpush.bf16.msra.mxu0 0
      %1584 = vmatpush.bf16.msra.mxu0 0
      %1585 = vmatpush.bf16.msra.mxu0 0
      %1586 = vmatpush.bf16.msra.mxu0 0
      %1587 = vmatpush.bf16.msra.mxu0 %v1557
      %1588 = vmatmul.bf16.gmra.mxu0 %v1560
      %v1589 = vpop.f32.mrf.mxu0
      %v1590 = vadd.f32 0.0, %v1589
      %v1591 = vpop.f32.mrf.mxu0
      %v1592 = vadd.f32 0.0, %v1591
      %1593 = vmatmul.bf16.gmra.mxu0 %v1563
      %v1594 = vpop.f32.mrf.mxu0
      %v1595 = vadd.f32 0.0, %v1594
      %v1596 = vpop.f32.mrf.mxu0
      %v1597 = vadd.f32 0.0, %v1596
      %1598 = vmatmul.bf16.gmra.mxu0 %v1566
      %v1599 = vpop.f32.mrf.mxu0
      %v1600 = vadd.f32 0.0, %v1599
      %v1601 = vpop.f32.mrf.mxu0
      %v1602 = vadd.f32 0.0, %v1601
      %1603 = vmatmul.bf16.gmra.mxu0 %v1569
      %v1604 = vpop.f32.mrf.mxu0
      %v1605 = vadd.f32 0.0, %v1604
      %v1606 = vpop.f32.mrf.mxu0
      %v1607 = vadd.f32 0.0, %v1606
      %1608 = vmatmul.bf16.gmra.mxu0 %v1572
      %v1609 = vpop.f32.mrf.mxu0
      %v1610 = vadd.f32 0.0, %v1609
      %v1611 = vpop.f32.mrf.mxu0
      %v1612 = vadd.f32 0.0, %v1611
      %1613 = vmatmul.bf16.gmra.mxu0 %v1575
      %v1614 = vpop.f32.mrf.mxu0
      %v1615 = vadd.f32 0.0, %v1614
      %v1616 = vpop.f32.mrf.mxu0
      %v1617 = vadd.f32 0.0, %v1616
      %1618 = vmatmul.bf16.gmra.mxu0 %v1578
      %v1619 = vpop.f32.mrf.mxu0
      %v1620 = vadd.f32 0.0, %v1619
      %v1621 = vpop.f32.mrf.mxu0
      %1622 = vdwg.mxu0
      %v1623 = vadd.f32 %v1497, %v1590
      %v1624 = vadd.f32 %v1499, %v1592
      %v1625 = vadd.f32 %v1502, %v1595
      %v1626 = vadd.f32 %v1504, %v1597
      %v1627 = vadd.f32 %v1507, %v1600
      %v1628 = vadd.f32 %v1509, %v1602
      %v1629 = vadd.f32 %v1512, %v1605
      %v1630 = vadd.f32 %v1514, %v1607
      %v1631 = vadd.f32 %v1517, %v1610
      %v1632 = vadd.f32 %v1519, %v1612
      %v1633 = vadd.f32 %v1522, %v1615
      %v1634 = vadd.f32 %v1524, %v1617
      %v1635 = vadd.f32 %v1527, %v1620
      %v1636 = vld [vmem:[%s985 + $0xf] sm:$0xff]
      %v1637 = vld [vmem:[%s985 + $0x17] sm:$0xff]
      %v1638 = vld [vmem:[%s985 + $0x1f] sm:$0xff]
      %v1639 = vld [vmem:[%s985 + $0x27] sm:$0xff]
      %v1640 = vld [vmem:[%s985 + $0x2f] sm:$0xff]
      %v1641 = vld [vmem:[%s985 + $0x37] sm:$0xff]
      %v1642 = vld [vmem:[%s985 + $0x3f] sm:$0xff]
      %v1643 = vld [vmem:[%s985 + $0x47] sm:$0xff]
      %v1644 = vld [vmem:[%s985 + $0x4f] sm:$0xff]
      %v1645 = vld [vmem:[%s985 + $0x57] sm:$0xff]
      %v1646 = vld [vmem:[%s985 + $0x5f] sm:$0xff]
      %v1647 = vld [vmem:[%s985 + $0x67] sm:$0xff]
      %v1648 = vld [vmem:[%s985 + $0x6f] sm:$0xf]
      %v1649 = vpack.c.bf16 %v1637, %v1636
      %v1650 = vpack.c.bf16 %v1639, %v1638
      %v1651 = vpack.c.bf16 %v1641, %v1640
      %v1652 = vpack.c.bf16 %v1643, %v1642
      %v1653 = vpack.c.bf16 %v1645, %v1644
      %v1654 = vpack.c.bf16 %v1647, %v1646
      %v1655 = vpack.c.bf16 %v1648, %v1648
      %s1656 = scalar_lea.vmem %s4, 24
      %v1657 = vld [vmem:[%s1656] sm:$0xf]
      %v1658 = vld [vmem:[%s1656 + $0x4] sm:$0xf]
      %v1661 = vunpack.c.l.b16 %v1657
      %v1662 = vunpack.c.l.b16 %v1658
      %v1663 = vpack.c.b16 %v1662, %v1661
      %v1666 = vsel %vm428, %v1649, 0
      %v1669 = vsel %vm428, %v1650, 0
      %v1672 = vsel %vm428, %v1651, 0
      %v1675 = vsel %vm428, %v1652, 0
      %v1678 = vsel %vm428, %v1653, 0
      %v1681 = vsel %vm428, %v1654, 0
      %v1684 = vsel %vm428, %v1655, 0
      %1686 = vmatpush.bf16.msra.mxu0 0
      %1687 = vmatpush.bf16.msra.mxu0 0
      %1688 = vmatpush.bf16.msra.mxu0 0
      %1689 = vmatpush.bf16.msra.mxu0 0
      %1690 = vmatpush.bf16.msra.mxu0 0
      %1691 = vmatpush.bf16.msra.mxu0 0
      %1692 = vmatpush.bf16.msra.mxu0 0
      %1693 = vmatpush.bf16.msra.mxu0 %v1663
      %1694 = vmatmul.bf16.gmra.mxu0 %v1666
      %v1695 = vpop.f32.mrf.mxu0
      %v1696 = vadd.f32 0.0, %v1695
      %v1697 = vpop.f32.mrf.mxu0
      %v1698 = vadd.f32 0.0, %v1697
      %1699 = vmatmul.bf16.gmra.mxu0 %v1669
      %v1700 = vpop.f32.mrf.mxu0
      %v1701 = vadd.f32 0.0, %v1700
      %v1702 = vpop.f32.mrf.mxu0
      %v1703 = vadd.f32 0.0, %v1702
      %1704 = vmatmul.bf16.gmra.mxu0 %v1672
      %v1705 = vpop.f32.mrf.mxu0
      %v1706 = vadd.f32 0.0, %v1705
      %v1707 = vpop.f32.mrf.mxu0
      %v1708 = vadd.f32 0.0, %v1707
      %1709 = vmatmul.bf16.gmra.mxu0 %v1675
      %v1710 = vpop.f32.mrf.mxu0
      %v1711 = vadd.f32 0.0, %v1710
      %v1712 = vpop.f32.mrf.mxu0
      %v1713 = vadd.f32 0.0, %v1712
      %1714 = vmatmul.bf16.gmra.mxu0 %v1678
      %v1715 = vpop.f32.mrf.mxu0
      %v1716 = vadd.f32 0.0, %v1715
      %v1717 = vpop.f32.mrf.mxu0
      %v1718 = vadd.f32 0.0, %v1717
      %1719 = vmatmul.bf16.gmra.mxu0 %v1681
      %v1720 = vpop.f32.mrf.mxu0
      %v1721 = vadd.f32 0.0, %v1720
      %v1722 = vpop.f32.mrf.mxu0
      %v1723 = vadd.f32 0.0, %v1722
      %1724 = vmatmul.bf16.gmra.mxu0 %v1684
      %v1725 = vpop.f32.mrf.mxu0
      %v1726 = vadd.f32 0.0, %v1725
      %v1727 = vpop.f32.mrf.mxu0
      %1728 = vdwg.mxu0
      %v1729 = vadd.f32 %v1623, %v1696
      %v1730 = vadd.f32 %v1624, %v1698
      %v1731 = vadd.f32 %v1625, %v1701
      %v1732 = vadd.f32 %v1626, %v1703
      %v1733 = vadd.f32 %v1627, %v1706
      %v1734 = vadd.f32 %v1628, %v1708
      %v1735 = vadd.f32 %v1629, %v1711
      %v1736 = vadd.f32 %v1630, %v1713
      %v1737 = vadd.f32 %v1631, %v1716
      %v1738 = vadd.f32 %v1632, %v1718
      %v1739 = vadd.f32 %v1633, %v1721
      %v1740 = vadd.f32 %v1634, %v1723
      %v1741 = vadd.f32 %v1635, %v1726
      %v1742 = vld [vmem:[#allocation2 + $0x10] sm:$0xff]
      %v1743 = vld [vmem:[#allocation2 + $0x18] sm:$0xff]
      %v1744 = vld [vmem:[#allocation2 + $0x20] sm:$0xff]
      %v1745 = vld [vmem:[#allocation2 + $0x28] sm:$0xff]
      %v1746 = vld [vmem:[#allocation2 + $0x30] sm:$0xff]
      %v1747 = vld [vmem:[#allocation2 + $0x38] sm:$0xff]
      %v1748 = vld [vmem:[#allocation2 + $0x40] sm:$0xff]
      %v1749 = vld [vmem:[#allocation2 + $0x48] sm:$0xff]
      %v1750 = vld [vmem:[#allocation2 + $0x50] sm:$0xff]
      %v1751 = vld [vmem:[#allocation2 + $0x58] sm:$0xff]
      %v1752 = vld [vmem:[#allocation2 + $0x60] sm:$0xff]
      %v1753 = vld [vmem:[#allocation2 + $0x68] sm:$0xff]
      %v1754 = vld [vmem:[#allocation2 + $0x70] sm:$0xf]
      %v1755 = vpack.c.bf16 %v1743, %v1742
      %v1756 = vpack.c.bf16 %v1745, %v1744
      %v1757 = vpack.c.bf16 %v1747, %v1746
      %v1758 = vpack.c.bf16 %v1749, %v1748
      %v1759 = vpack.c.bf16 %v1751, %v1750
      %v1760 = vpack.c.bf16 %v1753, %v1752
      %v1761 = vpack.c.bf16 %v1754, %v1754
      %s1762 = scalar_lea.vmem %s4, 32
      %v1763 = vld [vmem:[%s1762] sm:$0xf]
      %v1764 = vld [vmem:[%s1762 + $0x4] sm:$0xf]
      %v1767 = vunpack.c.l.b16 %v1763
      %v1768 = vunpack.c.l.b16 %v1764
      %v1769 = vpack.c.b16 %v1768, %v1767
      %v1772 = vsel %vm428, %v1755, 0
      %v1775 = vsel %vm428, %v1756, 0
      %v1778 = vsel %vm428, %v1757, 0
      %v1781 = vsel %vm428, %v1758, 0
      %v1784 = vsel %vm428, %v1759, 0
      %v1787 = vsel %vm428, %v1760, 0
      %v1790 = vsel %vm428, %v1761, 0
      %1792 = vmatpush.bf16.msra.mxu0 0
      %1793 = vmatpush.bf16.msra.mxu0 0
      %1794 = vmatpush.bf16.msra.mxu0 0
      %1795 = vmatpush.bf16.msra.mxu0 0
      %1796 = vmatpush.bf16.msra.mxu0 0
      %1797 = vmatpush.bf16.msra.mxu0 0
      %1798 = vmatpush.bf16.msra.mxu0 0
      %1799 = vmatpush.bf16.msra.mxu0 %v1769
      %1800 = vmatmul.bf16.gmra.mxu0 %v1772
      %v1801 = vpop.f32.mrf.mxu0
      %v1802 = vadd.f32 0.0, %v1801
      %v1803 = vpop.f32.mrf.mxu0
      %v1804 = vadd.f32 0.0, %v1803
      %1805 = vmatmul.bf16.gmra.mxu0 %v1775
      %v1806 = vpop.f32.mrf.mxu0
      %v1807 = vadd.f32 0.0, %v1806
      %v1808 = vpop.f32.mrf.mxu0
      %v1809 = vadd.f32 0.0, %v1808
      %1810 = vmatmul.bf16.gmra.mxu0 %v1778
      %v1811 = vpop.f32.mrf.mxu0
      %v1812 = vadd.f32 0.0, %v1811
      %v1813 = vpop.f32.mrf.mxu0
      %v1814 = vadd.f32 0.0, %v1813
      %1815 = vmatmul.bf16.gmra.mxu0 %v1781
      %v1816 = vpop.f32.mrf.mxu0
      %v1817 = vadd.f32 0.0, %v1816
      %v1818 = vpop.f32.mrf.mxu0
      %v1819 = vadd.f32 0.0, %v1818
      %1820 = vmatmul.bf16.gmra.mxu0 %v1784
      %v1821 = vpop.f32.mrf.mxu0
      %v1822 = vadd.f32 0.0, %v1821
      %v1823 = vpop.f32.mrf.mxu0
      %v1824 = vadd.f32 0.0, %v1823
      %1825 = vmatmul.bf16.gmra.mxu0 %v1787
      %v1826 = vpop.f32.mrf.mxu0
      %v1827 = vadd.f32 0.0, %v1826
      %v1828 = vpop.f32.mrf.mxu0
      %v1829 = vadd.f32 0.0, %v1828
      %1830 = vmatmul.bf16.gmra.mxu0 %v1790
      %v1831 = vpop.f32.mrf.mxu0
      %v1832 = vadd.f32 0.0, %v1831
      %v1833 = vpop.f32.mrf.mxu0
      %1834 = vdwg.mxu0
      %v1835 = vadd.f32 %v1729, %v1802
      %v1836 = vadd.f32 %v1730, %v1804
      %v1837 = vadd.f32 %v1731, %v1807
      %v1838 = vadd.f32 %v1732, %v1809
      %v1839 = vadd.f32 %v1733, %v1812
      %v1840 = vadd.f32 %v1734, %v1814
      %v1841 = vadd.f32 %v1735, %v1817
      %v1842 = vadd.f32 %v1736, %v1819
      %v1843 = vadd.f32 %v1737, %v1822
      %v1844 = vadd.f32 %v1738, %v1824
      %v1845 = vadd.f32 %v1739, %v1827
      %v1846 = vadd.f32 %v1740, %v1829
      %v1847 = vadd.f32 %v1741, %v1832
      %v1848 = vld [vmem:[%s985 + $0x10] sm:$0xff]
      %v1849 = vld [vmem:[%s985 + $0x18] sm:$0xff]
      %v1850 = vld [vmem:[%s985 + $0x20] sm:$0xff]
      %v1851 = vld [vmem:[%s985 + $0x28] sm:$0xff]
      %v1852 = vld [vmem:[%s985 + $0x30] sm:$0xff]
      %v1853 = vld [vmem:[%s985 + $0x38] sm:$0xff]
      %v1854 = vld [vmem:[%s985 + $0x40] sm:$0xff]
      %v1855 = vld [vmem:[%s985 + $0x48] sm:$0xff]
      %v1856 = vld [vmem:[%s985 + $0x50] sm:$0xff]
      %v1857 = vld [vmem:[%s985 + $0x58] sm:$0xff]
      %v1858 = vld [vmem:[%s985 + $0x60] sm:$0xff]
      %v1859 = vld [vmem:[%s985 + $0x68] sm:$0xff]
      %v1860 = vld [vmem:[%s985 + $0x70] sm:$0xf]
      %v1861 = vpack.c.bf16 %v1849, %v1848
      %v1862 = vpack.c.bf16 %v1851, %v1850
      %v1863 = vpack.c.bf16 %v1853, %v1852
      %v1864 = vpack.c.bf16 %v1855, %v1854
      %v1865 = vpack.c.bf16 %v1857, %v1856
      %v1866 = vpack.c.bf16 %v1859, %v1858
      %v1867 = vpack.c.bf16 %v1860, %v1860
      %s1868 = scalar_lea.vmem %s4, 40
      %v1869 = vld [vmem:[%s1868] sm:$0xf]
      %v1870 = vld [vmem:[%s1868 + $0x4] sm:$0xf]
      %v1873 = vunpack.c.l.b16 %v1869
      %v1874 = vunpack.c.l.b16 %v1870
      %v1875 = vpack.c.b16 %v1874, %v1873
      %v1878 = vsel %vm428, %v1861, 0
      %v1881 = vsel %vm428, %v1862, 0
      %v1884 = vsel %vm428, %v1863, 0
      %v1887 = vsel %vm428, %v1864, 0
      %v1890 = vsel %vm428, %v1865, 0
      %v1893 = vsel %vm428, %v1866, 0
      %v1896 = vsel %vm428, %v1867, 0
      %1898 = vmatpush.bf16.msra.mxu0 0
      %1899 = vmatpush.bf16.msra.mxu0 0
      %1900 = vmatpush.bf16.msra.mxu0 0
      %1901 = vmatpush.bf16.msra.mxu0 0
      %1902 = vmatpush.bf16.msra.mxu0 0
      %1903 = vmatpush.bf16.msra.mxu0 0
      %1904 = vmatpush.bf16.msra.mxu0 0
      %1905 = vmatpush.bf16.msra.mxu0 %v1875
      %1906 = vmatmul.bf16.gmra.mxu0 %v1878
      %v1907 = vpop.f32.mrf.mxu0
      %v1908 = vadd.f32 0.0, %v1907
      %v1909 = vpop.f32.mrf.mxu0
      %v1910 = vadd.f32 0.0, %v1909
      %1911 = vmatmul.bf16.gmra.mxu0 %v1881
      %v1912 = vpop.f32.mrf.mxu0
      %v1913 = vadd.f32 0.0, %v1912
      %v1914 = vpop.f32.mrf.mxu0
      %v1915 = vadd.f32 0.0, %v1914
      %1916 = vmatmul.bf16.gmra.mxu0 %v1884
      %v1917 = vpop.f32.mrf.mxu0
      %v1918 = vadd.f32 0.0, %v1917
      %v1919 = vpop.f32.mrf.mxu0
      %v1920 = vadd.f32 0.0, %v1919
      %1921 = vmatmul.bf16.gmra.mxu0 %v1887
      %v1922 = vpop.f32.mrf.mxu0
      %v1923 = vadd.f32 0.0, %v1922
      %v1924 = vpop.f32.mrf.mxu0
      %v1925 = vadd.f32 0.0, %v1924
      %1926 = vmatmul.bf16.gmra.mxu0 %v1890
      %v1927 = vpop.f32.mrf.mxu0
      %v1928 = vadd.f32 0.0, %v1927
      %v1929 = vpop.f32.mrf.mxu0
      %v1930 = vadd.f32 0.0, %v1929
      %1931 = vmatmul.bf16.gmra.mxu0 %v1893
      %v1932 = vpop.f32.mrf.mxu0
      %v1933 = vadd.f32 0.0, %v1932
      %v1934 = vpop.f32.mrf.mxu0
      %v1935 = vadd.f32 0.0, %v1934
      %1936 = vmatmul.bf16.gmra.mxu0 %v1896
      %v1937 = vpop.f32.mrf.mxu0
      %v1938 = vadd.f32 0.0, %v1937
      %v1939 = vpop.f32.mrf.mxu0
      %1940 = vdwg.mxu0
      %v1941 = vadd.f32 %v1835, %v1908
      %v1942 = vadd.f32 %v1836, %v1910
      %v1943 = vadd.f32 %v1837, %v1913
      %v1944 = vadd.f32 %v1838, %v1915
      %v1945 = vadd.f32 %v1839, %v1918
      %v1946 = vadd.f32 %v1840, %v1920
      %v1947 = vadd.f32 %v1841, %v1923
      %v1948 = vadd.f32 %v1842, %v1925
      %v1949 = vadd.f32 %v1843, %v1928
      %v1950 = vadd.f32 %v1844, %v1930
      %v1951 = vadd.f32 %v1845, %v1933
      %v1952 = vadd.f32 %v1846, %v1935
      %v1953 = vadd.f32 %v1847, %v1938
      %v1954 = vld [vmem:[%s1331 + $0xf] sm:$0xff]
      %v1955 = vld [vmem:[%s1331 + $0x17] sm:$0xff]
      %v1956 = vld [vmem:[%s1331 + $0x1f] sm:$0xff]
      %v1957 = vld [vmem:[%s1331 + $0x27] sm:$0xff]
      %v1958 = vld [vmem:[%s1331 + $0x2f] sm:$0xff]
      %v1959 = vld [vmem:[%s1331 + $0x37] sm:$0xff]
      %v1960 = vld [vmem:[%s1331 + $0x3f] sm:$0xff]
      %v1961 = vld [vmem:[%s1331 + $0x47] sm:$0xff]
      %v1962 = vld [vmem:[%s1331 + $0x4f] sm:$0xff]
      %v1963 = vld [vmem:[%s1331 + $0x57] sm:$0xff]
      %v1964 = vld [vmem:[%s1331 + $0x5f] sm:$0xff]
      %v1965 = vld [vmem:[%s1331 + $0x67] sm:$0xff]
      %v1966 = vld [vmem:[%s1331 + $0x6f] sm:$0xf]
      %v1967 = vpack.c.bf16 %v1955, %v1954
      %v1968 = vpack.c.bf16 %v1957, %v1956
      %v1969 = vpack.c.bf16 %v1959, %v1958
      %v1970 = vpack.c.bf16 %v1961, %v1960
      %v1971 = vpack.c.bf16 %v1963, %v1962
      %v1972 = vpack.c.bf16 %v1965, %v1964
      %v1973 = vpack.c.bf16 %v1966, %v1966
      %s1974 = scalar_lea.vmem %s4, 48
      %v1975 = vld [vmem:[%s1974] sm:$0xf]
      %v1976 = vld [vmem:[%s1974 + $0x4] sm:$0xf]
      %v1979 = vunpack.c.l.b16 %v1975
      %v1980 = vunpack.c.l.b16 %v1976
      %v1981 = vpack.c.b16 %v1980, %v1979
      %v1984 = vsel %vm428, %v1967, 0
      %v1987 = vsel %vm428, %v1968, 0
      %v1990 = vsel %vm428, %v1969, 0
      %v1993 = vsel %vm428, %v1970, 0
      %v1996 = vsel %vm428, %v1971, 0
      %v1999 = vsel %vm428, %v1972, 0
      %v2002 = vsel %vm428, %v1973, 0
      %2004 = vmatpush.bf16.msra.mxu0 0
      %2005 = vmatpush.bf16.msra.mxu0 0
      %2006 = vmatpush.bf16.msra.mxu0 0
      %2007 = vmatpush.bf16.msra.mxu0 0
      %2008 = vmatpush.bf16.msra.mxu0 0
      %2009 = vmatpush.bf16.msra.mxu0 0
      %2010 = vmatpush.bf16.msra.mxu0 0
      %2011 = vmatpush.bf16.msra.mxu0 %v1981
      %2012 = vmatmul.bf16.gmra.mxu0 %v1984
      %v2013 = vpop.f32.mrf.mxu0
      %v2014 = vadd.f32 0.0, %v2013
      %v2015 = vpop.f32.mrf.mxu0
      %v2016 = vadd.f32 0.0, %v2015
      %2017 = vmatmul.bf16.gmra.mxu0 %v1987
      %v2018 = vpop.f32.mrf.mxu0
      %v2019 = vadd.f32 0.0, %v2018
      %v2020 = vpop.f32.mrf.mxu0
      %v2021 = vadd.f32 0.0, %v2020
      %2022 = vmatmul.bf16.gmra.mxu0 %v1990
      %v2023 = vpop.f32.mrf.mxu0
      %v2024 = vadd.f32 0.0, %v2023
      %v2025 = vpop.f32.mrf.mxu0
      %v2026 = vadd.f32 0.0, %v2025
      %2027 = vmatmul.bf16.gmra.mxu0 %v1993
      %v2028 = vpop.f32.mrf.mxu0
      %v2029 = vadd.f32 0.0, %v2028
      %v2030 = vpop.f32.mrf.mxu0
      %v2031 = vadd.f32 0.0, %v2030
      %2032 = vmatmul.bf16.gmra.mxu0 %v1996
      %v2033 = vpop.f32.mrf.mxu0
      %v2034 = vadd.f32 0.0, %v2033
      %v2035 = vpop.f32.mrf.mxu0
      %v2036 = vadd.f32 0.0, %v2035
      %2037 = vmatmul.bf16.gmra.mxu0 %v1999
      %v2038 = vpop.f32.mrf.mxu0
      %v2039 = vadd.f32 0.0, %v2038
      %v2040 = vpop.f32.mrf.mxu0
      %v2041 = vadd.f32 0.0, %v2040
      %2042 = vmatmul.bf16.gmra.mxu0 %v2002
      %v2043 = vpop.f32.mrf.mxu0
      %v2044 = vadd.f32 0.0, %v2043
      %v2045 = vpop.f32.mrf.mxu0
      %2046 = vdwg.mxu0
      %v2047 = vadd.f32 %v1941, %v2014
      %v2048 = vadd.f32 %v1942, %v2016
      %v2049 = vadd.f32 %v1943, %v2019
      %v2050 = vadd.f32 %v1944, %v2021
      %v2051 = vadd.f32 %v1945, %v2024
      %v2052 = vadd.f32 %v1946, %v2026
      %v2053 = vadd.f32 %v1947, %v2029
      %v2054 = vadd.f32 %v1948, %v2031
      %v2055 = vadd.f32 %v1949, %v2034
      %v2056 = vadd.f32 %v1950, %v2036
      %v2057 = vadd.f32 %v1951, %v2039
      %v2058 = vadd.f32 %v1952, %v2041
      %v2059 = vadd.f32 %v1953, %v2044
      %v2060 = vld [vmem:[%s1158 + $0x10] sm:$0xff]
      %v2061 = vld [vmem:[%s1158 + $0x18] sm:$0xff]
      %v2062 = vld [vmem:[%s1158 + $0x20] sm:$0xff]
      %v2063 = vld [vmem:[%s1158 + $0x28] sm:$0xff]
      %v2064 = vld [vmem:[%s1158 + $0x30] sm:$0xff]
      %v2065 = vld [vmem:[%s1158 + $0x38] sm:$0xff]
      %v2066 = vld [vmem:[%s1158 + $0x40] sm:$0xff]
      %v2067 = vld [vmem:[%s1158 + $0x48] sm:$0xff]
      %v2068 = vld [vmem:[%s1158 + $0x50] sm:$0xff]
      %v2069 = vld [vmem:[%s1158 + $0x58] sm:$0xff]
      %v2070 = vld [vmem:[%s1158 + $0x60] sm:$0xff]
      %v2071 = vld [vmem:[%s1158 + $0x68] sm:$0xff]
      %v2072 = vld [vmem:[%s1158 + $0x70] sm:$0xf]
      %v2073 = vpack.c.bf16 %v2061, %v2060
      %v2074 = vpack.c.bf16 %v2063, %v2062
      %v2075 = vpack.c.bf16 %v2065, %v2064
      %v2076 = vpack.c.bf16 %v2067, %v2066
      %v2077 = vpack.c.bf16 %v2069, %v2068
      %v2078 = vpack.c.bf16 %v2071, %v2070
      %v2079 = vpack.c.bf16 %v2072, %v2072
      %s2080 = scalar_lea.vmem %s4, 56
      %v2081 = vld [vmem:[%s2080] sm:$0xf]
      %v2082 = vld [vmem:[%s2080 + $0x4] sm:$0xf]
      %v2085 = vunpack.c.l.b16 %v2081
      %v2086 = vunpack.c.l.b16 %v2082
      %v2087 = vpack.c.b16 %v2086, %v2085
      %v2090 = vsel %vm428, %v2073, 0
      %v2093 = vsel %vm428, %v2074, 0
      %v2096 = vsel %vm428, %v2075, 0
      %v2099 = vsel %vm428, %v2076, 0
      %v2102 = vsel %vm428, %v2077, 0
      %v2105 = vsel %vm428, %v2078, 0
      %v2108 = vsel %vm428, %v2079, 0
      %2110 = vmatpush.bf16.msra.mxu0 0
      %2111 = vmatpush.bf16.msra.mxu0 0
      %2112 = vmatpush.bf16.msra.mxu0 0
      %2113 = vmatpush.bf16.msra.mxu0 0
      %2114 = vmatpush.bf16.msra.mxu0 0
      %2115 = vmatpush.bf16.msra.mxu0 0
      %2116 = vmatpush.bf16.msra.mxu0 0
      %2117 = vmatpush.bf16.msra.mxu0 %v2087
      %2118 = vmatmul.bf16.gmra.mxu0 %v2090
      %v2119 = vpop.f32.mrf.mxu0
      %v2120 = vadd.f32 0.0, %v2119
      %v2121 = vpop.f32.mrf.mxu0
      %v2122 = vadd.f32 0.0, %v2121
      %2123 = vmatmul.bf16.gmra.mxu0 %v2093
      %v2124 = vpop.f32.mrf.mxu0
      %v2125 = vadd.f32 0.0, %v2124
      %v2126 = vpop.f32.mrf.mxu0
      %v2127 = vadd.f32 0.0, %v2126
      %2128 = vmatmul.bf16.gmra.mxu0 %v2096
      %v2129 = vpop.f32.mrf.mxu0
      %v2130 = vadd.f32 0.0, %v2129
      %v2131 = vpop.f32.mrf.mxu0
      %v2132 = vadd.f32 0.0, %v2131
      %2133 = vmatmul.bf16.gmra.mxu0 %v2099
      %v2134 = vpop.f32.mrf.mxu0
      %v2135 = vadd.f32 0.0, %v2134
      %v2136 = vpop.f32.mrf.mxu0
      %v2137 = vadd.f32 0.0, %v2136
      %2138 = vmatmul.bf16.gmra.mxu0 %v2102
      %v2139 = vpop.f32.mrf.mxu0
      %v2140 = vadd.f32 0.0, %v2139
      %v2141 = vpop.f32.mrf.mxu0
      %v2142 = vadd.f32 0.0, %v2141
      %2143 = vmatmul.bf16.gmra.mxu0 %v2105
      %v2144 = vpop.f32.mrf.mxu0
      %v2145 = vadd.f32 0.0, %v2144
      %v2146 = vpop.f32.mrf.mxu0
      %v2147 = vadd.f32 0.0, %v2146
      %2148 = vmatmul.bf16.gmra.mxu0 %v2108
      %v2149 = vpop.f32.mrf.mxu0
      %v2150 = vadd.f32 0.0, %v2149
      %v2151 = vpop.f32.mrf.mxu0
      %2152 = vdwg.mxu0
      %v2153 = vadd.f32 %v2047, %v2120
      %v2154 = vadd.f32 %v2048, %v2122
      %v2155 = vadd.f32 %v2049, %v2125
      %v2156 = vadd.f32 %v2050, %v2127
      %v2157 = vadd.f32 %v2051, %v2130
      %v2158 = vadd.f32 %v2052, %v2132
      %v2159 = vadd.f32 %v2053, %v2135
      %v2160 = vadd.f32 %v2054, %v2137
      %v2161 = vadd.f32 %v2055, %v2140
      %v2162 = vadd.f32 %v2056, %v2142
      %v2163 = vadd.f32 %v2057, %v2145
      %v2164 = vadd.f32 %v2058, %v2147
      %v2165 = vadd.f32 %v2059, %v2150
      %v2166 = vld [vmem:[%s1331 + $0x10] sm:$0xff]
      %v2167 = vld [vmem:[%s1331 + $0x18] sm:$0xff]
      %v2168 = vld [vmem:[%s1331 + $0x20] sm:$0xff]
      %v2169 = vld [vmem:[%s1331 + $0x28] sm:$0xff]
      %v2170 = vld [vmem:[%s1331 + $0x30] sm:$0xff]
      %v2171 = vld [vmem:[%s1331 + $0x38] sm:$0xff]
      %v2172 = vld [vmem:[%s1331 + $0x40] sm:$0xff]
      %v2173 = vld [vmem:[%s1331 + $0x48] sm:$0xff]
      %v2174 = vld [vmem:[%s1331 + $0x50] sm:$0xff]
      %v2175 = vld [vmem:[%s1331 + $0x58] sm:$0xff]
      %v2176 = vld [vmem:[%s1331 + $0x60] sm:$0xff]
      %v2177 = vld [vmem:[%s1331 + $0x68] sm:$0xff]
      %v2178 = vld [vmem:[%s1331 + $0x70] sm:$0xf]
      %v2179 = vpack.c.bf16 %v2167, %v2166
      %v2180 = vpack.c.bf16 %v2169, %v2168
      %v2181 = vpack.c.bf16 %v2171, %v2170
      %v2182 = vpack.c.bf16 %v2173, %v2172
      %v2183 = vpack.c.bf16 %v2175, %v2174
      %v2184 = vpack.c.bf16 %v2177, %v2176
      %v2185 = vpack.c.bf16 %v2178, %v2178
      %s2186 = scalar_lea.vmem %s4, 64
      %v2187 = vld [vmem:[%s2186] sm:$0xf]
      %v2188 = vld [vmem:[%s2186 + $0x4] sm:$0xf]
      %v2191 = vunpack.c.l.b16 %v2187
      %v2192 = vunpack.c.l.b16 %v2188
      %v2193 = vpack.c.b16 %v2192, %v2191
      %v2196 = vsel %vm428, %v2179, 0
      %v2199 = vsel %vm428, %v2180, 0
      %v2202 = vsel %vm428, %v2181, 0
      %v2205 = vsel %vm428, %v2182, 0
      %v2208 = vsel %vm428, %v2183, 0
      %v2211 = vsel %vm428, %v2184, 0
      %v2214 = vsel %vm428, %v2185, 0
      %2216 = vmatpush.bf16.msra.mxu0 0
      %2217 = vmatpush.bf16.msra.mxu0 0
      %2218 = vmatpush.bf16.msra.mxu0 0
      %2219 = vmatpush.bf16.msra.mxu0 0
      %2220 = vmatpush.bf16.msra.mxu0 0
      %2221 = vmatpush.bf16.msra.mxu0 0
      %2222 = vmatpush.bf16.msra.mxu0 0
      %2223 = vmatpush.bf16.msra.mxu0 %v2193
      %2224 = vmatmul.bf16.gmra.mxu0 %v2196
      %v2225 = vpop.f32.mrf.mxu0
      %v2226 = vadd.f32 0.0, %v2225
      %v2227 = vpop.f32.mrf.mxu0
      %v2228 = vadd.f32 0.0, %v2227
      %2229 = vmatmul.bf16.gmra.mxu0 %v2199
      %v2230 = vpop.f32.mrf.mxu0
      %v2231 = vadd.f32 0.0, %v2230
      %v2232 = vpop.f32.mrf.mxu0
      %v2233 = vadd.f32 0.0, %v2232
      %2234 = vmatmul.bf16.gmra.mxu0 %v2202
      %v2235 = vpop.f32.mrf.mxu0
      %v2236 = vadd.f32 0.0, %v2235
      %v2237 = vpop.f32.mrf.mxu0
      %v2238 = vadd.f32 0.0, %v2237
      %2239 = vmatmul.bf16.gmra.mxu0 %v2205
      %v2240 = vpop.f32.mrf.mxu0
      %v2241 = vadd.f32 0.0, %v2240
      %v2242 = vpop.f32.mrf.mxu0
      %v2243 = vadd.f32 0.0, %v2242
      %2244 = vmatmul.bf16.gmra.mxu0 %v2208
      %v2245 = vpop.f32.mrf.mxu0
      %v2246 = vadd.f32 0.0, %v2245
      %v2247 = vpop.f32.mrf.mxu0
      %v2248 = vadd.f32 0.0, %v2247
      %2249 = vmatmul.bf16.gmra.mxu0 %v2211
      %v2250 = vpop.f32.mrf.mxu0
      %v2251 = vadd.f32 0.0, %v2250
      %v2252 = vpop.f32.mrf.mxu0
      %v2253 = vadd.f32 0.0, %v2252
      %2254 = vmatmul.bf16.gmra.mxu0 %v2214
      %v2255 = vpop.f32.mrf.mxu0
      %v2256 = vadd.f32 0.0, %v2255
      %v2257 = vpop.f32.mrf.mxu0
      %2258 = vdwg.mxu0
      %v2259 = vadd.f32 %v2153, %v2226
      %v2260 = vadd.f32 %v2154, %v2228
      %v2261 = vadd.f32 %v2155, %v2231
      %v2262 = vadd.f32 %v2156, %v2233
      %v2263 = vadd.f32 %v2157, %v2236
      %v2264 = vadd.f32 %v2158, %v2238
      %v2265 = vadd.f32 %v2159, %v2241
      %v2266 = vadd.f32 %v2160, %v2243
      %v2267 = vadd.f32 %v2161, %v2246
      %v2268 = vadd.f32 %v2162, %v2248
      %v2269 = vadd.f32 %v2163, %v2251
      %v2270 = vadd.f32 %v2164, %v2253
      %v2271 = vadd.f32 %v2165, %v2256
      %v2272 = vld [vmem:[%s5] sm:$0x1]
      %v2274 = vperm.slane %v2272, 0
      %v2276 = vadd.f32 %v2259, %v2274
      %v2277 = vadd.f32 %v2260, %v2274
      %v2278 = vadd.f32 %v2261, %v2274
      %v2279 = vadd.f32 %v2262, %v2274
      %v2280 = vadd.f32 %v2263, %v2274
      %v2281 = vadd.f32 %v2264, %v2274
      %v2282 = vadd.f32 %v2265, %v2274
      %v2283 = vadd.f32 %v2266, %v2274
      %v2284 = vadd.f32 %v2267, %v2274
      %v2285 = vadd.f32 %v2268, %v2274
      %v2286 = vadd.f32 %v2269, %v2274
      %v2287 = vadd.f32 %v2270, %v2274
      %v2288 = vadd.f32 %v2271, %v2274
      %v2289 = vmax.f32 %v2276, 0.0
      %v2290 = vmax.f32 %v2277, 0.0
      %v2291 = vmax.f32 %v2278, 0.0
      %v2292 = vmax.f32 %v2279, 0.0
      %v2293 = vmax.f32 %v2280, 0.0
      %v2294 = vmax.f32 %v2281, 0.0
      %v2295 = vmax.f32 %v2282, 0.0
      %v2296 = vmax.f32 %v2283, 0.0
      %v2297 = vmax.f32 %v2284, 0.0
      %v2298 = vmax.f32 %v2285, 0.0
      %v2299 = vmax.f32 %v2286, 0.0
      %v2300 = vmax.f32 %v2287, 0.0
      %v2301 = vmax.f32 %v2288, 0.0
      %v2302 = vmul.f32 %v2289, %v738
      %v2303 = vmul.f32 %v2290, %v743
      %v2304 = vmul.f32 %v2291, %v748
      %v2305 = vmul.f32 %v2292, %v753
      %v2306 = vmul.f32 %v2293, %v758
      %v2307 = vmul.f32 %v2294, %v763
      %v2308 = vmul.f32 %v2295, %v768
      %v2309 = vmul.f32 %v2296, %v773
      %v2310 = vmul.f32 %v2297, %v778
      %v2311 = vmul.f32 %v2298, %v783
      %v2312 = vmul.f32 %v2299, %v788
      %v2313 = vmul.f32 %v2300, %v793
      %v2314 = vmul.f32 %v2301, %v798
      %2315 = vst.msk [vmem:[#allocation3 + $0x10] sm:$0xff] %vm498, %v2302
      %2316 = vst.msk [vmem:[#allocation3 + $0x18] sm:$0xff] %vm498, %v2303
      %2317 = vst.msk [vmem:[#allocation3 + $0x20] sm:$0xff] %vm498, %v2304
      %2318 = vst.msk [vmem:[#allocation3 + $0x28] sm:$0xff] %vm498, %v2305
      %2319 = vst.msk [vmem:[#allocation3 + $0x30] sm:$0xff] %vm498, %v2306
      %2320 = vst.msk [vmem:[#allocation3 + $0x38] sm:$0xff] %vm498, %v2307
      %2321 = vst.msk [vmem:[#allocation3 + $0x40] sm:$0xff] %vm498, %v2308
      %2322 = vst.msk [vmem:[#allocation3 + $0x48] sm:$0xff] %vm498, %v2309
      %2323 = vst.msk [vmem:[#allocation3 + $0x50] sm:$0xff] %vm498, %v2310
      %2324 = vst.msk [vmem:[#allocation3 + $0x58] sm:$0xff] %vm498, %v2311
      %2325 = vst.msk [vmem:[#allocation3 + $0x60] sm:$0xff] %vm498, %v2312
      %2326 = vst.msk [vmem:[#allocation3 + $0x68] sm:$0xff] %vm498, %v2313
      %2327 = vst.msk [vmem:[#allocation3 + $0x70] sm:$0xf] %vm515, %v2314
      %v2328 = vld [vmem:[#allocation3 + $0x5] sm:$0xff]
      %v2329 = vld [vmem:[#allocation3 + $0xd] sm:$0xff]
      %v2330 = vld [vmem:[#allocation3 + $0x15] sm:$0xff]
      %v2331 = vld [vmem:[#allocation3 + $0x1d] sm:$0xff]
      %v2332 = vld [vmem:[#allocation3 + $0x25] sm:$0xff]
      %v2333 = vld [vmem:[#allocation3 + $0x2d] sm:$0xff]
      %v2334 = vld [vmem:[#allocation3 + $0x35] sm:$0xff]
      %v2335 = vld [vmem:[#allocation3 + $0x3d] sm:$0xff]
      %v2336 = vld [vmem:[#allocation3 + $0x45] sm:$0xff]
      %v2337 = vld [vmem:[#allocation3 + $0x4d] sm:$0xff]
      %v2338 = vld [vmem:[#allocation3 + $0x55] sm:$0xff]
      %v2339 = vld [vmem:[#allocation3 + $0x5d] sm:$0xff]
      %v2340 = vld [vmem:[#allocation3 + $0x65] sm:$0xf]
      %v2341 = vpack.c.bf16 %v2329, %v2328
      %v2342 = vpack.c.bf16 %v2331, %v2330
      %v2343 = vpack.c.bf16 %v2333, %v2332
      %v2344 = vpack.c.bf16 %v2335, %v2334
      %v2345 = vpack.c.bf16 %v2337, %v2336
      %v2346 = vpack.c.bf16 %v2339, %v2338
      %v2347 = vpack.c.bf16 %v2340, %v2340
      %v2348 = vld [vmem:[%s6] sm:$0xf]
      %v2349 = vld [vmem:[%s6 + $0x4] sm:$0xf]
      %v2350 = vld [vmem:[%s6 + $0x8] sm:$0xf]
      %v2351 = vld [vmem:[%s6 + $0xc] sm:$0xf]
      %v2352 = vld [vmem:[#allocation3 + $0x6] sm:$0xff]
      %v2353 = vld [vmem:[#allocation3 + $0xe] sm:$0xff]
      %v2354 = vld [vmem:[#allocation3 + $0x16] sm:$0xff]
      %v2355 = vld [vmem:[#allocation3 + $0x1e] sm:$0xff]
      %v2356 = vld [vmem:[#allocation3 + $0x26] sm:$0xff]
      %v2357 = vld [vmem:[#allocation3 + $0x2e] sm:$0xff]
      %v2358 = vld [vmem:[#allocation3 + $0x36] sm:$0xff]
      %v2359 = vld [vmem:[#allocation3 + $0x3e] sm:$0xff]
      %v2360 = vld [vmem:[#allocation3 + $0x46] sm:$0xff]
      %v2361 = vld [vmem:[#allocation3 + $0x4e] sm:$0xff]
      %v2362 = vld [vmem:[#allocation3 + $0x56] sm:$0xff]
      %v2363 = vld [vmem:[#allocation3 + $0x5e] sm:$0xff]
      %v2364 = vld [vmem:[#allocation3 + $0x66] sm:$0xf]
      %v2365 = vpack.c.bf16 %v2353, %v2352
      %v2366 = vpack.c.bf16 %v2355, %v2354
      %v2367 = vpack.c.bf16 %v2357, %v2356
      %v2368 = vpack.c.bf16 %v2359, %v2358
      %v2369 = vpack.c.bf16 %v2361, %v2360
      %v2370 = vpack.c.bf16 %v2363, %v2362
      %v2371 = vpack.c.bf16 %v2364, %v2364
      %s2372 = scalar_lea.vmem %s6, 16
      %v2373 = vld [vmem:[%s2372] sm:$0xf]
      %v2374 = vld [vmem:[%s2372 + $0x4] sm:$0xf]
      %v2375 = vld [vmem:[%s2372 + $0x8] sm:$0xf]
      %v2376 = vld [vmem:[%s2372 + $0xc] sm:$0xf]
      %v2381 = vunpack.c.l.b16 %v2373
      %v2382 = vunpack.c.l.b16 %v2374
      %v2383 = vunpack.c.l.b16 %v2375
      %v2384 = vunpack.c.l.b16 %v2376
      %v2385 = vpack.c.b16 %v2382, %v2381
      %v2386 = vpack.c.b16 %v2384, %v2383
      %v2390 = vsel %vm498, %v2365, 0
      %v2393 = vsel %vm498, %v2366, 0
      %v2396 = vsel %vm498, %v2367, 0
      %v2399 = vsel %vm498, %v2368, 0
      %v2402 = vsel %vm498, %v2369, 0
      %v2405 = vsel %vm498, %v2370, 0
      %v2408 = vsel %vm498, %v2371, 0
      %2410 = vmatpush.bf16.msra.mxu0 0
      %2411 = vmatpush.bf16.msra.mxu0 0
      %2412 = vmatpush.bf16.msra.mxu0 0
      %2413 = vmatpush.bf16.msra.mxu0 0
      %2414 = vmatpush.bf16.msra.mxu0 0
      %2415 = vmatpush.bf16.msra.mxu0 0
      %2416 = vmatpush.bf16.msra.mxu0 %v2386
      %2417 = vmatpush.bf16.msra.mxu0 %v2385
      %2418 = vmatmul.bf16.gmra.mxu0 %v2390
      %v2419 = vpop.f32.mrf.mxu0
      %v2420 = vadd.f32 0.0, %v2419
      %v2421 = vpop.f32.mrf.mxu0
      %v2422 = vadd.f32 0.0, %v2421
      %2423 = vmatmul.bf16.gmra.mxu0 %v2393
      %v2424 = vpop.f32.mrf.mxu0
      %v2425 = vadd.f32 0.0, %v2424
      %v2426 = vpop.f32.mrf.mxu0
      %v2427 = vadd.f32 0.0, %v2426
      %2428 = vmatmul.bf16.gmra.mxu0 %v2396
      %v2429 = vpop.f32.mrf.mxu0
      %v2430 = vadd.f32 0.0, %v2429
      %v2431 = vpop.f32.mrf.mxu0
      %v2432 = vadd.f32 0.0, %v2431
      %2433 = vmatmul.bf16.gmra.mxu0 %v2399
      %v2434 = vpop.f32.mrf.mxu0
      %v2435 = vadd.f32 0.0, %v2434
      %v2436 = vpop.f32.mrf.mxu0
      %v2437 = vadd.f32 0.0, %v2436
      %2438 = vmatmul.bf16.gmra.mxu0 %v2402
      %v2439 = vpop.f32.mrf.mxu0
      %v2440 = vadd.f32 0.0, %v2439
      %v2441 = vpop.f32.mrf.mxu0
      %v2442 = vadd.f32 0.0, %v2441
      %2443 = vmatmul.bf16.gmra.mxu0 %v2405
      %v2444 = vpop.f32.mrf.mxu0
      %v2445 = vadd.f32 0.0, %v2444
      %v2446 = vpop.f32.mrf.mxu0
      %v2447 = vadd.f32 0.0, %v2446
      %2448 = vmatmul.bf16.gmra.mxu0 %v2408
      %v2449 = vpop.f32.mrf.mxu0
      %v2450 = vadd.f32 0.0, %v2449
      %v2451 = vpop.f32.mrf.mxu0
      %2452 = vdwg.mxu0
      %v2457 = vunpack.c.l.b16 %v2348
      %v2458 = vunpack.c.l.b16 %v2349
      %v2459 = vunpack.c.l.b16 %v2350
      %v2460 = vunpack.c.l.b16 %v2351
      %v2461 = vpack.c.b16 %v2458, %v2457
      %v2462 = vpack.c.b16 %v2460, %v2459
      %v2466 = vsel %vm498, %v2341, 0
      %v2469 = vsel %vm498, %v2342, 0
      %v2472 = vsel %vm498, %v2343, 0
      %v2475 = vsel %vm498, %v2344, 0
      %v2478 = vsel %vm498, %v2345, 0
      %v2481 = vsel %vm498, %v2346, 0
      %v2484 = vsel %vm498, %v2347, 0
      %2486 = vmatpush.bf16.msra.mxu0 0
      %2487 = vmatpush.bf16.msra.mxu0 0
      %2488 = vmatpush.bf16.msra.mxu0 0
      %2489 = vmatpush.bf16.msra.mxu0 0
      %2490 = vmatpush.bf16.msra.mxu0 0
      %2491 = vmatpush.bf16.msra.mxu0 0
      %2492 = vmatpush.bf16.msra.mxu0 %v2462
      %2493 = vmatpush.bf16.msra.mxu0 %v2461
      %2494 = vmatmul.bf16.gmra.mxu0 %v2466
      %v2495 = vpop.f32.mrf.mxu0
      %v2496 = vadd.f32 %v2420, %v2495
      %v2497 = vpop.f32.mrf.mxu0
      %v2498 = vadd.f32 %v2422, %v2497
      %2499 = vmatmul.bf16.gmra.mxu0 %v2469
      %v2500 = vpop.f32.mrf.mxu0
      %v2501 = vadd.f32 %v2425, %v2500
      %v2502 = vpop.f32.mrf.mxu0
      %v2503 = vadd.f32 %v2427, %v2502
      %2504 = vmatmul.bf16.gmra.mxu0 %v2472
      %v2505 = vpop.f32.mrf.mxu0
      %v2506 = vadd.f32 %v2430, %v2505
      %v2507 = vpop.f32.mrf.mxu0
      %v2508 = vadd.f32 %v2432, %v2507
      %2509 = vmatmul.bf16.gmra.mxu0 %v2475
      %v2510 = vpop.f32.mrf.mxu0
      %v2511 = vadd.f32 %v2435, %v2510
      %v2512 = vpop.f32.mrf.mxu0
      %v2513 = vadd.f32 %v2437, %v2512
      %2514 = vmatmul.bf16.gmra.mxu0 %v2478
      %v2515 = vpop.f32.mrf.mxu0
      %v2516 = vadd.f32 %v2440, %v2515
      %v2517 = vpop.f32.mrf.mxu0
      %v2518 = vadd.f32 %v2442, %v2517
      %2519 = vmatmul.bf16.gmra.mxu0 %v2481
      %v2520 = vpop.f32.mrf.mxu0
      %v2521 = vadd.f32 %v2445, %v2520
      %v2522 = vpop.f32.mrf.mxu0
      %v2523 = vadd.f32 %v2447, %v2522
      %2524 = vmatmul.bf16.gmra.mxu0 %v2484
      %v2525 = vpop.f32.mrf.mxu0
      %v2526 = vadd.f32 %v2450, %v2525
      %v2527 = vpop.f32.mrf.mxu0
      %2528 = vdwg.mxu0
      %v2529 = vld [vmem:[#allocation3 + $0xf] sm:$0xff]
      %v2530 = vld [vmem:[#allocation3 + $0x17] sm:$0xff]
      %v2531 = vld [vmem:[#allocation3 + $0x1f] sm:$0xff]
      %v2532 = vld [vmem:[#allocation3 + $0x27] sm:$0xff]
      %v2533 = vld [vmem:[#allocation3 + $0x2f] sm:$0xff]
      %v2534 = vld [vmem:[#allocation3 + $0x37] sm:$0xff]
      %v2535 = vld [vmem:[#allocation3 + $0x3f] sm:$0xff]
      %v2536 = vld [vmem:[#allocation3 + $0x47] sm:$0xff]
      %v2537 = vld [vmem:[#allocation3 + $0x4f] sm:$0xff]
      %v2538 = vld [vmem:[#allocation3 + $0x57] sm:$0xff]
      %v2539 = vld [vmem:[#allocation3 + $0x5f] sm:$0xff]
      %v2540 = vld [vmem:[#allocation3 + $0x67] sm:$0xff]
      %v2541 = vld [vmem:[#allocation3 + $0x6f] sm:$0xf]
      %v2542 = vpack.c.bf16 %v2530, %v2529
      %v2543 = vpack.c.bf16 %v2532, %v2531
      %v2544 = vpack.c.bf16 %v2534, %v2533
      %v2545 = vpack.c.bf16 %v2536, %v2535
      %v2546 = vpack.c.bf16 %v2538, %v2537
      %v2547 = vpack.c.bf16 %v2540, %v2539
      %v2548 = vpack.c.bf16 %v2541, %v2541
      %s2549 = scalar_lea.vmem %s6, 32
      %v2550 = vld [vmem:[%s2549] sm:$0xf]
      %v2551 = vld [vmem:[%s2549 + $0x4] sm:$0xf]
      %v2552 = vld [vmem:[%s2549 + $0x8] sm:$0xf]
      %v2553 = vld [vmem:[%s2549 + $0xc] sm:$0xf]
      %v2558 = vunpack.c.l.b16 %v2550
      %v2559 = vunpack.c.l.b16 %v2551
      %v2560 = vunpack.c.l.b16 %v2552
      %v2561 = vunpack.c.l.b16 %v2553
      %v2562 = vpack.c.b16 %v2559, %v2558
      %v2563 = vpack.c.b16 %v2561, %v2560
      %v2567 = vsel %vm498, %v2542, 0
      %v2570 = vsel %vm498, %v2543, 0
      %v2573 = vsel %vm498, %v2544, 0
      %v2576 = vsel %vm498, %v2545, 0
      %v2579 = vsel %vm498, %v2546, 0
      %v2582 = vsel %vm498, %v2547, 0
      %v2585 = vsel %vm498, %v2548, 0
      %2587 = vmatpush.bf16.msra.mxu0 0
      %2588 = vmatpush.bf16.msra.mxu0 0
      %2589 = vmatpush.bf16.msra.mxu0 0
      %2590 = vmatpush.bf16.msra.mxu0 0
      %2591 = vmatpush.bf16.msra.mxu0 0
      %2592 = vmatpush.bf16.msra.mxu0 0
      %2593 = vmatpush.bf16.msra.mxu0 %v2563
      %2594 = vmatpush.bf16.msra.mxu0 %v2562
      %2595 = vmatmul.bf16.gmra.mxu0 %v2567
      %v2596 = vpop.f32.mrf.mxu0
      %v2597 = vadd.f32 0.0, %v2596
      %v2598 = vpop.f32.mrf.mxu0
      %v2599 = vadd.f32 0.0, %v2598
      %2600 = vmatmul.bf16.gmra.mxu0 %v2570
      %v2601 = vpop.f32.mrf.mxu0
      %v2602 = vadd.f32 0.0, %v2601
      %v2603 = vpop.f32.mrf.mxu0
      %v2604 = vadd.f32 0.0, %v2603
      %2605 = vmatmul.bf16.gmra.mxu0 %v2573
      %v2606 = vpop.f32.mrf.mxu0
      %v2607 = vadd.f32 0.0, %v2606
      %v2608 = vpop.f32.mrf.mxu0
      %v2609 = vadd.f32 0.0, %v2608
      %2610 = vmatmul.bf16.gmra.mxu0 %v2576
      %v2611 = vpop.f32.mrf.mxu0
      %v2612 = vadd.f32 0.0, %v2611
      %v2613 = vpop.f32.mrf.mxu0
      %v2614 = vadd.f32 0.0, %v2613
      %2615 = vmatmul.bf16.gmra.mxu0 %v2579
      %v2616 = vpop.f32.mrf.mxu0
      %v2617 = vadd.f32 0.0, %v2616
      %v2618 = vpop.f32.mrf.mxu0
      %v2619 = vadd.f32 0.0, %v2618
      %2620 = vmatmul.bf16.gmra.mxu0 %v2582
      %v2621 = vpop.f32.mrf.mxu0
      %v2622 = vadd.f32 0.0, %v2621
      %v2623 = vpop.f32.mrf.mxu0
      %v2624 = vadd.f32 0.0, %v2623
      %2625 = vmatmul.bf16.gmra.mxu0 %v2585
      %v2626 = vpop.f32.mrf.mxu0
      %v2627 = vadd.f32 0.0, %v2626
      %v2628 = vpop.f32.mrf.mxu0
      %2629 = vdwg.mxu0
      %v2630 = vadd.f32 %v2496, %v2597
      %v2631 = vadd.f32 %v2498, %v2599
      %v2632 = vadd.f32 %v2501, %v2602
      %v2633 = vadd.f32 %v2503, %v2604
      %v2634 = vadd.f32 %v2506, %v2607
      %v2635 = vadd.f32 %v2508, %v2609
      %v2636 = vadd.f32 %v2511, %v2612
      %v2637 = vadd.f32 %v2513, %v2614
      %v2638 = vadd.f32 %v2516, %v2617
      %v2639 = vadd.f32 %v2518, %v2619
      %v2640 = vadd.f32 %v2521, %v2622
      %v2641 = vadd.f32 %v2523, %v2624
      %v2642 = vadd.f32 %v2526, %v2627
      %v2643 = vld [vmem:[#allocation3 + $0x10] sm:$0xff]
      %v2644 = vld [vmem:[#allocation3 + $0x18] sm:$0xff]
      %v2645 = vld [vmem:[#allocation3 + $0x20] sm:$0xff]
      %v2646 = vld [vmem:[#allocation3 + $0x28] sm:$0xff]
      %v2647 = vld [vmem:[#allocation3 + $0x30] sm:$0xff]
      %v2648 = vld [vmem:[#allocation3 + $0x38] sm:$0xff]
      %v2649 = vld [vmem:[#allocation3 + $0x40] sm:$0xff]
      %v2650 = vld [vmem:[#allocation3 + $0x48] sm:$0xff]
      %v2651 = vld [vmem:[#allocation3 + $0x50] sm:$0xff]
      %v2652 = vld [vmem:[#allocation3 + $0x58] sm:$0xff]
      %v2653 = vld [vmem:[#allocation3 + $0x60] sm:$0xff]
      %v2654 = vld [vmem:[#allocation3 + $0x68] sm:$0xff]
      %v2655 = vld [vmem:[#allocation3 + $0x70] sm:$0xf]
      %v2656 = vpack.c.bf16 %v2644, %v2643
      %v2657 = vpack.c.bf16 %v2646, %v2645
      %v2658 = vpack.c.bf16 %v2648, %v2647
      %v2659 = vpack.c.bf16 %v2650, %v2649
      %v2660 = vpack.c.bf16 %v2652, %v2651
      %v2661 = vpack.c.bf16 %v2654, %v2653
      %v2662 = vpack.c.bf16 %v2655, %v2655
      %s2663 = scalar_lea.vmem %s6, 48
      %v2664 = vld [vmem:[%s2663] sm:$0xf]
      %v2665 = vld [vmem:[%s2663 + $0x4] sm:$0xf]
      %v2666 = vld [vmem:[%s2663 + $0x8] sm:$0xf]
      %v2667 = vld [vmem:[%s2663 + $0xc] sm:$0xf]
      %v2672 = vunpack.c.l.b16 %v2664
      %v2673 = vunpack.c.l.b16 %v2665
      %v2674 = vunpack.c.l.b16 %v2666
      %v2675 = vunpack.c.l.b16 %v2667
      %v2676 = vpack.c.b16 %v2673, %v2672
      %v2677 = vpack.c.b16 %v2675, %v2674
      %v2681 = vsel %vm498, %v2656, 0
      %v2684 = vsel %vm498, %v2657, 0
      %v2687 = vsel %vm498, %v2658, 0
      %v2690 = vsel %vm498, %v2659, 0
      %v2693 = vsel %vm498, %v2660, 0
      %v2696 = vsel %vm498, %v2661, 0
      %v2699 = vsel %vm498, %v2662, 0
      %2701 = vmatpush.bf16.msra.mxu0 0
      %2702 = vmatpush.bf16.msra.mxu0 0
      %2703 = vmatpush.bf16.msra.mxu0 0
      %2704 = vmatpush.bf16.msra.mxu0 0
      %2705 = vmatpush.bf16.msra.mxu0 0
      %2706 = vmatpush.bf16.msra.mxu0 0
      %2707 = vmatpush.bf16.msra.mxu0 %v2677
      %2708 = vmatpush.bf16.msra.mxu0 %v2676
      %2709 = vmatmul.bf16.gmra.mxu0 %v2681
      %v2710 = vpop.f32.mrf.mxu0
      %v2711 = vadd.f32 0.0, %v2710
      %v2712 = vpop.f32.mrf.mxu0
      %v2713 = vadd.f32 0.0, %v2712
      %2714 = vmatmul.bf16.gmra.mxu0 %v2684
      %v2715 = vpop.f32.mrf.mxu0
      %v2716 = vadd.f32 0.0, %v2715
      %v2717 = vpop.f32.mrf.mxu0
      %v2718 = vadd.f32 0.0, %v2717
      %2719 = vmatmul.bf16.gmra.mxu0 %v2687
      %v2720 = vpop.f32.mrf.mxu0
      %v2721 = vadd.f32 0.0, %v2720
      %v2722 = vpop.f32.mrf.mxu0
      %v2723 = vadd.f32 0.0, %v2722
      %2724 = vmatmul.bf16.gmra.mxu0 %v2690
      %v2725 = vpop.f32.mrf.mxu0
      %v2726 = vadd.f32 0.0, %v2725
      %v2727 = vpop.f32.mrf.mxu0
      %v2728 = vadd.f32 0.0, %v2727
      %2729 = vmatmul.bf16.gmra.mxu0 %v2693
      %v2730 = vpop.f32.mrf.mxu0
      %v2731 = vadd.f32 0.0, %v2730
      %v2732 = vpop.f32.mrf.mxu0
      %v2733 = vadd.f32 0.0, %v2732
      %2734 = vmatmul.bf16.gmra.mxu0 %v2696
      %v2735 = vpop.f32.mrf.mxu0
      %v2736 = vadd.f32 0.0, %v2735
      %v2737 = vpop.f32.mrf.mxu0
      %v2738 = vadd.f32 0.0, %v2737
      %2739 = vmatmul.bf16.gmra.mxu0 %v2699
      %v2740 = vpop.f32.mrf.mxu0
      %v2741 = vadd.f32 0.0, %v2740
      %v2742 = vpop.f32.mrf.mxu0
      %2743 = vdwg.mxu0
      %v2744 = vadd.f32 %v2630, %v2711
      %v2745 = vadd.f32 %v2631, %v2713
      %v2746 = vadd.f32 %v2632, %v2716
      %v2747 = vadd.f32 %v2633, %v2718
      %v2748 = vadd.f32 %v2634, %v2721
      %v2749 = vadd.f32 %v2635, %v2723
      %v2750 = vadd.f32 %v2636, %v2726
      %v2751 = vadd.f32 %v2637, %v2728
      %v2752 = vadd.f32 %v2638, %v2731
      %v2753 = vadd.f32 %v2639, %v2733
      %v2754 = vadd.f32 %v2640, %v2736
      %v2755 = vadd.f32 %v2641, %v2738
      %v2756 = vadd.f32 %v2642, %v2741
      %v2757 = vld [vmem:[%s7] sm:$0x1]
      %v2759 = vperm.slane %v2757, 0
      %v2761 = vadd.f32 %v2744, %v2759
      %v2762 = vadd.f32 %v2745, %v2759
      %v2763 = vadd.f32 %v2746, %v2759
      %v2764 = vadd.f32 %v2747, %v2759
      %v2765 = vadd.f32 %v2748, %v2759
      %v2766 = vadd.f32 %v2749, %v2759
      %v2767 = vadd.f32 %v2750, %v2759
      %v2768 = vadd.f32 %v2751, %v2759
      %v2769 = vadd.f32 %v2752, %v2759
      %v2770 = vadd.f32 %v2753, %v2759
      %v2771 = vadd.f32 %v2754, %v2759
      %v2772 = vadd.f32 %v2755, %v2759
      %v2773 = vadd.f32 %v2756, %v2759
      %v2774 = vmax.f32 %v2761, 0.0
      %v2775 = vmax.f32 %v2762, 0.0
      %v2776 = vmax.f32 %v2763, 0.0
      %v2777 = vmax.f32 %v2764, 0.0
      %v2778 = vmax.f32 %v2765, 0.0
      %v2779 = vmax.f32 %v2766, 0.0
      %v2780 = vmax.f32 %v2767, 0.0
      %v2781 = vmax.f32 %v2768, 0.0
      %v2782 = vmax.f32 %v2769, 0.0
      %v2783 = vmax.f32 %v2770, 0.0
      %v2784 = vmax.f32 %v2771, 0.0
      %v2785 = vmax.f32 %v2772, 0.0
      %v2786 = vmax.f32 %v2773, 0.0
      %v2787 = vmul.f32 %v2774, %v738
      %v2788 = vmul.f32 %v2775, %v743
      %v2789 = vmul.f32 %v2776, %v748
      %v2790 = vmul.f32 %v2777, %v753
      %v2791 = vmul.f32 %v2778, %v758
      %v2792 = vmul.f32 %v2779, %v763
      %v2793 = vmul.f32 %v2780, %v768
      %v2794 = vmul.f32 %v2781, %v773
      %v2795 = vmul.f32 %v2782, %v778
      %v2796 = vmul.f32 %v2783, %v783
      %v2797 = vmul.f32 %v2784, %v788
      %v2798 = vmul.f32 %v2785, %v793
      %v2799 = vmul.f32 %v2786, %v798
      %2800 = vst.msk [vmem:[#allocation4 + $0x10] sm:$0xff] %vm498, %v2787
      %2801 = vst.msk [vmem:[#allocation4 + $0x18] sm:$0xff] %vm498, %v2788
      %2802 = vst.msk [vmem:[#allocation4 + $0x20] sm:$0xff] %vm498, %v2789
      %2803 = vst.msk [vmem:[#allocation4 + $0x28] sm:$0xff] %vm498, %v2790
      %2804 = vst.msk [vmem:[#allocation4 + $0x30] sm:$0xff] %vm498, %v2791
      %2805 = vst.msk [vmem:[#allocation4 + $0x38] sm:$0xff] %vm498, %v2792
      %2806 = vst.msk [vmem:[#allocation4 + $0x40] sm:$0xff] %vm498, %v2793
      %2807 = vst.msk [vmem:[#allocation4 + $0x48] sm:$0xff] %vm498, %v2794
      %2808 = vst.msk [vmem:[#allocation4 + $0x50] sm:$0xff] %vm498, %v2795
      %2809 = vst.msk [vmem:[#allocation4 + $0x58] sm:$0xff] %vm498, %v2796
      %2810 = vst.msk [vmem:[#allocation4 + $0x60] sm:$0xff] %vm498, %v2797
      %2811 = vst.msk [vmem:[#allocation4 + $0x68] sm:$0xff] %vm498, %v2798
      %2812 = vst.msk [vmem:[#allocation4 + $0x70] sm:$0xf] %vm515, %v2799
      %v2813 = vld [vmem:[#allocation3 + $0x6] sm:$0xff]
      %v2814 = vld [vmem:[#allocation3 + $0xe] sm:$0xff]
      %v2815 = vld [vmem:[#allocation3 + $0x16] sm:$0xff]
      %v2816 = vld [vmem:[#allocation3 + $0x1e] sm:$0xff]
      %v2817 = vld [vmem:[#allocation3 + $0x26] sm:$0xff]
      %v2818 = vld [vmem:[#allocation3 + $0x2e] sm:$0xff]
      %v2819 = vld [vmem:[#allocation3 + $0x36] sm:$0xff]
      %v2820 = vld [vmem:[#allocation3 + $0x3e] sm:$0xff]
      %v2821 = vld [vmem:[#allocation3 + $0x46] sm:$0xff]
      %v2822 = vld [vmem:[#allocation3 + $0x4e] sm:$0xff]
      %v2823 = vld [vmem:[#allocation3 + $0x56] sm:$0xff]
      %v2824 = vld [vmem:[#allocation3 + $0x5e] sm:$0xff]
      %v2825 = vld [vmem:[#allocation3 + $0x66] sm:$0xf]
      %v2826 = vpack.c.bf16 %v2814, %v2813
      %v2827 = vpack.c.bf16 %v2816, %v2815
      %v2828 = vpack.c.bf16 %v2818, %v2817
      %v2829 = vpack.c.bf16 %v2820, %v2819
      %v2830 = vpack.c.bf16 %v2822, %v2821
      %v2831 = vpack.c.bf16 %v2824, %v2823
      %v2832 = vpack.c.bf16 %v2825, %v2825
      %s2833 = scalar_lea.vmem %s6, 64
      %v2834 = vld [vmem:[%s2833] sm:$0xf]
      %v2835 = vld [vmem:[%s2833 + $0x4] sm:$0xf]
      %v2836 = vld [vmem:[%s2833 + $0x8] sm:$0xf]
      %v2837 = vld [vmem:[%s2833 + $0xc] sm:$0xf]
      %v2838 = vld [vmem:[#allocation3 + $0x7] sm:$0xff]
      %v2839 = vld [vmem:[#allocation3 + $0xf] sm:$0xff]
      %v2840 = vld [vmem:[#allocation3 + $0x17] sm:$0xff]
      %v2841 = vld [vmem:[#allocation3 + $0x1f] sm:$0xff]
      %v2842 = vld [vmem:[#allocation3 + $0x27] sm:$0xff]
      %v2843 = vld [vmem:[#allocation3 + $0x2f] sm:$0xff]
      %v2844 = vld [vmem:[#allocation3 + $0x37] sm:$0xff]
      %v2845 = vld [vmem:[#allocation3 + $0x3f] sm:$0xff]
      %v2846 = vld [vmem:[#allocation3 + $0x47] sm:$0xff]
      %v2847 = vld [vmem:[#allocation3 + $0x4f] sm:$0xff]
      %v2848 = vld [vmem:[#allocation3 + $0x57] sm:$0xff]
      %v2849 = vld [vmem:[#allocation3 + $0x5f] sm:$0xff]
      %v2850 = vld [vmem:[#allocation3 + $0x67] sm:$0xf]
      %v2851 = vpack.c.bf16 %v2839, %v2838
      %v2852 = vpack.c.bf16 %v2841, %v2840
      %v2853 = vpack.c.bf16 %v2843, %v2842
      %v2854 = vpack.c.bf16 %v2845, %v2844
      %v2855 = vpack.c.bf16 %v2847, %v2846
      %v2856 = vpack.c.bf16 %v2849, %v2848
      %v2857 = vpack.c.bf16 %v2850, %v2850
      %s2858 = scalar_lea.vmem %s6, 80
      %v2859 = vld [vmem:[%s2858] sm:$0xf]
      %v2860 = vld [vmem:[%s2858 + $0x4] sm:$0xf]
      %v2861 = vld [vmem:[%s2858 + $0x8] sm:$0xf]
      %v2862 = vld [vmem:[%s2858 + $0xc] sm:$0xf]
      %v2867 = vunpack.c.l.b16 %v2859
      %v2868 = vunpack.c.l.b16 %v2860
      %v2869 = vunpack.c.l.b16 %v2861
      %v2870 = vunpack.c.l.b16 %v2862
      %v2871 = vpack.c.b16 %v2868, %v2867
      %v2872 = vpack.c.b16 %v2870, %v2869
      %v2876 = vsel %vm498, %v2851, 0
      %v2879 = vsel %vm498, %v2852, 0
      %v2882 = vsel %vm498, %v2853, 0
      %v2885 = vsel %vm498, %v2854, 0
      %v2888 = vsel %vm498, %v2855, 0
      %v2891 = vsel %vm498, %v2856, 0
      %v2894 = vsel %vm498, %v2857, 0
      %2896 = vmatpush.bf16.msra.mxu0 0
      %2897 = vmatpush.bf16.msra.mxu0 0
      %2898 = vmatpush.bf16.msra.mxu0 0
      %2899 = vmatpush.bf16.msra.mxu0 0
      %2900 = vmatpush.bf16.msra.mxu0 0
      %2901 = vmatpush.bf16.msra.mxu0 0
      %2902 = vmatpush.bf16.msra.mxu0 %v2872
      %2903 = vmatpush.bf16.msra.mxu0 %v2871
      %2904 = vmatmul.bf16.gmra.mxu0 %v2876
      %v2905 = vpop.f32.mrf.mxu0
      %v2906 = vadd.f32 0.0, %v2905
      %v2907 = vpop.f32.mrf.mxu0
      %v2908 = vadd.f32 0.0, %v2907
      %2909 = vmatmul.bf16.gmra.mxu0 %v2879
      %v2910 = vpop.f32.mrf.mxu0
      %v2911 = vadd.f32 0.0, %v2910
      %v2912 = vpop.f32.mrf.mxu0
      %v2913 = vadd.f32 0.0, %v2912
      %2914 = vmatmul.bf16.gmra.mxu0 %v2882
      %v2915 = vpop.f32.mrf.mxu0
      %v2916 = vadd.f32 0.0, %v2915
      %v2917 = vpop.f32.mrf.mxu0
      %v2918 = vadd.f32 0.0, %v2917
      %2919 = vmatmul.bf16.gmra.mxu0 %v2885
      %v2920 = vpop.f32.mrf.mxu0
      %v2921 = vadd.f32 0.0, %v2920
      %v2922 = vpop.f32.mrf.mxu0
      %v2923 = vadd.f32 0.0, %v2922
      %2924 = vmatmul.bf16.gmra.mxu0 %v2888
      %v2925 = vpop.f32.mrf.mxu0
      %v2926 = vadd.f32 0.0, %v2925
      %v2927 = vpop.f32.mrf.mxu0
      %v2928 = vadd.f32 0.0, %v2927
      %2929 = vmatmul.bf16.gmra.mxu0 %v2891
      %v2930 = vpop.f32.mrf.mxu0
      %v2931 = vadd.f32 0.0, %v2930
      %v2932 = vpop.f32.mrf.mxu0
      %v2933 = vadd.f32 0.0, %v2932
      %2934 = vmatmul.bf16.gmra.mxu0 %v2894
      %v2935 = vpop.f32.mrf.mxu0
      %v2936 = vadd.f32 0.0, %v2935
      %v2937 = vpop.f32.mrf.mxu0
      %2938 = vdwg.mxu0
      %v2943 = vunpack.c.l.b16 %v2834
      %v2944 = vunpack.c.l.b16 %v2835
      %v2945 = vunpack.c.l.b16 %v2836
      %v2946 = vunpack.c.l.b16 %v2837
      %v2947 = vpack.c.b16 %v2944, %v2943
      %v2948 = vpack.c.b16 %v2946, %v2945
      %v2952 = vsel %vm498, %v2826, 0
      %v2955 = vsel %vm498, %v2827, 0
      %v2958 = vsel %vm498, %v2828, 0
      %v2961 = vsel %vm498, %v2829, 0
      %v2964 = vsel %vm498, %v2830, 0
      %v2967 = vsel %vm498, %v2831, 0
      %v2970 = vsel %vm498, %v2832, 0
      %2972 = vmatpush.bf16.msra.mxu0 0
      %2973 = vmatpush.bf16.msra.mxu0 0
      %2974 = vmatpush.bf16.msra.mxu0 0
      %2975 = vmatpush.bf16.msra.mxu0 0
      %2976 = vmatpush.bf16.msra.mxu0 0
      %2977 = vmatpush.bf16.msra.mxu0 0
      %2978 = vmatpush.bf16.msra.mxu0 %v2948
      %2979 = vmatpush.bf16.msra.mxu0 %v2947
      %2980 = vmatmul.bf16.gmra.mxu0 %v2952
      %v2981 = vpop.f32.mrf.mxu0
      %v2982 = vadd.f32 %v2906, %v2981
      %v2983 = vpop.f32.mrf.mxu0
      %v2984 = vadd.f32 %v2908, %v2983
      %2985 = vmatmul.bf16.gmra.mxu0 %v2955
      %v2986 = vpop.f32.mrf.mxu0
      %v2987 = vadd.f32 %v2911, %v2986
      %v2988 = vpop.f32.mrf.mxu0
      %v2989 = vadd.f32 %v2913, %v2988
      %2990 = vmatmul.bf16.gmra.mxu0 %v2958
      %v2991 = vpop.f32.mrf.mxu0
      %v2992 = vadd.f32 %v2916, %v2991
      %v2993 = vpop.f32.mrf.mxu0
      %v2994 = vadd.f32 %v2918, %v2993
      %2995 = vmatmul.bf16.gmra.mxu0 %v2961
      %v2996 = vpop.f32.mrf.mxu0
      %v2997 = vadd.f32 %v2921, %v2996
      %v2998 = vpop.f32.mrf.mxu0
      %v2999 = vadd.f32 %v2923, %v2998
      %3000 = vmatmul.bf16.gmra.mxu0 %v2964
      %v3001 = vpop.f32.mrf.mxu0
      %v3002 = vadd.f32 %v2926, %v3001
      %v3003 = vpop.f32.mrf.mxu0
      %v3004 = vadd.f32 %v2928, %v3003
      %3005 = vmatmul.bf16.gmra.mxu0 %v2967
      %v3006 = vpop.f32.mrf.mxu0
      %v3007 = vadd.f32 %v2931, %v3006
      %v3008 = vpop.f32.mrf.mxu0
      %v3009 = vadd.f32 %v2933, %v3008
      %3010 = vmatmul.bf16.gmra.mxu0 %v2970
      %v3011 = vpop.f32.mrf.mxu0
      %v3012 = vadd.f32 %v2936, %v3011
      %v3013 = vpop.f32.mrf.mxu0
      %3014 = vdwg.mxu0
      %v3015 = vld [vmem:[#allocation3 + $0x10] sm:$0xff]
      %v3016 = vld [vmem:[#allocation3 + $0x18] sm:$0xff]
      %v3017 = vld [vmem:[#allocation3 + $0x20] sm:$0xff]
      %v3018 = vld [vmem:[#allocation3 + $0x28] sm:$0xff]
      %v3019 = vld [vmem:[#allocation3 + $0x30] sm:$0xff]
      %v3020 = vld [vmem:[#allocation3 + $0x38] sm:$0xff]
      %v3021 = vld [vmem:[#allocation3 + $0x40] sm:$0xff]
      %v3022 = vld [vmem:[#allocation3 + $0x48] sm:$0xff]
      %v3023 = vld [vmem:[#allocation3 + $0x50] sm:$0xff]
      %v3024 = vld [vmem:[#allocation3 + $0x58] sm:$0xff]
      %v3025 = vld [vmem:[#allocation3 + $0x60] sm:$0xff]
      %v3026 = vld [vmem:[#allocation3 + $0x68] sm:$0xff]
      %v3027 = vld [vmem:[#allocation3 + $0x70] sm:$0xf]
      %v3028 = vpack.c.bf16 %v3016, %v3015
      %v3029 = vpack.c.bf16 %v3018, %v3017
      %v3030 = vpack.c.bf16 %v3020, %v3019
      %v3031 = vpack.c.bf16 %v3022, %v3021
      %v3032 = vpack.c.bf16 %v3024, %v3023
      %v3033 = vpack.c.bf16 %v3026, %v3025
      %v3034 = vpack.c.bf16 %v3027, %v3027
      %s3035 = scalar_lea.vmem %s6, 96
      %v3036 = vld [vmem:[%s3035] sm:$0xf]
      %v3037 = vld [vmem:[%s3035 + $0x4] sm:$0xf]
      %v3038 = vld [vmem:[%s3035 + $0x8] sm:$0xf]
      %v3039 = vld [vmem:[%s3035 + $0xc] sm:$0xf]
      %v3044 = vunpack.c.l.b16 %v3036
      %v3045 = vunpack.c.l.b16 %v3037
      %v3046 = vunpack.c.l.b16 %v3038
      %v3047 = vunpack.c.l.b16 %v3039
      %v3048 = vpack.c.b16 %v3045, %v3044
      %v3049 = vpack.c.b16 %v3047, %v3046
      %v3053 = vsel %vm498, %v3028, 0
      %v3056 = vsel %vm498, %v3029, 0
      %v3059 = vsel %vm498, %v3030, 0
      %v3062 = vsel %vm498, %v3031, 0
      %v3065 = vsel %vm498, %v3032, 0
      %v3068 = vsel %vm498, %v3033, 0
      %v3071 = vsel %vm498, %v3034, 0
      %3073 = vmatpush.bf16.msra.mxu0 0
      %3074 = vmatpush.bf16.msra.mxu0 0
      %3075 = vmatpush.bf16.msra.mxu0 0
      %3076 = vmatpush.bf16.msra.mxu0 0
      %3077 = vmatpush.bf16.msra.mxu0 0
      %3078 = vmatpush.bf16.msra.mxu0 0
      %3079 = vmatpush.bf16.msra.mxu0 %v3049
      %3080 = vmatpush.bf16.msra.mxu0 %v3048
      %3081 = vmatmul.bf16.gmra.mxu0 %v3053
      %v3082 = vpop.f32.mrf.mxu0
      %v3083 = vadd.f32 0.0, %v3082
      %v3084 = vpop.f32.mrf.mxu0
      %v3085 = vadd.f32 0.0, %v3084
      %3086 = vmatmul.bf16.gmra.mxu0 %v3056
      %v3087 = vpop.f32.mrf.mxu0
      %v3088 = vadd.f32 0.0, %v3087
      %v3089 = vpop.f32.mrf.mxu0
      %v3090 = vadd.f32 0.0, %v3089
      %3091 = vmatmul.bf16.gmra.mxu0 %v3059
      %v3092 = vpop.f32.mrf.mxu0
      %v3093 = vadd.f32 0.0, %v3092
      %v3094 = vpop.f32.mrf.mxu0
      %v3095 = vadd.f32 0.0, %v3094
      %3096 = vmatmul.bf16.gmra.mxu0 %v3062
      %v3097 = vpop.f32.mrf.mxu0
      %v3098 = vadd.f32 0.0, %v3097
      %v3099 = vpop.f32.mrf.mxu0
      %v3100 = vadd.f32 0.0, %v3099
      %3101 = vmatmul.bf16.gmra.mxu0 %v3065
      %v3102 = vpop.f32.mrf.mxu0
      %v3103 = vadd.f32 0.0, %v3102
      %v3104 = vpop.f32.mrf.mxu0
      %v3105 = vadd.f32 0.0, %v3104
      %3106 = vmatmul.bf16.gmra.mxu0 %v3068
      %v3107 = vpop.f32.mrf.mxu0
      %v3108 = vadd.f32 0.0, %v3107
      %v3109 = vpop.f32.mrf.mxu0
      %v3110 = vadd.f32 0.0, %v3109
      %3111 = vmatmul.bf16.gmra.mxu0 %v3071
      %v3112 = vpop.f32.mrf.mxu0
      %v3113 = vadd.f32 0.0, %v3112
      %v3114 = vpop.f32.mrf.mxu0
      %3115 = vdwg.mxu0
      %v3116 = vadd.f32 %v2982, %v3083
      %v3117 = vadd.f32 %v2984, %v3085
      %v3118 = vadd.f32 %v2987, %v3088
      %v3119 = vadd.f32 %v2989, %v3090
      %v3120 = vadd.f32 %v2992, %v3093
      %v3121 = vadd.f32 %v2994, %v3095
      %v3122 = vadd.f32 %v2997, %v3098
      %v3123 = vadd.f32 %v2999, %v3100
      %v3124 = vadd.f32 %v3002, %v3103
      %v3125 = vadd.f32 %v3004, %v3105
      %v3126 = vadd.f32 %v3007, %v3108
      %v3127 = vadd.f32 %v3009, %v3110
      %v3128 = vadd.f32 %v3012, %v3113
      %v3129 = vld [vmem:[#allocation3 + $0x11] sm:$0xff]
      %v3130 = vld [vmem:[#allocation3 + $0x19] sm:$0xff]
      %v3131 = vld [vmem:[#allocation3 + $0x21] sm:$0xff]
      %v3132 = vld [vmem:[#allocation3 + $0x29] sm:$0xff]
      %v3133 = vld [vmem:[#allocation3 + $0x31] sm:$0xff]
      %v3134 = vld [vmem:[#allocation3 + $0x39] sm:$0xff]
      %v3135 = vld [vmem:[#allocation3 + $0x41] sm:$0xff]
      %v3136 = vld [vmem:[#allocation3 + $0x49] sm:$0xff]
      %v3137 = vld [vmem:[#allocation3 + $0x51] sm:$0xff]
      %v3138 = vld [vmem:[#allocation3 + $0x59] sm:$0xff]
      %v3139 = vld [vmem:[#allocation3 + $0x61] sm:$0xff]
      %v3140 = vld [vmem:[#allocation3 + $0x69] sm:$0xff]
      %v3141 = vld [vmem:[#allocation3 + $0x71] sm:$0xf]
      %v3142 = vpack.c.bf16 %v3130, %v3129
      %v3143 = vpack.c.bf16 %v3132, %v3131
      %v3144 = vpack.c.bf16 %v3134, %v3133
      %v3145 = vpack.c.bf16 %v3136, %v3135
      %v3146 = vpack.c.bf16 %v3138, %v3137
      %v3147 = vpack.c.bf16 %v3140, %v3139
      %v3148 = vpack.c.bf16 %v3141, %v3141
      %s3149 = scalar_lea.vmem %s6, 112
      %v3150 = vld [vmem:[%s3149] sm:$0xf]
      %v3151 = vld [vmem:[%s3149 + $0x4] sm:$0xf]
      %v3152 = vld [vmem:[%s3149 + $0x8] sm:$0xf]
      %v3153 = vld [vmem:[%s3149 + $0xc] sm:$0xf]
      %v3158 = vunpack.c.l.b16 %v3150
      %v3159 = vunpack.c.l.b16 %v3151
      %v3160 = vunpack.c.l.b16 %v3152
      %v3161 = vunpack.c.l.b16 %v3153
      %v3162 = vpack.c.b16 %v3159, %v3158
      %v3163 = vpack.c.b16 %v3161, %v3160
      %v3167 = vsel %vm498, %v3142, 0
      %v3170 = vsel %vm498, %v3143, 0
      %v3173 = vsel %vm498, %v3144, 0
      %v3176 = vsel %vm498, %v3145, 0
      %v3179 = vsel %vm498, %v3146, 0
      %v3182 = vsel %vm498, %v3147, 0
      %v3185 = vsel %vm498, %v3148, 0
      %3187 = vmatpush.bf16.msra.mxu0 0
      %3188 = vmatpush.bf16.msra.mxu0 0
      %3189 = vmatpush.bf16.msra.mxu0 0
      %3190 = vmatpush.bf16.msra.mxu0 0
      %3191 = vmatpush.bf16.msra.mxu0 0
      %3192 = vmatpush.bf16.msra.mxu0 0
      %3193 = vmatpush.bf16.msra.mxu0 %v3163
      %3194 = vmatpush.bf16.msra.mxu0 %v3162
      %3195 = vmatmul.bf16.gmra.mxu0 %v3167
      %v3196 = vpop.f32.mrf.mxu0
      %v3197 = vadd.f32 0.0, %v3196
      %v3198 = vpop.f32.mrf.mxu0
      %v3199 = vadd.f32 0.0, %v3198
      %3200 = vmatmul.bf16.gmra.mxu0 %v3170
      %v3201 = vpop.f32.mrf.mxu0
      %v3202 = vadd.f32 0.0, %v3201
      %v3203 = vpop.f32.mrf.mxu0
      %v3204 = vadd.f32 0.0, %v3203
      %3205 = vmatmul.bf16.gmra.mxu0 %v3173
      %v3206 = vpop.f32.mrf.mxu0
      %v3207 = vadd.f32 0.0, %v3206
      %v3208 = vpop.f32.mrf.mxu0
      %v3209 = vadd.f32 0.0, %v3208
      %3210 = vmatmul.bf16.gmra.mxu0 %v3176
      %v3211 = vpop.f32.mrf.mxu0
      %v3212 = vadd.f32 0.0, %v3211
      %v3213 = vpop.f32.mrf.mxu0
      %v3214 = vadd.f32 0.0, %v3213
      %3215 = vmatmul.bf16.gmra.mxu0 %v3179
      %v3216 = vpop.f32.mrf.mxu0
      %v3217 = vadd.f32 0.0, %v3216
      %v3218 = vpop.f32.mrf.mxu0
      %v3219 = vadd.f32 0.0, %v3218
      %3220 = vmatmul.bf16.gmra.mxu0 %v3182
      %v3221 = vpop.f32.mrf.mxu0
      %v3222 = vadd.f32 0.0, %v3221
      %v3223 = vpop.f32.mrf.mxu0
      %v3224 = vadd.f32 0.0, %v3223
      %3225 = vmatmul.bf16.gmra.mxu0 %v3185
      %v3226 = vpop.f32.mrf.mxu0
      %v3227 = vadd.f32 0.0, %v3226
      %v3228 = vpop.f32.mrf.mxu0
      %3229 = vdwg.mxu0
      %v3230 = vadd.f32 %v3116, %v3197
      %v3231 = vadd.f32 %v3117, %v3199
      %v3232 = vadd.f32 %v3118, %v3202
      %v3233 = vadd.f32 %v3119, %v3204
      %v3234 = vadd.f32 %v3120, %v3207
      %v3235 = vadd.f32 %v3121, %v3209
      %v3236 = vadd.f32 %v3122, %v3212
      %v3237 = vadd.f32 %v3123, %v3214
      %v3238 = vadd.f32 %v3124, %v3217
      %v3239 = vadd.f32 %v3125, %v3219
      %v3240 = vadd.f32 %v3126, %v3222
      %v3241 = vadd.f32 %v3127, %v3224
      %v3242 = vadd.f32 %v3128, %v3227
      %v3243 = vld [vmem:[%s7] sm:$0x1]
      %v3245 = vperm.slane %v3243, 0
      %v3247 = vadd.f32 %v3230, %v3245
      %v3248 = vadd.f32 %v3231, %v3245
      %v3249 = vadd.f32 %v3232, %v3245
      %v3250 = vadd.f32 %v3233, %v3245
      %v3251 = vadd.f32 %v3234, %v3245
      %v3252 = vadd.f32 %v3235, %v3245
      %v3253 = vadd.f32 %v3236, %v3245
      %v3254 = vadd.f32 %v3237, %v3245
      %v3255 = vadd.f32 %v3238, %v3245
      %v3256 = vadd.f32 %v3239, %v3245
      %v3257 = vadd.f32 %v3240, %v3245
      %v3258 = vadd.f32 %v3241, %v3245
      %v3259 = vadd.f32 %v3242, %v3245
      %v3260 = vmax.f32 %v3247, 0.0
      %v3261 = vmax.f32 %v3248, 0.0
      %v3262 = vmax.f32 %v3249, 0.0
      %v3263 = vmax.f32 %v3250, 0.0
      %v3264 = vmax.f32 %v3251, 0.0
      %v3265 = vmax.f32 %v3252, 0.0
      %v3266 = vmax.f32 %v3253, 0.0
      %v3267 = vmax.f32 %v3254, 0.0
      %v3268 = vmax.f32 %v3255, 0.0
      %v3269 = vmax.f32 %v3256, 0.0
      %v3270 = vmax.f32 %v3257, 0.0
      %v3271 = vmax.f32 %v3258, 0.0
      %v3272 = vmax.f32 %v3259, 0.0
      %v3273 = vmul.f32 %v3260, %v738
      %v3274 = vmul.f32 %v3261, %v743
      %v3275 = vmul.f32 %v3262, %v748
      %v3276 = vmul.f32 %v3263, %v753
      %v3277 = vmul.f32 %v3264, %v758
      %v3278 = vmul.f32 %v3265, %v763
      %v3279 = vmul.f32 %v3266, %v768
      %v3280 = vmul.f32 %v3267, %v773
      %v3281 = vmul.f32 %v3268, %v778
      %v3282 = vmul.f32 %v3269, %v783
      %v3283 = vmul.f32 %v3270, %v788
      %v3284 = vmul.f32 %v3271, %v793
      %v3285 = vmul.f32 %v3272, %v798
      %s3286 = scalar_lea.vmem [#allocation4], 136
      %3287 = vst.msk [vmem:[%s3286 + $0x10] sm:$0xff] %vm498, %v3273
      %3288 = vst.msk [vmem:[%s3286 + $0x18] sm:$0xff] %vm498, %v3274
      %3289 = vst.msk [vmem:[%s3286 + $0x20] sm:$0xff] %vm498, %v3275
      %3290 = vst.msk [vmem:[%s3286 + $0x28] sm:$0xff] %vm498, %v3276
      %3291 = vst.msk [vmem:[%s3286 + $0x30] sm:$0xff] %vm498, %v3277
      %3292 = vst.msk [vmem:[%s3286 + $0x38] sm:$0xff] %vm498, %v3278
      %3293 = vst.msk [vmem:[%s3286 + $0x40] sm:$0xff] %vm498, %v3279
      %3294 = vst.msk [vmem:[%s3286 + $0x48] sm:$0xff] %vm498, %v3280
      %3295 = vst.msk [vmem:[%s3286 + $0x50] sm:$0xff] %vm498, %v3281
      %3296 = vst.msk [vmem:[%s3286 + $0x58] sm:$0xff] %vm498, %v3282
      %3297 = vst.msk [vmem:[%s3286 + $0x60] sm:$0xff] %vm498, %v3283
      %3298 = vst.msk [vmem:[%s3286 + $0x68] sm:$0xff] %vm498, %v3284
      %3299 = vst.msk [vmem:[%s3286 + $0x70] sm:$0xf] %vm515, %v3285
      %v3300 = vld [vmem:[#allocation3 + $0xf] sm:$0xff]
      %v3301 = vld [vmem:[#allocation3 + $0x17] sm:$0xff]
      %v3302 = vld [vmem:[#allocation3 + $0x1f] sm:$0xff]
      %v3303 = vld [vmem:[#allocation3 + $0x27] sm:$0xff]
      %v3304 = vld [vmem:[#allocation3 + $0x2f] sm:$0xff]
      %v3305 = vld [vmem:[#allocation3 + $0x37] sm:$0xff]
      %v3306 = vld [vmem:[#allocation3 + $0x3f] sm:$0xff]
      %v3307 = vld [vmem:[#allocation3 + $0x47] sm:$0xff]
      %v3308 = vld [vmem:[#allocation3 + $0x4f] sm:$0xff]
      %v3309 = vld [vmem:[#allocation3 + $0x57] sm:$0xff]
      %v3310 = vld [vmem:[#allocation3 + $0x5f] sm:$0xff]
      %v3311 = vld [vmem:[#allocation3 + $0x67] sm:$0xff]
      %v3312 = vld [vmem:[#allocation3 + $0x6f] sm:$0xf]
      %v3313 = vpack.c.bf16 %v3301, %v3300
      %v3314 = vpack.c.bf16 %v3303, %v3302
      %v3315 = vpack.c.bf16 %v3305, %v3304
      %v3316 = vpack.c.bf16 %v3307, %v3306
      %v3317 = vpack.c.bf16 %v3309, %v3308
      %v3318 = vpack.c.bf16 %v3311, %v3310
      %v3319 = vpack.c.bf16 %v3312, %v3312
      %s3320 = scalar_lea.vmem %s6, 128
      %v3321 = vld [vmem:[%s3320] sm:$0xf]
      %v3322 = vld [vmem:[%s3320 + $0x4] sm:$0xf]
      %v3323 = vld [vmem:[%s3320 + $0x8] sm:$0xf]
      %v3324 = vld [vmem:[%s3320 + $0xc] sm:$0xf]
      %v3325 = vld [vmem:[#allocation3 + $0x10] sm:$0xff]
      %v3326 = vld [vmem:[#allocation3 + $0x18] sm:$0xff]
      %v3327 = vld [vmem:[#allocation3 + $0x20] sm:$0xff]
      %v3328 = vld [vmem:[#allocation3 + $0x28] sm:$0xff]
      %v3329 = vld [vmem:[#allocation3 + $0x30] sm:$0xff]
      %v3330 = vld [vmem:[#allocation3 + $0x38] sm:$0xff]
      %v3331 = vld [vmem:[#allocation3 + $0x40] sm:$0xff]
      %v3332 = vld [vmem:[#allocation3 + $0x48] sm:$0xff]
      %v3333 = vld [vmem:[#allocation3 + $0x50] sm:$0xff]
      %v3334 = vld [vmem:[#allocation3 + $0x58] sm:$0xff]
      %v3335 = vld [vmem:[#allocation3 + $0x60] sm:$0xff]
      %v3336 = vld [vmem:[#allocation3 + $0x68] sm:$0xff]
      %v3337 = vld [vmem:[#allocation3 + $0x70] sm:$0xf]
      %v3338 = vpack.c.bf16 %v3326, %v3325
      %v3339 = vpack.c.bf16 %v3328, %v3327
      %v3340 = vpack.c.bf16 %v3330, %v3329
      %v3341 = vpack.c.bf16 %v3332, %v3331
      %v3342 = vpack.c.bf16 %v3334, %v3333
      %v3343 = vpack.c.bf16 %v3336, %v3335
      %v3344 = vpack.c.bf16 %v3337, %v3337
      %s3345 = scalar_lea.vmem %s6, 144
      %v3346 = vld [vmem:[%s3345] sm:$0xf]
      %v3347 = vld [vmem:[%s3345 + $0x4] sm:$0xf]
      %v3348 = vld [vmem:[%s3345 + $0x8] sm:$0xf]
      %v3349 = vld [vmem:[%s3345 + $0xc] sm:$0xf]
      %v3354 = vunpack.c.l.b16 %v3346
      %v3355 = vunpack.c.l.b16 %v3347
      %v3356 = vunpack.c.l.b16 %v3348
      %v3357 = vunpack.c.l.b16 %v3349
      %v3358 = vpack.c.b16 %v3355, %v3354
      %v3359 = vpack.c.b16 %v3357, %v3356
      %v3363 = vsel %vm498, %v3338, 0
      %v3366 = vsel %vm498, %v3339, 0
      %v3369 = vsel %vm498, %v3340, 0
      %v3372 = vsel %vm498, %v3341, 0
      %v3375 = vsel %vm498, %v3342, 0
      %v3378 = vsel %vm498, %v3343, 0
      %v3381 = vsel %vm498, %v3344, 0
      %3383 = vmatpush.bf16.msra.mxu0 0
      %3384 = vmatpush.bf16.msra.mxu0 0
      %3385 = vmatpush.bf16.msra.mxu0 0
      %3386 = vmatpush.bf16.msra.mxu0 0
      %3387 = vmatpush.bf16.msra.mxu0 0
      %3388 = vmatpush.bf16.msra.mxu0 0
      %3389 = vmatpush.bf16.msra.mxu0 %v3359
      %3390 = vmatpush.bf16.msra.mxu0 %v3358
      %3391 = vmatmul.bf16.gmra.mxu0 %v3363
      %v3392 = vpop.f32.mrf.mxu0
      %v3393 = vadd.f32 0.0, %v3392
      %v3394 = vpop.f32.mrf.mxu0
      %v3395 = vadd.f32 0.0, %v3394
      %3396 = vmatmul.bf16.gmra.mxu0 %v3366
      %v3397 = vpop.f32.mrf.mxu0
      %v3398 = vadd.f32 0.0, %v3397
      %v3399 = vpop.f32.mrf.mxu0
      %v3400 = vadd.f32 0.0, %v3399
      %3401 = vmatmul.bf16.gmra.mxu0 %v3369
      %v3402 = vpop.f32.mrf.mxu0
      %v3403 = vadd.f32 0.0, %v3402
      %v3404 = vpop.f32.mrf.mxu0
      %v3405 = vadd.f32 0.0, %v3404
      %3406 = vmatmul.bf16.gmra.mxu0 %v3372
      %v3407 = vpop.f32.mrf.mxu0
      %v3408 = vadd.f32 0.0, %v3407
      %v3409 = vpop.f32.mrf.mxu0
      %v3410 = vadd.f32 0.0, %v3409
      %3411 = vmatmul.bf16.gmra.mxu0 %v3375
      %v3412 = vpop.f32.mrf.mxu0
      %v3413 = vadd.f32 0.0, %v3412
      %v3414 = vpop.f32.mrf.mxu0
      %v3415 = vadd.f32 0.0, %v3414
      %3416 = vmatmul.bf16.gmra.mxu0 %v3378
      %v3417 = vpop.f32.mrf.mxu0
      %v3418 = vadd.f32 0.0, %v3417
      %v3419 = vpop.f32.mrf.mxu0
      %v3420 = vadd.f32 0.0, %v3419
      %3421 = vmatmul.bf16.gmra.mxu0 %v3381
      %v3422 = vpop.f32.mrf.mxu0
      %v3423 = vadd.f32 0.0, %v3422
      %v3424 = vpop.f32.mrf.mxu0
      %3425 = vdwg.mxu0
      %v3430 = vunpack.c.l.b16 %v3321
      %v3431 = vunpack.c.l.b16 %v3322
      %v3432 = vunpack.c.l.b16 %v3323
      %v3433 = vunpack.c.l.b16 %v3324
      %v3434 = vpack.c.b16 %v3431, %v3430
      %v3435 = vpack.c.b16 %v3433, %v3432
      %v3439 = vsel %vm498, %v3313, 0
      %v3442 = vsel %vm498, %v3314, 0
      %v3445 = vsel %vm498, %v3315, 0
      %v3448 = vsel %vm498, %v3316, 0
      %v3451 = vsel %vm498, %v3317, 0
      %v3454 = vsel %vm498, %v3318, 0
      %v3457 = vsel %vm498, %v3319, 0
      %3459 = vmatpush.bf16.msra.mxu0 0
      %3460 = vmatpush.bf16.msra.mxu0 0
      %3461 = vmatpush.bf16.msra.mxu0 0
      %3462 = vmatpush.bf16.msra.mxu0 0
      %3463 = vmatpush.bf16.msra.mxu0 0
      %3464 = vmatpush.bf16.msra.mxu0 0
      %3465 = vmatpush.bf16.msra.mxu0 %v3435
      %3466 = vmatpush.bf16.msra.mxu0 %v3434
      %3467 = vmatmul.bf16.gmra.mxu0 %v3439
      %v3468 = vpop.f32.mrf.mxu0
      %v3469 = vadd.f32 %v3393, %v3468
      %v3470 = vpop.f32.mrf.mxu0
      %v3471 = vadd.f32 %v3395, %v3470
      %3472 = vmatmul.bf16.gmra.mxu0 %v3442
      %v3473 = vpop.f32.mrf.mxu0
      %v3474 = vadd.f32 %v3398, %v3473
      %v3475 = vpop.f32.mrf.mxu0
      %v3476 = vadd.f32 %v3400, %v3475
      %3477 = vmatmul.bf16.gmra.mxu0 %v3445
      %v3478 = vpop.f32.mrf.mxu0
      %v3479 = vadd.f32 %v3403, %v3478
      %v3480 = vpop.f32.mrf.mxu0
      %v3481 = vadd.f32 %v3405, %v3480
      %3482 = vmatmul.bf16.gmra.mxu0 %v3448
      %v3483 = vpop.f32.mrf.mxu0
      %v3484 = vadd.f32 %v3408, %v3483
      %v3485 = vpop.f32.mrf.mxu0
      %v3486 = vadd.f32 %v3410, %v3485
      %3487 = vmatmul.bf16.gmra.mxu0 %v3451
      %v3488 = vpop.f32.mrf.mxu0
      %v3489 = vadd.f32 %v3413, %v3488
      %v3490 = vpop.f32.mrf.mxu0
      %v3491 = vadd.f32 %v3415, %v3490
      %3492 = vmatmul.bf16.gmra.mxu0 %v3454
      %v3493 = vpop.f32.mrf.mxu0
      %v3494 = vadd.f32 %v3418, %v3493
      %v3495 = vpop.f32.mrf.mxu0
      %v3496 = vadd.f32 %v3420, %v3495
      %3497 = vmatmul.bf16.gmra.mxu0 %v3457
      %v3498 = vpop.f32.mrf.mxu0
      %v3499 = vadd.f32 %v3423, %v3498
      %v3500 = vpop.f32.mrf.mxu0
      %3501 = vdwg.mxu0
      %v3502 = vld [vmem:[#allocation3 + $0x19] sm:$0xff]
      %v3503 = vld [vmem:[#allocation3 + $0x21] sm:$0xff]
      %v3504 = vld [vmem:[#allocation3 + $0x29] sm:$0xff]
      %v3505 = vld [vmem:[#allocation3 + $0x31] sm:$0xff]
      %v3506 = vld [vmem:[#allocation3 + $0x39] sm:$0xff]
      %v3507 = vld [vmem:[#allocation3 + $0x41] sm:$0xff]
      %v3508 = vld [vmem:[#allocation3 + $0x49] sm:$0xff]
      %v3509 = vld [vmem:[#allocation3 + $0x51] sm:$0xff]
      %v3510 = vld [vmem:[#allocation3 + $0x59] sm:$0xff]
      %v3511 = vld [vmem:[#allocation3 + $0x61] sm:$0xff]
      %v3512 = vld [vmem:[#allocation3 + $0x69] sm:$0xff]
      %v3513 = vld [vmem:[#allocation3 + $0x71] sm:$0xff]
      %v3514 = vld [vmem:[#allocation3 + $0x79] sm:$0xf]
      %v3515 = vpack.c.bf16 %v3503, %v3502
      %v3516 = vpack.c.bf16 %v3505, %v3504
      %v3517 = vpack.c.bf16 %v3507, %v3506
      %v3518 = vpack.c.bf16 %v3509, %v3508
      %v3519 = vpack.c.bf16 %v3511, %v3510
      %v3520 = vpack.c.bf16 %v3513, %v3512
      %v3521 = vpack.c.bf16 %v3514, %v3514
      %s3522 = scalar_lea.vmem %s6, 160
      %v3523 = vld [vmem:[%s3522] sm:$0xf]
      %v3524 = vld [vmem:[%s3522 + $0x4] sm:$0xf]
      %v3525 = vld [vmem:[%s3522 + $0x8] sm:$0xf]
      %v3526 = vld [vmem:[%s3522 + $0xc] sm:$0xf]
      %v3531 = vunpack.c.l.b16 %v3523
      %v3532 = vunpack.c.l.b16 %v3524
      %v3533 = vunpack.c.l.b16 %v3525
      %v3534 = vunpack.c.l.b16 %v3526
      %v3535 = vpack.c.b16 %v3532, %v3531
      %v3536 = vpack.c.b16 %v3534, %v3533
      %v3540 = vsel %vm498, %v3515, 0
      %v3543 = vsel %vm498, %v3516, 0
      %v3546 = vsel %vm498, %v3517, 0
      %v3549 = vsel %vm498, %v3518, 0
      %v3552 = vsel %vm498, %v3519, 0
      %v3555 = vsel %vm498, %v3520, 0
      %v3558 = vsel %vm498, %v3521, 0
      %3560 = vmatpush.bf16.msra.mxu0 0
      %3561 = vmatpush.bf16.msra.mxu0 0
      %3562 = vmatpush.bf16.msra.mxu0 0
      %3563 = vmatpush.bf16.msra.mxu0 0
      %3564 = vmatpush.bf16.msra.mxu0 0
      %3565 = vmatpush.bf16.msra.mxu0 0
      %3566 = vmatpush.bf16.msra.mxu0 %v3536
      %3567 = vmatpush.bf16.msra.mxu0 %v3535
      %3568 = vmatmul.bf16.gmra.mxu0 %v3540
      %v3569 = vpop.f32.mrf.mxu0
      %v3570 = vadd.f32 0.0, %v3569
      %v3571 = vpop.f32.mrf.mxu0
      %v3572 = vadd.f32 0.0, %v3571
      %3573 = vmatmul.bf16.gmra.mxu0 %v3543
      %v3574 = vpop.f32.mrf.mxu0
      %v3575 = vadd.f32 0.0, %v3574
      %v3576 = vpop.f32.mrf.mxu0
      %v3577 = vadd.f32 0.0, %v3576
      %3578 = vmatmul.bf16.gmra.mxu0 %v3546
      %v3579 = vpop.f32.mrf.mxu0
      %v3580 = vadd.f32 0.0, %v3579
      %v3581 = vpop.f32.mrf.mxu0
      %v3582 = vadd.f32 0.0, %v3581
      %3583 = vmatmul.bf16.gmra.mxu0 %v3549
      %v3584 = vpop.f32.mrf.mxu0
      %v3585 = vadd.f32 0.0, %v3584
      %v3586 = vpop.f32.mrf.mxu0
      %v3587 = vadd.f32 0.0, %v3586
      %3588 = vmatmul.bf16.gmra.mxu0 %v3552
      %v3589 = vpop.f32.mrf.mxu0
      %v3590 = vadd.f32 0.0, %v3589
      %v3591 = vpop.f32.mrf.mxu0
      %v3592 = vadd.f32 0.0, %v3591
      %3593 = vmatmul.bf16.gmra.mxu0 %v3555
      %v3594 = vpop.f32.mrf.mxu0
      %v3595 = vadd.f32 0.0, %v3594
      %v3596 = vpop.f32.mrf.mxu0
      %v3597 = vadd.f32 0.0, %v3596
      %3598 = vmatmul.bf16.gmra.mxu0 %v3558
      %v3599 = vpop.f32.mrf.mxu0
      %v3600 = vadd.f32 0.0, %v3599
      %v3601 = vpop.f32.mrf.mxu0
      %3602 = vdwg.mxu0
      %v3603 = vadd.f32 %v3469, %v3570
      %v3604 = vadd.f32 %v3471, %v3572
      %v3605 = vadd.f32 %v3474, %v3575
      %v3606 = vadd.f32 %v3476, %v3577
      %v3607 = vadd.f32 %v3479, %v3580
      %v3608 = vadd.f32 %v3481, %v3582
      %v3609 = vadd.f32 %v3484, %v3585
      %v3610 = vadd.f32 %v3486, %v3587
      %v3611 = vadd.f32 %v3489, %v3590
      %v3612 = vadd.f32 %v3491, %v3592
      %v3613 = vadd.f32 %v3494, %v3595
      %v3614 = vadd.f32 %v3496, %v3597
      %v3615 = vadd.f32 %v3499, %v3600
      %v3616 = vld [vmem:[#allocation3 + $0x1a] sm:$0xff]
      %v3617 = vld [vmem:[#allocation3 + $0x22] sm:$0xff]
      %v3618 = vld [vmem:[#allocation3 + $0x2a] sm:$0xff]
      %v3619 = vld [vmem:[#allocation3 + $0x32] sm:$0xff]
      %v3620 = vld [vmem:[#allocation3 + $0x3a] sm:$0xff]
      %v3621 = vld [vmem:[#allocation3 + $0x42] sm:$0xff]
      %v3622 = vld [vmem:[#allocation3 + $0x4a] sm:$0xff]
      %v3623 = vld [vmem:[#allocation3 + $0x52] sm:$0xff]
      %v3624 = vld [vmem:[#allocation3 + $0x5a] sm:$0xff]
      %v3625 = vld [vmem:[#allocation3 + $0x62] sm:$0xff]
      %v3626 = vld [vmem:[#allocation3 + $0x6a] sm:$0xff]
      %v3627 = vld [vmem:[#allocation3 + $0x72] sm:$0xff]
      %v3628 = vld [vmem:[#allocation3 + $0x7a] sm:$0xf]
      %v3629 = vpack.c.bf16 %v3617, %v3616
      %v3630 = vpack.c.bf16 %v3619, %v3618
      %v3631 = vpack.c.bf16 %v3621, %v3620
      %v3632 = vpack.c.bf16 %v3623, %v3622
      %v3633 = vpack.c.bf16 %v3625, %v3624
      %v3634 = vpack.c.bf16 %v3627, %v3626
      %v3635 = vpack.c.bf16 %v3628, %v3628
      %s3636 = scalar_lea.vmem %s6, 176
      %v3637 = vld [vmem:[%s3636] sm:$0xf]
      %v3638 = vld [vmem:[%s3636 + $0x4] sm:$0xf]
      %v3639 = vld [vmem:[%s3636 + $0x8] sm:$0xf]
      %v3640 = vld [vmem:[%s3636 + $0xc] sm:$0xf]
      %v3645 = vunpack.c.l.b16 %v3637
      %v3646 = vunpack.c.l.b16 %v3638
      %v3647 = vunpack.c.l.b16 %v3639
      %v3648 = vunpack.c.l.b16 %v3640
      %v3649 = vpack.c.b16 %v3646, %v3645
      %v3650 = vpack.c.b16 %v3648, %v3647
      %v3654 = vsel %vm498, %v3629, 0
      %v3657 = vsel %vm498, %v3630, 0
      %v3660 = vsel %vm498, %v3631, 0
      %v3663 = vsel %vm498, %v3632, 0
      %v3666 = vsel %vm498, %v3633, 0
      %v3669 = vsel %vm498, %v3634, 0
      %v3672 = vsel %vm498, %v3635, 0
      %3674 = vmatpush.bf16.msra.mxu0 0
      %3675 = vmatpush.bf16.msra.mxu0 0
      %3676 = vmatpush.bf16.msra.mxu0 0
      %3677 = vmatpush.bf16.msra.mxu0 0
      %3678 = vmatpush.bf16.msra.mxu0 0
      %3679 = vmatpush.bf16.msra.mxu0 0
      %3680 = vmatpush.bf16.msra.mxu0 %v3650
      %3681 = vmatpush.bf16.msra.mxu0 %v3649
      %3682 = vmatmul.bf16.gmra.mxu0 %v3654
      %v3683 = vpop.f32.mrf.mxu0
      %v3684 = vadd.f32 0.0, %v3683
      %v3685 = vpop.f32.mrf.mxu0
      %v3686 = vadd.f32 0.0, %v3685
      %3687 = vmatmul.bf16.gmra.mxu0 %v3657
      %v3688 = vpop.f32.mrf.mxu0
      %v3689 = vadd.f32 0.0, %v3688
      %v3690 = vpop.f32.mrf.mxu0
      %v3691 = vadd.f32 0.0, %v3690
      %3692 = vmatmul.bf16.gmra.mxu0 %v3660
      %v3693 = vpop.f32.mrf.mxu0
      %v3694 = vadd.f32 0.0, %v3693
      %v3695 = vpop.f32.mrf.mxu0
      %v3696 = vadd.f32 0.0, %v3695
      %3697 = vmatmul.bf16.gmra.mxu0 %v3663
      %v3698 = vpop.f32.mrf.mxu0
      %v3699 = vadd.f32 0.0, %v3698
      %v3700 = vpop.f32.mrf.mxu0
      %v3701 = vadd.f32 0.0, %v3700
      %3702 = vmatmul.bf16.gmra.mxu0 %v3666
      %v3703 = vpop.f32.mrf.mxu0
      %v3704 = vadd.f32 0.0, %v3703
      %v3705 = vpop.f32.mrf.mxu0
      %v3706 = vadd.f32 0.0, %v3705
      %3707 = vmatmul.bf16.gmra.mxu0 %v3669
      %v3708 = vpop.f32.mrf.mxu0
      %v3709 = vadd.f32 0.0, %v3708
      %v3710 = vpop.f32.mrf.mxu0
      %v3711 = vadd.f32 0.0, %v3710
      %3712 = vmatmul.bf16.gmra.mxu0 %v3672
      %v3713 = vpop.f32.mrf.mxu0
      %v3714 = vadd.f32 0.0, %v3713
      %v3715 = vpop.f32.mrf.mxu0
      %3716 = vdwg.mxu0
      %v3717 = vadd.f32 %v3603, %v3684
      %v3718 = vadd.f32 %v3604, %v3686
      %v3719 = vadd.f32 %v3605, %v3689
      %v3720 = vadd.f32 %v3606, %v3691
      %v3721 = vadd.f32 %v3607, %v3694
      %v3722 = vadd.f32 %v3608, %v3696
      %v3723 = vadd.f32 %v3609, %v3699
      %v3724 = vadd.f32 %v3610, %v3701
      %v3725 = vadd.f32 %v3611, %v3704
      %v3726 = vadd.f32 %v3612, %v3706
      %v3727 = vadd.f32 %v3613, %v3709
      %v3728 = vadd.f32 %v3614, %v3711
      %v3729 = vadd.f32 %v3615, %v3714
      %v3730 = vld [vmem:[%s7] sm:$0x1]
      %v3732 = vperm.slane %v3730, 0
      %v3734 = vadd.f32 %v3717, %v3732
      %v3735 = vadd.f32 %v3718, %v3732
      %v3736 = vadd.f32 %v3719, %v3732
      %v3737 = vadd.f32 %v3720, %v3732
      %v3738 = vadd.f32 %v3721, %v3732
      %v3739 = vadd.f32 %v3722, %v3732
      %v3740 = vadd.f32 %v3723, %v3732
      %v3741 = vadd.f32 %v3724, %v3732
      %v3742 = vadd.f32 %v3725, %v3732
      %v3743 = vadd.f32 %v3726, %v3732
      %v3744 = vadd.f32 %v3727, %v3732
      %v3745 = vadd.f32 %v3728, %v3732
      %v3746 = vadd.f32 %v3729, %v3732
      %v3747 = vmax.f32 %v3734, 0.0
      %v3748 = vmax.f32 %v3735, 0.0
      %v3749 = vmax.f32 %v3736, 0.0
      %v3750 = vmax.f32 %v3737, 0.0
      %v3751 = vmax.f32 %v3738, 0.0
      %v3752 = vmax.f32 %v3739, 0.0
      %v3753 = vmax.f32 %v3740, 0.0
      %v3754 = vmax.f32 %v3741, 0.0
      %v3755 = vmax.f32 %v3742, 0.0
      %v3756 = vmax.f32 %v3743, 0.0
      %v3757 = vmax.f32 %v3744, 0.0
      %v3758 = vmax.f32 %v3745, 0.0
      %v3759 = vmax.f32 %v3746, 0.0
      %v3760 = vmul.f32 %v3747, %v738
      %v3761 = vmul.f32 %v3748, %v743
      %v3762 = vmul.f32 %v3749, %v748
      %v3763 = vmul.f32 %v3750, %v753
      %v3764 = vmul.f32 %v3751, %v758
      %v3765 = vmul.f32 %v3752, %v763
      %v3766 = vmul.f32 %v3753, %v768
      %v3767 = vmul.f32 %v3754, %v773
      %v3768 = vmul.f32 %v3755, %v778
      %v3769 = vmul.f32 %v3756, %v783
      %v3770 = vmul.f32 %v3757, %v788
      %v3771 = vmul.f32 %v3758, %v793
      %v3772 = vmul.f32 %v3759, %v798
      %s3773 = scalar_lea.vmem [#allocation4], 272
      %3774 = vst.msk [vmem:[%s3773 + $0x10] sm:$0xff] %vm498, %v3760
      %3775 = vst.msk [vmem:[%s3773 + $0x18] sm:$0xff] %vm498, %v3761
      %3776 = vst.msk [vmem:[%s3773 + $0x20] sm:$0xff] %vm498, %v3762
      %3777 = vst.msk [vmem:[%s3773 + $0x28] sm:$0xff] %vm498, %v3763
      %3778 = vst.msk [vmem:[%s3773 + $0x30] sm:$0xff] %vm498, %v3764
      %3779 = vst.msk [vmem:[%s3773 + $0x38] sm:$0xff] %vm498, %v3765
      %3780 = vst.msk [vmem:[%s3773 + $0x40] sm:$0xff] %vm498, %v3766
      %3781 = vst.msk [vmem:[%s3773 + $0x48] sm:$0xff] %vm498, %v3767
      %3782 = vst.msk [vmem:[%s3773 + $0x50] sm:$0xff] %vm498, %v3768
      %3783 = vst.msk [vmem:[%s3773 + $0x58] sm:$0xff] %vm498, %v3769
      %3784 = vst.msk [vmem:[%s3773 + $0x60] sm:$0xff] %vm498, %v3770
      %3785 = vst.msk [vmem:[%s3773 + $0x68] sm:$0xff] %vm498, %v3771
      %3786 = vst.msk [vmem:[%s3773 + $0x70] sm:$0xf] %vm515, %v3772
      %v3787 = vld [vmem:[#allocation3 + $0x10] sm:$0xff]
      %v3788 = vld [vmem:[#allocation3 + $0x18] sm:$0xff]
      %v3789 = vld [vmem:[#allocation3 + $0x20] sm:$0xff]
      %v3790 = vld [vmem:[#allocation3 + $0x28] sm:$0xff]
      %v3791 = vld [vmem:[#allocation3 + $0x30] sm:$0xff]
      %v3792 = vld [vmem:[#allocation3 + $0x38] sm:$0xff]
      %v3793 = vld [vmem:[#allocation3 + $0x40] sm:$0xff]
      %v3794 = vld [vmem:[#allocation3 + $0x48] sm:$0xff]
      %v3795 = vld [vmem:[#allocation3 + $0x50] sm:$0xff]
      %v3796 = vld [vmem:[#allocation3 + $0x58] sm:$0xff]
      %v3797 = vld [vmem:[#allocation3 + $0x60] sm:$0xff]
      %v3798 = vld [vmem:[#allocation3 + $0x68] sm:$0xff]
      %v3799 = vld [vmem:[#allocation3 + $0x70] sm:$0xf]
      %v3800 = vpack.c.bf16 %v3788, %v3787
      %v3801 = vpack.c.bf16 %v3790, %v3789
      %v3802 = vpack.c.bf16 %v3792, %v3791
      %v3803 = vpack.c.bf16 %v3794, %v3793
      %v3804 = vpack.c.bf16 %v3796, %v3795
      %v3805 = vpack.c.bf16 %v3798, %v3797
      %v3806 = vpack.c.bf16 %v3799, %v3799
      %s3807 = scalar_lea.vmem %s6, 192
      %v3808 = vld [vmem:[%s3807] sm:$0xf]
      %v3809 = vld [vmem:[%s3807 + $0x4] sm:$0xf]
      %v3810 = vld [vmem:[%s3807 + $0x8] sm:$0xf]
      %v3811 = vld [vmem:[%s3807 + $0xc] sm:$0xf]
      %v3812 = vld [vmem:[#allocation3 + $0x11] sm:$0xff]
      %v3813 = vld [vmem:[#allocation3 + $0x19] sm:$0xff]
      %v3814 = vld [vmem:[#allocation3 + $0x21] sm:$0xff]
      %v3815 = vld [vmem:[#allocation3 + $0x29] sm:$0xff]
      %v3816 = vld [vmem:[#allocation3 + $0x31] sm:$0xff]
      %v3817 = vld [vmem:[#allocation3 + $0x39] sm:$0xff]
      %v3818 = vld [vmem:[#allocation3 + $0x41] sm:$0xff]
      %v3819 = vld [vmem:[#allocation3 + $0x49] sm:$0xff]
      %v3820 = vld [vmem:[#allocation3 + $0x51] sm:$0xff]
      %v3821 = vld [vmem:[#allocation3 + $0x59] sm:$0xff]
      %v3822 = vld [vmem:[#allocation3 + $0x61] sm:$0xff]
      %v3823 = vld [vmem:[#allocation3 + $0x69] sm:$0xff]
      %v3824 = vld [vmem:[#allocation3 + $0x71] sm:$0xf]
      %v3825 = vpack.c.bf16 %v3813, %v3812
      %v3826 = vpack.c.bf16 %v3815, %v3814
      %v3827 = vpack.c.bf16 %v3817, %v3816
      %v3828 = vpack.c.bf16 %v3819, %v3818
      %v3829 = vpack.c.bf16 %v3821, %v3820
      %v3830 = vpack.c.bf16 %v3823, %v3822
      %v3831 = vpack.c.bf16 %v3824, %v3824
      %s3832 = scalar_lea.vmem %s6, 208
      %v3833 = vld [vmem:[%s3832] sm:$0xf]
      %v3834 = vld [vmem:[%s3832 + $0x4] sm:$0xf]
      %v3835 = vld [vmem:[%s3832 + $0x8] sm:$0xf]
      %v3836 = vld [vmem:[%s3832 + $0xc] sm:$0xf]
      %v3841 = vunpack.c.l.b16 %v3833
      %v3842 = vunpack.c.l.b16 %v3834
      %v3843 = vunpack.c.l.b16 %v3835
      %v3844 = vunpack.c.l.b16 %v3836
      %v3845 = vpack.c.b16 %v3842, %v3841
      %v3846 = vpack.c.b16 %v3844, %v3843
      %v3850 = vsel %vm498, %v3825, 0
      %v3853 = vsel %vm498, %v3826, 0
      %v3856 = vsel %vm498, %v3827, 0
      %v3859 = vsel %vm498, %v3828, 0
      %v3862 = vsel %vm498, %v3829, 0
      %v3865 = vsel %vm498, %v3830, 0
      %v3868 = vsel %vm498, %v3831, 0
      %3870 = vmatpush.bf16.msra.mxu0 0
      %3871 = vmatpush.bf16.msra.mxu0 0
      %3872 = vmatpush.bf16.msra.mxu0 0
      %3873 = vmatpush.bf16.msra.mxu0 0
      %3874 = vmatpush.bf16.msra.mxu0 0
      %3875 = vmatpush.bf16.msra.mxu0 0
      %3876 = vmatpush.bf16.msra.mxu0 %v3846
      %3877 = vmatpush.bf16.msra.mxu0 %v3845
      %3878 = vmatmul.bf16.gmra.mxu0 %v3850
      %v3879 = vpop.f32.mrf.mxu0
      %v3880 = vadd.f32 0.0, %v3879
      %v3881 = vpop.f32.mrf.mxu0
      %v3882 = vadd.f32 0.0, %v3881
      %3883 = vmatmul.bf16.gmra.mxu0 %v3853
      %v3884 = vpop.f32.mrf.mxu0
      %v3885 = vadd.f32 0.0, %v3884
      %v3886 = vpop.f32.mrf.mxu0
      %v3887 = vadd.f32 0.0, %v3886
      %3888 = vmatmul.bf16.gmra.mxu0 %v3856
      %v3889 = vpop.f32.mrf.mxu0
      %v3890 = vadd.f32 0.0, %v3889
      %v3891 = vpop.f32.mrf.mxu0
      %v3892 = vadd.f32 0.0, %v3891
      %3893 = vmatmul.bf16.gmra.mxu0 %v3859
      %v3894 = vpop.f32.mrf.mxu0
      %v3895 = vadd.f32 0.0, %v3894
      %v3896 = vpop.f32.mrf.mxu0
      %v3897 = vadd.f32 0.0, %v3896
      %3898 = vmatmul.bf16.gmra.mxu0 %v3862
      %v3899 = vpop.f32.mrf.mxu0
      %v3900 = vadd.f32 0.0, %v3899
      %v3901 = vpop.f32.mrf.mxu0
      %v3902 = vadd.f32 0.0, %v3901
      %3903 = vmatmul.bf16.gmra.mxu0 %v3865
      %v3904 = vpop.f32.mrf.mxu0
      %v3905 = vadd.f32 0.0, %v3904
      %v3906 = vpop.f32.mrf.mxu0
      %v3907 = vadd.f32 0.0, %v3906
      %3908 = vmatmul.bf16.gmra.mxu0 %v3868
      %v3909 = vpop.f32.mrf.mxu0
      %v3910 = vadd.f32 0.0, %v3909
      %v3911 = vpop.f32.mrf.mxu0
      %3912 = vdwg.mxu0
      %v3917 = vunpack.c.l.b16 %v3808
      %v3918 = vunpack.c.l.b16 %v3809
      %v3919 = vunpack.c.l.b16 %v3810
      %v3920 = vunpack.c.l.b16 %v3811
      %v3921 = vpack.c.b16 %v3918, %v3917
      %v3922 = vpack.c.b16 %v3920, %v3919
      %v3926 = vsel %vm498, %v3800, 0
      %v3929 = vsel %vm498, %v3801, 0
      %v3932 = vsel %vm498, %v3802, 0
      %v3935 = vsel %vm498, %v3803, 0
      %v3938 = vsel %vm498, %v3804, 0
      %v3941 = vsel %vm498, %v3805, 0
      %v3944 = vsel %vm498, %v3806, 0
      %3946 = vmatpush.bf16.msra.mxu0 0
      %3947 = vmatpush.bf16.msra.mxu0 0
      %3948 = vmatpush.bf16.msra.mxu0 0
      %3949 = vmatpush.bf16.msra.mxu0 0
      %3950 = vmatpush.bf16.msra.mxu0 0
      %3951 = vmatpush.bf16.msra.mxu0 0
      %3952 = vmatpush.bf16.msra.mxu0 %v3922
      %3953 = vmatpush.bf16.msra.mxu0 %v3921
      %3954 = vmatmul.bf16.gmra.mxu0 %v3926
      %v3955 = vpop.f32.mrf.mxu0
      %v3956 = vadd.f32 %v3880, %v3955
      %v3957 = vpop.f32.mrf.mxu0
      %v3958 = vadd.f32 %v3882, %v3957
      %3959 = vmatmul.bf16.gmra.mxu0 %v3929
      %v3960 = vpop.f32.mrf.mxu0
      %v3961 = vadd.f32 %v3885, %v3960
      %v3962 = vpop.f32.mrf.mxu0
      %v3963 = vadd.f32 %v3887, %v3962
      %3964 = vmatmul.bf16.gmra.mxu0 %v3932
      %v3965 = vpop.f32.mrf.mxu0
      %v3966 = vadd.f32 %v3890, %v3965
      %v3967 = vpop.f32.mrf.mxu0
      %v3968 = vadd.f32 %v3892, %v3967
      %3969 = vmatmul.bf16.gmra.mxu0 %v3935
      %v3970 = vpop.f32.mrf.mxu0
      %v3971 = vadd.f32 %v3895, %v3970
      %v3972 = vpop.f32.mrf.mxu0
      %v3973 = vadd.f32 %v3897, %v3972
      %3974 = vmatmul.bf16.gmra.mxu0 %v3938
      %v3975 = vpop.f32.mrf.mxu0
      %v3976 = vadd.f32 %v3900, %v3975
      %v3977 = vpop.f32.mrf.mxu0
      %v3978 = vadd.f32 %v3902, %v3977
      %3979 = vmatmul.bf16.gmra.mxu0 %v3941
      %v3980 = vpop.f32.mrf.mxu0
      %v3981 = vadd.f32 %v3905, %v3980
      %v3982 = vpop.f32.mrf.mxu0
      %v3983 = vadd.f32 %v3907, %v3982
      %3984 = vmatmul.bf16.gmra.mxu0 %v3944
      %v3985 = vpop.f32.mrf.mxu0
      %v3986 = vadd.f32 %v3910, %v3985
      %v3987 = vpop.f32.mrf.mxu0
      %3988 = vdwg.mxu0
      %v3989 = vld [vmem:[#allocation3 + $0x1a] sm:$0xff]
      %v3990 = vld [vmem:[#allocation3 + $0x22] sm:$0xff]
      %v3991 = vld [vmem:[#allocation3 + $0x2a] sm:$0xff]
      %v3992 = vld [vmem:[#allocation3 + $0x32] sm:$0xff]
      %v3993 = vld [vmem:[#allocation3 + $0x3a] sm:$0xff]
      %v3994 = vld [vmem:[#allocation3 + $0x42] sm:$0xff]
      %v3995 = vld [vmem:[#allocation3 + $0x4a] sm:$0xff]
      %v3996 = vld [vmem:[#allocation3 + $0x52] sm:$0xff]
      %v3997 = vld [vmem:[#allocation3 + $0x5a] sm:$0xff]
      %v3998 = vld [vmem:[#allocation3 + $0x62] sm:$0xff]
      %v3999 = vld [vmem:[#allocation3 + $0x6a] sm:$0xff]
      %v4000 = vld [vmem:[#allocation3 + $0x72] sm:$0xff]
      %v4001 = vld [vmem:[#allocation3 + $0x7a] sm:$0xf]
      %v4002 = vpack.c.bf16 %v3990, %v3989
      %v4003 = vpack.c.bf16 %v3992, %v3991
      %v4004 = vpack.c.bf16 %v3994, %v3993
      %v4005 = vpack.c.bf16 %v3996, %v3995
      %v4006 = vpack.c.bf16 %v3998, %v3997
      %v4007 = vpack.c.bf16 %v4000, %v3999
      %v4008 = vpack.c.bf16 %v4001, %v4001
      %s4009 = scalar_lea.vmem %s6, 224
      %v4010 = vld [vmem:[%s4009] sm:$0xf]
      %v4011 = vld [vmem:[%s4009 + $0x4] sm:$0xf]
      %v4012 = vld [vmem:[%s4009 + $0x8] sm:$0xf]
      %v4013 = vld [vmem:[%s4009 + $0xc] sm:$0xf]
      %v4018 = vunpack.c.l.b16 %v4010
      %v4019 = vunpack.c.l.b16 %v4011
      %v4020 = vunpack.c.l.b16 %v4012
      %v4021 = vunpack.c.l.b16 %v4013
      %v4022 = vpack.c.b16 %v4019, %v4018
      %v4023 = vpack.c.b16 %v4021, %v4020
      %v4027 = vsel %vm498, %v4002, 0
      %v4030 = vsel %vm498, %v4003, 0
      %v4033 = vsel %vm498, %v4004, 0
      %v4036 = vsel %vm498, %v4005, 0
      %v4039 = vsel %vm498, %v4006, 0
      %v4042 = vsel %vm498, %v4007, 0
      %v4045 = vsel %vm498, %v4008, 0
      %4047 = vmatpush.bf16.msra.mxu0 0
      %4048 = vmatpush.bf16.msra.mxu0 0
      %4049 = vmatpush.bf16.msra.mxu0 0
      %4050 = vmatpush.bf16.msra.mxu0 0
      %4051 = vmatpush.bf16.msra.mxu0 0
      %4052 = vmatpush.bf16.msra.mxu0 0
      %4053 = vmatpush.bf16.msra.mxu0 %v4023
      %4054 = vmatpush.bf16.msra.mxu0 %v4022
      %4055 = vmatmul.bf16.gmra.mxu0 %v4027
      %v4056 = vpop.f32.mrf.mxu0
      %v4057 = vadd.f32 0.0, %v4056
      %v4058 = vpop.f32.mrf.mxu0
      %v4059 = vadd.f32 0.0, %v4058
      %4060 = vmatmul.bf16.gmra.mxu0 %v4030
      %v4061 = vpop.f32.mrf.mxu0
      %v4062 = vadd.f32 0.0, %v4061
      %v4063 = vpop.f32.mrf.mxu0
      %v4064 = vadd.f32 0.0, %v4063
      %4065 = vmatmul.bf16.gmra.mxu0 %v4033
      %v4066 = vpop.f32.mrf.mxu0
      %v4067 = vadd.f32 0.0, %v4066
      %v4068 = vpop.f32.mrf.mxu0
      %v4069 = vadd.f32 0.0, %v4068
      %4070 = vmatmul.bf16.gmra.mxu0 %v4036
      %v4071 = vpop.f32.mrf.mxu0
      %v4072 = vadd.f32 0.0, %v4071
      %v4073 = vpop.f32.mrf.mxu0
      %v4074 = vadd.f32 0.0, %v4073
      %4075 = vmatmul.bf16.gmra.mxu0 %v4039
      %v4076 = vpop.f32.mrf.mxu0
      %v4077 = vadd.f32 0.0, %v4076
      %v4078 = vpop.f32.mrf.mxu0
      %v4079 = vadd.f32 0.0, %v4078
      %4080 = vmatmul.bf16.gmra.mxu0 %v4042
      %v4081 = vpop.f32.mrf.mxu0
      %v4082 = vadd.f32 0.0, %v4081
      %v4083 = vpop.f32.mrf.mxu0
      %v4084 = vadd.f32 0.0, %v4083
      %4085 = vmatmul.bf16.gmra.mxu0 %v4045
      %v4086 = vpop.f32.mrf.mxu0
      %v4087 = vadd.f32 0.0, %v4086
      %v4088 = vpop.f32.mrf.mxu0
      %4089 = vdwg.mxu0
      %v4090 = vadd.f32 %v3956, %v4057
      %v4091 = vadd.f32 %v3958, %v4059
      %v4092 = vadd.f32 %v3961, %v4062
      %v4093 = vadd.f32 %v3963, %v4064
      %v4094 = vadd.f32 %v3966, %v4067
      %v4095 = vadd.f32 %v3968, %v4069
      %v4096 = vadd.f32 %v3971, %v4072
      %v4097 = vadd.f32 %v3973, %v4074
      %v4098 = vadd.f32 %v3976, %v4077
      %v4099 = vadd.f32 %v3978, %v4079
      %v4100 = vadd.f32 %v3981, %v4082
      %v4101 = vadd.f32 %v3983, %v4084
      %v4102 = vadd.f32 %v3986, %v4087
      %v4103 = vld [vmem:[#allocation3 + $0x1b] sm:$0xff]
      %v4104 = vld [vmem:[#allocation3 + $0x23] sm:$0xff]
      %v4105 = vld [vmem:[#allocation3 + $0x2b] sm:$0xff]
      %v4106 = vld [vmem:[#allocation3 + $0x33] sm:$0xff]
      %v4107 = vld [vmem:[#allocation3 + $0x3b] sm:$0xff]
      %v4108 = vld [vmem:[#allocation3 + $0x43] sm:$0xff]
      %v4109 = vld [vmem:[#allocation3 + $0x4b] sm:$0xff]
      %v4110 = vld [vmem:[#allocation3 + $0x53] sm:$0xff]
      %v4111 = vld [vmem:[#allocation3 + $0x5b] sm:$0xff]
      %v4112 = vld [vmem:[#allocation3 + $0x63] sm:$0xff]
      %v4113 = vld [vmem:[#allocation3 + $0x6b] sm:$0xff]
      %v4114 = vld [vmem:[#allocation3 + $0x73] sm:$0xff]
      %v4115 = vld [vmem:[#allocation3 + $0x7b] sm:$0xf]
      %v4116 = vpack.c.bf16 %v4104, %v4103
      %v4117 = vpack.c.bf16 %v4106, %v4105
      %v4118 = vpack.c.bf16 %v4108, %v4107
      %v4119 = vpack.c.bf16 %v4110, %v4109
      %v4120 = vpack.c.bf16 %v4112, %v4111
      %v4121 = vpack.c.bf16 %v4114, %v4113
      %v4122 = vpack.c.bf16 %v4115, %v4115
      %s4123 = scalar_lea.vmem %s6, 240
      %v4124 = vld [vmem:[%s4123] sm:$0xf]
      %v4125 = vld [vmem:[%s4123 + $0x4] sm:$0xf]
      %v4126 = vld [vmem:[%s4123 + $0x8] sm:$0xf]
      %v4127 = vld [vmem:[%s4123 + $0xc] sm:$0xf]
      %v4132 = vunpack.c.l.b16 %v4124
      %v4133 = vunpack.c.l.b16 %v4125
      %v4134 = vunpack.c.l.b16 %v4126
      %v4135 = vunpack.c.l.b16 %v4127
      %v4136 = vpack.c.b16 %v4133, %v4132
      %v4137 = vpack.c.b16 %v4135, %v4134
      %v4141 = vsel %vm498, %v4116, 0
      %v4144 = vsel %vm498, %v4117, 0
      %v4147 = vsel %vm498, %v4118, 0
      %v4150 = vsel %vm498, %v4119, 0
      %v4153 = vsel %vm498, %v4120, 0
      %v4156 = vsel %vm498, %v4121, 0
      %v4159 = vsel %vm498, %v4122, 0
      %4161 = vmatpush.bf16.msra.mxu0 0
      %4162 = vmatpush.bf16.msra.mxu0 0
      %4163 = vmatpush.bf16.msra.mxu0 0
      %4164 = vmatpush.bf16.msra.mxu0 0
      %4165 = vmatpush.bf16.msra.mxu0 0
      %4166 = vmatpush.bf16.msra.mxu0 0
      %4167 = vmatpush.bf16.msra.mxu0 %v4137
      %4168 = vmatpush.bf16.msra.mxu0 %v4136
      %4169 = vmatmul.bf16.gmra.mxu0 %v4141
      %v4170 = vpop.f32.mrf.mxu0
      %v4171 = vadd.f32 0.0, %v4170
      %v4172 = vpop.f32.mrf.mxu0
      %v4173 = vadd.f32 0.0, %v4172
      %4174 = vmatmul.bf16.gmra.mxu0 %v4144
      %v4175 = vpop.f32.mrf.mxu0
      %v4176 = vadd.f32 0.0, %v4175
      %v4177 = vpop.f32.mrf.mxu0
      %v4178 = vadd.f32 0.0, %v4177
      %4179 = vmatmul.bf16.gmra.mxu0 %v4147
      %v4180 = vpop.f32.mrf.mxu0
      %v4181 = vadd.f32 0.0, %v4180
      %v4182 = vpop.f32.mrf.mxu0
      %v4183 = vadd.f32 0.0, %v4182
      %4184 = vmatmul.bf16.gmra.mxu0 %v4150
      %v4185 = vpop.f32.mrf.mxu0
      %v4186 = vadd.f32 0.0, %v4185
      %v4187 = vpop.f32.mrf.mxu0
      %v4188 = vadd.f32 0.0, %v4187
      %4189 = vmatmul.bf16.gmra.mxu0 %v4153
      %v4190 = vpop.f32.mrf.mxu0
      %v4191 = vadd.f32 0.0, %v4190
      %v4192 = vpop.f32.mrf.mxu0
      %v4193 = vadd.f32 0.0, %v4192
      %4194 = vmatmul.bf16.gmra.mxu0 %v4156
      %v4195 = vpop.f32.mrf.mxu0
      %v4196 = vadd.f32 0.0, %v4195
      %v4197 = vpop.f32.mrf.mxu0
      %v4198 = vadd.f32 0.0, %v4197
      %4199 = vmatmul.bf16.gmra.mxu0 %v4159
      %v4200 = vpop.f32.mrf.mxu0
      %v4201 = vadd.f32 0.0, %v4200
      %v4202 = vpop.f32.mrf.mxu0
      %4203 = vdwg.mxu0
      %v4204 = vadd.f32 %v4090, %v4171
      %v4205 = vadd.f32 %v4091, %v4173
      %v4206 = vadd.f32 %v4092, %v4176
      %v4207 = vadd.f32 %v4093, %v4178
      %v4208 = vadd.f32 %v4094, %v4181
      %v4209 = vadd.f32 %v4095, %v4183
      %v4210 = vadd.f32 %v4096, %v4186
      %v4211 = vadd.f32 %v4097, %v4188
      %v4212 = vadd.f32 %v4098, %v4191
      %v4213 = vadd.f32 %v4099, %v4193
      %v4214 = vadd.f32 %v4100, %v4196
      %v4215 = vadd.f32 %v4101, %v4198
      %v4216 = vadd.f32 %v4102, %v4201
      %v4217 = vld [vmem:[%s7] sm:$0x1]
      %v4219 = vperm.slane %v4217, 0
      %v4221 = vadd.f32 %v4204, %v4219
      %v4222 = vadd.f32 %v4205, %v4219
      %v4223 = vadd.f32 %v4206, %v4219
      %v4224 = vadd.f32 %v4207, %v4219
      %v4225 = vadd.f32 %v4208, %v4219
      %v4226 = vadd.f32 %v4209, %v4219
      %v4227 = vadd.f32 %v4210, %v4219
      %v4228 = vadd.f32 %v4211, %v4219
      %v4229 = vadd.f32 %v4212, %v4219
      %v4230 = vadd.f32 %v4213, %v4219
      %v4231 = vadd.f32 %v4214, %v4219
      %v4232 = vadd.f32 %v4215, %v4219
      %v4233 = vadd.f32 %v4216, %v4219
      %v4234 = vmax.f32 %v4221, 0.0
      %v4235 = vmax.f32 %v4222, 0.0
      %v4236 = vmax.f32 %v4223, 0.0
      %v4237 = vmax.f32 %v4224, 0.0
      %v4238 = vmax.f32 %v4225, 0.0
      %v4239 = vmax.f32 %v4226, 0.0
      %v4240 = vmax.f32 %v4227, 0.0
      %v4241 = vmax.f32 %v4228, 0.0
      %v4242 = vmax.f32 %v4229, 0.0
      %v4243 = vmax.f32 %v4230, 0.0
      %v4244 = vmax.f32 %v4231, 0.0
      %v4245 = vmax.f32 %v4232, 0.0
      %v4246 = vmax.f32 %v4233, 0.0
      %v4247 = vmul.f32 %v4234, %v738
      %v4248 = vmul.f32 %v4235, %v743
      %v4249 = vmul.f32 %v4236, %v748
      %v4250 = vmul.f32 %v4237, %v753
      %v4251 = vmul.f32 %v4238, %v758
      %v4252 = vmul.f32 %v4239, %v763
      %v4253 = vmul.f32 %v4240, %v768
      %v4254 = vmul.f32 %v4241, %v773
      %v4255 = vmul.f32 %v4242, %v778
      %v4256 = vmul.f32 %v4243, %v783
      %v4257 = vmul.f32 %v4244, %v788
      %v4258 = vmul.f32 %v4245, %v793
      %v4259 = vmul.f32 %v4246, %v798
      %s4260 = scalar_lea.vmem [#allocation4], 408
      %4261 = vst.msk [vmem:[%s4260 + $0x10] sm:$0xff] %vm498, %v4247
      %4262 = vst.msk [vmem:[%s4260 + $0x18] sm:$0xff] %vm498, %v4248
      %4263 = vst.msk [vmem:[%s4260 + $0x20] sm:$0xff] %vm498, %v4249
      %4264 = vst.msk [vmem:[%s4260 + $0x28] sm:$0xff] %vm498, %v4250
      %4265 = vst.msk [vmem:[%s4260 + $0x30] sm:$0xff] %vm498, %v4251
      %4266 = vst.msk [vmem:[%s4260 + $0x38] sm:$0xff] %vm498, %v4252
      %4267 = vst.msk [vmem:[%s4260 + $0x40] sm:$0xff] %vm498, %v4253
      %4268 = vst.msk [vmem:[%s4260 + $0x48] sm:$0xff] %vm498, %v4254
      %4269 = vst.msk [vmem:[%s4260 + $0x50] sm:$0xff] %vm498, %v4255
      %4270 = vst.msk [vmem:[%s4260 + $0x58] sm:$0xff] %vm498, %v4256
      %4271 = vst.msk [vmem:[%s4260 + $0x60] sm:$0xff] %vm498, %v4257
      %4272 = vst.msk [vmem:[%s4260 + $0x68] sm:$0xff] %vm498, %v4258
      %4273 = vst.msk [vmem:[%s4260 + $0x70] sm:$0xf] %vm515, %v4259
      %v4274 = vld [vmem:[%s4260 + $0x5] sm:$0xff]
      %v4275 = vld [vmem:[%s4260 + $0xd] sm:$0xff]
      %v4276 = vld [vmem:[%s4260 + $0x15] sm:$0xff]
      %v4277 = vld [vmem:[%s4260 + $0x1d] sm:$0xff]
      %v4278 = vld [vmem:[%s4260 + $0x25] sm:$0xff]
      %v4279 = vld [vmem:[%s4260 + $0x2d] sm:$0xff]
      %v4280 = vld [vmem:[%s4260 + $0x35] sm:$0xff]
      %v4281 = vld [vmem:[%s4260 + $0x3d] sm:$0xff]
      %v4282 = vld [vmem:[%s4260 + $0x45] sm:$0xff]
      %v4283 = vld [vmem:[%s4260 + $0x4d] sm:$0xff]
      %v4284 = vld [vmem:[%s4260 + $0x55] sm:$0xff]
      %v4285 = vld [vmem:[%s4260 + $0x5d] sm:$0xff]
      %v4286 = vld [vmem:[%s4260 + $0x65] sm:$0xf]
      %v4287 = vpack.c.bf16 %v4275, %v4274
      %v4288 = vpack.c.bf16 %v4277, %v4276
      %v4289 = vpack.c.bf16 %v4279, %v4278
      %v4290 = vpack.c.bf16 %v4281, %v4280
      %v4291 = vpack.c.bf16 %v4283, %v4282
      %v4292 = vpack.c.bf16 %v4285, %v4284
      %v4293 = vpack.c.bf16 %v4286, %v4286
      %v4294 = vld [vmem:[%s8] sm:$0xf]
      %v4295 = vld [vmem:[%s8 + $0x4] sm:$0xf]
      %v4296 = vld [vmem:[%s8 + $0x8] sm:$0xf]
      %v4297 = vld [vmem:[%s8 + $0xc] sm:$0xf]
      %v4298 = vld [vmem:[%s3773 + $0x6] sm:$0xff]
      %v4299 = vld [vmem:[%s3773 + $0xe] sm:$0xff]
      %v4300 = vld [vmem:[%s3773 + $0x16] sm:$0xff]
      %v4301 = vld [vmem:[%s3773 + $0x1e] sm:$0xff]
      %v4302 = vld [vmem:[%s3773 + $0x26] sm:$0xff]
      %v4303 = vld [vmem:[%s3773 + $0x2e] sm:$0xff]
      %v4304 = vld [vmem:[%s3773 + $0x36] sm:$0xff]
      %v4305 = vld [vmem:[%s3773 + $0x3e] sm:$0xff]
      %v4306 = vld [vmem:[%s3773 + $0x46] sm:$0xff]
      %v4307 = vld [vmem:[%s3773 + $0x4e] sm:$0xff]
      %v4308 = vld [vmem:[%s3773 + $0x56] sm:$0xff]
      %v4309 = vld [vmem:[%s3773 + $0x5e] sm:$0xff]
      %v4310 = vld [vmem:[%s3773 + $0x66] sm:$0xf]
      %v4311 = vpack.c.bf16 %v4299, %v4298
      %v4312 = vpack.c.bf16 %v4301, %v4300
      %v4313 = vpack.c.bf16 %v4303, %v4302
      %v4314 = vpack.c.bf16 %v4305, %v4304
      %v4315 = vpack.c.bf16 %v4307, %v4306
      %v4316 = vpack.c.bf16 %v4309, %v4308
      %v4317 = vpack.c.bf16 %v4310, %v4310
      %s4318 = scalar_lea.vmem %s8, 16
      %v4319 = vld [vmem:[%s4318] sm:$0xf]
      %v4320 = vld [vmem:[%s4318 + $0x4] sm:$0xf]
      %v4321 = vld [vmem:[%s4318 + $0x8] sm:$0xf]
      %v4322 = vld [vmem:[%s4318 + $0xc] sm:$0xf]
      %v4327 = vunpack.c.l.b16 %v4319
      %v4328 = vunpack.c.l.b16 %v4320
      %v4329 = vunpack.c.l.b16 %v4321
      %v4330 = vunpack.c.l.b16 %v4322
      %v4331 = vpack.c.b16 %v4328, %v4327
      %v4332 = vpack.c.b16 %v4330, %v4329
      %v4336 = vsel %vm498, %v4311, 0
      %v4339 = vsel %vm498, %v4312, 0
      %v4342 = vsel %vm498, %v4313, 0
      %v4345 = vsel %vm498, %v4314, 0
      %v4348 = vsel %vm498, %v4315, 0
      %v4351 = vsel %vm498, %v4316, 0
      %v4354 = vsel %vm498, %v4317, 0
      %4356 = vmatpush.bf16.msra.mxu0 0
      %4357 = vmatpush.bf16.msra.mxu0 0
      %4358 = vmatpush.bf16.msra.mxu0 0
      %4359 = vmatpush.bf16.msra.mxu0 0
      %4360 = vmatpush.bf16.msra.mxu0 0
      %4361 = vmatpush.bf16.msra.mxu0 0
      %4362 = vmatpush.bf16.msra.mxu0 %v4332
      %4363 = vmatpush.bf16.msra.mxu0 %v4331
      %4364 = vmatmul.bf16.gmra.mxu0 %v4336
      %v4365 = vpop.f32.mrf.mxu0
      %v4366 = vadd.f32 0.0, %v4365
      %v4367 = vpop.f32.mrf.mxu0
      %v4368 = vadd.f32 0.0, %v4367
      %4369 = vmatmul.bf16.gmra.mxu0 %v4339
      %v4370 = vpop.f32.mrf.mxu0
      %v4371 = vadd.f32 0.0, %v4370
      %v4372 = vpop.f32.mrf.mxu0
      %v4373 = vadd.f32 0.0, %v4372
      %4374 = vmatmul.bf16.gmra.mxu0 %v4342
      %v4375 = vpop.f32.mrf.mxu0
      %v4376 = vadd.f32 0.0, %v4375
      %v4377 = vpop.f32.mrf.mxu0
      %v4378 = vadd.f32 0.0, %v4377
      %4379 = vmatmul.bf16.gmra.mxu0 %v4345
      %v4380 = vpop.f32.mrf.mxu0
      %v4381 = vadd.f32 0.0, %v4380
      %v4382 = vpop.f32.mrf.mxu0
      %v4383 = vadd.f32 0.0, %v4382
      %4384 = vmatmul.bf16.gmra.mxu0 %v4348
      %v4385 = vpop.f32.mrf.mxu0
      %v4386 = vadd.f32 0.0, %v4385
      %v4387 = vpop.f32.mrf.mxu0
      %v4388 = vadd.f32 0.0, %v4387
      %4389 = vmatmul.bf16.gmra.mxu0 %v4351
      %v4390 = vpop.f32.mrf.mxu0
      %v4391 = vadd.f32 0.0, %v4390
      %v4392 = vpop.f32.mrf.mxu0
      %v4393 = vadd.f32 0.0, %v4392
      %4394 = vmatmul.bf16.gmra.mxu0 %v4354
      %v4395 = vpop.f32.mrf.mxu0
      %v4396 = vadd.f32 0.0, %v4395
      %v4397 = vpop.f32.mrf.mxu0
      %4398 = vdwg.mxu0
      %v4403 = vunpack.c.l.b16 %v4294
      %v4404 = vunpack.c.l.b16 %v4295
      %v4405 = vunpack.c.l.b16 %v4296
      %v4406 = vunpack.c.l.b16 %v4297
      %v4407 = vpack.c.b16 %v4404, %v4403
      %v4408 = vpack.c.b16 %v4406, %v4405
      %v4412 = vsel %vm498, %v4287, 0
      %v4415 = vsel %vm498, %v4288, 0
      %v4418 = vsel %vm498, %v4289, 0
      %v4421 = vsel %vm498, %v4290, 0
      %v4424 = vsel %vm498, %v4291, 0
      %v4427 = vsel %vm498, %v4292, 0
      %v4430 = vsel %vm498, %v4293, 0
      %4432 = vmatpush.bf16.msra.mxu0 0
      %4433 = vmatpush.bf16.msra.mxu0 0
      %4434 = vmatpush.bf16.msra.mxu0 0
      %4435 = vmatpush.bf16.msra.mxu0 0
      %4436 = vmatpush.bf16.msra.mxu0 0
      %4437 = vmatpush.bf16.msra.mxu0 0
      %4438 = vmatpush.bf16.msra.mxu0 %v4408
      %4439 = vmatpush.bf16.msra.mxu0 %v4407
      %4440 = vmatmul.bf16.gmra.mxu0 %v4412
      %v4441 = vpop.f32.mrf.mxu0
      %v4442 = vadd.f32 %v4366, %v4441
      %v4443 = vpop.f32.mrf.mxu0
      %v4444 = vadd.f32 %v4368, %v4443
      %4445 = vmatmul.bf16.gmra.mxu0 %v4415
      %v4446 = vpop.f32.mrf.mxu0
      %v4447 = vadd.f32 %v4371, %v4446
      %v4448 = vpop.f32.mrf.mxu0
      %v4449 = vadd.f32 %v4373, %v4448
      %4450 = vmatmul.bf16.gmra.mxu0 %v4418
      %v4451 = vpop.f32.mrf.mxu0
      %v4452 = vadd.f32 %v4376, %v4451
      %v4453 = vpop.f32.mrf.mxu0
      %v4454 = vadd.f32 %v4378, %v4453
      %4455 = vmatmul.bf16.gmra.mxu0 %v4421
      %v4456 = vpop.f32.mrf.mxu0
      %v4457 = vadd.f32 %v4381, %v4456
      %v4458 = vpop.f32.mrf.mxu0
      %v4459 = vadd.f32 %v4383, %v4458
      %4460 = vmatmul.bf16.gmra.mxu0 %v4424
      %v4461 = vpop.f32.mrf.mxu0
      %v4462 = vadd.f32 %v4386, %v4461
      %v4463 = vpop.f32.mrf.mxu0
      %v4464 = vadd.f32 %v4388, %v4463
      %4465 = vmatmul.bf16.gmra.mxu0 %v4427
      %v4466 = vpop.f32.mrf.mxu0
      %v4467 = vadd.f32 %v4391, %v4466
      %v4468 = vpop.f32.mrf.mxu0
      %v4469 = vadd.f32 %v4393, %v4468
      %4470 = vmatmul.bf16.gmra.mxu0 %v4430
      %v4471 = vpop.f32.mrf.mxu0
      %v4472 = vadd.f32 %v4396, %v4471
      %v4473 = vpop.f32.mrf.mxu0
      %4474 = vdwg.mxu0
      %v4475 = vld [vmem:[%s4260 + $0x6] sm:$0xff]
      %v4476 = vld [vmem:[%s4260 + $0xe] sm:$0xff]
      %v4477 = vld [vmem:[%s4260 + $0x16] sm:$0xff]
      %v4478 = vld [vmem:[%s4260 + $0x1e] sm:$0xff]
      %v4479 = vld [vmem:[%s4260 + $0x26] sm:$0xff]
      %v4480 = vld [vmem:[%s4260 + $0x2e] sm:$0xff]
      %v4481 = vld [vmem:[%s4260 + $0x36] sm:$0xff]
      %v4482 = vld [vmem:[%s4260 + $0x3e] sm:$0xff]
      %v4483 = vld [vmem:[%s4260 + $0x46] sm:$0xff]
      %v4484 = vld [vmem:[%s4260 + $0x4e] sm:$0xff]
      %v4485 = vld [vmem:[%s4260 + $0x56] sm:$0xff]
      %v4486 = vld [vmem:[%s4260 + $0x5e] sm:$0xff]
      %v4487 = vld [vmem:[%s4260 + $0x66] sm:$0xf]
      %v4488 = vpack.c.bf16 %v4476, %v4475
      %v4489 = vpack.c.bf16 %v4478, %v4477
      %v4490 = vpack.c.bf16 %v4480, %v4479
      %v4491 = vpack.c.bf16 %v4482, %v4481
      %v4492 = vpack.c.bf16 %v4484, %v4483
      %v4493 = vpack.c.bf16 %v4486, %v4485
      %v4494 = vpack.c.bf16 %v4487, %v4487
      %s4495 = scalar_lea.vmem %s8, 32
      %v4496 = vld [vmem:[%s4495] sm:$0xf]
      %v4497 = vld [vmem:[%s4495 + $0x4] sm:$0xf]
      %v4498 = vld [vmem:[%s4495 + $0x8] sm:$0xf]
      %v4499 = vld [vmem:[%s4495 + $0xc] sm:$0xf]
      %v4504 = vunpack.c.l.b16 %v4496
      %v4505 = vunpack.c.l.b16 %v4497
      %v4506 = vunpack.c.l.b16 %v4498
      %v4507 = vunpack.c.l.b16 %v4499
      %v4508 = vpack.c.b16 %v4505, %v4504
      %v4509 = vpack.c.b16 %v4507, %v4506
      %v4513 = vsel %vm498, %v4488, 0
      %v4516 = vsel %vm498, %v4489, 0
      %v4519 = vsel %vm498, %v4490, 0
      %v4522 = vsel %vm498, %v4491, 0
      %v4525 = vsel %vm498, %v4492, 0
      %v4528 = vsel %vm498, %v4493, 0
      %v4531 = vsel %vm498, %v4494, 0
      %4533 = vmatpush.bf16.msra.mxu0 0
      %4534 = vmatpush.bf16.msra.mxu0 0
      %4535 = vmatpush.bf16.msra.mxu0 0
      %4536 = vmatpush.bf16.msra.mxu0 0
      %4537 = vmatpush.bf16.msra.mxu0 0
      %4538 = vmatpush.bf16.msra.mxu0 0
      %4539 = vmatpush.bf16.msra.mxu0 %v4509
      %4540 = vmatpush.bf16.msra.mxu0 %v4508
      %4541 = vmatmul.bf16.gmra.mxu0 %v4513
      %v4542 = vpop.f32.mrf.mxu0
      %v4543 = vadd.f32 0.0, %v4542
      %v4544 = vpop.f32.mrf.mxu0
      %v4545 = vadd.f32 0.0, %v4544
      %4546 = vmatmul.bf16.gmra.mxu0 %v4516
      %v4547 = vpop.f32.mrf.mxu0
      %v4548 = vadd.f32 0.0, %v4547
      %v4549 = vpop.f32.mrf.mxu0
      %v4550 = vadd.f32 0.0, %v4549
      %4551 = vmatmul.bf16.gmra.mxu0 %v4519
      %v4552 = vpop.f32.mrf.mxu0
      %v4553 = vadd.f32 0.0, %v4552
      %v4554 = vpop.f32.mrf.mxu0
      %v4555 = vadd.f32 0.0, %v4554
      %4556 = vmatmul.bf16.gmra.mxu0 %v4522
      %v4557 = vpop.f32.mrf.mxu0
      %v4558 = vadd.f32 0.0, %v4557
      %v4559 = vpop.f32.mrf.mxu0
      %v4560 = vadd.f32 0.0, %v4559
      %4561 = vmatmul.bf16.gmra.mxu0 %v4525
      %v4562 = vpop.f32.mrf.mxu0
      %v4563 = vadd.f32 0.0, %v4562
      %v4564 = vpop.f32.mrf.mxu0
      %v4565 = vadd.f32 0.0, %v4564
      %4566 = vmatmul.bf16.gmra.mxu0 %v4528
      %v4567 = vpop.f32.mrf.mxu0
      %v4568 = vadd.f32 0.0, %v4567
      %v4569 = vpop.f32.mrf.mxu0
      %v4570 = vadd.f32 0.0, %v4569
      %4571 = vmatmul.bf16.gmra.mxu0 %v4531
      %v4572 = vpop.f32.mrf.mxu0
      %v4573 = vadd.f32 0.0, %v4572
      %v4574 = vpop.f32.mrf.mxu0
      %4575 = vdwg.mxu0
      %v4576 = vadd.f32 %v4442, %v4543
      %v4577 = vadd.f32 %v4444, %v4545
      %v4578 = vadd.f32 %v4447, %v4548
      %v4579 = vadd.f32 %v4449, %v4550
      %v4580 = vadd.f32 %v4452, %v4553
      %v4581 = vadd.f32 %v4454, %v4555
      %v4582 = vadd.f32 %v4457, %v4558
      %v4583 = vadd.f32 %v4459, %v4560
      %v4584 = vadd.f32 %v4462, %v4563
      %v4585 = vadd.f32 %v4464, %v4565
      %v4586 = vadd.f32 %v4467, %v4568
      %v4587 = vadd.f32 %v4469, %v4570
      %v4588 = vadd.f32 %v4472, %v4573
      %v4589 = vld [vmem:[%s3286 + $0xf] sm:$0xff]
      %v4590 = vld [vmem:[%s3286 + $0x17] sm:$0xff]
      %v4591 = vld [vmem:[%s3286 + $0x1f] sm:$0xff]
      %v4592 = vld [vmem:[%s3286 + $0x27] sm:$0xff]
      %v4593 = vld [vmem:[%s3286 + $0x2f] sm:$0xff]
      %v4594 = vld [vmem:[%s3286 + $0x37] sm:$0xff]
      %v4595 = vld [vmem:[%s3286 + $0x3f] sm:$0xff]
      %v4596 = vld [vmem:[%s3286 + $0x47] sm:$0xff]
      %v4597 = vld [vmem:[%s3286 + $0x4f] sm:$0xff]
      %v4598 = vld [vmem:[%s3286 + $0x57] sm:$0xff]
      %v4599 = vld [vmem:[%s3286 + $0x5f] sm:$0xff]
      %v4600 = vld [vmem:[%s3286 + $0x67] sm:$0xff]
      %v4601 = vld [vmem:[%s3286 + $0x6f] sm:$0xf]
      %v4602 = vpack.c.bf16 %v4590, %v4589
      %v4603 = vpack.c.bf16 %v4592, %v4591
      %v4604 = vpack.c.bf16 %v4594, %v4593
      %v4605 = vpack.c.bf16 %v4596, %v4595
      %v4606 = vpack.c.bf16 %v4598, %v4597
      %v4607 = vpack.c.bf16 %v4600, %v4599
      %v4608 = vpack.c.bf16 %v4601, %v4601
      %s4609 = scalar_lea.vmem %s8, 48
      %v4610 = vld [vmem:[%s4609] sm:$0xf]
      %v4611 = vld [vmem:[%s4609 + $0x4] sm:$0xf]
      %v4612 = vld [vmem:[%s4609 + $0x8] sm:$0xf]
      %v4613 = vld [vmem:[%s4609 + $0xc] sm:$0xf]
      %v4618 = vunpack.c.l.b16 %v4610
      %v4619 = vunpack.c.l.b16 %v4611
      %v4620 = vunpack.c.l.b16 %v4612
      %v4621 = vunpack.c.l.b16 %v4613
      %v4622 = vpack.c.b16 %v4619, %v4618
      %v4623 = vpack.c.b16 %v4621, %v4620
      %v4627 = vsel %vm498, %v4602, 0
      %v4630 = vsel %vm498, %v4603, 0
      %v4633 = vsel %vm498, %v4604, 0
      %v4636 = vsel %vm498, %v4605, 0
      %v4639 = vsel %vm498, %v4606, 0
      %v4642 = vsel %vm498, %v4607, 0
      %v4645 = vsel %vm498, %v4608, 0
      %4647 = vmatpush.bf16.msra.mxu0 0
      %4648 = vmatpush.bf16.msra.mxu0 0
      %4649 = vmatpush.bf16.msra.mxu0 0
      %4650 = vmatpush.bf16.msra.mxu0 0
      %4651 = vmatpush.bf16.msra.mxu0 0
      %4652 = vmatpush.bf16.msra.mxu0 0
      %4653 = vmatpush.bf16.msra.mxu0 %v4623
      %4654 = vmatpush.bf16.msra.mxu0 %v4622
      %4655 = vmatmul.bf16.gmra.mxu0 %v4627
      %v4656 = vpop.f32.mrf.mxu0
      %v4657 = vadd.f32 0.0, %v4656
      %v4658 = vpop.f32.mrf.mxu0
      %v4659 = vadd.f32 0.0, %v4658
      %4660 = vmatmul.bf16.gmra.mxu0 %v4630
      %v4661 = vpop.f32.mrf.mxu0
      %v4662 = vadd.f32 0.0, %v4661
      %v4663 = vpop.f32.mrf.mxu0
      %v4664 = vadd.f32 0.0, %v4663
      %4665 = vmatmul.bf16.gmra.mxu0 %v4633
      %v4666 = vpop.f32.mrf.mxu0
      %v4667 = vadd.f32 0.0, %v4666
      %v4668 = vpop.f32.mrf.mxu0
      %v4669 = vadd.f32 0.0, %v4668
      %4670 = vmatmul.bf16.gmra.mxu0 %v4636
      %v4671 = vpop.f32.mrf.mxu0
      %v4672 = vadd.f32 0.0, %v4671
      %v4673 = vpop.f32.mrf.mxu0
      %v4674 = vadd.f32 0.0, %v4673
      %4675 = vmatmul.bf16.gmra.mxu0 %v4639
      %v4676 = vpop.f32.mrf.mxu0
      %v4677 = vadd.f32 0.0, %v4676
      %v4678 = vpop.f32.mrf.mxu0
      %v4679 = vadd.f32 0.0, %v4678
      %4680 = vmatmul.bf16.gmra.mxu0 %v4642
      %v4681 = vpop.f32.mrf.mxu0
      %v4682 = vadd.f32 0.0, %v4681
      %v4683 = vpop.f32.mrf.mxu0
      %v4684 = vadd.f32 0.0, %v4683
      %4685 = vmatmul.bf16.gmra.mxu0 %v4645
      %v4686 = vpop.f32.mrf.mxu0
      %v4687 = vadd.f32 0.0, %v4686
      %v4688 = vpop.f32.mrf.mxu0
      %4689 = vdwg.mxu0
      %v4690 = vadd.f32 %v4576, %v4657
      %v4691 = vadd.f32 %v4577, %v4659
      %v4692 = vadd.f32 %v4578, %v4662
      %v4693 = vadd.f32 %v4579, %v4664
      %v4694 = vadd.f32 %v4580, %v4667
      %v4695 = vadd.f32 %v4581, %v4669
      %v4696 = vadd.f32 %v4582, %v4672
      %v4697 = vadd.f32 %v4583, %v4674
      %v4698 = vadd.f32 %v4584, %v4677
      %v4699 = vadd.f32 %v4585, %v4679
      %v4700 = vadd.f32 %v4586, %v4682
      %v4701 = vadd.f32 %v4587, %v4684
      %v4702 = vadd.f32 %v4588, %v4687
      %v4703 = vld [vmem:[#allocation4 + $0x10] sm:$0xff]
      %v4704 = vld [vmem:[#allocation4 + $0x18] sm:$0xff]
      %v4705 = vld [vmem:[#allocation4 + $0x20] sm:$0xff]
      %v4706 = vld [vmem:[#allocation4 + $0x28] sm:$0xff]
      %v4707 = vld [vmem:[#allocation4 + $0x30] sm:$0xff]
      %v4708 = vld [vmem:[#allocation4 + $0x38] sm:$0xff]
      %v4709 = vld [vmem:[#allocation4 + $0x40] sm:$0xff]
      %v4710 = vld [vmem:[#allocation4 + $0x48] sm:$0xff]
      %v4711 = vld [vmem:[#allocation4 + $0x50] sm:$0xff]
      %v4712 = vld [vmem:[#allocation4 + $0x58] sm:$0xff]
      %v4713 = vld [vmem:[#allocation4 + $0x60] sm:$0xff]
      %v4714 = vld [vmem:[#allocation4 + $0x68] sm:$0xff]
      %v4715 = vld [vmem:[#allocation4 + $0x70] sm:$0xf]
      %v4716 = vpack.c.bf16 %v4704, %v4703
      %v4717 = vpack.c.bf16 %v4706, %v4705
      %v4718 = vpack.c.bf16 %v4708, %v4707
      %v4719 = vpack.c.bf16 %v4710, %v4709
      %v4720 = vpack.c.bf16 %v4712, %v4711
      %v4721 = vpack.c.bf16 %v4714, %v4713
      %v4722 = vpack.c.bf16 %v4715, %v4715
      %s4723 = scalar_lea.vmem %s8, 64
      %v4724 = vld [vmem:[%s4723] sm:$0xf]
      %v4725 = vld [vmem:[%s4723 + $0x4] sm:$0xf]
      %v4726 = vld [vmem:[%s4723 + $0x8] sm:$0xf]
      %v4727 = vld [vmem:[%s4723 + $0xc] sm:$0xf]
      %v4732 = vunpack.c.l.b16 %v4724
      %v4733 = vunpack.c.l.b16 %v4725
      %v4734 = vunpack.c.l.b16 %v4726
      %v4735 = vunpack.c.l.b16 %v4727
      %v4736 = vpack.c.b16 %v4733, %v4732
      %v4737 = vpack.c.b16 %v4735, %v4734
      %v4741 = vsel %vm498, %v4716, 0
      %v4744 = vsel %vm498, %v4717, 0
      %v4747 = vsel %vm498, %v4718, 0
      %v4750 = vsel %vm498, %v4719, 0
      %v4753 = vsel %vm498, %v4720, 0
      %v4756 = vsel %vm498, %v4721, 0
      %v4759 = vsel %vm498, %v4722, 0
      %4761 = vmatpush.bf16.msra.mxu0 0
      %4762 = vmatpush.bf16.msra.mxu0 0
      %4763 = vmatpush.bf16.msra.mxu0 0
      %4764 = vmatpush.bf16.msra.mxu0 0
      %4765 = vmatpush.bf16.msra.mxu0 0
      %4766 = vmatpush.bf16.msra.mxu0 0
      %4767 = vmatpush.bf16.msra.mxu0 %v4737
      %4768 = vmatpush.bf16.msra.mxu0 %v4736
      %4769 = vmatmul.bf16.gmra.mxu0 %v4741
      %v4770 = vpop.f32.mrf.mxu0
      %v4771 = vadd.f32 0.0, %v4770
      %v4772 = vpop.f32.mrf.mxu0
      %v4773 = vadd.f32 0.0, %v4772
      %4774 = vmatmul.bf16.gmra.mxu0 %v4744
      %v4775 = vpop.f32.mrf.mxu0
      %v4776 = vadd.f32 0.0, %v4775
      %v4777 = vpop.f32.mrf.mxu0
      %v4778 = vadd.f32 0.0, %v4777
      %4779 = vmatmul.bf16.gmra.mxu0 %v4747
      %v4780 = vpop.f32.mrf.mxu0
      %v4781 = vadd.f32 0.0, %v4780
      %v4782 = vpop.f32.mrf.mxu0
      %v4783 = vadd.f32 0.0, %v4782
      %4784 = vmatmul.bf16.gmra.mxu0 %v4750
      %v4785 = vpop.f32.mrf.mxu0
      %v4786 = vadd.f32 0.0, %v4785
      %v4787 = vpop.f32.mrf.mxu0
      %v4788 = vadd.f32 0.0, %v4787
      %4789 = vmatmul.bf16.gmra.mxu0 %v4753
      %v4790 = vpop.f32.mrf.mxu0
      %v4791 = vadd.f32 0.0, %v4790
      %v4792 = vpop.f32.mrf.mxu0
      %v4793 = vadd.f32 0.0, %v4792
      %4794 = vmatmul.bf16.gmra.mxu0 %v4756
      %v4795 = vpop.f32.mrf.mxu0
      %v4796 = vadd.f32 0.0, %v4795
      %v4797 = vpop.f32.mrf.mxu0
      %v4798 = vadd.f32 0.0, %v4797
      %4799 = vmatmul.bf16.gmra.mxu0 %v4759
      %v4800 = vpop.f32.mrf.mxu0
      %v4801 = vadd.f32 0.0, %v4800
      %v4802 = vpop.f32.mrf.mxu0
      %4803 = vdwg.mxu0
      %v4804 = vadd.f32 %v4690, %v4771
      %v4805 = vadd.f32 %v4691, %v4773
      %v4806 = vadd.f32 %v4692, %v4776
      %v4807 = vadd.f32 %v4693, %v4778
      %v4808 = vadd.f32 %v4694, %v4781
      %v4809 = vadd.f32 %v4695, %v4783
      %v4810 = vadd.f32 %v4696, %v4786
      %v4811 = vadd.f32 %v4697, %v4788
      %v4812 = vadd.f32 %v4698, %v4791
      %v4813 = vadd.f32 %v4699, %v4793
      %v4814 = vadd.f32 %v4700, %v4796
      %v4815 = vadd.f32 %v4701, %v4798
      %v4816 = vadd.f32 %v4702, %v4801
      %v4817 = vld [vmem:[%s3286 + $0x10] sm:$0xff]
      %v4818 = vld [vmem:[%s3286 + $0x18] sm:$0xff]
      %v4819 = vld [vmem:[%s3286 + $0x20] sm:$0xff]
      %v4820 = vld [vmem:[%s3286 + $0x28] sm:$0xff]
      %v4821 = vld [vmem:[%s3286 + $0x30] sm:$0xff]
      %v4822 = vld [vmem:[%s3286 + $0x38] sm:$0xff]
      %v4823 = vld [vmem:[%s3286 + $0x40] sm:$0xff]
      %v4824 = vld [vmem:[%s3286 + $0x48] sm:$0xff]
      %v4825 = vld [vmem:[%s3286 + $0x50] sm:$0xff]
      %v4826 = vld [vmem:[%s3286 + $0x58] sm:$0xff]
      %v4827 = vld [vmem:[%s3286 + $0x60] sm:$0xff]
      %v4828 = vld [vmem:[%s3286 + $0x68] sm:$0xff]
      %v4829 = vld [vmem:[%s3286 + $0x70] sm:$0xf]
      %v4830 = vpack.c.bf16 %v4818, %v4817
      %v4831 = vpack.c.bf16 %v4820, %v4819
      %v4832 = vpack.c.bf16 %v4822, %v4821
      %v4833 = vpack.c.bf16 %v4824, %v4823
      %v4834 = vpack.c.bf16 %v4826, %v4825
      %v4835 = vpack.c.bf16 %v4828, %v4827
      %v4836 = vpack.c.bf16 %v4829, %v4829
      %s4837 = scalar_lea.vmem %s8, 80
      %v4838 = vld [vmem:[%s4837] sm:$0xf]
      %v4839 = vld [vmem:[%s4837 + $0x4] sm:$0xf]
      %v4840 = vld [vmem:[%s4837 + $0x8] sm:$0xf]
      %v4841 = vld [vmem:[%s4837 + $0xc] sm:$0xf]
      %v4846 = vunpack.c.l.b16 %v4838
      %v4847 = vunpack.c.l.b16 %v4839
      %v4848 = vunpack.c.l.b16 %v4840
      %v4849 = vunpack.c.l.b16 %v4841
      %v4850 = vpack.c.b16 %v4847, %v4846
      %v4851 = vpack.c.b16 %v4849, %v4848
      %v4855 = vsel %vm498, %v4830, 0
      %v4858 = vsel %vm498, %v4831, 0
      %v4861 = vsel %vm498, %v4832, 0
      %v4864 = vsel %vm498, %v4833, 0
      %v4867 = vsel %vm498, %v4834, 0
      %v4870 = vsel %vm498, %v4835, 0
      %v4873 = vsel %vm498, %v4836, 0
      %4875 = vmatpush.bf16.msra.mxu0 0
      %4876 = vmatpush.bf16.msra.mxu0 0
      %4877 = vmatpush.bf16.msra.mxu0 0
      %4878 = vmatpush.bf16.msra.mxu0 0
      %4879 = vmatpush.bf16.msra.mxu0 0
      %4880 = vmatpush.bf16.msra.mxu0 0
      %4881 = vmatpush.bf16.msra.mxu0 %v4851
      %4882 = vmatpush.bf16.msra.mxu0 %v4850
      %4883 = vmatmul.bf16.gmra.mxu0 %v4855
      %v4884 = vpop.f32.mrf.mxu0
      %v4885 = vadd.f32 0.0, %v4884
      %v4886 = vpop.f32.mrf.mxu0
      %v4887 = vadd.f32 0.0, %v4886
      %4888 = vmatmul.bf16.gmra.mxu0 %v4858
      %v4889 = vpop.f32.mrf.mxu0
      %v4890 = vadd.f32 0.0, %v4889
      %v4891 = vpop.f32.mrf.mxu0
      %v4892 = vadd.f32 0.0, %v4891
      %4893 = vmatmul.bf16.gmra.mxu0 %v4861
      %v4894 = vpop.f32.mrf.mxu0
      %v4895 = vadd.f32 0.0, %v4894
      %v4896 = vpop.f32.mrf.mxu0
      %v4897 = vadd.f32 0.0, %v4896
      %4898 = vmatmul.bf16.gmra.mxu0 %v4864
      %v4899 = vpop.f32.mrf.mxu0
      %v4900 = vadd.f32 0.0, %v4899
      %v4901 = vpop.f32.mrf.mxu0
      %v4902 = vadd.f32 0.0, %v4901
      %4903 = vmatmul.bf16.gmra.mxu0 %v4867
      %v4904 = vpop.f32.mrf.mxu0
      %v4905 = vadd.f32 0.0, %v4904
      %v4906 = vpop.f32.mrf.mxu0
      %v4907 = vadd.f32 0.0, %v4906
      %4908 = vmatmul.bf16.gmra.mxu0 %v4870
      %v4909 = vpop.f32.mrf.mxu0
      %v4910 = vadd.f32 0.0, %v4909
      %v4911 = vpop.f32.mrf.mxu0
      %v4912 = vadd.f32 0.0, %v4911
      %4913 = vmatmul.bf16.gmra.mxu0 %v4873
      %v4914 = vpop.f32.mrf.mxu0
      %v4915 = vadd.f32 0.0, %v4914
      %v4916 = vpop.f32.mrf.mxu0
      %4917 = vdwg.mxu0
      %v4918 = vadd.f32 %v4804, %v4885
      %v4919 = vadd.f32 %v4805, %v4887
      %v4920 = vadd.f32 %v4806, %v4890
      %v4921 = vadd.f32 %v4807, %v4892
      %v4922 = vadd.f32 %v4808, %v4895
      %v4923 = vadd.f32 %v4809, %v4897
      %v4924 = vadd.f32 %v4810, %v4900
      %v4925 = vadd.f32 %v4811, %v4902
      %v4926 = vadd.f32 %v4812, %v4905
      %v4927 = vadd.f32 %v4813, %v4907
      %v4928 = vadd.f32 %v4814, %v4910
      %v4929 = vadd.f32 %v4815, %v4912
      %v4930 = vadd.f32 %v4816, %v4915
      %v4931 = vld [vmem:[%s4260 + $0xf] sm:$0xff]
      %v4932 = vld [vmem:[%s4260 + $0x17] sm:$0xff]
      %v4933 = vld [vmem:[%s4260 + $0x1f] sm:$0xff]
      %v4934 = vld [vmem:[%s4260 + $0x27] sm:$0xff]
      %v4935 = vld [vmem:[%s4260 + $0x2f] sm:$0xff]
      %v4936 = vld [vmem:[%s4260 + $0x37] sm:$0xff]
      %v4937 = vld [vmem:[%s4260 + $0x3f] sm:$0xff]
      %v4938 = vld [vmem:[%s4260 + $0x47] sm:$0xff]
      %v4939 = vld [vmem:[%s4260 + $0x4f] sm:$0xff]
      %v4940 = vld [vmem:[%s4260 + $0x57] sm:$0xff]
      %v4941 = vld [vmem:[%s4260 + $0x5f] sm:$0xff]
      %v4942 = vld [vmem:[%s4260 + $0x67] sm:$0xff]
      %v4943 = vld [vmem:[%s4260 + $0x6f] sm:$0xf]
      %v4944 = vpack.c.bf16 %v4932, %v4931
      %v4945 = vpack.c.bf16 %v4934, %v4933
      %v4946 = vpack.c.bf16 %v4936, %v4935
      %v4947 = vpack.c.bf16 %v4938, %v4937
      %v4948 = vpack.c.bf16 %v4940, %v4939
      %v4949 = vpack.c.bf16 %v4942, %v4941
      %v4950 = vpack.c.bf16 %v4943, %v4943
      %s4951 = scalar_lea.vmem %s8, 96
      %v4952 = vld [vmem:[%s4951] sm:$0xf]
      %v4953 = vld [vmem:[%s4951 + $0x4] sm:$0xf]
      %v4954 = vld [vmem:[%s4951 + $0x8] sm:$0xf]
      %v4955 = vld [vmem:[%s4951 + $0xc] sm:$0xf]
      %v4960 = vunpack.c.l.b16 %v4952
      %v4961 = vunpack.c.l.b16 %v4953
      %v4962 = vunpack.c.l.b16 %v4954
      %v4963 = vunpack.c.l.b16 %v4955
      %v4964 = vpack.c.b16 %v4961, %v4960
      %v4965 = vpack.c.b16 %v4963, %v4962
      %v4969 = vsel %vm498, %v4944, 0
      %v4972 = vsel %vm498, %v4945, 0
      %v4975 = vsel %vm498, %v4946, 0
      %v4978 = vsel %vm498, %v4947, 0
      %v4981 = vsel %vm498, %v4948, 0
      %v4984 = vsel %vm498, %v4949, 0
      %v4987 = vsel %vm498, %v4950, 0
      %4989 = vmatpush.bf16.msra.mxu0 0
      %4990 = vmatpush.bf16.msra.mxu0 0
      %4991 = vmatpush.bf16.msra.mxu0 0
      %4992 = vmatpush.bf16.msra.mxu0 0
      %4993 = vmatpush.bf16.msra.mxu0 0
      %4994 = vmatpush.bf16.msra.mxu0 0
      %4995 = vmatpush.bf16.msra.mxu0 %v4965
      %4996 = vmatpush.bf16.msra.mxu0 %v4964
      %4997 = vmatmul.bf16.gmra.mxu0 %v4969
      %v4998 = vpop.f32.mrf.mxu0
      %v4999 = vadd.f32 0.0, %v4998
      %v5000 = vpop.f32.mrf.mxu0
      %v5001 = vadd.f32 0.0, %v5000
      %5002 = vmatmul.bf16.gmra.mxu0 %v4972
      %v5003 = vpop.f32.mrf.mxu0
      %v5004 = vadd.f32 0.0, %v5003
      %v5005 = vpop.f32.mrf.mxu0
      %v5006 = vadd.f32 0.0, %v5005
      %5007 = vmatmul.bf16.gmra.mxu0 %v4975
      %v5008 = vpop.f32.mrf.mxu0
      %v5009 = vadd.f32 0.0, %v5008
      %v5010 = vpop.f32.mrf.mxu0
      %v5011 = vadd.f32 0.0, %v5010
      %5012 = vmatmul.bf16.gmra.mxu0 %v4978
      %v5013 = vpop.f32.mrf.mxu0
      %v5014 = vadd.f32 0.0, %v5013
      %v5015 = vpop.f32.mrf.mxu0
      %v5016 = vadd.f32 0.0, %v5015
      %5017 = vmatmul.bf16.gmra.mxu0 %v4981
      %v5018 = vpop.f32.mrf.mxu0
      %v5019 = vadd.f32 0.0, %v5018
      %v5020 = vpop.f32.mrf.mxu0
      %v5021 = vadd.f32 0.0, %v5020
      %5022 = vmatmul.bf16.gmra.mxu0 %v4984
      %v5023 = vpop.f32.mrf.mxu0
      %v5024 = vadd.f32 0.0, %v5023
      %v5025 = vpop.f32.mrf.mxu0
      %v5026 = vadd.f32 0.0, %v5025
      %5027 = vmatmul.bf16.gmra.mxu0 %v4987
      %v5028 = vpop.f32.mrf.mxu0
      %v5029 = vadd.f32 0.0, %v5028
      %v5030 = vpop.f32.mrf.mxu0
      %5031 = vdwg.mxu0
      %v5032 = vadd.f32 %v4918, %v4999
      %v5033 = vadd.f32 %v4919, %v5001
      %v5034 = vadd.f32 %v4920, %v5004
      %v5035 = vadd.f32 %v4921, %v5006
      %v5036 = vadd.f32 %v4922, %v5009
      %v5037 = vadd.f32 %v4923, %v5011
      %v5038 = vadd.f32 %v4924, %v5014
      %v5039 = vadd.f32 %v4925, %v5016
      %v5040 = vadd.f32 %v4926, %v5019
      %v5041 = vadd.f32 %v4927, %v5021
      %v5042 = vadd.f32 %v4928, %v5024
      %v5043 = vadd.f32 %v4929, %v5026
      %v5044 = vadd.f32 %v4930, %v5029
      %v5045 = vld [vmem:[%s3773 + $0x10] sm:$0xff]
      %v5046 = vld [vmem:[%s3773 + $0x18] sm:$0xff]
      %v5047 = vld [vmem:[%s3773 + $0x20] sm:$0xff]
      %v5048 = vld [vmem:[%s3773 + $0x28] sm:$0xff]
      %v5049 = vld [vmem:[%s3773 + $0x30] sm:$0xff]
      %v5050 = vld [vmem:[%s3773 + $0x38] sm:$0xff]
      %v5051 = vld [vmem:[%s3773 + $0x40] sm:$0xff]
      %v5052 = vld [vmem:[%s3773 + $0x48] sm:$0xff]
      %v5053 = vld [vmem:[%s3773 + $0x50] sm:$0xff]
      %v5054 = vld [vmem:[%s3773 + $0x58] sm:$0xff]
      %v5055 = vld [vmem:[%s3773 + $0x60] sm:$0xff]
      %v5056 = vld [vmem:[%s3773 + $0x68] sm:$0xff]
      %v5057 = vld [vmem:[%s3773 + $0x70] sm:$0xf]
      %v5058 = vpack.c.bf16 %v5046, %v5045
      %v5059 = vpack.c.bf16 %v5048, %v5047
      %v5060 = vpack.c.bf16 %v5050, %v5049
      %v5061 = vpack.c.bf16 %v5052, %v5051
      %v5062 = vpack.c.bf16 %v5054, %v5053
      %v5063 = vpack.c.bf16 %v5056, %v5055
      %v5064 = vpack.c.bf16 %v5057, %v5057
      %s5065 = scalar_lea.vmem %s8, 112
      %v5066 = vld [vmem:[%s5065] sm:$0xf]
      %v5067 = vld [vmem:[%s5065 + $0x4] sm:$0xf]
      %v5068 = vld [vmem:[%s5065 + $0x8] sm:$0xf]
      %v5069 = vld [vmem:[%s5065 + $0xc] sm:$0xf]
      %v5074 = vunpack.c.l.b16 %v5066
      %v5075 = vunpack.c.l.b16 %v5067
      %v5076 = vunpack.c.l.b16 %v5068
      %v5077 = vunpack.c.l.b16 %v5069
      %v5078 = vpack.c.b16 %v5075, %v5074
      %v5079 = vpack.c.b16 %v5077, %v5076
      %v5083 = vsel %vm498, %v5058, 0
      %v5086 = vsel %vm498, %v5059, 0
      %v5089 = vsel %vm498, %v5060, 0
      %v5092 = vsel %vm498, %v5061, 0
      %v5095 = vsel %vm498, %v5062, 0
      %v5098 = vsel %vm498, %v5063, 0
      %v5101 = vsel %vm498, %v5064, 0
      %5103 = vmatpush.bf16.msra.mxu0 0
      %5104 = vmatpush.bf16.msra.mxu0 0
      %5105 = vmatpush.bf16.msra.mxu0 0
      %5106 = vmatpush.bf16.msra.mxu0 0
      %5107 = vmatpush.bf16.msra.mxu0 0
      %5108 = vmatpush.bf16.msra.mxu0 0
      %5109 = vmatpush.bf16.msra.mxu0 %v5079
      %5110 = vmatpush.bf16.msra.mxu0 %v5078
      %5111 = vmatmul.bf16.gmra.mxu0 %v5083
      %v5112 = vpop.f32.mrf.mxu0
      %v5113 = vadd.f32 0.0, %v5112
      %v5114 = vpop.f32.mrf.mxu0
      %v5115 = vadd.f32 0.0, %v5114
      %5116 = vmatmul.bf16.gmra.mxu0 %v5086
      %v5117 = vpop.f32.mrf.mxu0
      %v5118 = vadd.f32 0.0, %v5117
      %v5119 = vpop.f32.mrf.mxu0
      %v5120 = vadd.f32 0.0, %v5119
      %5121 = vmatmul.bf16.gmra.mxu0 %v5089
      %v5122 = vpop.f32.mrf.mxu0
      %v5123 = vadd.f32 0.0, %v5122
      %v5124 = vpop.f32.mrf.mxu0
      %v5125 = vadd.f32 0.0, %v5124
      %5126 = vmatmul.bf16.gmra.mxu0 %v5092
      %v5127 = vpop.f32.mrf.mxu0
      %v5128 = vadd.f32 0.0, %v5127
      %v5129 = vpop.f32.mrf.mxu0
      %v5130 = vadd.f32 0.0, %v5129
      %5131 = vmatmul.bf16.gmra.mxu0 %v5095
      %v5132 = vpop.f32.mrf.mxu0
      %v5133 = vadd.f32 0.0, %v5132
      %v5134 = vpop.f32.mrf.mxu0
      %v5135 = vadd.f32 0.0, %v5134
      %5136 = vmatmul.bf16.gmra.mxu0 %v5098
      %v5137 = vpop.f32.mrf.mxu0
      %v5138 = vadd.f32 0.0, %v5137
      %v5139 = vpop.f32.mrf.mxu0
      %v5140 = vadd.f32 0.0, %v5139
      %5141 = vmatmul.bf16.gmra.mxu0 %v5101
      %v5142 = vpop.f32.mrf.mxu0
      %v5143 = vadd.f32 0.0, %v5142
      %v5144 = vpop.f32.mrf.mxu0
      %5145 = vdwg.mxu0
      %v5146 = vadd.f32 %v5032, %v5113
      %v5147 = vadd.f32 %v5033, %v5115
      %v5148 = vadd.f32 %v5034, %v5118
      %v5149 = vadd.f32 %v5035, %v5120
      %v5150 = vadd.f32 %v5036, %v5123
      %v5151 = vadd.f32 %v5037, %v5125
      %v5152 = vadd.f32 %v5038, %v5128
      %v5153 = vadd.f32 %v5039, %v5130
      %v5154 = vadd.f32 %v5040, %v5133
      %v5155 = vadd.f32 %v5041, %v5135
      %v5156 = vadd.f32 %v5042, %v5138
      %v5157 = vadd.f32 %v5043, %v5140
      %v5158 = vadd.f32 %v5044, %v5143
      %v5159 = vld [vmem:[%s4260 + $0x10] sm:$0xff]
      %v5160 = vld [vmem:[%s4260 + $0x18] sm:$0xff]
      %v5161 = vld [vmem:[%s4260 + $0x20] sm:$0xff]
      %v5162 = vld [vmem:[%s4260 + $0x28] sm:$0xff]
      %v5163 = vld [vmem:[%s4260 + $0x30] sm:$0xff]
      %v5164 = vld [vmem:[%s4260 + $0x38] sm:$0xff]
      %v5165 = vld [vmem:[%s4260 + $0x40] sm:$0xff]
      %v5166 = vld [vmem:[%s4260 + $0x48] sm:$0xff]
      %v5167 = vld [vmem:[%s4260 + $0x50] sm:$0xff]
      %v5168 = vld [vmem:[%s4260 + $0x58] sm:$0xff]
      %v5169 = vld [vmem:[%s4260 + $0x60] sm:$0xff]
      %v5170 = vld [vmem:[%s4260 + $0x68] sm:$0xff]
      %v5171 = vld [vmem:[%s4260 + $0x70] sm:$0xf]
      %v5172 = vpack.c.bf16 %v5160, %v5159
      %v5173 = vpack.c.bf16 %v5162, %v5161
      %v5174 = vpack.c.bf16 %v5164, %v5163
      %v5175 = vpack.c.bf16 %v5166, %v5165
      %v5176 = vpack.c.bf16 %v5168, %v5167
      %v5177 = vpack.c.bf16 %v5170, %v5169
      %v5178 = vpack.c.bf16 %v5171, %v5171
      %s5179 = scalar_lea.vmem %s8, 128
      %v5180 = vld [vmem:[%s5179] sm:$0xf]
      %v5181 = vld [vmem:[%s5179 + $0x4] sm:$0xf]
      %v5182 = vld [vmem:[%s5179 + $0x8] sm:$0xf]
      %v5183 = vld [vmem:[%s5179 + $0xc] sm:$0xf]
      %v5188 = vunpack.c.l.b16 %v5180
      %v5189 = vunpack.c.l.b16 %v5181
      %v5190 = vunpack.c.l.b16 %v5182
      %v5191 = vunpack.c.l.b16 %v5183
      %v5192 = vpack.c.b16 %v5189, %v5188
      %v5193 = vpack.c.b16 %v5191, %v5190
      %v5197 = vsel %vm498, %v5172, 0
      %v5200 = vsel %vm498, %v5173, 0
      %v5203 = vsel %vm498, %v5174, 0
      %v5206 = vsel %vm498, %v5175, 0
      %v5209 = vsel %vm498, %v5176, 0
      %v5212 = vsel %vm498, %v5177, 0
      %v5215 = vsel %vm498, %v5178, 0
      %5217 = vmatpush.bf16.msra.mxu0 0
      %5218 = vmatpush.bf16.msra.mxu0 0
      %5219 = vmatpush.bf16.msra.mxu0 0
      %5220 = vmatpush.bf16.msra.mxu0 0
      %5221 = vmatpush.bf16.msra.mxu0 0
      %5222 = vmatpush.bf16.msra.mxu0 0
      %5223 = vmatpush.bf16.msra.mxu0 %v5193
      %5224 = vmatpush.bf16.msra.mxu0 %v5192
      %5225 = vmatmul.bf16.gmra.mxu0 %v5197
      %v5226 = vpop.f32.mrf.mxu0
      %v5227 = vadd.f32 0.0, %v5226
      %v5228 = vpop.f32.mrf.mxu0
      %v5229 = vadd.f32 0.0, %v5228
      %5230 = vmatmul.bf16.gmra.mxu0 %v5200
      %v5231 = vpop.f32.mrf.mxu0
      %v5232 = vadd.f32 0.0, %v5231
      %v5233 = vpop.f32.mrf.mxu0
      %v5234 = vadd.f32 0.0, %v5233
      %5235 = vmatmul.bf16.gmra.mxu0 %v5203
      %v5236 = vpop.f32.mrf.mxu0
      %v5237 = vadd.f32 0.0, %v5236
      %v5238 = vpop.f32.mrf.mxu0
      %v5239 = vadd.f32 0.0, %v5238
      %5240 = vmatmul.bf16.gmra.mxu0 %v5206
      %v5241 = vpop.f32.mrf.mxu0
      %v5242 = vadd.f32 0.0, %v5241
      %v5243 = vpop.f32.mrf.mxu0
      %v5244 = vadd.f32 0.0, %v5243
      %5245 = vmatmul.bf16.gmra.mxu0 %v5209
      %v5246 = vpop.f32.mrf.mxu0
      %v5247 = vadd.f32 0.0, %v5246
      %v5248 = vpop.f32.mrf.mxu0
      %v5249 = vadd.f32 0.0, %v5248
      %5250 = vmatmul.bf16.gmra.mxu0 %v5212
      %v5251 = vpop.f32.mrf.mxu0
      %v5252 = vadd.f32 0.0, %v5251
      %v5253 = vpop.f32.mrf.mxu0
      %v5254 = vadd.f32 0.0, %v5253
      %5255 = vmatmul.bf16.gmra.mxu0 %v5215
      %v5256 = vpop.f32.mrf.mxu0
      %v5257 = vadd.f32 0.0, %v5256
      %v5258 = vpop.f32.mrf.mxu0
      %5259 = vdwg.mxu0
      %v5260 = vadd.f32 %v5146, %v5227
      %v5261 = vadd.f32 %v5147, %v5229
      %v5262 = vadd.f32 %v5148, %v5232
      %v5263 = vadd.f32 %v5149, %v5234
      %v5264 = vadd.f32 %v5150, %v5237
      %v5265 = vadd.f32 %v5151, %v5239
      %v5266 = vadd.f32 %v5152, %v5242
      %v5267 = vadd.f32 %v5153, %v5244
      %v5268 = vadd.f32 %v5154, %v5247
      %v5269 = vadd.f32 %v5155, %v5249
      %v5270 = vadd.f32 %v5156, %v5252
      %v5271 = vadd.f32 %v5157, %v5254
      %v5272 = vadd.f32 %v5158, %v5257
      %v5273 = vld [vmem:[%s9] sm:$0x1]
      %v5275 = vperm.slane %v5273, 0
      %v5277 = vadd.f32 %v5260, %v5275
      %v5278 = vadd.f32 %v5261, %v5275
      %v5279 = vadd.f32 %v5262, %v5275
      %v5280 = vadd.f32 %v5263, %v5275
      %v5281 = vadd.f32 %v5264, %v5275
      %v5282 = vadd.f32 %v5265, %v5275
      %v5283 = vadd.f32 %v5266, %v5275
      %v5284 = vadd.f32 %v5267, %v5275
      %v5285 = vadd.f32 %v5268, %v5275
      %v5286 = vadd.f32 %v5269, %v5275
      %v5287 = vadd.f32 %v5270, %v5275
      %v5288 = vadd.f32 %v5271, %v5275
      %v5289 = vadd.f32 %v5272, %v5275
      %v5290 = vmax.f32 %v5277, 0.0
      %v5291 = vmax.f32 %v5278, 0.0
      %v5292 = vmax.f32 %v5279, 0.0
      %v5293 = vmax.f32 %v5280, 0.0
      %v5294 = vmax.f32 %v5281, 0.0
      %v5295 = vmax.f32 %v5282, 0.0
      %v5296 = vmax.f32 %v5283, 0.0
      %v5297 = vmax.f32 %v5284, 0.0
      %v5298 = vmax.f32 %v5285, 0.0
      %v5299 = vmax.f32 %v5286, 0.0
      %v5300 = vmax.f32 %v5287, 0.0
      %v5301 = vmax.f32 %v5288, 0.0
      %v5302 = vmax.f32 %v5289, 0.0
      %v5303 = vpack.c.bf16 %v5291, %v5290
      %v5304 = vpack.c.bf16 %v5293, %v5292
      %v5305 = vpack.c.bf16 %v5295, %v5294
      %v5306 = vpack.c.bf16 %v5297, %v5296
      %v5307 = vpack.c.bf16 %v5299, %v5298
      %v5308 = vpack.c.bf16 %v5301, %v5300
      %v5309 = vpack.c.bf16 %v5302, %v5302
      %v5310 = vld [vmem:[%s10] sm:$0xf]
      %v5311 = vld [vmem:[%s10 + $0x4] sm:$0xf]
      %v5312 = vld [vmem:[%s10 + $0x8] sm:$0xf]
      %v5313 = vld [vmem:[%s10 + $0xc] sm:$0xf]
      %v5314 = vld [vmem:[%s10 + $0x10] sm:$0xf]
      %v5315 = vld [vmem:[%s10 + $0x14] sm:$0xf]
      %v5316 = vld [vmem:[%s10 + $0x18] sm:$0xf]
      %v5317 = vld [vmem:[%s10 + $0x1c] sm:$0xf]
      %v5318 = vld [vmem:[%s10 + $0x20] sm:$0xf]
      %v5319 = vld [vmem:[%s10 + $0x24] sm:$0xf]
      %v5320 = vld [vmem:[%s10 + $0x28] sm:$0xf]
      %v5321 = vld [vmem:[%s10 + $0x2c] sm:$0xf]
      %v5322 = vld [vmem:[%s11] sm:$0x1]
      %v5324 = vperm.slane %v5322, 0
      %v5338 = vunpack.c.l.b16 %v5310
      %v5339 = vunpack.c.l.b16 %v5311
      %v5340 = vunpack.c.l.b16 %v5312
      %v5341 = vunpack.c.l.b16 %v5313
      %v5342 = vunpack.c.l.b16 %v5314
      %v5343 = vunpack.c.l.b16 %v5315
      %v5344 = vunpack.c.l.b16 %v5316
      %v5345 = vunpack.c.l.b16 %v5317
      %v5346 = vunpack.c.l.b16 %v5318
      %v5347 = vunpack.c.l.b16 %v5319
      %v5348 = vunpack.c.l.b16 %v5320
      %v5349 = vunpack.c.l.b16 %v5321
      %v5350 = vpack.c.b16 %v5339, %v5338
      %v5351 = vpack.c.b16 %v5341, %v5340
      %v5352 = vpack.c.b16 %v5343, %v5342
      %v5353 = vpack.c.b16 %v5345, %v5344
      %v5354 = vpack.c.b16 %v5347, %v5346
      %v5355 = vpack.c.b16 %v5349, %v5348
      %vm5362 = vcmask 785408
      %v5364 = vsel %vm5362, %v5303, 0
      %v5367 = vsel %vm5362, %v5304, 0
      %v5370 = vsel %vm5362, %v5305, 0
      %v5373 = vsel %vm5362, %v5306, 0
      %v5376 = vsel %vm5362, %v5307, 0
      %v5379 = vsel %vm5362, %v5308, 0
      %v5382 = vsel %vm5362, %v5309, 0
      %5384 = vmatpush.bf16.msra.mxu0 0
      %5385 = vmatpush.bf16.msra.mxu0 0
      %5386 = vmatpush.bf16.msra.mxu0 %v5355
      %5387 = vmatpush.bf16.msra.mxu0 %v5354
      %5388 = vmatpush.bf16.msra.mxu0 %v5353
      %5389 = vmatpush.bf16.msra.mxu0 %v5352
      %5390 = vmatpush.bf16.msra.mxu0 %v5351
      %5391 = vmatpush.bf16.msra.mxu0 %v5350
      %5392 = vmatmul.bf16.gmra.mxu0 %v5364
      %v5393 = vpop.f32.mrf.mxu0
      %v5394 = vadd.f32 %v5324, %v5393
      %v5395 = vpop.f32.mrf.mxu0
      %v5396 = vadd.f32 %v5324, %v5395
      %5397 = vmatmul.bf16.gmra.mxu0 %v5367
      %v5398 = vpop.f32.mrf.mxu0
      %v5399 = vadd.f32 %v5324, %v5398
      %v5400 = vpop.f32.mrf.mxu0
      %v5401 = vadd.f32 %v5324, %v5400
      %5402 = vmatmul.bf16.gmra.mxu0 %v5370
      %v5403 = vpop.f32.mrf.mxu0
      %v5404 = vadd.f32 %v5324, %v5403
      %v5405 = vpop.f32.mrf.mxu0
      %v5406 = vadd.f32 %v5324, %v5405
      %5407 = vmatmul.bf16.gmra.mxu0 %v5373
      %v5408 = vpop.f32.mrf.mxu0
      %v5409 = vadd.f32 %v5324, %v5408
      %v5410 = vpop.f32.mrf.mxu0
      %v5411 = vadd.f32 %v5324, %v5410
      %5412 = vmatmul.bf16.gmra.mxu0 %v5376
      %v5413 = vpop.f32.mrf.mxu0
      %v5414 = vadd.f32 %v5324, %v5413
      %v5415 = vpop.f32.mrf.mxu0
      %v5416 = vadd.f32 %v5324, %v5415
      %5417 = vmatmul.bf16.gmra.mxu0 %v5379
      %v5418 = vpop.f32.mrf.mxu0
      %v5419 = vadd.f32 %v5324, %v5418
      %v5420 = vpop.f32.mrf.mxu0
      %v5421 = vadd.f32 %v5324, %v5420
      %5422 = vmatmul.bf16.gmra.mxu0 %v5382
      %v5423 = vpop.f32.mrf.mxu0
      %v5424 = vadd.f32 %v5324, %v5423
      %v5425 = vpop.f32.mrf.mxu0
      %5426 = vdwg.mxu0
      %vm5427 = vcmask 64512
      %5428 = vst.msk [vmem:[%s413] sm:$0xff] %vm5427, %v5394
      %5429 = vst.msk [vmem:[%s413 + $0x8] sm:$0xff] %vm5427, %v5396
      %5430 = vst.msk [vmem:[%s413 + $0x10] sm:$0xff] %vm5427, %v5399
      %5431 = vst.msk [vmem:[%s413 + $0x18] sm:$0xff] %vm5427, %v5401
      %5432 = vst.msk [vmem:[%s413 + $0x20] sm:$0xff] %vm5427, %v5404
      %5433 = vst.msk [vmem:[%s413 + $0x28] sm:$0xff] %vm5427, %v5406
      %5434 = vst.msk [vmem:[%s413 + $0x30] sm:$0xff] %vm5427, %v5409
      %5435 = vst.msk [vmem:[%s413 + $0x38] sm:$0xff] %vm5427, %v5411
      %5436 = vst.msk [vmem:[%s413 + $0x40] sm:$0xff] %vm5427, %v5414
      %5437 = vst.msk [vmem:[%s413 + $0x48] sm:$0xff] %vm5427, %v5416
      %5438 = vst.msk [vmem:[%s413 + $0x50] sm:$0xff] %vm5427, %v5419
      %5439 = vst.msk [vmem:[%s413 + $0x58] sm:$0xff] %vm5427, %v5421
      %vm5440 = vcmask 60416
      %5441 = vst.msk [vmem:[%s413 + $0x60] sm:$0xf] %vm5440, %v5424
      %v5442 = vld [vmem:[%s3773 + $0x6] sm:$0xff]
      %v5443 = vld [vmem:[%s3773 + $0xe] sm:$0xff]
      %v5444 = vld [vmem:[%s3773 + $0x16] sm:$0xff]
      %v5445 = vld [vmem:[%s3773 + $0x1e] sm:$0xff]
      %v5446 = vld [vmem:[%s3773 + $0x26] sm:$0xff]
      %v5447 = vld [vmem:[%s3773 + $0x2e] sm:$0xff]
      %v5448 = vld [vmem:[%s3773 + $0x36] sm:$0xff]
      %v5449 = vld [vmem:[%s3773 + $0x3e] sm:$0xff]
      %v5450 = vld [vmem:[%s3773 + $0x46] sm:$0xff]
      %v5451 = vld [vmem:[%s3773 + $0x4e] sm:$0xff]
      %v5452 = vld [vmem:[%s3773 + $0x56] sm:$0xff]
      %v5453 = vld [vmem:[%s3773 + $0x5e] sm:$0xff]
      %v5454 = vld [vmem:[%s3773 + $0x66] sm:$0xf]
      %v5455 = vpack.c.bf16 %v5443, %v5442
      %v5456 = vpack.c.bf16 %v5445, %v5444
      %v5457 = vpack.c.bf16 %v5447, %v5446
      %v5458 = vpack.c.bf16 %v5449, %v5448
      %v5459 = vpack.c.bf16 %v5451, %v5450
      %v5460 = vpack.c.bf16 %v5453, %v5452
      %v5461 = vpack.c.bf16 %v5454, %v5454
      %v5462 = vld [vmem:[%s8] sm:$0xf]
      %v5463 = vld [vmem:[%s8 + $0x4] sm:$0xf]
      %v5464 = vld [vmem:[%s8 + $0x8] sm:$0xf]
      %v5465 = vld [vmem:[%s8 + $0xc] sm:$0xf]
      %v5466 = vld [vmem:[%s4260 + $0x6] sm:$0xff]
      %v5467 = vld [vmem:[%s4260 + $0xe] sm:$0xff]
      %v5468 = vld [vmem:[%s4260 + $0x16] sm:$0xff]
      %v5469 = vld [vmem:[%s4260 + $0x1e] sm:$0xff]
      %v5470 = vld [vmem:[%s4260 + $0x26] sm:$0xff]
      %v5471 = vld [vmem:[%s4260 + $0x2e] sm:$0xff]
      %v5472 = vld [vmem:[%s4260 + $0x36] sm:$0xff]
      %v5473 = vld [vmem:[%s4260 + $0x3e] sm:$0xff]
      %v5474 = vld [vmem:[%s4260 + $0x46] sm:$0xff]
      %v5475 = vld [vmem:[%s4260 + $0x4e] sm:$0xff]
      %v5476 = vld [vmem:[%s4260 + $0x56] sm:$0xff]
      %v5477 = vld [vmem:[%s4260 + $0x5e] sm:$0xff]
      %v5478 = vld [vmem:[%s4260 + $0x66] sm:$0xf]
      %v5479 = vpack.c.bf16 %v5467, %v5466
      %v5480 = vpack.c.bf16 %v5469, %v5468
      %v5481 = vpack.c.bf16 %v5471, %v5470
      %v5482 = vpack.c.bf16 %v5473, %v5472
      %v5483 = vpack.c.bf16 %v5475, %v5474
      %v5484 = vpack.c.bf16 %v5477, %v5476
      %v5485 = vpack.c.bf16 %v5478, %v5478
      %v5486 = vld [vmem:[%s4318] sm:$0xf]
      %v5487 = vld [vmem:[%s4318 + $0x4] sm:$0xf]
      %v5488 = vld [vmem:[%s4318 + $0x8] sm:$0xf]
      %v5489 = vld [vmem:[%s4318 + $0xc] sm:$0xf]
      %v5494 = vunpack.c.l.b16 %v5486
      %v5495 = vunpack.c.l.b16 %v5487
      %v5496 = vunpack.c.l.b16 %v5488
      %v5497 = vunpack.c.l.b16 %v5489
      %v5498 = vpack.c.b16 %v5495, %v5494
      %v5499 = vpack.c.b16 %v5497, %v5496
      %v5503 = vsel %vm498, %v5479, 0
      %v5506 = vsel %vm498, %v5480, 0
      %v5509 = vsel %vm498, %v5481, 0
      %v5512 = vsel %vm498, %v5482, 0
      %v5515 = vsel %vm498, %v5483, 0
      %v5518 = vsel %vm498, %v5484, 0
      %v5521 = vsel %vm498, %v5485, 0
      %5523 = vmatpush.bf16.msra.mxu0 0
      %5524 = vmatpush.bf16.msra.mxu0 0
      %5525 = vmatpush.bf16.msra.mxu0 0
      %5526 = vmatpush.bf16.msra.mxu0 0
      %5527 = vmatpush.bf16.msra.mxu0 0
      %5528 = vmatpush.bf16.msra.mxu0 0
      %5529 = vmatpush.bf16.msra.mxu0 %v5499
      %5530 = vmatpush.bf16.msra.mxu0 %v5498
      %5531 = vmatmul.bf16.gmra.mxu0 %v5503
      %v5532 = vpop.f32.mrf.mxu0
      %v5533 = vadd.f32 0.0, %v5532
      %v5534 = vpop.f32.mrf.mxu0
      %v5535 = vadd.f32 0.0, %v5534
      %5536 = vmatmul.bf16.gmra.mxu0 %v5506
      %v5537 = vpop.f32.mrf.mxu0
      %v5538 = vadd.f32 0.0, %v5537
      %v5539 = vpop.f32.mrf.mxu0
      %v5540 = vadd.f32 0.0, %v5539
      %5541 = vmatmul.bf16.gmra.mxu0 %v5509
      %v5542 = vpop.f32.mrf.mxu0
      %v5543 = vadd.f32 0.0, %v5542
      %v5544 = vpop.f32.mrf.mxu0
      %v5545 = vadd.f32 0.0, %v5544
      %5546 = vmatmul.bf16.gmra.mxu0 %v5512
      %v5547 = vpop.f32.mrf.mxu0
      %v5548 = vadd.f32 0.0, %v5547
      %v5549 = vpop.f32.mrf.mxu0
      %v5550 = vadd.f32 0.0, %v5549
      %5551 = vmatmul.bf16.gmra.mxu0 %v5515
      %v5552 = vpop.f32.mrf.mxu0
      %v5553 = vadd.f32 0.0, %v5552
      %v5554 = vpop.f32.mrf.mxu0
      %v5555 = vadd.f32 0.0, %v5554
      %5556 = vmatmul.bf16.gmra.mxu0 %v5518
      %v5557 = vpop.f32.mrf.mxu0
      %v5558 = vadd.f32 0.0, %v5557
      %v5559 = vpop.f32.mrf.mxu0
      %v5560 = vadd.f32 0.0, %v5559
      %5561 = vmatmul.bf16.gmra.mxu0 %v5521
      %v5562 = vpop.f32.mrf.mxu0
      %v5563 = vadd.f32 0.0, %v5562
      %v5564 = vpop.f32.mrf.mxu0
      %5565 = vdwg.mxu0
      %v5570 = vunpack.c.l.b16 %v5462
      %v5571 = vunpack.c.l.b16 %v5463
      %v5572 = vunpack.c.l.b16 %v5464
      %v5573 = vunpack.c.l.b16 %v5465
      %v5574 = vpack.c.b16 %v5571, %v5570
      %v5575 = vpack.c.b16 %v5573, %v5572
      %v5579 = vsel %vm498, %v5455, 0
      %v5582 = vsel %vm498, %v5456, 0
      %v5585 = vsel %vm498, %v5457, 0
      %v5588 = vsel %vm498, %v5458, 0
      %v5591 = vsel %vm498, %v5459, 0
      %v5594 = vsel %vm498, %v5460, 0
      %v5597 = vsel %vm498, %v5461, 0
      %5599 = vmatpush.bf16.msra.mxu0 0
      %5600 = vmatpush.bf16.msra.mxu0 0
      %5601 = vmatpush.bf16.msra.mxu0 0
      %5602 = vmatpush.bf16.msra.mxu0 0
      %5603 = vmatpush.bf16.msra.mxu0 0
      %5604 = vmatpush.bf16.msra.mxu0 0
      %5605 = vmatpush.bf16.msra.mxu0 %v5575
      %5606 = vmatpush.bf16.msra.mxu0 %v5574
      %5607 = vmatmul.bf16.gmra.mxu0 %v5579
      %v5608 = vpop.f32.mrf.mxu0
      %v5609 = vadd.f32 %v5533, %v5608
      %v5610 = vpop.f32.mrf.mxu0
      %v5611 = vadd.f32 %v5535, %v5610
      %5612 = vmatmul.bf16.gmra.mxu0 %v5582
      %v5613 = vpop.f32.mrf.mxu0
      %v5614 = vadd.f32 %v5538, %v5613
      %v5615 = vpop.f32.mrf.mxu0
      %v5616 = vadd.f32 %v5540, %v5615
      %5617 = vmatmul.bf16.gmra.mxu0 %v5585
      %v5618 = vpop.f32.mrf.mxu0
      %v5619 = vadd.f32 %v5543, %v5618
      %v5620 = vpop.f32.mrf.mxu0
      %v5621 = vadd.f32 %v5545, %v5620
      %5622 = vmatmul.bf16.gmra.mxu0 %v5588
      %v5623 = vpop.f32.mrf.mxu0
      %v5624 = vadd.f32 %v5548, %v5623
      %v5625 = vpop.f32.mrf.mxu0
      %v5626 = vadd.f32 %v5550, %v5625
      %5627 = vmatmul.bf16.gmra.mxu0 %v5591
      %v5628 = vpop.f32.mrf.mxu0
      %v5629 = vadd.f32 %v5553, %v5628
      %v5630 = vpop.f32.mrf.mxu0
      %v5631 = vadd.f32 %v5555, %v5630
      %5632 = vmatmul.bf16.gmra.mxu0 %v5594
      %v5633 = vpop.f32.mrf.mxu0
      %v5634 = vadd.f32 %v5558, %v5633
      %v5635 = vpop.f32.mrf.mxu0
      %v5636 = vadd.f32 %v5560, %v5635
      %5637 = vmatmul.bf16.gmra.mxu0 %v5597
      %v5638 = vpop.f32.mrf.mxu0
      %v5639 = vadd.f32 %v5563, %v5638
      %v5640 = vpop.f32.mrf.mxu0
      %5641 = vdwg.mxu0
      %v5642 = vld [vmem:[%s3773 + $0x7] sm:$0xff]
      %v5643 = vld [vmem:[%s3773 + $0xf] sm:$0xff]
      %v5644 = vld [vmem:[%s3773 + $0x17] sm:$0xff]
      %v5645 = vld [vmem:[%s3773 + $0x1f] sm:$0xff]
      %v5646 = vld [vmem:[%s3773 + $0x27] sm:$0xff]
      %v5647 = vld [vmem:[%s3773 + $0x2f] sm:$0xff]
      %v5648 = vld [vmem:[%s3773 + $0x37] sm:$0xff]
      %v5649 = vld [vmem:[%s3773 + $0x3f] sm:$0xff]
      %v5650 = vld [vmem:[%s3773 + $0x47] sm:$0xff]
      %v5651 = vld [vmem:[%s3773 + $0x4f] sm:$0xff]
      %v5652 = vld [vmem:[%s3773 + $0x57] sm:$0xff]
      %v5653 = vld [vmem:[%s3773 + $0x5f] sm:$0xff]
      %v5654 = vld [vmem:[%s3773 + $0x67] sm:$0xf]
      %v5655 = vpack.c.bf16 %v5643, %v5642
      %v5656 = vpack.c.bf16 %v5645, %v5644
      %v5657 = vpack.c.bf16 %v5647, %v5646
      %v5658 = vpack.c.bf16 %v5649, %v5648
      %v5659 = vpack.c.bf16 %v5651, %v5650
      %v5660 = vpack.c.bf16 %v5653, %v5652
      %v5661 = vpack.c.bf16 %v5654, %v5654
      %v5662 = vld [vmem:[%s4495] sm:$0xf]
      %v5663 = vld [vmem:[%s4495 + $0x4] sm:$0xf]
      %v5664 = vld [vmem:[%s4495 + $0x8] sm:$0xf]
      %v5665 = vld [vmem:[%s4495 + $0xc] sm:$0xf]
      %v5670 = vunpack.c.l.b16 %v5662
      %v5671 = vunpack.c.l.b16 %v5663
      %v5672 = vunpack.c.l.b16 %v5664
      %v5673 = vunpack.c.l.b16 %v5665
      %v5674 = vpack.c.b16 %v5671, %v5670
      %v5675 = vpack.c.b16 %v5673, %v5672
      %v5679 = vsel %vm498, %v5655, 0
      %v5682 = vsel %vm498, %v5656, 0
      %v5685 = vsel %vm498, %v5657, 0
      %v5688 = vsel %vm498, %v5658, 0
      %v5691 = vsel %vm498, %v5659, 0
      %v5694 = vsel %vm498, %v5660, 0
      %v5697 = vsel %vm498, %v5661, 0
      %5699 = vmatpush.bf16.msra.mxu0 0
      %5700 = vmatpush.bf16.msra.mxu0 0
      %5701 = vmatpush.bf16.msra.mxu0 0
      %5702 = vmatpush.bf16.msra.mxu0 0
      %5703 = vmatpush.bf16.msra.mxu0 0
      %5704 = vmatpush.bf16.msra.mxu0 0
      %5705 = vmatpush.bf16.msra.mxu0 %v5675
      %5706 = vmatpush.bf16.msra.mxu0 %v5674
      %5707 = vmatmul.bf16.gmra.mxu0 %v5679
      %v5708 = vpop.f32.mrf.mxu0
      %v5709 = vadd.f32 0.0, %v5708
      %v5710 = vpop.f32.mrf.mxu0
      %v5711 = vadd.f32 0.0, %v5710
      %5712 = vmatmul.bf16.gmra.mxu0 %v5682
      %v5713 = vpop.f32.mrf.mxu0
      %v5714 = vadd.f32 0.0, %v5713
      %v5715 = vpop.f32.mrf.mxu0
      %v5716 = vadd.f32 0.0, %v5715
      %5717 = vmatmul.bf16.gmra.mxu0 %v5685
      %v5718 = vpop.f32.mrf.mxu0
      %v5719 = vadd.f32 0.0, %v5718
      %v5720 = vpop.f32.mrf.mxu0
      %v5721 = vadd.f32 0.0, %v5720
      %5722 = vmatmul.bf16.gmra.mxu0 %v5688
      %v5723 = vpop.f32.mrf.mxu0
      %v5724 = vadd.f32 0.0, %v5723
      %v5725 = vpop.f32.mrf.mxu0
      %v5726 = vadd.f32 0.0, %v5725
      %5727 = vmatmul.bf16.gmra.mxu0 %v5691
      %v5728 = vpop.f32.mrf.mxu0
      %v5729 = vadd.f32 0.0, %v5728
      %v5730 = vpop.f32.mrf.mxu0
      %v5731 = vadd.f32 0.0, %v5730
      %5732 = vmatmul.bf16.gmra.mxu0 %v5694
      %v5733 = vpop.f32.mrf.mxu0
      %v5734 = vadd.f32 0.0, %v5733
      %v5735 = vpop.f32.mrf.mxu0
      %v5736 = vadd.f32 0.0, %v5735
      %5737 = vmatmul.bf16.gmra.mxu0 %v5697
      %v5738 = vpop.f32.mrf.mxu0
      %v5739 = vadd.f32 0.0, %v5738
      %v5740 = vpop.f32.mrf.mxu0
      %5741 = vdwg.mxu0
      %v5742 = vadd.f32 %v5609, %v5709
      %v5743 = vadd.f32 %v5611, %v5711
      %v5744 = vadd.f32 %v5614, %v5714
      %v5745 = vadd.f32 %v5616, %v5716
      %v5746 = vadd.f32 %v5619, %v5719
      %v5747 = vadd.f32 %v5621, %v5721
      %v5748 = vadd.f32 %v5624, %v5724
      %v5749 = vadd.f32 %v5626, %v5726
      %v5750 = vadd.f32 %v5629, %v5729
      %v5751 = vadd.f32 %v5631, %v5731
      %v5752 = vadd.f32 %v5634, %v5734
      %v5753 = vadd.f32 %v5636, %v5736
      %v5754 = vadd.f32 %v5639, %v5739
      %v5755 = vld [vmem:[#allocation4 + $0x10] sm:$0xff]
      %v5756 = vld [vmem:[#allocation4 + $0x18] sm:$0xff]
      %v5757 = vld [vmem:[#allocation4 + $0x20] sm:$0xff]
      %v5758 = vld [vmem:[#allocation4 + $0x28] sm:$0xff]
      %v5759 = vld [vmem:[#allocation4 + $0x30] sm:$0xff]
      %v5760 = vld [vmem:[#allocation4 + $0x38] sm:$0xff]
      %v5761 = vld [vmem:[#allocation4 + $0x40] sm:$0xff]
      %v5762 = vld [vmem:[#allocation4 + $0x48] sm:$0xff]
      %v5763 = vld [vmem:[#allocation4 + $0x50] sm:$0xff]
      %v5764 = vld [vmem:[#allocation4 + $0x58] sm:$0xff]
      %v5765 = vld [vmem:[#allocation4 + $0x60] sm:$0xff]
      %v5766 = vld [vmem:[#allocation4 + $0x68] sm:$0xff]
      %v5767 = vld [vmem:[#allocation4 + $0x70] sm:$0xf]
      %v5768 = vpack.c.bf16 %v5756, %v5755
      %v5769 = vpack.c.bf16 %v5758, %v5757
      %v5770 = vpack.c.bf16 %v5760, %v5759
      %v5771 = vpack.c.bf16 %v5762, %v5761
      %v5772 = vpack.c.bf16 %v5764, %v5763
      %v5773 = vpack.c.bf16 %v5766, %v5765
      %v5774 = vpack.c.bf16 %v5767, %v5767
      %v5775 = vld [vmem:[%s4609] sm:$0xf]
      %v5776 = vld [vmem:[%s4609 + $0x4] sm:$0xf]
      %v5777 = vld [vmem:[%s4609 + $0x8] sm:$0xf]
      %v5778 = vld [vmem:[%s4609 + $0xc] sm:$0xf]
      %v5783 = vunpack.c.l.b16 %v5775
      %v5784 = vunpack.c.l.b16 %v5776
      %v5785 = vunpack.c.l.b16 %v5777
      %v5786 = vunpack.c.l.b16 %v5778
      %v5787 = vpack.c.b16 %v5784, %v5783
      %v5788 = vpack.c.b16 %v5786, %v5785
      %v5792 = vsel %vm498, %v5768, 0
      %v5795 = vsel %vm498, %v5769, 0
      %v5798 = vsel %vm498, %v5770, 0
      %v5801 = vsel %vm498, %v5771, 0
      %v5804 = vsel %vm498, %v5772, 0
      %v5807 = vsel %vm498, %v5773, 0
      %v5810 = vsel %vm498, %v5774, 0
      %5812 = vmatpush.bf16.msra.mxu0 0
      %5813 = vmatpush.bf16.msra.mxu0 0
      %5814 = vmatpush.bf16.msra.mxu0 0
      %5815 = vmatpush.bf16.msra.mxu0 0
      %5816 = vmatpush.bf16.msra.mxu0 0
      %5817 = vmatpush.bf16.msra.mxu0 0
      %5818 = vmatpush.bf16.msra.mxu0 %v5788
      %5819 = vmatpush.bf16.msra.mxu0 %v5787
      %5820 = vmatmul.bf16.gmra.mxu0 %v5792
      %v5821 = vpop.f32.mrf.mxu0
      %v5822 = vadd.f32 0.0, %v5821
      %v5823 = vpop.f32.mrf.mxu0
      %v5824 = vadd.f32 0.0, %v5823
      %5825 = vmatmul.bf16.gmra.mxu0 %v5795
      %v5826 = vpop.f32.mrf.mxu0
      %v5827 = vadd.f32 0.0, %v5826
      %v5828 = vpop.f32.mrf.mxu0
      %v5829 = vadd.f32 0.0, %v5828
      %5830 = vmatmul.bf16.gmra.mxu0 %v5798
      %v5831 = vpop.f32.mrf.mxu0
      %v5832 = vadd.f32 0.0, %v5831
      %v5833 = vpop.f32.mrf.mxu0
      %v5834 = vadd.f32 0.0, %v5833
      %5835 = vmatmul.bf16.gmra.mxu0 %v5801
      %v5836 = vpop.f32.mrf.mxu0
      %v5837 = vadd.f32 0.0, %v5836
      %v5838 = vpop.f32.mrf.mxu0
      %v5839 = vadd.f32 0.0, %v5838
      %5840 = vmatmul.bf16.gmra.mxu0 %v5804
      %v5841 = vpop.f32.mrf.mxu0
      %v5842 = vadd.f32 0.0, %v5841
      %v5843 = vpop.f32.mrf.mxu0
      %v5844 = vadd.f32 0.0, %v5843
      %5845 = vmatmul.bf16.gmra.mxu0 %v5807
      %v5846 = vpop.f32.mrf.mxu0
      %v5847 = vadd.f32 0.0, %v5846
      %v5848 = vpop.f32.mrf.mxu0
      %v5849 = vadd.f32 0.0, %v5848
      %5850 = vmatmul.bf16.gmra.mxu0 %v5810
      %v5851 = vpop.f32.mrf.mxu0
      %v5852 = vadd.f32 0.0, %v5851
      %v5853 = vpop.f32.mrf.mxu0
      %5854 = vdwg.mxu0
      %v5855 = vadd.f32 %v5742, %v5822
      %v5856 = vadd.f32 %v5743, %v5824
      %v5857 = vadd.f32 %v5744, %v5827
      %v5858 = vadd.f32 %v5745, %v5829
      %v5859 = vadd.f32 %v5746, %v5832
      %v5860 = vadd.f32 %v5747, %v5834
      %v5861 = vadd.f32 %v5748, %v5837
      %v5862 = vadd.f32 %v5749, %v5839
      %v5863 = vadd.f32 %v5750, %v5842
      %v5864 = vadd.f32 %v5751, %v5844
      %v5865 = vadd.f32 %v5752, %v5847
      %v5866 = vadd.f32 %v5753, %v5849
      %v5867 = vadd.f32 %v5754, %v5852
      %v5868 = vld [vmem:[%s3286 + $0x10] sm:$0xff]
      %v5869 = vld [vmem:[%s3286 + $0x18] sm:$0xff]
      %v5870 = vld [vmem:[%s3286 + $0x20] sm:$0xff]
      %v5871 = vld [vmem:[%s3286 + $0x28] sm:$0xff]
      %v5872 = vld [vmem:[%s3286 + $0x30] sm:$0xff]
      %v5873 = vld [vmem:[%s3286 + $0x38] sm:$0xff]
      %v5874 = vld [vmem:[%s3286 + $0x40] sm:$0xff]
      %v5875 = vld [vmem:[%s3286 + $0x48] sm:$0xff]
      %v5876 = vld [vmem:[%s3286 + $0x50] sm:$0xff]
      %v5877 = vld [vmem:[%s3286 + $0x58] sm:$0xff]
      %v5878 = vld [vmem:[%s3286 + $0x60] sm:$0xff]
      %v5879 = vld [vmem:[%s3286 + $0x68] sm:$0xff]
      %v5880 = vld [vmem:[%s3286 + $0x70] sm:$0xf]
      %v5881 = vpack.c.bf16 %v5869, %v5868
      %v5882 = vpack.c.bf16 %v5871, %v5870
      %v5883 = vpack.c.bf16 %v5873, %v5872
      %v5884 = vpack.c.bf16 %v5875, %v5874
      %v5885 = vpack.c.bf16 %v5877, %v5876
      %v5886 = vpack.c.bf16 %v5879, %v5878
      %v5887 = vpack.c.bf16 %v5880, %v5880
      %v5888 = vld [vmem:[%s4723] sm:$0xf]
      %v5889 = vld [vmem:[%s4723 + $0x4] sm:$0xf]
      %v5890 = vld [vmem:[%s4723 + $0x8] sm:$0xf]
      %v5891 = vld [vmem:[%s4723 + $0xc] sm:$0xf]
      %v5896 = vunpack.c.l.b16 %v5888
      %v5897 = vunpack.c.l.b16 %v5889
      %v5898 = vunpack.c.l.b16 %v5890
      %v5899 = vunpack.c.l.b16 %v5891
      %v5900 = vpack.c.b16 %v5897, %v5896
      %v5901 = vpack.c.b16 %v5899, %v5898
      %v5905 = vsel %vm498, %v5881, 0
      %v5908 = vsel %vm498, %v5882, 0
      %v5911 = vsel %vm498, %v5883, 0
      %v5914 = vsel %vm498, %v5884, 0
      %v5917 = vsel %vm498, %v5885, 0
      %v5920 = vsel %vm498, %v5886, 0
      %v5923 = vsel %vm498, %v5887, 0
      %5925 = vmatpush.bf16.msra.mxu0 0
      %5926 = vmatpush.bf16.msra.mxu0 0
      %5927 = vmatpush.bf16.msra.mxu0 0
      %5928 = vmatpush.bf16.msra.mxu0 0
      %5929 = vmatpush.bf16.msra.mxu0 0
      %5930 = vmatpush.bf16.msra.mxu0 0
      %5931 = vmatpush.bf16.msra.mxu0 %v5901
      %5932 = vmatpush.bf16.msra.mxu0 %v5900
      %5933 = vmatmul.bf16.gmra.mxu0 %v5905
      %v5934 = vpop.f32.mrf.mxu0
      %v5935 = vadd.f32 0.0, %v5934
      %v5936 = vpop.f32.mrf.mxu0
      %v5937 = vadd.f32 0.0, %v5936
      %5938 = vmatmul.bf16.gmra.mxu0 %v5908
      %v5939 = vpop.f32.mrf.mxu0
      %v5940 = vadd.f32 0.0, %v5939
      %v5941 = vpop.f32.mrf.mxu0
      %v5942 = vadd.f32 0.0, %v5941
      %5943 = vmatmul.bf16.gmra.mxu0 %v5911
      %v5944 = vpop.f32.mrf.mxu0
      %v5945 = vadd.f32 0.0, %v5944
      %v5946 = vpop.f32.mrf.mxu0
      %v5947 = vadd.f32 0.0, %v5946
      %5948 = vmatmul.bf16.gmra.mxu0 %v5914
      %v5949 = vpop.f32.mrf.mxu0
      %v5950 = vadd.f32 0.0, %v5949
      %v5951 = vpop.f32.mrf.mxu0
      %v5952 = vadd.f32 0.0, %v5951
      %5953 = vmatmul.bf16.gmra.mxu0 %v5917
      %v5954 = vpop.f32.mrf.mxu0
      %v5955 = vadd.f32 0.0, %v5954
      %v5956 = vpop.f32.mrf.mxu0
      %v5957 = vadd.f32 0.0, %v5956
      %5958 = vmatmul.bf16.gmra.mxu0 %v5920
      %v5959 = vpop.f32.mrf.mxu0
      %v5960 = vadd.f32 0.0, %v5959
      %v5961 = vpop.f32.mrf.mxu0
      %v5962 = vadd.f32 0.0, %v5961
      %5963 = vmatmul.bf16.gmra.mxu0 %v5923
      %v5964 = vpop.f32.mrf.mxu0
      %v5965 = vadd.f32 0.0, %v5964
      %v5966 = vpop.f32.mrf.mxu0
      %5967 = vdwg.mxu0
      %v5968 = vadd.f32 %v5855, %v5935
      %v5969 = vadd.f32 %v5856, %v5937
      %v5970 = vadd.f32 %v5857, %v5940
      %v5971 = vadd.f32 %v5858, %v5942
      %v5972 = vadd.f32 %v5859, %v5945
      %v5973 = vadd.f32 %v5860, %v5947
      %v5974 = vadd.f32 %v5861, %v5950
      %v5975 = vadd.f32 %v5862, %v5952
      %v5976 = vadd.f32 %v5863, %v5955
      %v5977 = vadd.f32 %v5864, %v5957
      %v5978 = vadd.f32 %v5865, %v5960
      %v5979 = vadd.f32 %v5866, %v5962
      %v5980 = vadd.f32 %v5867, %v5965
      %v5981 = vld [vmem:[#allocation4 + $0x11] sm:$0xff]
      %v5982 = vld [vmem:[#allocation4 + $0x19] sm:$0xff]
      %v5983 = vld [vmem:[#allocation4 + $0x21] sm:$0xff]
      %v5984 = vld [vmem:[#allocation4 + $0x29] sm:$0xff]
      %v5985 = vld [vmem:[#allocation4 + $0x31] sm:$0xff]
      %v5986 = vld [vmem:[#allocation4 + $0x39] sm:$0xff]
      %v5987 = vld [vmem:[#allocation4 + $0x41] sm:$0xff]
      %v5988 = vld [vmem:[#allocation4 + $0x49] sm:$0xff]
      %v5989 = vld [vmem:[#allocation4 + $0x51] sm:$0xff]
      %v5990 = vld [vmem:[#allocation4 + $0x59] sm:$0xff]
      %v5991 = vld [vmem:[#allocation4 + $0x61] sm:$0xff]
      %v5992 = vld [vmem:[#allocation4 + $0x69] sm:$0xff]
      %v5993 = vld [vmem:[#allocation4 + $0x71] sm:$0xf]
      %v5994 = vpack.c.bf16 %v5982, %v5981
      %v5995 = vpack.c.bf16 %v5984, %v5983
      %v5996 = vpack.c.bf16 %v5986, %v5985
      %v5997 = vpack.c.bf16 %v5988, %v5987
      %v5998 = vpack.c.bf16 %v5990, %v5989
      %v5999 = vpack.c.bf16 %v5992, %v5991
      %v6000 = vpack.c.bf16 %v5993, %v5993
      %v6001 = vld [vmem:[%s4837] sm:$0xf]
      %v6002 = vld [vmem:[%s4837 + $0x4] sm:$0xf]
      %v6003 = vld [vmem:[%s4837 + $0x8] sm:$0xf]
      %v6004 = vld [vmem:[%s4837 + $0xc] sm:$0xf]
      %v6009 = vunpack.c.l.b16 %v6001
      %v6010 = vunpack.c.l.b16 %v6002
      %v6011 = vunpack.c.l.b16 %v6003
      %v6012 = vunpack.c.l.b16 %v6004
      %v6013 = vpack.c.b16 %v6010, %v6009
      %v6014 = vpack.c.b16 %v6012, %v6011
      %v6018 = vsel %vm498, %v5994, 0
      %v6021 = vsel %vm498, %v5995, 0
      %v6024 = vsel %vm498, %v5996, 0
      %v6027 = vsel %vm498, %v5997, 0
      %v6030 = vsel %vm498, %v5998, 0
      %v6033 = vsel %vm498, %v5999, 0
      %v6036 = vsel %vm498, %v6000, 0
      %6038 = vmatpush.bf16.msra.mxu0 0
      %6039 = vmatpush.bf16.msra.mxu0 0
      %6040 = vmatpush.bf16.msra.mxu0 0
      %6041 = vmatpush.bf16.msra.mxu0 0
      %6042 = vmatpush.bf16.msra.mxu0 0
      %6043 = vmatpush.bf16.msra.mxu0 0
      %6044 = vmatpush.bf16.msra.mxu0 %v6014
      %6045 = vmatpush.bf16.msra.mxu0 %v6013
      %6046 = vmatmul.bf16.gmra.mxu0 %v6018
      %v6047 = vpop.f32.mrf.mxu0
      %v6048 = vadd.f32 0.0, %v6047
      %v6049 = vpop.f32.mrf.mxu0
      %v6050 = vadd.f32 0.0, %v6049
      %6051 = vmatmul.bf16.gmra.mxu0 %v6021
      %v6052 = vpop.f32.mrf.mxu0
      %v6053 = vadd.f32 0.0, %v6052
      %v6054 = vpop.f32.mrf.mxu0
      %v6055 = vadd.f32 0.0, %v6054
      %6056 = vmatmul.bf16.gmra.mxu0 %v6024
      %v6057 = vpop.f32.mrf.mxu0
      %v6058 = vadd.f32 0.0, %v6057
      %v6059 = vpop.f32.mrf.mxu0
      %v6060 = vadd.f32 0.0, %v6059
      %6061 = vmatmul.bf16.gmra.mxu0 %v6027
      %v6062 = vpop.f32.mrf.mxu0
      %v6063 = vadd.f32 0.0, %v6062
      %v6064 = vpop.f32.mrf.mxu0
      %v6065 = vadd.f32 0.0, %v6064
      %6066 = vmatmul.bf16.gmra.mxu0 %v6030
      %v6067 = vpop.f32.mrf.mxu0
      %v6068 = vadd.f32 0.0, %v6067
      %v6069 = vpop.f32.mrf.mxu0
      %v6070 = vadd.f32 0.0, %v6069
      %6071 = vmatmul.bf16.gmra.mxu0 %v6033
      %v6072 = vpop.f32.mrf.mxu0
      %v6073 = vadd.f32 0.0, %v6072
      %v6074 = vpop.f32.mrf.mxu0
      %v6075 = vadd.f32 0.0, %v6074
      %6076 = vmatmul.bf16.gmra.mxu0 %v6036
      %v6077 = vpop.f32.mrf.mxu0
      %v6078 = vadd.f32 0.0, %v6077
      %v6079 = vpop.f32.mrf.mxu0
      %6080 = vdwg.mxu0
      %v6081 = vadd.f32 %v5968, %v6048
      %v6082 = vadd.f32 %v5969, %v6050
      %v6083 = vadd.f32 %v5970, %v6053
      %v6084 = vadd.f32 %v5971, %v6055
      %v6085 = vadd.f32 %v5972, %v6058
      %v6086 = vadd.f32 %v5973, %v6060
      %v6087 = vadd.f32 %v5974, %v6063
      %v6088 = vadd.f32 %v5975, %v6065
      %v6089 = vadd.f32 %v5976, %v6068
      %v6090 = vadd.f32 %v5977, %v6070
      %v6091 = vadd.f32 %v5978, %v6073
      %v6092 = vadd.f32 %v5979, %v6075
      %v6093 = vadd.f32 %v5980, %v6078
      %v6094 = vld [vmem:[%s3773 + $0x10] sm:$0xff]
      %v6095 = vld [vmem:[%s3773 + $0x18] sm:$0xff]
      %v6096 = vld [vmem:[%s3773 + $0x20] sm:$0xff]
      %v6097 = vld [vmem:[%s3773 + $0x28] sm:$0xff]
      %v6098 = vld [vmem:[%s3773 + $0x30] sm:$0xff]
      %v6099 = vld [vmem:[%s3773 + $0x38] sm:$0xff]
      %v6100 = vld [vmem:[%s3773 + $0x40] sm:$0xff]
      %v6101 = vld [vmem:[%s3773 + $0x48] sm:$0xff]
      %v6102 = vld [vmem:[%s3773 + $0x50] sm:$0xff]
      %v6103 = vld [vmem:[%s3773 + $0x58] sm:$0xff]
      %v6104 = vld [vmem:[%s3773 + $0x60] sm:$0xff]
      %v6105 = vld [vmem:[%s3773 + $0x68] sm:$0xff]
      %v6106 = vld [vmem:[%s3773 + $0x70] sm:$0xf]
      %v6107 = vpack.c.bf16 %v6095, %v6094
      %v6108 = vpack.c.bf16 %v6097, %v6096
      %v6109 = vpack.c.bf16 %v6099, %v6098
      %v6110 = vpack.c.bf16 %v6101, %v6100
      %v6111 = vpack.c.bf16 %v6103, %v6102
      %v6112 = vpack.c.bf16 %v6105, %v6104
      %v6113 = vpack.c.bf16 %v6106, %v6106
      %v6114 = vld [vmem:[%s4951] sm:$0xf]
      %v6115 = vld [vmem:[%s4951 + $0x4] sm:$0xf]
      %v6116 = vld [vmem:[%s4951 + $0x8] sm:$0xf]
      %v6117 = vld [vmem:[%s4951 + $0xc] sm:$0xf]
      %v6122 = vunpack.c.l.b16 %v6114
      %v6123 = vunpack.c.l.b16 %v6115
      %v6124 = vunpack.c.l.b16 %v6116
      %v6125 = vunpack.c.l.b16 %v6117
      %v6126 = vpack.c.b16 %v6123, %v6122
      %v6127 = vpack.c.b16 %v6125, %v6124
      %v6131 = vsel %vm498, %v6107, 0
      %v6134 = vsel %vm498, %v6108, 0
      %v6137 = vsel %vm498, %v6109, 0
      %v6140 = vsel %vm498, %v6110, 0
      %v6143 = vsel %vm498, %v6111, 0
      %v6146 = vsel %vm498, %v6112, 0
      %v6149 = vsel %vm498, %v6113, 0
      %6151 = vmatpush.bf16.msra.mxu0 0
      %6152 = vmatpush.bf16.msra.mxu0 0
      %6153 = vmatpush.bf16.msra.mxu0 0
      %6154 = vmatpush.bf16.msra.mxu0 0
      %6155 = vmatpush.bf16.msra.mxu0 0
      %6156 = vmatpush.bf16.msra.mxu0 0
      %6157 = vmatpush.bf16.msra.mxu0 %v6127
      %6158 = vmatpush.bf16.msra.mxu0 %v6126
      %6159 = vmatmul.bf16.gmra.mxu0 %v6131
      %v6160 = vpop.f32.mrf.mxu0
      %v6161 = vadd.f32 0.0, %v6160
      %v6162 = vpop.f32.mrf.mxu0
      %v6163 = vadd.f32 0.0, %v6162
      %6164 = vmatmul.bf16.gmra.mxu0 %v6134
      %v6165 = vpop.f32.mrf.mxu0
      %v6166 = vadd.f32 0.0, %v6165
      %v6167 = vpop.f32.mrf.mxu0
      %v6168 = vadd.f32 0.0, %v6167
      %6169 = vmatmul.bf16.gmra.mxu0 %v6137
      %v6170 = vpop.f32.mrf.mxu0
      %v6171 = vadd.f32 0.0, %v6170
      %v6172 = vpop.f32.mrf.mxu0
      %v6173 = vadd.f32 0.0, %v6172
      %6174 = vmatmul.bf16.gmra.mxu0 %v6140
      %v6175 = vpop.f32.mrf.mxu0
      %v6176 = vadd.f32 0.0, %v6175
      %v6177 = vpop.f32.mrf.mxu0
      %v6178 = vadd.f32 0.0, %v6177
      %6179 = vmatmul.bf16.gmra.mxu0 %v6143
      %v6180 = vpop.f32.mrf.mxu0
      %v6181 = vadd.f32 0.0, %v6180
      %v6182 = vpop.f32.mrf.mxu0
      %v6183 = vadd.f32 0.0, %v6182
      %6184 = vmatmul.bf16.gmra.mxu0 %v6146
      %v6185 = vpop.f32.mrf.mxu0
      %v6186 = vadd.f32 0.0, %v6185
      %v6187 = vpop.f32.mrf.mxu0
      %v6188 = vadd.f32 0.0, %v6187
      %6189 = vmatmul.bf16.gmra.mxu0 %v6149
      %v6190 = vpop.f32.mrf.mxu0
      %v6191 = vadd.f32 0.0, %v6190
      %v6192 = vpop.f32.mrf.mxu0
      %6193 = vdwg.mxu0
      %v6194 = vadd.f32 %v6081, %v6161
      %v6195 = vadd.f32 %v6082, %v6163
      %v6196 = vadd.f32 %v6083, %v6166
      %v6197 = vadd.f32 %v6084, %v6168
      %v6198 = vadd.f32 %v6085, %v6171
      %v6199 = vadd.f32 %v6086, %v6173
      %v6200 = vadd.f32 %v6087, %v6176
      %v6201 = vadd.f32 %v6088, %v6178
      %v6202 = vadd.f32 %v6089, %v6181
      %v6203 = vadd.f32 %v6090, %v6183
      %v6204 = vadd.f32 %v6091, %v6186
      %v6205 = vadd.f32 %v6092, %v6188
      %v6206 = vadd.f32 %v6093, %v6191
      %v6207 = vld [vmem:[%s4260 + $0x10] sm:$0xff]
      %v6208 = vld [vmem:[%s4260 + $0x18] sm:$0xff]
      %v6209 = vld [vmem:[%s4260 + $0x20] sm:$0xff]
      %v6210 = vld [vmem:[%s4260 + $0x28] sm:$0xff]
      %v6211 = vld [vmem:[%s4260 + $0x30] sm:$0xff]
      %v6212 = vld [vmem:[%s4260 + $0x38] sm:$0xff]
      %v6213 = vld [vmem:[%s4260 + $0x40] sm:$0xff]
      %v6214 = vld [vmem:[%s4260 + $0x48] sm:$0xff]
      %v6215 = vld [vmem:[%s4260 + $0x50] sm:$0xff]
      %v6216 = vld [vmem:[%s4260 + $0x58] sm:$0xff]
      %v6217 = vld [vmem:[%s4260 + $0x60] sm:$0xff]
      %v6218 = vld [vmem:[%s4260 + $0x68] sm:$0xff]
      %v6219 = vld [vmem:[%s4260 + $0x70] sm:$0xf]
      %v6220 = vpack.c.bf16 %v6208, %v6207
      %v6221 = vpack.c.bf16 %v6210, %v6209
      %v6222 = vpack.c.bf16 %v6212, %v6211
      %v6223 = vpack.c.bf16 %v6214, %v6213
      %v6224 = vpack.c.bf16 %v6216, %v6215
      %v6225 = vpack.c.bf16 %v6218, %v6217
      %v6226 = vpack.c.bf16 %v6219, %v6219
      %v6227 = vld [vmem:[%s5065] sm:$0xf]
      %v6228 = vld [vmem:[%s5065 + $0x4] sm:$0xf]
      %v6229 = vld [vmem:[%s5065 + $0x8] sm:$0xf]
      %v6230 = vld [vmem:[%s5065 + $0xc] sm:$0xf]
      %v6235 = vunpack.c.l.b16 %v6227
      %v6236 = vunpack.c.l.b16 %v6228
      %v6237 = vunpack.c.l.b16 %v6229
      %v6238 = vunpack.c.l.b16 %v6230
      %v6239 = vpack.c.b16 %v6236, %v6235
      %v6240 = vpack.c.b16 %v6238, %v6237
      %v6244 = vsel %vm498, %v6220, 0
      %v6247 = vsel %vm498, %v6221, 0
      %v6250 = vsel %vm498, %v6222, 0
      %v6253 = vsel %vm498, %v6223, 0
      %v6256 = vsel %vm498, %v6224, 0
      %v6259 = vsel %vm498, %v6225, 0
      %v6262 = vsel %vm498, %v6226, 0
      %6264 = vmatpush.bf16.msra.mxu0 0
      %6265 = vmatpush.bf16.msra.mxu0 0
      %6266 = vmatpush.bf16.msra.mxu0 0
      %6267 = vmatpush.bf16.msra.mxu0 0
      %6268 = vmatpush.bf16.msra.mxu0 0
      %6269 = vmatpush.bf16.msra.mxu0 0
      %6270 = vmatpush.bf16.msra.mxu0 %v6240
      %6271 = vmatpush.bf16.msra.mxu0 %v6239
      %6272 = vmatmul.bf16.gmra.mxu0 %v6244
      %v6273 = vpop.f32.mrf.mxu0
      %v6274 = vadd.f32 0.0, %v6273
      %v6275 = vpop.f32.mrf.mxu0
      %v6276 = vadd.f32 0.0, %v6275
      %6277 = vmatmul.bf16.gmra.mxu0 %v6247
      %v6278 = vpop.f32.mrf.mxu0
      %v6279 = vadd.f32 0.0, %v6278
      %v6280 = vpop.f32.mrf.mxu0
      %v6281 = vadd.f32 0.0, %v6280
      %6282 = vmatmul.bf16.gmra.mxu0 %v6250
      %v6283 = vpop.f32.mrf.mxu0
      %v6284 = vadd.f32 0.0, %v6283
      %v6285 = vpop.f32.mrf.mxu0
      %v6286 = vadd.f32 0.0, %v6285
      %6287 = vmatmul.bf16.gmra.mxu0 %v6253
      %v6288 = vpop.f32.mrf.mxu0
      %v6289 = vadd.f32 0.0, %v6288
      %v6290 = vpop.f32.mrf.mxu0
      %v6291 = vadd.f32 0.0, %v6290
      %6292 = vmatmul.bf16.gmra.mxu0 %v6256
      %v6293 = vpop.f32.mrf.mxu0
      %v6294 = vadd.f32 0.0, %v6293
      %v6295 = vpop.f32.mrf.mxu0
      %v6296 = vadd.f32 0.0, %v6295
      %6297 = vmatmul.bf16.gmra.mxu0 %v6259
      %v6298 = vpop.f32.mrf.mxu0
      %v6299 = vadd.f32 0.0, %v6298
      %v6300 = vpop.f32.mrf.mxu0
      %v6301 = vadd.f32 0.0, %v6300
      %6302 = vmatmul.bf16.gmra.mxu0 %v6262
      %v6303 = vpop.f32.mrf.mxu0
      %v6304 = vadd.f32 0.0, %v6303
      %v6305 = vpop.f32.mrf.mxu0
      %6306 = vdwg.mxu0
      %v6307 = vadd.f32 %v6194, %v6274
      %v6308 = vadd.f32 %v6195, %v6276
      %v6309 = vadd.f32 %v6196, %v6279
      %v6310 = vadd.f32 %v6197, %v6281
      %v6311 = vadd.f32 %v6198, %v6284
      %v6312 = vadd.f32 %v6199, %v6286
      %v6313 = vadd.f32 %v6200, %v6289
      %v6314 = vadd.f32 %v6201, %v6291
      %v6315 = vadd.f32 %v6202, %v6294
      %v6316 = vadd.f32 %v6203, %v6296
      %v6317 = vadd.f32 %v6204, %v6299
      %v6318 = vadd.f32 %v6205, %v6301
      %v6319 = vadd.f32 %v6206, %v6304
      %v6320 = vld [vmem:[%s3773 + $0x11] sm:$0xff]
      %v6321 = vld [vmem:[%s3773 + $0x19] sm:$0xff]
      %v6322 = vld [vmem:[%s3773 + $0x21] sm:$0xff]
      %v6323 = vld [vmem:[%s3773 + $0x29] sm:$0xff]
      %v6324 = vld [vmem:[%s3773 + $0x31] sm:$0xff]
      %v6325 = vld [vmem:[%s3773 + $0x39] sm:$0xff]
      %v6326 = vld [vmem:[%s3773 + $0x41] sm:$0xff]
      %v6327 = vld [vmem:[%s3773 + $0x49] sm:$0xff]
      %v6328 = vld [vmem:[%s3773 + $0x51] sm:$0xff]
      %v6329 = vld [vmem:[%s3773 + $0x59] sm:$0xff]
      %v6330 = vld [vmem:[%s3773 + $0x61] sm:$0xff]
      %v6331 = vld [vmem:[%s3773 + $0x69] sm:$0xff]
      %v6332 = vld [vmem:[%s3773 + $0x71] sm:$0xf]
      %v6333 = vpack.c.bf16 %v6321, %v6320
      %v6334 = vpack.c.bf16 %v6323, %v6322
      %v6335 = vpack.c.bf16 %v6325, %v6324
      %v6336 = vpack.c.bf16 %v6327, %v6326
      %v6337 = vpack.c.bf16 %v6329, %v6328
      %v6338 = vpack.c.bf16 %v6331, %v6330
      %v6339 = vpack.c.bf16 %v6332, %v6332
      %v6340 = vld [vmem:[%s5179] sm:$0xf]
      %v6341 = vld [vmem:[%s5179 + $0x4] sm:$0xf]
      %v6342 = vld [vmem:[%s5179 + $0x8] sm:$0xf]
      %v6343 = vld [vmem:[%s5179 + $0xc] sm:$0xf]
      %v6348 = vunpack.c.l.b16 %v6340
      %v6349 = vunpack.c.l.b16 %v6341
      %v6350 = vunpack.c.l.b16 %v6342
      %v6351 = vunpack.c.l.b16 %v6343
      %v6352 = vpack.c.b16 %v6349, %v6348
      %v6353 = vpack.c.b16 %v6351, %v6350
      %v6357 = vsel %vm498, %v6333, 0
      %v6360 = vsel %vm498, %v6334, 0
      %v6363 = vsel %vm498, %v6335, 0
      %v6366 = vsel %vm498, %v6336, 0
      %v6369 = vsel %vm498, %v6337, 0
      %v6372 = vsel %vm498, %v6338, 0
      %v6375 = vsel %vm498, %v6339, 0
      %6377 = vmatpush.bf16.msra.mxu0 0
      %6378 = vmatpush.bf16.msra.mxu0 0
      %6379 = vmatpush.bf16.msra.mxu0 0
      %6380 = vmatpush.bf16.msra.mxu0 0
      %6381 = vmatpush.bf16.msra.mxu0 0
      %6382 = vmatpush.bf16.msra.mxu0 0
      %6383 = vmatpush.bf16.msra.mxu0 %v6353
      %6384 = vmatpush.bf16.msra.mxu0 %v6352
      %6385 = vmatmul.bf16.gmra.mxu0 %v6357
      %v6386 = vpop.f32.mrf.mxu0
      %v6387 = vadd.f32 0.0, %v6386
      %v6388 = vpop.f32.mrf.mxu0
      %v6389 = vadd.f32 0.0, %v6388
      %6390 = vmatmul.bf16.gmra.mxu0 %v6360
      %v6391 = vpop.f32.mrf.mxu0
      %v6392 = vadd.f32 0.0, %v6391
      %v6393 = vpop.f32.mrf.mxu0
      %v6394 = vadd.f32 0.0, %v6393
      %6395 = vmatmul.bf16.gmra.mxu0 %v6363
      %v6396 = vpop.f32.mrf.mxu0
      %v6397 = vadd.f32 0.0, %v6396
      %v6398 = vpop.f32.mrf.mxu0
      %v6399 = vadd.f32 0.0, %v6398
      %6400 = vmatmul.bf16.gmra.mxu0 %v6366
      %v6401 = vpop.f32.mrf.mxu0
      %v6402 = vadd.f32 0.0, %v6401
      %v6403 = vpop.f32.mrf.mxu0
      %v6404 = vadd.f32 0.0, %v6403
      %6405 = vmatmul.bf16.gmra.mxu0 %v6369
      %v6406 = vpop.f32.mrf.mxu0
      %v6407 = vadd.f32 0.0, %v6406
      %v6408 = vpop.f32.mrf.mxu0
      %v6409 = vadd.f32 0.0, %v6408
      %6410 = vmatmul.bf16.gmra.mxu0 %v6372
      %v6411 = vpop.f32.mrf.mxu0
      %v6412 = vadd.f32 0.0, %v6411
      %v6413 = vpop.f32.mrf.mxu0
      %v6414 = vadd.f32 0.0, %v6413
      %6415 = vmatmul.bf16.gmra.mxu0 %v6375
      %v6416 = vpop.f32.mrf.mxu0
      %v6417 = vadd.f32 0.0, %v6416
      %v6418 = vpop.f32.mrf.mxu0
      %6419 = vdwg.mxu0
      %v6420 = vadd.f32 %v6307, %v6387
      %v6421 = vadd.f32 %v6308, %v6389
      %v6422 = vadd.f32 %v6309, %v6392
      %v6423 = vadd.f32 %v6310, %v6394
      %v6424 = vadd.f32 %v6311, %v6397
      %v6425 = vadd.f32 %v6312, %v6399
      %v6426 = vadd.f32 %v6313, %v6402
      %v6427 = vadd.f32 %v6314, %v6404
      %v6428 = vadd.f32 %v6315, %v6407
      %v6429 = vadd.f32 %v6316, %v6409
      %v6430 = vadd.f32 %v6317, %v6412
      %v6431 = vadd.f32 %v6318, %v6414
      %v6432 = vadd.f32 %v6319, %v6417
      %v6433 = vld [vmem:[%s9] sm:$0x1]
      %v6435 = vperm.slane %v6433, 0
      %v6437 = vadd.f32 %v6420, %v6435
      %v6438 = vadd.f32 %v6421, %v6435
      %v6439 = vadd.f32 %v6422, %v6435
      %v6440 = vadd.f32 %v6423, %v6435
      %v6441 = vadd.f32 %v6424, %v6435
      %v6442 = vadd.f32 %v6425, %v6435
      %v6443 = vadd.f32 %v6426, %v6435
      %v6444 = vadd.f32 %v6427, %v6435
      %v6445 = vadd.f32 %v6428, %v6435
      %v6446 = vadd.f32 %v6429, %v6435
      %v6447 = vadd.f32 %v6430, %v6435
      %v6448 = vadd.f32 %v6431, %v6435
      %v6449 = vadd.f32 %v6432, %v6435
      %v6450 = vmax.f32 %v6437, 0.0
      %v6451 = vmax.f32 %v6438, 0.0
      %v6452 = vmax.f32 %v6439, 0.0
      %v6453 = vmax.f32 %v6440, 0.0
      %v6454 = vmax.f32 %v6441, 0.0
      %v6455 = vmax.f32 %v6442, 0.0
      %v6456 = vmax.f32 %v6443, 0.0
      %v6457 = vmax.f32 %v6444, 0.0
      %v6458 = vmax.f32 %v6445, 0.0
      %v6459 = vmax.f32 %v6446, 0.0
      %v6460 = vmax.f32 %v6447, 0.0
      %v6461 = vmax.f32 %v6448, 0.0
      %v6462 = vmax.f32 %v6449, 0.0
      %v6463 = vpack.c.bf16 %v6451, %v6450
      %v6464 = vpack.c.bf16 %v6453, %v6452
      %v6465 = vpack.c.bf16 %v6455, %v6454
      %v6466 = vpack.c.bf16 %v6457, %v6456
      %v6467 = vpack.c.bf16 %v6459, %v6458
      %v6468 = vpack.c.bf16 %v6461, %v6460
      %v6469 = vpack.c.bf16 %v6462, %v6462
      %v6470 = vld [vmem:[%s10] sm:$0xf]
      %v6471 = vld [vmem:[%s10 + $0x4] sm:$0xf]
      %v6472 = vld [vmem:[%s10 + $0x8] sm:$0xf]
      %v6473 = vld [vmem:[%s10 + $0xc] sm:$0xf]
      %v6474 = vld [vmem:[%s10 + $0x10] sm:$0xf]
      %v6475 = vld [vmem:[%s10 + $0x14] sm:$0xf]
      %v6476 = vld [vmem:[%s10 + $0x18] sm:$0xf]
      %v6477 = vld [vmem:[%s10 + $0x1c] sm:$0xf]
      %v6478 = vld [vmem:[%s10 + $0x20] sm:$0xf]
      %v6479 = vld [vmem:[%s10 + $0x24] sm:$0xf]
      %v6480 = vld [vmem:[%s10 + $0x28] sm:$0xf]
      %v6481 = vld [vmem:[%s10 + $0x2c] sm:$0xf]
      %v6482 = vld [vmem:[%s11] sm:$0x1]
      %v6484 = vperm.slane %v6482, 0
      %v6498 = vunpack.c.l.b16 %v6470
      %v6499 = vunpack.c.l.b16 %v6471
      %v6500 = vunpack.c.l.b16 %v6472
      %v6501 = vunpack.c.l.b16 %v6473
      %v6502 = vunpack.c.l.b16 %v6474
      %v6503 = vunpack.c.l.b16 %v6475
      %v6504 = vunpack.c.l.b16 %v6476
      %v6505 = vunpack.c.l.b16 %v6477
      %v6506 = vunpack.c.l.b16 %v6478
      %v6507 = vunpack.c.l.b16 %v6479
      %v6508 = vunpack.c.l.b16 %v6480
      %v6509 = vunpack.c.l.b16 %v6481
      %v6510 = vpack.c.b16 %v6499, %v6498
      %v6511 = vpack.c.b16 %v6501, %v6500
      %v6512 = vpack.c.b16 %v6503, %v6502
      %v6513 = vpack.c.b16 %v6505, %v6504
      %v6514 = vpack.c.b16 %v6507, %v6506
      %v6515 = vpack.c.b16 %v6509, %v6508
      %v6523 = vsel %vm5362, %v6463, 0
      %v6526 = vsel %vm5362, %v6464, 0
      %v6529 = vsel %vm5362, %v6465, 0
      %v6532 = vsel %vm5362, %v6466, 0
      %v6535 = vsel %vm5362, %v6467, 0
      %v6538 = vsel %vm5362, %v6468, 0
      %v6541 = vsel %vm5362, %v6469, 0
      %6543 = vmatpush.bf16.msra.mxu0 0
      %6544 = vmatpush.bf16.msra.mxu0 0
      %6545 = vmatpush.bf16.msra.mxu0 %v6515
      %6546 = vmatpush.bf16.msra.mxu0 %v6514
      %6547 = vmatpush.bf16.msra.mxu0 %v6513
      %6548 = vmatpush.bf16.msra.mxu0 %v6512
      %6549 = vmatpush.bf16.msra.mxu0 %v6511
      %6550 = vmatpush.bf16.msra.mxu0 %v6510
      %6551 = vmatmul.bf16.gmra.mxu0 %v6523
      %v6552 = vpop.f32.mrf.mxu0
      %v6553 = vadd.f32 %v6484, %v6552
      %v6554 = vpop.f32.mrf.mxu0
      %v6555 = vadd.f32 %v6484, %v6554
      %6556 = vmatmul.bf16.gmra.mxu0 %v6526
      %v6557 = vpop.f32.mrf.mxu0
      %v6558 = vadd.f32 %v6484, %v6557
      %v6559 = vpop.f32.mrf.mxu0
      %v6560 = vadd.f32 %v6484, %v6559
      %6561 = vmatmul.bf16.gmra.mxu0 %v6529
      %v6562 = vpop.f32.mrf.mxu0
      %v6563 = vadd.f32 %v6484, %v6562
      %v6564 = vpop.f32.mrf.mxu0
      %v6565 = vadd.f32 %v6484, %v6564
      %6566 = vmatmul.bf16.gmra.mxu0 %v6532
      %v6567 = vpop.f32.mrf.mxu0
      %v6568 = vadd.f32 %v6484, %v6567
      %v6569 = vpop.f32.mrf.mxu0
      %v6570 = vadd.f32 %v6484, %v6569
      %6571 = vmatmul.bf16.gmra.mxu0 %v6535
      %v6572 = vpop.f32.mrf.mxu0
      %v6573 = vadd.f32 %v6484, %v6572
      %v6574 = vpop.f32.mrf.mxu0
      %v6575 = vadd.f32 %v6484, %v6574
      %6576 = vmatmul.bf16.gmra.mxu0 %v6538
      %v6577 = vpop.f32.mrf.mxu0
      %v6578 = vadd.f32 %v6484, %v6577
      %v6579 = vpop.f32.mrf.mxu0
      %v6580 = vadd.f32 %v6484, %v6579
      %6581 = vmatmul.bf16.gmra.mxu0 %v6541
      %v6582 = vpop.f32.mrf.mxu0
      %v6583 = vadd.f32 %v6484, %v6582
      %v6584 = vpop.f32.mrf.mxu0
      %6585 = vdwg.mxu0
      %s6586 = scalar_lea.vmem %s413, 104
      %6587 = vst.msk [vmem:[%s6586] sm:$0xff] %vm5427, %v6553
      %6588 = vst.msk [vmem:[%s6586 + $0x8] sm:$0xff] %vm5427, %v6555
      %6589 = vst.msk [vmem:[%s6586 + $0x10] sm:$0xff] %vm5427, %v6558
      %6590 = vst.msk [vmem:[%s6586 + $0x18] sm:$0xff] %vm5427, %v6560
      %6591 = vst.msk [vmem:[%s6586 + $0x20] sm:$0xff] %vm5427, %v6563
      %6592 = vst.msk [vmem:[%s6586 + $0x28] sm:$0xff] %vm5427, %v6565
      %6593 = vst.msk [vmem:[%s6586 + $0x30] sm:$0xff] %vm5427, %v6568
      %6594 = vst.msk [vmem:[%s6586 + $0x38] sm:$0xff] %vm5427, %v6570
      %6595 = vst.msk [vmem:[%s6586 + $0x40] sm:$0xff] %vm5427, %v6573
      %6596 = vst.msk [vmem:[%s6586 + $0x48] sm:$0xff] %vm5427, %v6575
      %6597 = vst.msk [vmem:[%s6586 + $0x50] sm:$0xff] %vm5427, %v6578
      %6598 = vst.msk [vmem:[%s6586 + $0x58] sm:$0xff] %vm5427, %v6580
      %6599 = vst.msk [vmem:[%s6586 + $0x60] sm:$0xf] %vm5440, %v6583
      %v6600 = vld [vmem:[%s3286 + $0xf] sm:$0xff]
      %v6601 = vld [vmem:[%s3286 + $0x17] sm:$0xff]
      %v6602 = vld [vmem:[%s3286 + $0x1f] sm:$0xff]
      %v6603 = vld [vmem:[%s3286 + $0x27] sm:$0xff]
      %v6604 = vld [vmem:[%s3286 + $0x2f] sm:$0xff]
      %v6605 = vld [vmem:[%s3286 + $0x37] sm:$0xff]
      %v6606 = vld [vmem:[%s3286 + $0x3f] sm:$0xff]
      %v6607 = vld [vmem:[%s3286 + $0x47] sm:$0xff]
      %v6608 = vld [vmem:[%s3286 + $0x4f] sm:$0xff]
      %v6609 = vld [vmem:[%s3286 + $0x57] sm:$0xff]
      %v6610 = vld [vmem:[%s3286 + $0x5f] sm:$0xff]
      %v6611 = vld [vmem:[%s3286 + $0x67] sm:$0xff]
      %v6612 = vld [vmem:[%s3286 + $0x6f] sm:$0xf]
      %v6613 = vpack.c.bf16 %v6601, %v6600
      %v6614 = vpack.c.bf16 %v6603, %v6602
      %v6615 = vpack.c.bf16 %v6605, %v6604
      %v6616 = vpack.c.bf16 %v6607, %v6606
      %v6617 = vpack.c.bf16 %v6609, %v6608
      %v6618 = vpack.c.bf16 %v6611, %v6610
      %v6619 = vpack.c.bf16 %v6612, %v6612
      %v6620 = vld [vmem:[%s8] sm:$0xf]
      %v6621 = vld [vmem:[%s8 + $0x4] sm:$0xf]
      %v6622 = vld [vmem:[%s8 + $0x8] sm:$0xf]
      %v6623 = vld [vmem:[%s8 + $0xc] sm:$0xf]
      %v6624 = vld [vmem:[#allocation4 + $0x10] sm:$0xff]
      %v6625 = vld [vmem:[#allocation4 + $0x18] sm:$0xff]
      %v6626 = vld [vmem:[#allocation4 + $0x20] sm:$0xff]
      %v6627 = vld [vmem:[#allocation4 + $0x28] sm:$0xff]
      %v6628 = vld [vmem:[#allocation4 + $0x30] sm:$0xff]
      %v6629 = vld [vmem:[#allocation4 + $0x38] sm:$0xff]
      %v6630 = vld [vmem:[#allocation4 + $0x40] sm:$0xff]
      %v6631 = vld [vmem:[#allocation4 + $0x48] sm:$0xff]
      %v6632 = vld [vmem:[#allocation4 + $0x50] sm:$0xff]
      %v6633 = vld [vmem:[#allocation4 + $0x58] sm:$0xff]
      %v6634 = vld [vmem:[#allocation4 + $0x60] sm:$0xff]
      %v6635 = vld [vmem:[#allocation4 + $0x68] sm:$0xff]
      %v6636 = vld [vmem:[#allocation4 + $0x70] sm:$0xf]
      %v6637 = vpack.c.bf16 %v6625, %v6624
      %v6638 = vpack.c.bf16 %v6627, %v6626
      %v6639 = vpack.c.bf16 %v6629, %v6628
      %v6640 = vpack.c.bf16 %v6631, %v6630
      %v6641 = vpack.c.bf16 %v6633, %v6632
      %v6642 = vpack.c.bf16 %v6635, %v6634
      %v6643 = vpack.c.bf16 %v6636, %v6636
      %v6644 = vld [vmem:[%s4318] sm:$0xf]
      %v6645 = vld [vmem:[%s4318 + $0x4] sm:$0xf]
      %v6646 = vld [vmem:[%s4318 + $0x8] sm:$0xf]
      %v6647 = vld [vmem:[%s4318 + $0xc] sm:$0xf]
      %v6652 = vunpack.c.l.b16 %v6644
      %v6653 = vunpack.c.l.b16 %v6645
      %v6654 = vunpack.c.l.b16 %v6646
      %v6655 = vunpack.c.l.b16 %v6647
      %v6656 = vpack.c.b16 %v6653, %v6652
      %v6657 = vpack.c.b16 %v6655, %v6654
      %v6661 = vsel %vm498, %v6637, 0
      %v6664 = vsel %vm498, %v6638, 0
      %v6667 = vsel %vm498, %v6639, 0
      %v6670 = vsel %vm498, %v6640, 0
      %v6673 = vsel %vm498, %v6641, 0
      %v6676 = vsel %vm498, %v6642, 0
      %v6679 = vsel %vm498, %v6643, 0
      %6681 = vmatpush.bf16.msra.mxu0 0
      %6682 = vmatpush.bf16.msra.mxu0 0
      %6683 = vmatpush.bf16.msra.mxu0 0
      %6684 = vmatpush.bf16.msra.mxu0 0
      %6685 = vmatpush.bf16.msra.mxu0 0
      %6686 = vmatpush.bf16.msra.mxu0 0
      %6687 = vmatpush.bf16.msra.mxu0 %v6657
      %6688 = vmatpush.bf16.msra.mxu0 %v6656
      %6689 = vmatmul.bf16.gmra.mxu0 %v6661
      %v6690 = vpop.f32.mrf.mxu0
      %v6691 = vadd.f32 0.0, %v6690
      %v6692 = vpop.f32.mrf.mxu0
      %v6693 = vadd.f32 0.0, %v6692
      %6694 = vmatmul.bf16.gmra.mxu0 %v6664
      %v6695 = vpop.f32.mrf.mxu0
      %v6696 = vadd.f32 0.0, %v6695
      %v6697 = vpop.f32.mrf.mxu0
      %v6698 = vadd.f32 0.0, %v6697
      %6699 = vmatmul.bf16.gmra.mxu0 %v6667
      %v6700 = vpop.f32.mrf.mxu0
      %v6701 = vadd.f32 0.0, %v6700
      %v6702 = vpop.f32.mrf.mxu0
      %v6703 = vadd.f32 0.0, %v6702
      %6704 = vmatmul.bf16.gmra.mxu0 %v6670
      %v6705 = vpop.f32.mrf.mxu0
      %v6706 = vadd.f32 0.0, %v6705
      %v6707 = vpop.f32.mrf.mxu0
      %v6708 = vadd.f32 0.0, %v6707
      %6709 = vmatmul.bf16.gmra.mxu0 %v6673
      %v6710 = vpop.f32.mrf.mxu0
      %v6711 = vadd.f32 0.0, %v6710
      %v6712 = vpop.f32.mrf.mxu0
      %v6713 = vadd.f32 0.0, %v6712
      %6714 = vmatmul.bf16.gmra.mxu0 %v6676
      %v6715 = vpop.f32.mrf.mxu0
      %v6716 = vadd.f32 0.0, %v6715
      %v6717 = vpop.f32.mrf.mxu0
      %v6718 = vadd.f32 0.0, %v6717
      %6719 = vmatmul.bf16.gmra.mxu0 %v6679
      %v6720 = vpop.f32.mrf.mxu0
      %v6721 = vadd.f32 0.0, %v6720
      %v6722 = vpop.f32.mrf.mxu0
      %6723 = vdwg.mxu0
      %v6728 = vunpack.c.l.b16 %v6620
      %v6729 = vunpack.c.l.b16 %v6621
      %v6730 = vunpack.c.l.b16 %v6622
      %v6731 = vunpack.c.l.b16 %v6623
      %v6732 = vpack.c.b16 %v6729, %v6728
      %v6733 = vpack.c.b16 %v6731, %v6730
      %v6737 = vsel %vm498, %v6613, 0
      %v6740 = vsel %vm498, %v6614, 0
      %v6743 = vsel %vm498, %v6615, 0
      %v6746 = vsel %vm498, %v6616, 0
      %v6749 = vsel %vm498, %v6617, 0
      %v6752 = vsel %vm498, %v6618, 0
      %v6755 = vsel %vm498, %v6619, 0
      %6757 = vmatpush.bf16.msra.mxu0 0
      %6758 = vmatpush.bf16.msra.mxu0 0
      %6759 = vmatpush.bf16.msra.mxu0 0
      %6760 = vmatpush.bf16.msra.mxu0 0
      %6761 = vmatpush.bf16.msra.mxu0 0
      %6762 = vmatpush.bf16.msra.mxu0 0
      %6763 = vmatpush.bf16.msra.mxu0 %v6733
      %6764 = vmatpush.bf16.msra.mxu0 %v6732
      %6765 = vmatmul.bf16.gmra.mxu0 %v6737
      %v6766 = vpop.f32.mrf.mxu0
      %v6767 = vadd.f32 %v6691, %v6766
      %v6768 = vpop.f32.mrf.mxu0
      %v6769 = vadd.f32 %v6693, %v6768
      %6770 = vmatmul.bf16.gmra.mxu0 %v6740
      %v6771 = vpop.f32.mrf.mxu0
      %v6772 = vadd.f32 %v6696, %v6771
      %v6773 = vpop.f32.mrf.mxu0
      %v6774 = vadd.f32 %v6698, %v6773
      %6775 = vmatmul.bf16.gmra.mxu0 %v6743
      %v6776 = vpop.f32.mrf.mxu0
      %v6777 = vadd.f32 %v6701, %v6776
      %v6778 = vpop.f32.mrf.mxu0
      %v6779 = vadd.f32 %v6703, %v6778
      %6780 = vmatmul.bf16.gmra.mxu0 %v6746
      %v6781 = vpop.f32.mrf.mxu0
      %v6782 = vadd.f32 %v6706, %v6781
      %v6783 = vpop.f32.mrf.mxu0
      %v6784 = vadd.f32 %v6708, %v6783
      %6785 = vmatmul.bf16.gmra.mxu0 %v6749
      %v6786 = vpop.f32.mrf.mxu0
      %v6787 = vadd.f32 %v6711, %v6786
      %v6788 = vpop.f32.mrf.mxu0
      %v6789 = vadd.f32 %v6713, %v6788
      %6790 = vmatmul.bf16.gmra.mxu0 %v6752
      %v6791 = vpop.f32.mrf.mxu0
      %v6792 = vadd.f32 %v6716, %v6791
      %v6793 = vpop.f32.mrf.mxu0
      %v6794 = vadd.f32 %v6718, %v6793
      %6795 = vmatmul.bf16.gmra.mxu0 %v6755
      %v6796 = vpop.f32.mrf.mxu0
      %v6797 = vadd.f32 %v6721, %v6796
      %v6798 = vpop.f32.mrf.mxu0
      %6799 = vdwg.mxu0
      %v6800 = vld [vmem:[%s3286 + $0x10] sm:$0xff]
      %v6801 = vld [vmem:[%s3286 + $0x18] sm:$0xff]
      %v6802 = vld [vmem:[%s3286 + $0x20] sm:$0xff]
      %v6803 = vld [vmem:[%s3286 + $0x28] sm:$0xff]
      %v6804 = vld [vmem:[%s3286 + $0x30] sm:$0xff]
      %v6805 = vld [vmem:[%s3286 + $0x38] sm:$0xff]
      %v6806 = vld [vmem:[%s3286 + $0x40] sm:$0xff]
      %v6807 = vld [vmem:[%s3286 + $0x48] sm:$0xff]
      %v6808 = vld [vmem:[%s3286 + $0x50] sm:$0xff]
      %v6809 = vld [vmem:[%s3286 + $0x58] sm:$0xff]
      %v6810 = vld [vmem:[%s3286 + $0x60] sm:$0xff]
      %v6811 = vld [vmem:[%s3286 + $0x68] sm:$0xff]
      %v6812 = vld [vmem:[%s3286 + $0x70] sm:$0xf]
      %v6813 = vpack.c.bf16 %v6801, %v6800
      %v6814 = vpack.c.bf16 %v6803, %v6802
      %v6815 = vpack.c.bf16 %v6805, %v6804
      %v6816 = vpack.c.bf16 %v6807, %v6806
      %v6817 = vpack.c.bf16 %v6809, %v6808
      %v6818 = vpack.c.bf16 %v6811, %v6810
      %v6819 = vpack.c.bf16 %v6812, %v6812
      %v6820 = vld [vmem:[%s4495] sm:$0xf]
      %v6821 = vld [vmem:[%s4495 + $0x4] sm:$0xf]
      %v6822 = vld [vmem:[%s4495 + $0x8] sm:$0xf]
      %v6823 = vld [vmem:[%s4495 + $0xc] sm:$0xf]
      %v6828 = vunpack.c.l.b16 %v6820
      %v6829 = vunpack.c.l.b16 %v6821
      %v6830 = vunpack.c.l.b16 %v6822
      %v6831 = vunpack.c.l.b16 %v6823
      %v6832 = vpack.c.b16 %v6829, %v6828
      %v6833 = vpack.c.b16 %v6831, %v6830
      %v6837 = vsel %vm498, %v6813, 0
      %v6840 = vsel %vm498, %v6814, 0
      %v6843 = vsel %vm498, %v6815, 0
      %v6846 = vsel %vm498, %v6816, 0
      %v6849 = vsel %vm498, %v6817, 0
      %v6852 = vsel %vm498, %v6818, 0
      %v6855 = vsel %vm498, %v6819, 0
      %6857 = vmatpush.bf16.msra.mxu0 0
      %6858 = vmatpush.bf16.msra.mxu0 0
      %6859 = vmatpush.bf16.msra.mxu0 0
      %6860 = vmatpush.bf16.msra.mxu0 0
      %6861 = vmatpush.bf16.msra.mxu0 0
      %6862 = vmatpush.bf16.msra.mxu0 0
      %6863 = vmatpush.bf16.msra.mxu0 %v6833
      %6864 = vmatpush.bf16.msra.mxu0 %v6832
      %6865 = vmatmul.bf16.gmra.mxu0 %v6837
      %v6866 = vpop.f32.mrf.mxu0
      %v6867 = vadd.f32 0.0, %v6866
      %v6868 = vpop.f32.mrf.mxu0
      %v6869 = vadd.f32 0.0, %v6868
      %6870 = vmatmul.bf16.gmra.mxu0 %v6840
      %v6871 = vpop.f32.mrf.mxu0
      %v6872 = vadd.f32 0.0, %v6871
      %v6873 = vpop.f32.mrf.mxu0
      %v6874 = vadd.f32 0.0, %v6873
      %6875 = vmatmul.bf16.gmra.mxu0 %v6843
      %v6876 = vpop.f32.mrf.mxu0
      %v6877 = vadd.f32 0.0, %v6876
      %v6878 = vpop.f32.mrf.mxu0
      %v6879 = vadd.f32 0.0, %v6878
      %6880 = vmatmul.bf16.gmra.mxu0 %v6846
      %v6881 = vpop.f32.mrf.mxu0
      %v6882 = vadd.f32 0.0, %v6881
      %v6883 = vpop.f32.mrf.mxu0
      %v6884 = vadd.f32 0.0, %v6883
      %6885 = vmatmul.bf16.gmra.mxu0 %v6849
      %v6886 = vpop.f32.mrf.mxu0
      %v6887 = vadd.f32 0.0, %v6886
      %v6888 = vpop.f32.mrf.mxu0
      %v6889 = vadd.f32 0.0, %v6888
      %6890 = vmatmul.bf16.gmra.mxu0 %v6852
      %v6891 = vpop.f32.mrf.mxu0
      %v6892 = vadd.f32 0.0, %v6891
      %v6893 = vpop.f32.mrf.mxu0
      %v6894 = vadd.f32 0.0, %v6893
      %6895 = vmatmul.bf16.gmra.mxu0 %v6855
      %v6896 = vpop.f32.mrf.mxu0
      %v6897 = vadd.f32 0.0, %v6896
      %v6898 = vpop.f32.mrf.mxu0
      %6899 = vdwg.mxu0
      %v6900 = vadd.f32 %v6767, %v6867
      %v6901 = vadd.f32 %v6769, %v6869
      %v6902 = vadd.f32 %v6772, %v6872
      %v6903 = vadd.f32 %v6774, %v6874
      %v6904 = vadd.f32 %v6777, %v6877
      %v6905 = vadd.f32 %v6779, %v6879
      %v6906 = vadd.f32 %v6782, %v6882
      %v6907 = vadd.f32 %v6784, %v6884
      %v6908 = vadd.f32 %v6787, %v6887
      %v6909 = vadd.f32 %v6789, %v6889
      %v6910 = vadd.f32 %v6792, %v6892
      %v6911 = vadd.f32 %v6794, %v6894
      %v6912 = vadd.f32 %v6797, %v6897
      %v6913 = vld [vmem:[%s4260 + $0xf] sm:$0xff]
      %v6914 = vld [vmem:[%s4260 + $0x17] sm:$0xff]
      %v6915 = vld [vmem:[%s4260 + $0x1f] sm:$0xff]
      %v6916 = vld [vmem:[%s4260 + $0x27] sm:$0xff]
      %v6917 = vld [vmem:[%s4260 + $0x2f] sm:$0xff]
      %v6918 = vld [vmem:[%s4260 + $0x37] sm:$0xff]
      %v6919 = vld [vmem:[%s4260 + $0x3f] sm:$0xff]
      %v6920 = vld [vmem:[%s4260 + $0x47] sm:$0xff]
      %v6921 = vld [vmem:[%s4260 + $0x4f] sm:$0xff]
      %v6922 = vld [vmem:[%s4260 + $0x57] sm:$0xff]
      %v6923 = vld [vmem:[%s4260 + $0x5f] sm:$0xff]
      %v6924 = vld [vmem:[%s4260 + $0x67] sm:$0xff]
      %v6925 = vld [vmem:[%s4260 + $0x6f] sm:$0xf]
      %v6926 = vpack.c.bf16 %v6914, %v6913
      %v6927 = vpack.c.bf16 %v6916, %v6915
      %v6928 = vpack.c.bf16 %v6918, %v6917
      %v6929 = vpack.c.bf16 %v6920, %v6919
      %v6930 = vpack.c.bf16 %v6922, %v6921
      %v6931 = vpack.c.bf16 %v6924, %v6923
      %v6932 = vpack.c.bf16 %v6925, %v6925
      %v6933 = vld [vmem:[%s4609] sm:$0xf]
      %v6934 = vld [vmem:[%s4609 + $0x4] sm:$0xf]
      %v6935 = vld [vmem:[%s4609 + $0x8] sm:$0xf]
      %v6936 = vld [vmem:[%s4609 + $0xc] sm:$0xf]
      %v6941 = vunpack.c.l.b16 %v6933
      %v6942 = vunpack.c.l.b16 %v6934
      %v6943 = vunpack.c.l.b16 %v6935
      %v6944 = vunpack.c.l.b16 %v6936
      %v6945 = vpack.c.b16 %v6942, %v6941
      %v6946 = vpack.c.b16 %v6944, %v6943
      %v6950 = vsel %vm498, %v6926, 0
      %v6953 = vsel %vm498, %v6927, 0
      %v6956 = vsel %vm498, %v6928, 0
      %v6959 = vsel %vm498, %v6929, 0
      %v6962 = vsel %vm498, %v6930, 0
      %v6965 = vsel %vm498, %v6931, 0
      %v6968 = vsel %vm498, %v6932, 0
      %6970 = vmatpush.bf16.msra.mxu0 0
      %6971 = vmatpush.bf16.msra.mxu0 0
      %6972 = vmatpush.bf16.msra.mxu0 0
      %6973 = vmatpush.bf16.msra.mxu0 0
      %6974 = vmatpush.bf16.msra.mxu0 0
      %6975 = vmatpush.bf16.msra.mxu0 0
      %6976 = vmatpush.bf16.msra.mxu0 %v6946
      %6977 = vmatpush.bf16.msra.mxu0 %v6945
      %6978 = vmatmul.bf16.gmra.mxu0 %v6950
      %v6979 = vpop.f32.mrf.mxu0
      %v6980 = vadd.f32 0.0, %v6979
      %v6981 = vpop.f32.mrf.mxu0
      %v6982 = vadd.f32 0.0, %v6981
      %6983 = vmatmul.bf16.gmra.mxu0 %v6953
      %v6984 = vpop.f32.mrf.mxu0
      %v6985 = vadd.f32 0.0, %v6984
      %v6986 = vpop.f32.mrf.mxu0
      %v6987 = vadd.f32 0.0, %v6986
      %6988 = vmatmul.bf16.gmra.mxu0 %v6956
      %v6989 = vpop.f32.mrf.mxu0
      %v6990 = vadd.f32 0.0, %v6989
      %v6991 = vpop.f32.mrf.mxu0
      %v6992 = vadd.f32 0.0, %v6991
      %6993 = vmatmul.bf16.gmra.mxu0 %v6959
      %v6994 = vpop.f32.mrf.mxu0
      %v6995 = vadd.f32 0.0, %v6994
      %v6996 = vpop.f32.mrf.mxu0
      %v6997 = vadd.f32 0.0, %v6996
      %6998 = vmatmul.bf16.gmra.mxu0 %v6962
      %v6999 = vpop.f32.mrf.mxu0
      %v7000 = vadd.f32 0.0, %v6999
      %v7001 = vpop.f32.mrf.mxu0
      %v7002 = vadd.f32 0.0, %v7001
      %7003 = vmatmul.bf16.gmra.mxu0 %v6965
      %v7004 = vpop.f32.mrf.mxu0
      %v7005 = vadd.f32 0.0, %v7004
      %v7006 = vpop.f32.mrf.mxu0
      %v7007 = vadd.f32 0.0, %v7006
      %7008 = vmatmul.bf16.gmra.mxu0 %v6968
      %v7009 = vpop.f32.mrf.mxu0
      %v7010 = vadd.f32 0.0, %v7009
      %v7011 = vpop.f32.mrf.mxu0
      %7012 = vdwg.mxu0
      %v7013 = vadd.f32 %v6900, %v6980
      %v7014 = vadd.f32 %v6901, %v6982
      %v7015 = vadd.f32 %v6902, %v6985
      %v7016 = vadd.f32 %v6903, %v6987
      %v7017 = vadd.f32 %v6904, %v6990
      %v7018 = vadd.f32 %v6905, %v6992
      %v7019 = vadd.f32 %v6906, %v6995
      %v7020 = vadd.f32 %v6907, %v6997
      %v7021 = vadd.f32 %v6908, %v7000
      %v7022 = vadd.f32 %v6909, %v7002
      %v7023 = vadd.f32 %v6910, %v7005
      %v7024 = vadd.f32 %v6911, %v7007
      %v7025 = vadd.f32 %v6912, %v7010
      %v7026 = vld [vmem:[%s3773 + $0x10] sm:$0xff]
      %v7027 = vld [vmem:[%s3773 + $0x18] sm:$0xff]
      %v7028 = vld [vmem:[%s3773 + $0x20] sm:$0xff]
      %v7029 = vld [vmem:[%s3773 + $0x28] sm:$0xff]
      %v7030 = vld [vmem:[%s3773 + $0x30] sm:$0xff]
      %v7031 = vld [vmem:[%s3773 + $0x38] sm:$0xff]
      %v7032 = vld [vmem:[%s3773 + $0x40] sm:$0xff]
      %v7033 = vld [vmem:[%s3773 + $0x48] sm:$0xff]
      %v7034 = vld [vmem:[%s3773 + $0x50] sm:$0xff]
      %v7035 = vld [vmem:[%s3773 + $0x58] sm:$0xff]
      %v7036 = vld [vmem:[%s3773 + $0x60] sm:$0xff]
      %v7037 = vld [vmem:[%s3773 + $0x68] sm:$0xff]
      %v7038 = vld [vmem:[%s3773 + $0x70] sm:$0xf]
      %v7039 = vpack.c.bf16 %v7027, %v7026
      %v7040 = vpack.c.bf16 %v7029, %v7028
      %v7041 = vpack.c.bf16 %v7031, %v7030
      %v7042 = vpack.c.bf16 %v7033, %v7032
      %v7043 = vpack.c.bf16 %v7035, %v7034
      %v7044 = vpack.c.bf16 %v7037, %v7036
      %v7045 = vpack.c.bf16 %v7038, %v7038
      %v7046 = vld [vmem:[%s4723] sm:$0xf]
      %v7047 = vld [vmem:[%s4723 + $0x4] sm:$0xf]
      %v7048 = vld [vmem:[%s4723 + $0x8] sm:$0xf]
      %v7049 = vld [vmem:[%s4723 + $0xc] sm:$0xf]
      %v7054 = vunpack.c.l.b16 %v7046
      %v7055 = vunpack.c.l.b16 %v7047
      %v7056 = vunpack.c.l.b16 %v7048
      %v7057 = vunpack.c.l.b16 %v7049
      %v7058 = vpack.c.b16 %v7055, %v7054
      %v7059 = vpack.c.b16 %v7057, %v7056
      %v7063 = vsel %vm498, %v7039, 0
      %v7066 = vsel %vm498, %v7040, 0
      %v7069 = vsel %vm498, %v7041, 0
      %v7072 = vsel %vm498, %v7042, 0
      %v7075 = vsel %vm498, %v7043, 0
      %v7078 = vsel %vm498, %v7044, 0
      %v7081 = vsel %vm498, %v7045, 0
      %7083 = vmatpush.bf16.msra.mxu0 0
      %7084 = vmatpush.bf16.msra.mxu0 0
      %7085 = vmatpush.bf16.msra.mxu0 0
      %7086 = vmatpush.bf16.msra.mxu0 0
      %7087 = vmatpush.bf16.msra.mxu0 0
      %7088 = vmatpush.bf16.msra.mxu0 0
      %7089 = vmatpush.bf16.msra.mxu0 %v7059
      %7090 = vmatpush.bf16.msra.mxu0 %v7058
      %7091 = vmatmul.bf16.gmra.mxu0 %v7063
      %v7092 = vpop.f32.mrf.mxu0
      %v7093 = vadd.f32 0.0, %v7092
      %v7094 = vpop.f32.mrf.mxu0
      %v7095 = vadd.f32 0.0, %v7094
      %7096 = vmatmul.bf16.gmra.mxu0 %v7066
      %v7097 = vpop.f32.mrf.mxu0
      %v7098 = vadd.f32 0.0, %v7097
      %v7099 = vpop.f32.mrf.mxu0
      %v7100 = vadd.f32 0.0, %v7099
      %7101 = vmatmul.bf16.gmra.mxu0 %v7069
      %v7102 = vpop.f32.mrf.mxu0
      %v7103 = vadd.f32 0.0, %v7102
      %v7104 = vpop.f32.mrf.mxu0
      %v7105 = vadd.f32 0.0, %v7104
      %7106 = vmatmul.bf16.gmra.mxu0 %v7072
      %v7107 = vpop.f32.mrf.mxu0
      %v7108 = vadd.f32 0.0, %v7107
      %v7109 = vpop.f32.mrf.mxu0
      %v7110 = vadd.f32 0.0, %v7109
      %7111 = vmatmul.bf16.gmra.mxu0 %v7075
      %v7112 = vpop.f32.mrf.mxu0
      %v7113 = vadd.f32 0.0, %v7112
      %v7114 = vpop.f32.mrf.mxu0
      %v7115 = vadd.f32 0.0, %v7114
      %7116 = vmatmul.bf16.gmra.mxu0 %v7078
      %v7117 = vpop.f32.mrf.mxu0
      %v7118 = vadd.f32 0.0, %v7117
      %v7119 = vpop.f32.mrf.mxu0
      %v7120 = vadd.f32 0.0, %v7119
      %7121 = vmatmul.bf16.gmra.mxu0 %v7081
      %v7122 = vpop.f32.mrf.mxu0
      %v7123 = vadd.f32 0.0, %v7122
      %v7124 = vpop.f32.mrf.mxu0
      %7125 = vdwg.mxu0
      %v7126 = vadd.f32 %v7013, %v7093
      %v7127 = vadd.f32 %v7014, %v7095
      %v7128 = vadd.f32 %v7015, %v7098
      %v7129 = vadd.f32 %v7016, %v7100
      %v7130 = vadd.f32 %v7017, %v7103
      %v7131 = vadd.f32 %v7018, %v7105
      %v7132 = vadd.f32 %v7019, %v7108
      %v7133 = vadd.f32 %v7020, %v7110
      %v7134 = vadd.f32 %v7021, %v7113
      %v7135 = vadd.f32 %v7022, %v7115
      %v7136 = vadd.f32 %v7023, %v7118
      %v7137 = vadd.f32 %v7024, %v7120
      %v7138 = vadd.f32 %v7025, %v7123
      %v7139 = vld [vmem:[%s4260 + $0x10] sm:$0xff]
      %v7140 = vld [vmem:[%s4260 + $0x18] sm:$0xff]
      %v7141 = vld [vmem:[%s4260 + $0x20] sm:$0xff]
      %v7142 = vld [vmem:[%s4260 + $0x28] sm:$0xff]
      %v7143 = vld [vmem:[%s4260 + $0x30] sm:$0xff]
      %v7144 = vld [vmem:[%s4260 + $0x38] sm:$0xff]
      %v7145 = vld [vmem:[%s4260 + $0x40] sm:$0xff]
      %v7146 = vld [vmem:[%s4260 + $0x48] sm:$0xff]
      %v7147 = vld [vmem:[%s4260 + $0x50] sm:$0xff]
      %v7148 = vld [vmem:[%s4260 + $0x58] sm:$0xff]
      %v7149 = vld [vmem:[%s4260 + $0x60] sm:$0xff]
      %v7150 = vld [vmem:[%s4260 + $0x68] sm:$0xff]
      %v7151 = vld [vmem:[%s4260 + $0x70] sm:$0xf]
      %v7152 = vpack.c.bf16 %v7140, %v7139
      %v7153 = vpack.c.bf16 %v7142, %v7141
      %v7154 = vpack.c.bf16 %v7144, %v7143
      %v7155 = vpack.c.bf16 %v7146, %v7145
      %v7156 = vpack.c.bf16 %v7148, %v7147
      %v7157 = vpack.c.bf16 %v7150, %v7149
      %v7158 = vpack.c.bf16 %v7151, %v7151
      %v7159 = vld [vmem:[%s4837] sm:$0xf]
      %v7160 = vld [vmem:[%s4837 + $0x4] sm:$0xf]
      %v7161 = vld [vmem:[%s4837 + $0x8] sm:$0xf]
      %v7162 = vld [vmem:[%s4837 + $0xc] sm:$0xf]
      %v7167 = vunpack.c.l.b16 %v7159
      %v7168 = vunpack.c.l.b16 %v7160
      %v7169 = vunpack.c.l.b16 %v7161
      %v7170 = vunpack.c.l.b16 %v7162
      %v7171 = vpack.c.b16 %v7168, %v7167
      %v7172 = vpack.c.b16 %v7170, %v7169
      %v7176 = vsel %vm498, %v7152, 0
      %v7179 = vsel %vm498, %v7153, 0
      %v7182 = vsel %vm498, %v7154, 0
      %v7185 = vsel %vm498, %v7155, 0
      %v7188 = vsel %vm498, %v7156, 0
      %v7191 = vsel %vm498, %v7157, 0
      %v7194 = vsel %vm498, %v7158, 0
      %7196 = vmatpush.bf16.msra.mxu0 0
      %7197 = vmatpush.bf16.msra.mxu0 0
      %7198 = vmatpush.bf16.msra.mxu0 0
      %7199 = vmatpush.bf16.msra.mxu0 0
      %7200 = vmatpush.bf16.msra.mxu0 0
      %7201 = vmatpush.bf16.msra.mxu0 0
      %7202 = vmatpush.bf16.msra.mxu0 %v7172
      %7203 = vmatpush.bf16.msra.mxu0 %v7171
      %7204 = vmatmul.bf16.gmra.mxu0 %v7176
      %v7205 = vpop.f32.mrf.mxu0
      %v7206 = vadd.f32 0.0, %v7205
      %v7207 = vpop.f32.mrf.mxu0
      %v7208 = vadd.f32 0.0, %v7207
      %7209 = vmatmul.bf16.gmra.mxu0 %v7179
      %v7210 = vpop.f32.mrf.mxu0
      %v7211 = vadd.f32 0.0, %v7210
      %v7212 = vpop.f32.mrf.mxu0
      %v7213 = vadd.f32 0.0, %v7212
      %7214 = vmatmul.bf16.gmra.mxu0 %v7182
      %v7215 = vpop.f32.mrf.mxu0
      %v7216 = vadd.f32 0.0, %v7215
      %v7217 = vpop.f32.mrf.mxu0
      %v7218 = vadd.f32 0.0, %v7217
      %7219 = vmatmul.bf16.gmra.mxu0 %v7185
      %v7220 = vpop.f32.mrf.mxu0
      %v7221 = vadd.f32 0.0, %v7220
      %v7222 = vpop.f32.mrf.mxu0
      %v7223 = vadd.f32 0.0, %v7222
      %7224 = vmatmul.bf16.gmra.mxu0 %v7188
      %v7225 = vpop.f32.mrf.mxu0
      %v7226 = vadd.f32 0.0, %v7225
      %v7227 = vpop.f32.mrf.mxu0
      %v7228 = vadd.f32 0.0, %v7227
      %7229 = vmatmul.bf16.gmra.mxu0 %v7191
      %v7230 = vpop.f32.mrf.mxu0
      %v7231 = vadd.f32 0.0, %v7230
      %v7232 = vpop.f32.mrf.mxu0
      %v7233 = vadd.f32 0.0, %v7232
      %7234 = vmatmul.bf16.gmra.mxu0 %v7194
      %v7235 = vpop.f32.mrf.mxu0
      %v7236 = vadd.f32 0.0, %v7235
      %v7237 = vpop.f32.mrf.mxu0
      %7238 = vdwg.mxu0
      %v7239 = vadd.f32 %v7126, %v7206
      %v7240 = vadd.f32 %v7127, %v7208
      %v7241 = vadd.f32 %v7128, %v7211
      %v7242 = vadd.f32 %v7129, %v7213
      %v7243 = vadd.f32 %v7130, %v7216
      %v7244 = vadd.f32 %v7131, %v7218
      %v7245 = vadd.f32 %v7132, %v7221
      %v7246 = vadd.f32 %v7133, %v7223
      %v7247 = vadd.f32 %v7134, %v7226
      %v7248 = vadd.f32 %v7135, %v7228
      %v7249 = vadd.f32 %v7136, %v7231
      %v7250 = vadd.f32 %v7137, %v7233
      %v7251 = vadd.f32 %v7138, %v7236
      %v7252 = vld [vmem:[%s3286 + $0x19] sm:$0xff]
      %v7253 = vld [vmem:[%s3286 + $0x21] sm:$0xff]
      %v7254 = vld [vmem:[%s3286 + $0x29] sm:$0xff]
      %v7255 = vld [vmem:[%s3286 + $0x31] sm:$0xff]
      %v7256 = vld [vmem:[%s3286 + $0x39] sm:$0xff]
      %v7257 = vld [vmem:[%s3286 + $0x41] sm:$0xff]
      %v7258 = vld [vmem:[%s3286 + $0x49] sm:$0xff]
      %v7259 = vld [vmem:[%s3286 + $0x51] sm:$0xff]
      %v7260 = vld [vmem:[%s3286 + $0x59] sm:$0xff]
      %v7261 = vld [vmem:[%s3286 + $0x61] sm:$0xff]
      %v7262 = vld [vmem:[%s3286 + $0x69] sm:$0xff]
      %v7263 = vld [vmem:[%s3286 + $0x71] sm:$0xff]
      %v7264 = vld [vmem:[%s3286 + $0x79] sm:$0xf]
      %v7265 = vpack.c.bf16 %v7253, %v7252
      %v7266 = vpack.c.bf16 %v7255, %v7254
      %v7267 = vpack.c.bf16 %v7257, %v7256
      %v7268 = vpack.c.bf16 %v7259, %v7258
      %v7269 = vpack.c.bf16 %v7261, %v7260
      %v7270 = vpack.c.bf16 %v7263, %v7262
      %v7271 = vpack.c.bf16 %v7264, %v7264
      %v7272 = vld [vmem:[%s4951] sm:$0xf]
      %v7273 = vld [vmem:[%s4951 + $0x4] sm:$0xf]
      %v7274 = vld [vmem:[%s4951 + $0x8] sm:$0xf]
      %v7275 = vld [vmem:[%s4951 + $0xc] sm:$0xf]
      %v7280 = vunpack.c.l.b16 %v7272
      %v7281 = vunpack.c.l.b16 %v7273
      %v7282 = vunpack.c.l.b16 %v7274
      %v7283 = vunpack.c.l.b16 %v7275
      %v7284 = vpack.c.b16 %v7281, %v7280
      %v7285 = vpack.c.b16 %v7283, %v7282
      %v7289 = vsel %vm498, %v7265, 0
      %v7292 = vsel %vm498, %v7266, 0
      %v7295 = vsel %vm498, %v7267, 0
      %v7298 = vsel %vm498, %v7268, 0
      %v7301 = vsel %vm498, %v7269, 0
      %v7304 = vsel %vm498, %v7270, 0
      %v7307 = vsel %vm498, %v7271, 0
      %7309 = vmatpush.bf16.msra.mxu0 0
      %7310 = vmatpush.bf16.msra.mxu0 0
      %7311 = vmatpush.bf16.msra.mxu0 0
      %7312 = vmatpush.bf16.msra.mxu0 0
      %7313 = vmatpush.bf16.msra.mxu0 0
      %7314 = vmatpush.bf16.msra.mxu0 0
      %7315 = vmatpush.bf16.msra.mxu0 %v7285
      %7316 = vmatpush.bf16.msra.mxu0 %v7284
      %7317 = vmatmul.bf16.gmra.mxu0 %v7289
      %v7318 = vpop.f32.mrf.mxu0
      %v7319 = vadd.f32 0.0, %v7318
      %v7320 = vpop.f32.mrf.mxu0
      %v7321 = vadd.f32 0.0, %v7320
      %7322 = vmatmul.bf16.gmra.mxu0 %v7292
      %v7323 = vpop.f32.mrf.mxu0
      %v7324 = vadd.f32 0.0, %v7323
      %v7325 = vpop.f32.mrf.mxu0
      %v7326 = vadd.f32 0.0, %v7325
      %7327 = vmatmul.bf16.gmra.mxu0 %v7295
      %v7328 = vpop.f32.mrf.mxu0
      %v7329 = vadd.f32 0.0, %v7328
      %v7330 = vpop.f32.mrf.mxu0
      %v7331 = vadd.f32 0.0, %v7330
      %7332 = vmatmul.bf16.gmra.mxu0 %v7298
      %v7333 = vpop.f32.mrf.mxu0
      %v7334 = vadd.f32 0.0, %v7333
      %v7335 = vpop.f32.mrf.mxu0
      %v7336 = vadd.f32 0.0, %v7335
      %7337 = vmatmul.bf16.gmra.mxu0 %v7301
      %v7338 = vpop.f32.mrf.mxu0
      %v7339 = vadd.f32 0.0, %v7338
      %v7340 = vpop.f32.mrf.mxu0
      %v7341 = vadd.f32 0.0, %v7340
      %7342 = vmatmul.bf16.gmra.mxu0 %v7304
      %v7343 = vpop.f32.mrf.mxu0
      %v7344 = vadd.f32 0.0, %v7343
      %v7345 = vpop.f32.mrf.mxu0
      %v7346 = vadd.f32 0.0, %v7345
      %7347 = vmatmul.bf16.gmra.mxu0 %v7307
      %v7348 = vpop.f32.mrf.mxu0
      %v7349 = vadd.f32 0.0, %v7348
      %v7350 = vpop.f32.mrf.mxu0
      %7351 = vdwg.mxu0
      %v7352 = vadd.f32 %v7239, %v7319
      %v7353 = vadd.f32 %v7240, %v7321
      %v7354 = vadd.f32 %v7241, %v7324
      %v7355 = vadd.f32 %v7242, %v7326
      %v7356 = vadd.f32 %v7243, %v7329
      %v7357 = vadd.f32 %v7244, %v7331
      %v7358 = vadd.f32 %v7245, %v7334
      %v7359 = vadd.f32 %v7246, %v7336
      %v7360 = vadd.f32 %v7247, %v7339
      %v7361 = vadd.f32 %v7248, %v7341
      %v7362 = vadd.f32 %v7249, %v7344
      %v7363 = vadd.f32 %v7250, %v7346
      %v7364 = vadd.f32 %v7251, %v7349
      %v7365 = vld [vmem:[#allocation4 + $0x1a] sm:$0xff]
      %v7366 = vld [vmem:[#allocation4 + $0x22] sm:$0xff]
      %v7367 = vld [vmem:[#allocation4 + $0x2a] sm:$0xff]
      %v7368 = vld [vmem:[#allocation4 + $0x32] sm:$0xff]
      %v7369 = vld [vmem:[#allocation4 + $0x3a] sm:$0xff]
      %v7370 = vld [vmem:[#allocation4 + $0x42] sm:$0xff]
      %v7371 = vld [vmem:[#allocation4 + $0x4a] sm:$0xff]
      %v7372 = vld [vmem:[#allocation4 + $0x52] sm:$0xff]
      %v7373 = vld [vmem:[#allocation4 + $0x5a] sm:$0xff]
      %v7374 = vld [vmem:[#allocation4 + $0x62] sm:$0xff]
      %v7375 = vld [vmem:[#allocation4 + $0x6a] sm:$0xff]
      %v7376 = vld [vmem:[#allocation4 + $0x72] sm:$0xff]
      %v7377 = vld [vmem:[#allocation4 + $0x7a] sm:$0xf]
      %v7378 = vpack.c.bf16 %v7366, %v7365
      %v7379 = vpack.c.bf16 %v7368, %v7367
      %v7380 = vpack.c.bf16 %v7370, %v7369
      %v7381 = vpack.c.bf16 %v7372, %v7371
      %v7382 = vpack.c.bf16 %v7374, %v7373
      %v7383 = vpack.c.bf16 %v7376, %v7375
      %v7384 = vpack.c.bf16 %v7377, %v7377
      %v7385 = vld [vmem:[%s5065] sm:$0xf]
      %v7386 = vld [vmem:[%s5065 + $0x4] sm:$0xf]
      %v7387 = vld [vmem:[%s5065 + $0x8] sm:$0xf]
      %v7388 = vld [vmem:[%s5065 + $0xc] sm:$0xf]
      %v7393 = vunpack.c.l.b16 %v7385
      %v7394 = vunpack.c.l.b16 %v7386
      %v7395 = vunpack.c.l.b16 %v7387
      %v7396 = vunpack.c.l.b16 %v7388
      %v7397 = vpack.c.b16 %v7394, %v7393
      %v7398 = vpack.c.b16 %v7396, %v7395
      %v7402 = vsel %vm498, %v7378, 0
      %v7405 = vsel %vm498, %v7379, 0
      %v7408 = vsel %vm498, %v7380, 0
      %v7411 = vsel %vm498, %v7381, 0
      %v7414 = vsel %vm498, %v7382, 0
      %v7417 = vsel %vm498, %v7383, 0
      %v7420 = vsel %vm498, %v7384, 0
      %7422 = vmatpush.bf16.msra.mxu0 0
      %7423 = vmatpush.bf16.msra.mxu0 0
      %7424 = vmatpush.bf16.msra.mxu0 0
      %7425 = vmatpush.bf16.msra.mxu0 0
      %7426 = vmatpush.bf16.msra.mxu0 0
      %7427 = vmatpush.bf16.msra.mxu0 0
      %7428 = vmatpush.bf16.msra.mxu0 %v7398
      %7429 = vmatpush.bf16.msra.mxu0 %v7397
      %7430 = vmatmul.bf16.gmra.mxu0 %v7402
      %v7431 = vpop.f32.mrf.mxu0
      %v7432 = vadd.f32 0.0, %v7431
      %v7433 = vpop.f32.mrf.mxu0
      %v7434 = vadd.f32 0.0, %v7433
      %7435 = vmatmul.bf16.gmra.mxu0 %v7405
      %v7436 = vpop.f32.mrf.mxu0
      %v7437 = vadd.f32 0.0, %v7436
      %v7438 = vpop.f32.mrf.mxu0
      %v7439 = vadd.f32 0.0, %v7438
      %7440 = vmatmul.bf16.gmra.mxu0 %v7408
      %v7441 = vpop.f32.mrf.mxu0
      %v7442 = vadd.f32 0.0, %v7441
      %v7443 = vpop.f32.mrf.mxu0
      %v7444 = vadd.f32 0.0, %v7443
      %7445 = vmatmul.bf16.gmra.mxu0 %v7411
      %v7446 = vpop.f32.mrf.mxu0
      %v7447 = vadd.f32 0.0, %v7446
      %v7448 = vpop.f32.mrf.mxu0
      %v7449 = vadd.f32 0.0, %v7448
      %7450 = vmatmul.bf16.gmra.mxu0 %v7414
      %v7451 = vpop.f32.mrf.mxu0
      %v7452 = vadd.f32 0.0, %v7451
      %v7453 = vpop.f32.mrf.mxu0
      %v7454 = vadd.f32 0.0, %v7453
      %7455 = vmatmul.bf16.gmra.mxu0 %v7417
      %v7456 = vpop.f32.mrf.mxu0
      %v7457 = vadd.f32 0.0, %v7456
      %v7458 = vpop.f32.mrf.mxu0
      %v7459 = vadd.f32 0.0, %v7458
      %7460 = vmatmul.bf16.gmra.mxu0 %v7420
      %v7461 = vpop.f32.mrf.mxu0
      %v7462 = vadd.f32 0.0, %v7461
      %v7463 = vpop.f32.mrf.mxu0
      %7464 = vdwg.mxu0
      %v7465 = vadd.f32 %v7352, %v7432
      %v7466 = vadd.f32 %v7353, %v7434
      %v7467 = vadd.f32 %v7354, %v7437
      %v7468 = vadd.f32 %v7355, %v7439
      %v7469 = vadd.f32 %v7356, %v7442
      %v7470 = vadd.f32 %v7357, %v7444
      %v7471 = vadd.f32 %v7358, %v7447
      %v7472 = vadd.f32 %v7359, %v7449
      %v7473 = vadd.f32 %v7360, %v7452
      %v7474 = vadd.f32 %v7361, %v7454
      %v7475 = vadd.f32 %v7362, %v7457
      %v7476 = vadd.f32 %v7363, %v7459
      %v7477 = vadd.f32 %v7364, %v7462
      %v7478 = vld [vmem:[%s3286 + $0x1a] sm:$0xff]
      %v7479 = vld [vmem:[%s3286 + $0x22] sm:$0xff]
      %v7480 = vld [vmem:[%s3286 + $0x2a] sm:$0xff]
      %v7481 = vld [vmem:[%s3286 + $0x32] sm:$0xff]
      %v7482 = vld [vmem:[%s3286 + $0x3a] sm:$0xff]
      %v7483 = vld [vmem:[%s3286 + $0x42] sm:$0xff]
      %v7484 = vld [vmem:[%s3286 + $0x4a] sm:$0xff]
      %v7485 = vld [vmem:[%s3286 + $0x52] sm:$0xff]
      %v7486 = vld [vmem:[%s3286 + $0x5a] sm:$0xff]
      %v7487 = vld [vmem:[%s3286 + $0x62] sm:$0xff]
      %v7488 = vld [vmem:[%s3286 + $0x6a] sm:$0xff]
      %v7489 = vld [vmem:[%s3286 + $0x72] sm:$0xff]
      %v7490 = vld [vmem:[%s3286 + $0x7a] sm:$0xf]
      %v7491 = vpack.c.bf16 %v7479, %v7478
      %v7492 = vpack.c.bf16 %v7481, %v7480
      %v7493 = vpack.c.bf16 %v7483, %v7482
      %v7494 = vpack.c.bf16 %v7485, %v7484
      %v7495 = vpack.c.bf16 %v7487, %v7486
      %v7496 = vpack.c.bf16 %v7489, %v7488
      %v7497 = vpack.c.bf16 %v7490, %v7490
      %v7498 = vld [vmem:[%s5179] sm:$0xf]
      %v7499 = vld [vmem:[%s5179 + $0x4] sm:$0xf]
      %v7500 = vld [vmem:[%s5179 + $0x8] sm:$0xf]
      %v7501 = vld [vmem:[%s5179 + $0xc] sm:$0xf]
      %v7506 = vunpack.c.l.b16 %v7498
      %v7507 = vunpack.c.l.b16 %v7499
      %v7508 = vunpack.c.l.b16 %v7500
      %v7509 = vunpack.c.l.b16 %v7501
      %v7510 = vpack.c.b16 %v7507, %v7506
      %v7511 = vpack.c.b16 %v7509, %v7508
      %v7515 = vsel %vm498, %v7491, 0
      %v7518 = vsel %vm498, %v7492, 0
      %v7521 = vsel %vm498, %v7493, 0
      %v7524 = vsel %vm498, %v7494, 0
      %v7527 = vsel %vm498, %v7495, 0
      %v7530 = vsel %vm498, %v7496, 0
      %v7533 = vsel %vm498, %v7497, 0
      %7535 = vmatpush.bf16.msra.mxu0 0
      %7536 = vmatpush.bf16.msra.mxu0 0
      %7537 = vmatpush.bf16.msra.mxu0 0
      %7538 = vmatpush.bf16.msra.mxu0 0
      %7539 = vmatpush.bf16.msra.mxu0 0
      %7540 = vmatpush.bf16.msra.mxu0 0
      %7541 = vmatpush.bf16.msra.mxu0 %v7511
      %7542 = vmatpush.bf16.msra.mxu0 %v7510
      %7543 = vmatmul.bf16.gmra.mxu0 %v7515
      %v7544 = vpop.f32.mrf.mxu0
      %v7545 = vadd.f32 0.0, %v7544
      %v7546 = vpop.f32.mrf.mxu0
      %v7547 = vadd.f32 0.0, %v7546
      %7548 = vmatmul.bf16.gmra.mxu0 %v7518
      %v7549 = vpop.f32.mrf.mxu0
      %v7550 = vadd.f32 0.0, %v7549
      %v7551 = vpop.f32.mrf.mxu0
      %v7552 = vadd.f32 0.0, %v7551
      %7553 = vmatmul.bf16.gmra.mxu0 %v7521
      %v7554 = vpop.f32.mrf.mxu0
      %v7555 = vadd.f32 0.0, %v7554
      %v7556 = vpop.f32.mrf.mxu0
      %v7557 = vadd.f32 0.0, %v7556
      %7558 = vmatmul.bf16.gmra.mxu0 %v7524
      %v7559 = vpop.f32.mrf.mxu0
      %v7560 = vadd.f32 0.0, %v7559
      %v7561 = vpop.f32.mrf.mxu0
      %v7562 = vadd.f32 0.0, %v7561
      %7563 = vmatmul.bf16.gmra.mxu0 %v7527
      %v7564 = vpop.f32.mrf.mxu0
      %v7565 = vadd.f32 0.0, %v7564
      %v7566 = vpop.f32.mrf.mxu0
      %v7567 = vadd.f32 0.0, %v7566
      %7568 = vmatmul.bf16.gmra.mxu0 %v7530
      %v7569 = vpop.f32.mrf.mxu0
      %v7570 = vadd.f32 0.0, %v7569
      %v7571 = vpop.f32.mrf.mxu0
      %v7572 = vadd.f32 0.0, %v7571
      %7573 = vmatmul.bf16.gmra.mxu0 %v7533
      %v7574 = vpop.f32.mrf.mxu0
      %v7575 = vadd.f32 0.0, %v7574
      %v7576 = vpop.f32.mrf.mxu0
      %7577 = vdwg.mxu0
      %v7578 = vadd.f32 %v7465, %v7545
      %v7579 = vadd.f32 %v7466, %v7547
      %v7580 = vadd.f32 %v7467, %v7550
      %v7581 = vadd.f32 %v7468, %v7552
      %v7582 = vadd.f32 %v7469, %v7555
      %v7583 = vadd.f32 %v7470, %v7557
      %v7584 = vadd.f32 %v7471, %v7560
      %v7585 = vadd.f32 %v7472, %v7562
      %v7586 = vadd.f32 %v7473, %v7565
      %v7587 = vadd.f32 %v7474, %v7567
      %v7588 = vadd.f32 %v7475, %v7570
      %v7589 = vadd.f32 %v7476, %v7572
      %v7590 = vadd.f32 %v7477, %v7575
      %v7591 = vld [vmem:[%s9] sm:$0x1]
      %v7593 = vperm.slane %v7591, 0
      %v7595 = vadd.f32 %v7578, %v7593
      %v7596 = vadd.f32 %v7579, %v7593
      %v7597 = vadd.f32 %v7580, %v7593
      %v7598 = vadd.f32 %v7581, %v7593
      %v7599 = vadd.f32 %v7582, %v7593
      %v7600 = vadd.f32 %v7583, %v7593
      %v7601 = vadd.f32 %v7584, %v7593
      %v7602 = vadd.f32 %v7585, %v7593
      %v7603 = vadd.f32 %v7586, %v7593
      %v7604 = vadd.f32 %v7587, %v7593
      %v7605 = vadd.f32 %v7588, %v7593
      %v7606 = vadd.f32 %v7589, %v7593
      %v7607 = vadd.f32 %v7590, %v7593
      %v7608 = vmax.f32 %v7595, 0.0
      %v7609 = vmax.f32 %v7596, 0.0
      %v7610 = vmax.f32 %v7597, 0.0
      %v7611 = vmax.f32 %v7598, 0.0
      %v7612 = vmax.f32 %v7599, 0.0
      %v7613 = vmax.f32 %v7600, 0.0
      %v7614 = vmax.f32 %v7601, 0.0
      %v7615 = vmax.f32 %v7602, 0.0
      %v7616 = vmax.f32 %v7603, 0.0
      %v7617 = vmax.f32 %v7604, 0.0
      %v7618 = vmax.f32 %v7605, 0.0
      %v7619 = vmax.f32 %v7606, 0.0
      %v7620 = vmax.f32 %v7607, 0.0
      %v7621 = vpack.c.bf16 %v7609, %v7608
      %v7622 = vpack.c.bf16 %v7611, %v7610
      %v7623 = vpack.c.bf16 %v7613, %v7612
      %v7624 = vpack.c.bf16 %v7615, %v7614
      %v7625 = vpack.c.bf16 %v7617, %v7616
      %v7626 = vpack.c.bf16 %v7619, %v7618
      %v7627 = vpack.c.bf16 %v7620, %v7620
      %v7628 = vld [vmem:[%s10] sm:$0xf]
      %v7629 = vld [vmem:[%s10 + $0x4] sm:$0xf]
      %v7630 = vld [vmem:[%s10 + $0x8] sm:$0xf]
      %v7631 = vld [vmem:[%s10 + $0xc] sm:$0xf]
      %v7632 = vld [vmem:[%s10 + $0x10] sm:$0xf]
      %v7633 = vld [vmem:[%s10 + $0x14] sm:$0xf]
      %v7634 = vld [vmem:[%s10 + $0x18] sm:$0xf]
      %v7635 = vld [vmem:[%s10 + $0x1c] sm:$0xf]
      %v7636 = vld [vmem:[%s10 + $0x20] sm:$0xf]
      %v7637 = vld [vmem:[%s10 + $0x24] sm:$0xf]
      %v7638 = vld [vmem:[%s10 + $0x28] sm:$0xf]
      %v7639 = vld [vmem:[%s10 + $0x2c] sm:$0xf]
      %v7640 = vld [vmem:[%s11] sm:$0x1]
      %v7642 = vperm.slane %v7640, 0
      %v7656 = vunpack.c.l.b16 %v7628
      %v7657 = vunpack.c.l.b16 %v7629
      %v7658 = vunpack.c.l.b16 %v7630
      %v7659 = vunpack.c.l.b16 %v7631
      %v7660 = vunpack.c.l.b16 %v7632
      %v7661 = vunpack.c.l.b16 %v7633
      %v7662 = vunpack.c.l.b16 %v7634
      %v7663 = vunpack.c.l.b16 %v7635
      %v7664 = vunpack.c.l.b16 %v7636
      %v7665 = vunpack.c.l.b16 %v7637
      %v7666 = vunpack.c.l.b16 %v7638
      %v7667 = vunpack.c.l.b16 %v7639
      %v7668 = vpack.c.b16 %v7657, %v7656
      %v7669 = vpack.c.b16 %v7659, %v7658
      %v7670 = vpack.c.b16 %v7661, %v7660
      %v7671 = vpack.c.b16 %v7663, %v7662
      %v7672 = vpack.c.b16 %v7665, %v7664
      %v7673 = vpack.c.b16 %v7667, %v7666
      %v7681 = vsel %vm5362, %v7621, 0
      %v7684 = vsel %vm5362, %v7622, 0
      %v7687 = vsel %vm5362, %v7623, 0
      %v7690 = vsel %vm5362, %v7624, 0
      %v7693 = vsel %vm5362, %v7625, 0
      %v7696 = vsel %vm5362, %v7626, 0
      %v7699 = vsel %vm5362, %v7627, 0
      %7701 = vmatpush.bf16.msra.mxu0 0
      %7702 = vmatpush.bf16.msra.mxu0 0
      %7703 = vmatpush.bf16.msra.mxu0 %v7673
      %7704 = vmatpush.bf16.msra.mxu0 %v7672
      %7705 = vmatpush.bf16.msra.mxu0 %v7671
      %7706 = vmatpush.bf16.msra.mxu0 %v7670
      %7707 = vmatpush.bf16.msra.mxu0 %v7669
      %7708 = vmatpush.bf16.msra.mxu0 %v7668
      %7709 = vmatmul.bf16.gmra.mxu0 %v7681
      %v7710 = vpop.f32.mrf.mxu0
      %v7711 = vadd.f32 %v7642, %v7710
      %v7712 = vpop.f32.mrf.mxu0
      %v7713 = vadd.f32 %v7642, %v7712
      %7714 = vmatmul.bf16.gmra.mxu0 %v7684
      %v7715 = vpop.f32.mrf.mxu0
      %v7716 = vadd.f32 %v7642, %v7715
      %v7717 = vpop.f32.mrf.mxu0
      %v7718 = vadd.f32 %v7642, %v7717
      %7719 = vmatmul.bf16.gmra.mxu0 %v7687
      %v7720 = vpop.f32.mrf.mxu0
      %v7721 = vadd.f32 %v7642, %v7720
      %v7722 = vpop.f32.mrf.mxu0
      %v7723 = vadd.f32 %v7642, %v7722
      %7724 = vmatmul.bf16.gmra.mxu0 %v7690
      %v7725 = vpop.f32.mrf.mxu0
      %v7726 = vadd.f32 %v7642, %v7725
      %v7727 = vpop.f32.mrf.mxu0
      %v7728 = vadd.f32 %v7642, %v7727
      %7729 = vmatmul.bf16.gmra.mxu0 %v7693
      %v7730 = vpop.f32.mrf.mxu0
      %v7731 = vadd.f32 %v7642, %v7730
      %v7732 = vpop.f32.mrf.mxu0
      %v7733 = vadd.f32 %v7642, %v7732
      %7734 = vmatmul.bf16.gmra.mxu0 %v7696
      %v7735 = vpop.f32.mrf.mxu0
      %v7736 = vadd.f32 %v7642, %v7735
      %v7737 = vpop.f32.mrf.mxu0
      %v7738 = vadd.f32 %v7642, %v7737
      %7739 = vmatmul.bf16.gmra.mxu0 %v7699
      %v7740 = vpop.f32.mrf.mxu0
      %v7741 = vadd.f32 %v7642, %v7740
      %v7742 = vpop.f32.mrf.mxu0
      %7743 = vdwg.mxu0
      %s7744 = scalar_lea.vmem %s413, 208
      %7745 = vst.msk [vmem:[%s7744] sm:$0xff] %vm5427, %v7711
      %7746 = vst.msk [vmem:[%s7744 + $0x8] sm:$0xff] %vm5427, %v7713
      %7747 = vst.msk [vmem:[%s7744 + $0x10] sm:$0xff] %vm5427, %v7716
      %7748 = vst.msk [vmem:[%s7744 + $0x18] sm:$0xff] %vm5427, %v7718
      %7749 = vst.msk [vmem:[%s7744 + $0x20] sm:$0xff] %vm5427, %v7721
      %7750 = vst.msk [vmem:[%s7744 + $0x28] sm:$0xff] %vm5427, %v7723
      %7751 = vst.msk [vmem:[%s7744 + $0x30] sm:$0xff] %vm5427, %v7726
      %7752 = vst.msk [vmem:[%s7744 + $0x38] sm:$0xff] %vm5427, %v7728
      %7753 = vst.msk [vmem:[%s7744 + $0x40] sm:$0xff] %vm5427, %v7731
      %7754 = vst.msk [vmem:[%s7744 + $0x48] sm:$0xff] %vm5427, %v7733
      %7755 = vst.msk [vmem:[%s7744 + $0x50] sm:$0xff] %vm5427, %v7736
      %7756 = vst.msk [vmem:[%s7744 + $0x58] sm:$0xff] %vm5427, %v7738
      %7757 = vst.msk [vmem:[%s7744 + $0x60] sm:$0xf] %vm5440, %v7741
      %v7758 = vld [vmem:[#allocation4 + $0x10] sm:$0xff]
      %v7759 = vld [vmem:[#allocation4 + $0x18] sm:$0xff]
      %v7760 = vld [vmem:[#allocation4 + $0x20] sm:$0xff]
      %v7761 = vld [vmem:[#allocation4 + $0x28] sm:$0xff]
      %v7762 = vld [vmem:[#allocation4 + $0x30] sm:$0xff]
      %v7763 = vld [vmem:[#allocation4 + $0x38] sm:$0xff]
      %v7764 = vld [vmem:[#allocation4 + $0x40] sm:$0xff]
      %v7765 = vld [vmem:[#allocation4 + $0x48] sm:$0xff]
      %v7766 = vld [vmem:[#allocation4 + $0x50] sm:$0xff]
      %v7767 = vld [vmem:[#allocation4 + $0x58] sm:$0xff]
      %v7768 = vld [vmem:[#allocation4 + $0x60] sm:$0xff]
      %v7769 = vld [vmem:[#allocation4 + $0x68] sm:$0xff]
      %v7770 = vld [vmem:[#allocation4 + $0x70] sm:$0xf]
      %v7771 = vpack.c.bf16 %v7759, %v7758
      %v7772 = vpack.c.bf16 %v7761, %v7760
      %v7773 = vpack.c.bf16 %v7763, %v7762
      %v7774 = vpack.c.bf16 %v7765, %v7764
      %v7775 = vpack.c.bf16 %v7767, %v7766
      %v7776 = vpack.c.bf16 %v7769, %v7768
      %v7777 = vpack.c.bf16 %v7770, %v7770
      %v7778 = vld [vmem:[%s8] sm:$0xf]
      %v7779 = vld [vmem:[%s8 + $0x4] sm:$0xf]
      %v7780 = vld [vmem:[%s8 + $0x8] sm:$0xf]
      %v7781 = vld [vmem:[%s8 + $0xc] sm:$0xf]
      %v7782 = vld [vmem:[%s3286 + $0x10] sm:$0xff]
      %v7783 = vld [vmem:[%s3286 + $0x18] sm:$0xff]
      %v7784 = vld [vmem:[%s3286 + $0x20] sm:$0xff]
      %v7785 = vld [vmem:[%s3286 + $0x28] sm:$0xff]
      %v7786 = vld [vmem:[%s3286 + $0x30] sm:$0xff]
      %v7787 = vld [vmem:[%s3286 + $0x38] sm:$0xff]
      %v7788 = vld [vmem:[%s3286 + $0x40] sm:$0xff]
      %v7789 = vld [vmem:[%s3286 + $0x48] sm:$0xff]
      %v7790 = vld [vmem:[%s3286 + $0x50] sm:$0xff]
      %v7791 = vld [vmem:[%s3286 + $0x58] sm:$0xff]
      %v7792 = vld [vmem:[%s3286 + $0x60] sm:$0xff]
      %v7793 = vld [vmem:[%s3286 + $0x68] sm:$0xff]
      %v7794 = vld [vmem:[%s3286 + $0x70] sm:$0xf]
      %v7795 = vpack.c.bf16 %v7783, %v7782
      %v7796 = vpack.c.bf16 %v7785, %v7784
      %v7797 = vpack.c.bf16 %v7787, %v7786
      %v7798 = vpack.c.bf16 %v7789, %v7788
      %v7799 = vpack.c.bf16 %v7791, %v7790
      %v7800 = vpack.c.bf16 %v7793, %v7792
      %v7801 = vpack.c.bf16 %v7794, %v7794
      %v7802 = vld [vmem:[%s4318] sm:$0xf]
      %v7803 = vld [vmem:[%s4318 + $0x4] sm:$0xf]
      %v7804 = vld [vmem:[%s4318 + $0x8] sm:$0xf]
      %v7805 = vld [vmem:[%s4318 + $0xc] sm:$0xf]
      %v7810 = vunpack.c.l.b16 %v7802
      %v7811 = vunpack.c.l.b16 %v7803
      %v7812 = vunpack.c.l.b16 %v7804
      %v7813 = vunpack.c.l.b16 %v7805
      %v7814 = vpack.c.b16 %v7811, %v7810
      %v7815 = vpack.c.b16 %v7813, %v7812
      %v7819 = vsel %vm498, %v7795, 0
      %v7822 = vsel %vm498, %v7796, 0
      %v7825 = vsel %vm498, %v7797, 0
      %v7828 = vsel %vm498, %v7798, 0
      %v7831 = vsel %vm498, %v7799, 0
      %v7834 = vsel %vm498, %v7800, 0
      %v7837 = vsel %vm498, %v7801, 0
      %7839 = vmatpush.bf16.msra.mxu0 0
      %7840 = vmatpush.bf16.msra.mxu0 0
      %7841 = vmatpush.bf16.msra.mxu0 0
      %7842 = vmatpush.bf16.msra.mxu0 0
      %7843 = vmatpush.bf16.msra.mxu0 0
      %7844 = vmatpush.bf16.msra.mxu0 0
      %7845 = vmatpush.bf16.msra.mxu0 %v7815
      %7846 = vmatpush.bf16.msra.mxu0 %v7814
      %7847 = vmatmul.bf16.gmra.mxu0 %v7819
      %v7848 = vpop.f32.mrf.mxu0
      %v7849 = vadd.f32 0.0, %v7848
      %v7850 = vpop.f32.mrf.mxu0
      %v7851 = vadd.f32 0.0, %v7850
      %7852 = vmatmul.bf16.gmra.mxu0 %v7822
      %v7853 = vpop.f32.mrf.mxu0
      %v7854 = vadd.f32 0.0, %v7853
      %v7855 = vpop.f32.mrf.mxu0
      %v7856 = vadd.f32 0.0, %v7855
      %7857 = vmatmul.bf16.gmra.mxu0 %v7825
      %v7858 = vpop.f32.mrf.mxu0
      %v7859 = vadd.f32 0.0, %v7858
      %v7860 = vpop.f32.mrf.mxu0
      %v7861 = vadd.f32 0.0, %v7860
      %7862 = vmatmul.bf16.gmra.mxu0 %v7828
      %v7863 = vpop.f32.mrf.mxu0
      %v7864 = vadd.f32 0.0, %v7863
      %v7865 = vpop.f32.mrf.mxu0
      %v7866 = vadd.f32 0.0, %v7865
      %7867 = vmatmul.bf16.gmra.mxu0 %v7831
      %v7868 = vpop.f32.mrf.mxu0
      %v7869 = vadd.f32 0.0, %v7868
      %v7870 = vpop.f32.mrf.mxu0
      %v7871 = vadd.f32 0.0, %v7870
      %7872 = vmatmul.bf16.gmra.mxu0 %v7834
      %v7873 = vpop.f32.mrf.mxu0
      %v7874 = vadd.f32 0.0, %v7873
      %v7875 = vpop.f32.mrf.mxu0
      %v7876 = vadd.f32 0.0, %v7875
      %7877 = vmatmul.bf16.gmra.mxu0 %v7837
      %v7878 = vpop.f32.mrf.mxu0
      %v7879 = vadd.f32 0.0, %v7878
      %v7880 = vpop.f32.mrf.mxu0
      %7881 = vdwg.mxu0
      %v7886 = vunpack.c.l.b16 %v7778
      %v7887 = vunpack.c.l.b16 %v7779
      %v7888 = vunpack.c.l.b16 %v7780
      %v7889 = vunpack.c.l.b16 %v7781
      %v7890 = vpack.c.b16 %v7887, %v7886
      %v7891 = vpack.c.b16 %v7889, %v7888
      %v7895 = vsel %vm498, %v7771, 0
      %v7898 = vsel %vm498, %v7772, 0
      %v7901 = vsel %vm498, %v7773, 0
      %v7904 = vsel %vm498, %v7774, 0
      %v7907 = vsel %vm498, %v7775, 0
      %v7910 = vsel %vm498, %v7776, 0
      %v7913 = vsel %vm498, %v7777, 0
      %7915 = vmatpush.bf16.msra.mxu0 0
      %7916 = vmatpush.bf16.msra.mxu0 0
      %7917 = vmatpush.bf16.msra.mxu0 0
      %7918 = vmatpush.bf16.msra.mxu0 0
      %7919 = vmatpush.bf16.msra.mxu0 0
      %7920 = vmatpush.bf16.msra.mxu0 0
      %7921 = vmatpush.bf16.msra.mxu0 %v7891
      %7922 = vmatpush.bf16.msra.mxu0 %v7890
      %7923 = vmatmul.bf16.gmra.mxu0 %v7895
      %v7924 = vpop.f32.mrf.mxu0
      %v7925 = vadd.f32 %v7849, %v7924
      %v7926 = vpop.f32.mrf.mxu0
      %v7927 = vadd.f32 %v7851, %v7926
      %7928 = vmatmul.bf16.gmra.mxu0 %v7898
      %v7929 = vpop.f32.mrf.mxu0
      %v7930 = vadd.f32 %v7854, %v7929
      %v7931 = vpop.f32.mrf.mxu0
      %v7932 = vadd.f32 %v7856, %v7931
      %7933 = vmatmul.bf16.gmra.mxu0 %v7901
      %v7934 = vpop.f32.mrf.mxu0
      %v7935 = vadd.f32 %v7859, %v7934
      %v7936 = vpop.f32.mrf.mxu0
      %v7937 = vadd.f32 %v7861, %v7936
      %7938 = vmatmul.bf16.gmra.mxu0 %v7904
      %v7939 = vpop.f32.mrf.mxu0
      %v7940 = vadd.f32 %v7864, %v7939
      %v7941 = vpop.f32.mrf.mxu0
      %v7942 = vadd.f32 %v7866, %v7941
      %7943 = vmatmul.bf16.gmra.mxu0 %v7907
      %v7944 = vpop.f32.mrf.mxu0
      %v7945 = vadd.f32 %v7869, %v7944
      %v7946 = vpop.f32.mrf.mxu0
      %v7947 = vadd.f32 %v7871, %v7946
      %7948 = vmatmul.bf16.gmra.mxu0 %v7910
      %v7949 = vpop.f32.mrf.mxu0
      %v7950 = vadd.f32 %v7874, %v7949
      %v7951 = vpop.f32.mrf.mxu0
      %v7952 = vadd.f32 %v7876, %v7951
      %7953 = vmatmul.bf16.gmra.mxu0 %v7913
      %v7954 = vpop.f32.mrf.mxu0
      %v7955 = vadd.f32 %v7879, %v7954
      %v7956 = vpop.f32.mrf.mxu0
      %7957 = vdwg.mxu0
      %v7958 = vld [vmem:[#allocation4 + $0x11] sm:$0xff]
      %v7959 = vld [vmem:[#allocation4 + $0x19] sm:$0xff]
      %v7960 = vld [vmem:[#allocation4 + $0x21] sm:$0xff]
      %v7961 = vld [vmem:[#allocation4 + $0x29] sm:$0xff]
      %v7962 = vld [vmem:[#allocation4 + $0x31] sm:$0xff]
      %v7963 = vld [vmem:[#allocation4 + $0x39] sm:$0xff]
      %v7964 = vld [vmem:[#allocation4 + $0x41] sm:$0xff]
      %v7965 = vld [vmem:[#allocation4 + $0x49] sm:$0xff]
      %v7966 = vld [vmem:[#allocation4 + $0x51] sm:$0xff]
      %v7967 = vld [vmem:[#allocation4 + $0x59] sm:$0xff]
      %v7968 = vld [vmem:[#allocation4 + $0x61] sm:$0xff]
      %v7969 = vld [vmem:[#allocation4 + $0x69] sm:$0xff]
      %v7970 = vld [vmem:[#allocation4 + $0x71] sm:$0xf]
      %v7971 = vpack.c.bf16 %v7959, %v7958
      %v7972 = vpack.c.bf16 %v7961, %v7960
      %v7973 = vpack.c.bf16 %v7963, %v7962
      %v7974 = vpack.c.bf16 %v7965, %v7964
      %v7975 = vpack.c.bf16 %v7967, %v7966
      %v7976 = vpack.c.bf16 %v7969, %v7968
      %v7977 = vpack.c.bf16 %v7970, %v7970
      %v7978 = vld [vmem:[%s4495] sm:$0xf]
      %v7979 = vld [vmem:[%s4495 + $0x4] sm:$0xf]
      %v7980 = vld [vmem:[%s4495 + $0x8] sm:$0xf]
      %v7981 = vld [vmem:[%s4495 + $0xc] sm:$0xf]
      %v7986 = vunpack.c.l.b16 %v7978
      %v7987 = vunpack.c.l.b16 %v7979
      %v7988 = vunpack.c.l.b16 %v7980
      %v7989 = vunpack.c.l.b16 %v7981
      %v7990 = vpack.c.b16 %v7987, %v7986
      %v7991 = vpack.c.b16 %v7989, %v7988
      %v7995 = vsel %vm498, %v7971, 0
      %v7998 = vsel %vm498, %v7972, 0
      %v8001 = vsel %vm498, %v7973, 0
      %v8004 = vsel %vm498, %v7974, 0
      %v8007 = vsel %vm498, %v7975, 0
      %v8010 = vsel %vm498, %v7976, 0
      %v8013 = vsel %vm498, %v7977, 0
      %8015 = vmatpush.bf16.msra.mxu0 0
      %8016 = vmatpush.bf16.msra.mxu0 0
      %8017 = vmatpush.bf16.msra.mxu0 0
      %8018 = vmatpush.bf16.msra.mxu0 0
      %8019 = vmatpush.bf16.msra.mxu0 0
      %8020 = vmatpush.bf16.msra.mxu0 0
      %8021 = vmatpush.bf16.msra.mxu0 %v7991
      %8022 = vmatpush.bf16.msra.mxu0 %v7990
      %8023 = vmatmul.bf16.gmra.mxu0 %v7995
      %v8024 = vpop.f32.mrf.mxu0
      %v8025 = vadd.f32 0.0, %v8024
      %v8026 = vpop.f32.mrf.mxu0
      %v8027 = vadd.f32 0.0, %v8026
      %8028 = vmatmul.bf16.gmra.mxu0 %v7998
      %v8029 = vpop.f32.mrf.mxu0
      %v8030 = vadd.f32 0.0, %v8029
      %v8031 = vpop.f32.mrf.mxu0
      %v8032 = vadd.f32 0.0, %v8031
      %8033 = vmatmul.bf16.gmra.mxu0 %v8001
      %v8034 = vpop.f32.mrf.mxu0
      %v8035 = vadd.f32 0.0, %v8034
      %v8036 = vpop.f32.mrf.mxu0
      %v8037 = vadd.f32 0.0, %v8036
      %8038 = vmatmul.bf16.gmra.mxu0 %v8004
      %v8039 = vpop.f32.mrf.mxu0
      %v8040 = vadd.f32 0.0, %v8039
      %v8041 = vpop.f32.mrf.mxu0
      %v8042 = vadd.f32 0.0, %v8041
      %8043 = vmatmul.bf16.gmra.mxu0 %v8007
      %v8044 = vpop.f32.mrf.mxu0
      %v8045 = vadd.f32 0.0, %v8044
      %v8046 = vpop.f32.mrf.mxu0
      %v8047 = vadd.f32 0.0, %v8046
      %8048 = vmatmul.bf16.gmra.mxu0 %v8010
      %v8049 = vpop.f32.mrf.mxu0
      %v8050 = vadd.f32 0.0, %v8049
      %v8051 = vpop.f32.mrf.mxu0
      %v8052 = vadd.f32 0.0, %v8051
      %8053 = vmatmul.bf16.gmra.mxu0 %v8013
      %v8054 = vpop.f32.mrf.mxu0
      %v8055 = vadd.f32 0.0, %v8054
      %v8056 = vpop.f32.mrf.mxu0
      %8057 = vdwg.mxu0
      %v8058 = vadd.f32 %v7925, %v8025
      %v8059 = vadd.f32 %v7927, %v8027
      %v8060 = vadd.f32 %v7930, %v8030
      %v8061 = vadd.f32 %v7932, %v8032
      %v8062 = vadd.f32 %v7935, %v8035
      %v8063 = vadd.f32 %v7937, %v8037
      %v8064 = vadd.f32 %v7940, %v8040
      %v8065 = vadd.f32 %v7942, %v8042
      %v8066 = vadd.f32 %v7945, %v8045
      %v8067 = vadd.f32 %v7947, %v8047
      %v8068 = vadd.f32 %v7950, %v8050
      %v8069 = vadd.f32 %v7952, %v8052
      %v8070 = vadd.f32 %v7955, %v8055
      %v8071 = vld [vmem:[%s3773 + $0x10] sm:$0xff]
      %v8072 = vld [vmem:[%s3773 + $0x18] sm:$0xff]
      %v8073 = vld [vmem:[%s3773 + $0x20] sm:$0xff]
      %v8074 = vld [vmem:[%s3773 + $0x28] sm:$0xff]
      %v8075 = vld [vmem:[%s3773 + $0x30] sm:$0xff]
      %v8076 = vld [vmem:[%s3773 + $0x38] sm:$0xff]
      %v8077 = vld [vmem:[%s3773 + $0x40] sm:$0xff]
      %v8078 = vld [vmem:[%s3773 + $0x48] sm:$0xff]
      %v8079 = vld [vmem:[%s3773 + $0x50] sm:$0xff]
      %v8080 = vld [vmem:[%s3773 + $0x58] sm:$0xff]
      %v8081 = vld [vmem:[%s3773 + $0x60] sm:$0xff]
      %v8082 = vld [vmem:[%s3773 + $0x68] sm:$0xff]
      %v8083 = vld [vmem:[%s3773 + $0x70] sm:$0xf]
      %v8084 = vpack.c.bf16 %v8072, %v8071
      %v8085 = vpack.c.bf16 %v8074, %v8073
      %v8086 = vpack.c.bf16 %v8076, %v8075
      %v8087 = vpack.c.bf16 %v8078, %v8077
      %v8088 = vpack.c.bf16 %v8080, %v8079
      %v8089 = vpack.c.bf16 %v8082, %v8081
      %v8090 = vpack.c.bf16 %v8083, %v8083
      %v8091 = vld [vmem:[%s4609] sm:$0xf]
      %v8092 = vld [vmem:[%s4609 + $0x4] sm:$0xf]
      %v8093 = vld [vmem:[%s4609 + $0x8] sm:$0xf]
      %v8094 = vld [vmem:[%s4609 + $0xc] sm:$0xf]
      %v8099 = vunpack.c.l.b16 %v8091
      %v8100 = vunpack.c.l.b16 %v8092
      %v8101 = vunpack.c.l.b16 %v8093
      %v8102 = vunpack.c.l.b16 %v8094
      %v8103 = vpack.c.b16 %v8100, %v8099
      %v8104 = vpack.c.b16 %v8102, %v8101
      %v8108 = vsel %vm498, %v8084, 0
      %v8111 = vsel %vm498, %v8085, 0
      %v8114 = vsel %vm498, %v8086, 0
      %v8117 = vsel %vm498, %v8087, 0
      %v8120 = vsel %vm498, %v8088, 0
      %v8123 = vsel %vm498, %v8089, 0
      %v8126 = vsel %vm498, %v8090, 0
      %8128 = vmatpush.bf16.msra.mxu0 0
      %8129 = vmatpush.bf16.msra.mxu0 0
      %8130 = vmatpush.bf16.msra.mxu0 0
      %8131 = vmatpush.bf16.msra.mxu0 0
      %8132 = vmatpush.bf16.msra.mxu0 0
      %8133 = vmatpush.bf16.msra.mxu0 0
      %8134 = vmatpush.bf16.msra.mxu0 %v8104
      %8135 = vmatpush.bf16.msra.mxu0 %v8103
      %8136 = vmatmul.bf16.gmra.mxu0 %v8108
      %v8137 = vpop.f32.mrf.mxu0
      %v8138 = vadd.f32 0.0, %v8137
      %v8139 = vpop.f32.mrf.mxu0
      %v8140 = vadd.f32 0.0, %v8139
      %8141 = vmatmul.bf16.gmra.mxu0 %v8111
      %v8142 = vpop.f32.mrf.mxu0
      %v8143 = vadd.f32 0.0, %v8142
      %v8144 = vpop.f32.mrf.mxu0
      %v8145 = vadd.f32 0.0, %v8144
      %8146 = vmatmul.bf16.gmra.mxu0 %v8114
      %v8147 = vpop.f32.mrf.mxu0
      %v8148 = vadd.f32 0.0, %v8147
      %v8149 = vpop.f32.mrf.mxu0
      %v8150 = vadd.f32 0.0, %v8149
      %8151 = vmatmul.bf16.gmra.mxu0 %v8117
      %v8152 = vpop.f32.mrf.mxu0
      %v8153 = vadd.f32 0.0, %v8152
      %v8154 = vpop.f32.mrf.mxu0
      %v8155 = vadd.f32 0.0, %v8154
      %8156 = vmatmul.bf16.gmra.mxu0 %v8120
      %v8157 = vpop.f32.mrf.mxu0
      %v8158 = vadd.f32 0.0, %v8157
      %v8159 = vpop.f32.mrf.mxu0
      %v8160 = vadd.f32 0.0, %v8159
      %8161 = vmatmul.bf16.gmra.mxu0 %v8123
      %v8162 = vpop.f32.mrf.mxu0
      %v8163 = vadd.f32 0.0, %v8162
      %v8164 = vpop.f32.mrf.mxu0
      %v8165 = vadd.f32 0.0, %v8164
      %8166 = vmatmul.bf16.gmra.mxu0 %v8126
      %v8167 = vpop.f32.mrf.mxu0
      %v8168 = vadd.f32 0.0, %v8167
      %v8169 = vpop.f32.mrf.mxu0
      %8170 = vdwg.mxu0
      %v8171 = vadd.f32 %v8058, %v8138
      %v8172 = vadd.f32 %v8059, %v8140
      %v8173 = vadd.f32 %v8060, %v8143
      %v8174 = vadd.f32 %v8061, %v8145
      %v8175 = vadd.f32 %v8062, %v8148
      %v8176 = vadd.f32 %v8063, %v8150
      %v8177 = vadd.f32 %v8064, %v8153
      %v8178 = vadd.f32 %v8065, %v8155
      %v8179 = vadd.f32 %v8066, %v8158
      %v8180 = vadd.f32 %v8067, %v8160
      %v8181 = vadd.f32 %v8068, %v8163
      %v8182 = vadd.f32 %v8069, %v8165
      %v8183 = vadd.f32 %v8070, %v8168
      %v8184 = vld [vmem:[%s4260 + $0x10] sm:$0xff]
      %v8185 = vld [vmem:[%s4260 + $0x18] sm:$0xff]
      %v8186 = vld [vmem:[%s4260 + $0x20] sm:$0xff]
      %v8187 = vld [vmem:[%s4260 + $0x28] sm:$0xff]
      %v8188 = vld [vmem:[%s4260 + $0x30] sm:$0xff]
      %v8189 = vld [vmem:[%s4260 + $0x38] sm:$0xff]
      %v8190 = vld [vmem:[%s4260 + $0x40] sm:$0xff]
      %v8191 = vld [vmem:[%s4260 + $0x48] sm:$0xff]
      %v8192 = vld [vmem:[%s4260 + $0x50] sm:$0xff]
      %v8193 = vld [vmem:[%s4260 + $0x58] sm:$0xff]
      %v8194 = vld [vmem:[%s4260 + $0x60] sm:$0xff]
      %v8195 = vld [vmem:[%s4260 + $0x68] sm:$0xff]
      %v8196 = vld [vmem:[%s4260 + $0x70] sm:$0xf]
      %v8197 = vpack.c.bf16 %v8185, %v8184
      %v8198 = vpack.c.bf16 %v8187, %v8186
      %v8199 = vpack.c.bf16 %v8189, %v8188
      %v8200 = vpack.c.bf16 %v8191, %v8190
      %v8201 = vpack.c.bf16 %v8193, %v8192
      %v8202 = vpack.c.bf16 %v8195, %v8194
      %v8203 = vpack.c.bf16 %v8196, %v8196
      %v8204 = vld [vmem:[%s4723] sm:$0xf]
      %v8205 = vld [vmem:[%s4723 + $0x4] sm:$0xf]
      %v8206 = vld [vmem:[%s4723 + $0x8] sm:$0xf]
      %v8207 = vld [vmem:[%s4723 + $0xc] sm:$0xf]
      %v8212 = vunpack.c.l.b16 %v8204
      %v8213 = vunpack.c.l.b16 %v8205
      %v8214 = vunpack.c.l.b16 %v8206
      %v8215 = vunpack.c.l.b16 %v8207
      %v8216 = vpack.c.b16 %v8213, %v8212
      %v8217 = vpack.c.b16 %v8215, %v8214
      %v8221 = vsel %vm498, %v8197, 0
      %v8224 = vsel %vm498, %v8198, 0
      %v8227 = vsel %vm498, %v8199, 0
      %v8230 = vsel %vm498, %v8200, 0
      %v8233 = vsel %vm498, %v8201, 0
      %v8236 = vsel %vm498, %v8202, 0
      %v8239 = vsel %vm498, %v8203, 0
      %8241 = vmatpush.bf16.msra.mxu0 0
      %8242 = vmatpush.bf16.msra.mxu0 0
      %8243 = vmatpush.bf16.msra.mxu0 0
      %8244 = vmatpush.bf16.msra.mxu0 0
      %8245 = vmatpush.bf16.msra.mxu0 0
      %8246 = vmatpush.bf16.msra.mxu0 0
      %8247 = vmatpush.bf16.msra.mxu0 %v8217
      %8248 = vmatpush.bf16.msra.mxu0 %v8216
      %8249 = vmatmul.bf16.gmra.mxu0 %v8221
      %v8250 = vpop.f32.mrf.mxu0
      %v8251 = vadd.f32 0.0, %v8250
      %v8252 = vpop.f32.mrf.mxu0
      %v8253 = vadd.f32 0.0, %v8252
      %8254 = vmatmul.bf16.gmra.mxu0 %v8224
      %v8255 = vpop.f32.mrf.mxu0
      %v8256 = vadd.f32 0.0, %v8255
      %v8257 = vpop.f32.mrf.mxu0
      %v8258 = vadd.f32 0.0, %v8257
      %8259 = vmatmul.bf16.gmra.mxu0 %v8227
      %v8260 = vpop.f32.mrf.mxu0
      %v8261 = vadd.f32 0.0, %v8260
      %v8262 = vpop.f32.mrf.mxu0
      %v8263 = vadd.f32 0.0, %v8262
      %8264 = vmatmul.bf16.gmra.mxu0 %v8230
      %v8265 = vpop.f32.mrf.mxu0
      %v8266 = vadd.f32 0.0, %v8265
      %v8267 = vpop.f32.mrf.mxu0
      %v8268 = vadd.f32 0.0, %v8267
      %8269 = vmatmul.bf16.gmra.mxu0 %v8233
      %v8270 = vpop.f32.mrf.mxu0
      %v8271 = vadd.f32 0.0, %v8270
      %v8272 = vpop.f32.mrf.mxu0
      %v8273 = vadd.f32 0.0, %v8272
      %8274 = vmatmul.bf16.gmra.mxu0 %v8236
      %v8275 = vpop.f32.mrf.mxu0
      %v8276 = vadd.f32 0.0, %v8275
      %v8277 = vpop.f32.mrf.mxu0
      %v8278 = vadd.f32 0.0, %v8277
      %8279 = vmatmul.bf16.gmra.mxu0 %v8239
      %v8280 = vpop.f32.mrf.mxu0
      %v8281 = vadd.f32 0.0, %v8280
      %v8282 = vpop.f32.mrf.mxu0
      %8283 = vdwg.mxu0
      %v8284 = vadd.f32 %v8171, %v8251
      %v8285 = vadd.f32 %v8172, %v8253
      %v8286 = vadd.f32 %v8173, %v8256
      %v8287 = vadd.f32 %v8174, %v8258
      %v8288 = vadd.f32 %v8175, %v8261
      %v8289 = vadd.f32 %v8176, %v8263
      %v8290 = vadd.f32 %v8177, %v8266
      %v8291 = vadd.f32 %v8178, %v8268
      %v8292 = vadd.f32 %v8179, %v8271
      %v8293 = vadd.f32 %v8180, %v8273
      %v8294 = vadd.f32 %v8181, %v8276
      %v8295 = vadd.f32 %v8182, %v8278
      %v8296 = vadd.f32 %v8183, %v8281
      %v8297 = vld [vmem:[%s3773 + $0x11] sm:$0xff]
      %v8298 = vld [vmem:[%s3773 + $0x19] sm:$0xff]
      %v8299 = vld [vmem:[%s3773 + $0x21] sm:$0xff]
      %v8300 = vld [vmem:[%s3773 + $0x29] sm:$0xff]
      %v8301 = vld [vmem:[%s3773 + $0x31] sm:$0xff]
      %v8302 = vld [vmem:[%s3773 + $0x39] sm:$0xff]
      %v8303 = vld [vmem:[%s3773 + $0x41] sm:$0xff]
      %v8304 = vld [vmem:[%s3773 + $0x49] sm:$0xff]
      %v8305 = vld [vmem:[%s3773 + $0x51] sm:$0xff]
      %v8306 = vld [vmem:[%s3773 + $0x59] sm:$0xff]
      %v8307 = vld [vmem:[%s3773 + $0x61] sm:$0xff]
      %v8308 = vld [vmem:[%s3773 + $0x69] sm:$0xff]
      %v8309 = vld [vmem:[%s3773 + $0x71] sm:$0xf]
      %v8310 = vpack.c.bf16 %v8298, %v8297
      %v8311 = vpack.c.bf16 %v8300, %v8299
      %v8312 = vpack.c.bf16 %v8302, %v8301
      %v8313 = vpack.c.bf16 %v8304, %v8303
      %v8314 = vpack.c.bf16 %v8306, %v8305
      %v8315 = vpack.c.bf16 %v8308, %v8307
      %v8316 = vpack.c.bf16 %v8309, %v8309
      %v8317 = vld [vmem:[%s4837] sm:$0xf]
      %v8318 = vld [vmem:[%s4837 + $0x4] sm:$0xf]
      %v8319 = vld [vmem:[%s4837 + $0x8] sm:$0xf]
      %v8320 = vld [vmem:[%s4837 + $0xc] sm:$0xf]
      %v8325 = vunpack.c.l.b16 %v8317
      %v8326 = vunpack.c.l.b16 %v8318
      %v8327 = vunpack.c.l.b16 %v8319
      %v8328 = vunpack.c.l.b16 %v8320
      %v8329 = vpack.c.b16 %v8326, %v8325
      %v8330 = vpack.c.b16 %v8328, %v8327
      %v8334 = vsel %vm498, %v8310, 0
      %v8337 = vsel %vm498, %v8311, 0
      %v8340 = vsel %vm498, %v8312, 0
      %v8343 = vsel %vm498, %v8313, 0
      %v8346 = vsel %vm498, %v8314, 0
      %v8349 = vsel %vm498, %v8315, 0
      %v8352 = vsel %vm498, %v8316, 0
      %8354 = vmatpush.bf16.msra.mxu0 0
      %8355 = vmatpush.bf16.msra.mxu0 0
      %8356 = vmatpush.bf16.msra.mxu0 0
      %8357 = vmatpush.bf16.msra.mxu0 0
      %8358 = vmatpush.bf16.msra.mxu0 0
      %8359 = vmatpush.bf16.msra.mxu0 0
      %8360 = vmatpush.bf16.msra.mxu0 %v8330
      %8361 = vmatpush.bf16.msra.mxu0 %v8329
      %8362 = vmatmul.bf16.gmra.mxu0 %v8334
      %v8363 = vpop.f32.mrf.mxu0
      %v8364 = vadd.f32 0.0, %v8363
      %v8365 = vpop.f32.mrf.mxu0
      %v8366 = vadd.f32 0.0, %v8365
      %8367 = vmatmul.bf16.gmra.mxu0 %v8337
      %v8368 = vpop.f32.mrf.mxu0
      %v8369 = vadd.f32 0.0, %v8368
      %v8370 = vpop.f32.mrf.mxu0
      %v8371 = vadd.f32 0.0, %v8370
      %8372 = vmatmul.bf16.gmra.mxu0 %v8340
      %v8373 = vpop.f32.mrf.mxu0
      %v8374 = vadd.f32 0.0, %v8373
      %v8375 = vpop.f32.mrf.mxu0
      %v8376 = vadd.f32 0.0, %v8375
      %8377 = vmatmul.bf16.gmra.mxu0 %v8343
      %v8378 = vpop.f32.mrf.mxu0
      %v8379 = vadd.f32 0.0, %v8378
      %v8380 = vpop.f32.mrf.mxu0
      %v8381 = vadd.f32 0.0, %v8380
      %8382 = vmatmul.bf16.gmra.mxu0 %v8346
      %v8383 = vpop.f32.mrf.mxu0
      %v8384 = vadd.f32 0.0, %v8383
      %v8385 = vpop.f32.mrf.mxu0
      %v8386 = vadd.f32 0.0, %v8385
      %8387 = vmatmul.bf16.gmra.mxu0 %v8349
      %v8388 = vpop.f32.mrf.mxu0
      %v8389 = vadd.f32 0.0, %v8388
      %v8390 = vpop.f32.mrf.mxu0
      %v8391 = vadd.f32 0.0, %v8390
      %8392 = vmatmul.bf16.gmra.mxu0 %v8352
      %v8393 = vpop.f32.mrf.mxu0
      %v8394 = vadd.f32 0.0, %v8393
      %v8395 = vpop.f32.mrf.mxu0
      %8396 = vdwg.mxu0
      %v8397 = vadd.f32 %v8284, %v8364
      %v8398 = vadd.f32 %v8285, %v8366
      %v8399 = vadd.f32 %v8286, %v8369
      %v8400 = vadd.f32 %v8287, %v8371
      %v8401 = vadd.f32 %v8288, %v8374
      %v8402 = vadd.f32 %v8289, %v8376
      %v8403 = vadd.f32 %v8290, %v8379
      %v8404 = vadd.f32 %v8291, %v8381
      %v8405 = vadd.f32 %v8292, %v8384
      %v8406 = vadd.f32 %v8293, %v8386
      %v8407 = vadd.f32 %v8294, %v8389
      %v8408 = vadd.f32 %v8295, %v8391
      %v8409 = vadd.f32 %v8296, %v8394
      %v8410 = vld [vmem:[#allocation4 + $0x1a] sm:$0xff]
      %v8411 = vld [vmem:[#allocation4 + $0x22] sm:$0xff]
      %v8412 = vld [vmem:[#allocation4 + $0x2a] sm:$0xff]
      %v8413 = vld [vmem:[#allocation4 + $0x32] sm:$0xff]
      %v8414 = vld [vmem:[#allocation4 + $0x3a] sm:$0xff]
      %v8415 = vld [vmem:[#allocation4 + $0x42] sm:$0xff]
      %v8416 = vld [vmem:[#allocation4 + $0x4a] sm:$0xff]
      %v8417 = vld [vmem:[#allocation4 + $0x52] sm:$0xff]
      %v8418 = vld [vmem:[#allocation4 + $0x5a] sm:$0xff]
      %v8419 = vld [vmem:[#allocation4 + $0x62] sm:$0xff]
      %v8420 = vld [vmem:[#allocation4 + $0x6a] sm:$0xff]
      %v8421 = vld [vmem:[#allocation4 + $0x72] sm:$0xff]
      %v8422 = vld [vmem:[#allocation4 + $0x7a] sm:$0xf]
      %v8423 = vpack.c.bf16 %v8411, %v8410
      %v8424 = vpack.c.bf16 %v8413, %v8412
      %v8425 = vpack.c.bf16 %v8415, %v8414
      %v8426 = vpack.c.bf16 %v8417, %v8416
      %v8427 = vpack.c.bf16 %v8419, %v8418
      %v8428 = vpack.c.bf16 %v8421, %v8420
      %v8429 = vpack.c.bf16 %v8422, %v8422
      %v8430 = vld [vmem:[%s4951] sm:$0xf]
      %v8431 = vld [vmem:[%s4951 + $0x4] sm:$0xf]
      %v8432 = vld [vmem:[%s4951 + $0x8] sm:$0xf]
      %v8433 = vld [vmem:[%s4951 + $0xc] sm:$0xf]
      %v8438 = vunpack.c.l.b16 %v8430
      %v8439 = vunpack.c.l.b16 %v8431
      %v8440 = vunpack.c.l.b16 %v8432
      %v8441 = vunpack.c.l.b16 %v8433
      %v8442 = vpack.c.b16 %v8439, %v8438
      %v8443 = vpack.c.b16 %v8441, %v8440
      %v8447 = vsel %vm498, %v8423, 0
      %v8450 = vsel %vm498, %v8424, 0
      %v8453 = vsel %vm498, %v8425, 0
      %v8456 = vsel %vm498, %v8426, 0
      %v8459 = vsel %vm498, %v8427, 0
      %v8462 = vsel %vm498, %v8428, 0
      %v8465 = vsel %vm498, %v8429, 0
      %8467 = vmatpush.bf16.msra.mxu0 0
      %8468 = vmatpush.bf16.msra.mxu0 0
      %8469 = vmatpush.bf16.msra.mxu0 0
      %8470 = vmatpush.bf16.msra.mxu0 0
      %8471 = vmatpush.bf16.msra.mxu0 0
      %8472 = vmatpush.bf16.msra.mxu0 0
      %8473 = vmatpush.bf16.msra.mxu0 %v8443
      %8474 = vmatpush.bf16.msra.mxu0 %v8442
      %8475 = vmatmul.bf16.gmra.mxu0 %v8447
      %v8476 = vpop.f32.mrf.mxu0
      %v8477 = vadd.f32 0.0, %v8476
      %v8478 = vpop.f32.mrf.mxu0
      %v8479 = vadd.f32 0.0, %v8478
      %8480 = vmatmul.bf16.gmra.mxu0 %v8450
      %v8481 = vpop.f32.mrf.mxu0
      %v8482 = vadd.f32 0.0, %v8481
      %v8483 = vpop.f32.mrf.mxu0
      %v8484 = vadd.f32 0.0, %v8483
      %8485 = vmatmul.bf16.gmra.mxu0 %v8453
      %v8486 = vpop.f32.mrf.mxu0
      %v8487 = vadd.f32 0.0, %v8486
      %v8488 = vpop.f32.mrf.mxu0
      %v8489 = vadd.f32 0.0, %v8488
      %8490 = vmatmul.bf16.gmra.mxu0 %v8456
      %v8491 = vpop.f32.mrf.mxu0
      %v8492 = vadd.f32 0.0, %v8491
      %v8493 = vpop.f32.mrf.mxu0
      %v8494 = vadd.f32 0.0, %v8493
      %8495 = vmatmul.bf16.gmra.mxu0 %v8459
      %v8496 = vpop.f32.mrf.mxu0
      %v8497 = vadd.f32 0.0, %v8496
      %v8498 = vpop.f32.mrf.mxu0
      %v8499 = vadd.f32 0.0, %v8498
      %8500 = vmatmul.bf16.gmra.mxu0 %v8462
      %v8501 = vpop.f32.mrf.mxu0
      %v8502 = vadd.f32 0.0, %v8501
      %v8503 = vpop.f32.mrf.mxu0
      %v8504 = vadd.f32 0.0, %v8503
      %8505 = vmatmul.bf16.gmra.mxu0 %v8465
      %v8506 = vpop.f32.mrf.mxu0
      %v8507 = vadd.f32 0.0, %v8506
      %v8508 = vpop.f32.mrf.mxu0
      %8509 = vdwg.mxu0
      %v8510 = vadd.f32 %v8397, %v8477
      %v8511 = vadd.f32 %v8398, %v8479
      %v8512 = vadd.f32 %v8399, %v8482
      %v8513 = vadd.f32 %v8400, %v8484
      %v8514 = vadd.f32 %v8401, %v8487
      %v8515 = vadd.f32 %v8402, %v8489
      %v8516 = vadd.f32 %v8403, %v8492
      %v8517 = vadd.f32 %v8404, %v8494
      %v8518 = vadd.f32 %v8405, %v8497
      %v8519 = vadd.f32 %v8406, %v8499
      %v8520 = vadd.f32 %v8407, %v8502
      %v8521 = vadd.f32 %v8408, %v8504
      %v8522 = vadd.f32 %v8409, %v8507
      %v8523 = vld [vmem:[%s3286 + $0x1a] sm:$0xff]
      %v8524 = vld [vmem:[%s3286 + $0x22] sm:$0xff]
      %v8525 = vld [vmem:[%s3286 + $0x2a] sm:$0xff]
      %v8526 = vld [vmem:[%s3286 + $0x32] sm:$0xff]
      %v8527 = vld [vmem:[%s3286 + $0x3a] sm:$0xff]
      %v8528 = vld [vmem:[%s3286 + $0x42] sm:$0xff]
      %v8529 = vld [vmem:[%s3286 + $0x4a] sm:$0xff]
      %v8530 = vld [vmem:[%s3286 + $0x52] sm:$0xff]
      %v8531 = vld [vmem:[%s3286 + $0x5a] sm:$0xff]
      %v8532 = vld [vmem:[%s3286 + $0x62] sm:$0xff]
      %v8533 = vld [vmem:[%s3286 + $0x6a] sm:$0xff]
      %v8534 = vld [vmem:[%s3286 + $0x72] sm:$0xff]
      %v8535 = vld [vmem:[%s3286 + $0x7a] sm:$0xf]
      %v8536 = vpack.c.bf16 %v8524, %v8523
      %v8537 = vpack.c.bf16 %v8526, %v8525
      %v8538 = vpack.c.bf16 %v8528, %v8527
      %v8539 = vpack.c.bf16 %v8530, %v8529
      %v8540 = vpack.c.bf16 %v8532, %v8531
      %v8541 = vpack.c.bf16 %v8534, %v8533
      %v8542 = vpack.c.bf16 %v8535, %v8535
      %v8543 = vld [vmem:[%s5065] sm:$0xf]
      %v8544 = vld [vmem:[%s5065 + $0x4] sm:$0xf]
      %v8545 = vld [vmem:[%s5065 + $0x8] sm:$0xf]
      %v8546 = vld [vmem:[%s5065 + $0xc] sm:$0xf]
      %v8551 = vunpack.c.l.b16 %v8543
      %v8552 = vunpack.c.l.b16 %v8544
      %v8553 = vunpack.c.l.b16 %v8545
      %v8554 = vunpack.c.l.b16 %v8546
      %v8555 = vpack.c.b16 %v8552, %v8551
      %v8556 = vpack.c.b16 %v8554, %v8553
      %v8560 = vsel %vm498, %v8536, 0
      %v8563 = vsel %vm498, %v8537, 0
      %v8566 = vsel %vm498, %v8538, 0
      %v8569 = vsel %vm498, %v8539, 0
      %v8572 = vsel %vm498, %v8540, 0
      %v8575 = vsel %vm498, %v8541, 0
      %v8578 = vsel %vm498, %v8542, 0
      %8580 = vmatpush.bf16.msra.mxu0 0
      %8581 = vmatpush.bf16.msra.mxu0 0
      %8582 = vmatpush.bf16.msra.mxu0 0
      %8583 = vmatpush.bf16.msra.mxu0 0
      %8584 = vmatpush.bf16.msra.mxu0 0
      %8585 = vmatpush.bf16.msra.mxu0 0
      %8586 = vmatpush.bf16.msra.mxu0 %v8556
      %8587 = vmatpush.bf16.msra.mxu0 %v8555
      %8588 = vmatmul.bf16.gmra.mxu0 %v8560
      %v8589 = vpop.f32.mrf.mxu0
      %v8590 = vadd.f32 0.0, %v8589
      %v8591 = vpop.f32.mrf.mxu0
      %v8592 = vadd.f32 0.0, %v8591
      %8593 = vmatmul.bf16.gmra.mxu0 %v8563
      %v8594 = vpop.f32.mrf.mxu0
      %v8595 = vadd.f32 0.0, %v8594
      %v8596 = vpop.f32.mrf.mxu0
      %v8597 = vadd.f32 0.0, %v8596
      %8598 = vmatmul.bf16.gmra.mxu0 %v8566
      %v8599 = vpop.f32.mrf.mxu0
      %v8600 = vadd.f32 0.0, %v8599
      %v8601 = vpop.f32.mrf.mxu0
      %v8602 = vadd.f32 0.0, %v8601
      %8603 = vmatmul.bf16.gmra.mxu0 %v8569
      %v8604 = vpop.f32.mrf.mxu0
      %v8605 = vadd.f32 0.0, %v8604
      %v8606 = vpop.f32.mrf.mxu0
      %v8607 = vadd.f32 0.0, %v8606
      %8608 = vmatmul.bf16.gmra.mxu0 %v8572
      %v8609 = vpop.f32.mrf.mxu0
      %v8610 = vadd.f32 0.0, %v8609
      %v8611 = vpop.f32.mrf.mxu0
      %v8612 = vadd.f32 0.0, %v8611
      %8613 = vmatmul.bf16.gmra.mxu0 %v8575
      %v8614 = vpop.f32.mrf.mxu0
      %v8615 = vadd.f32 0.0, %v8614
      %v8616 = vpop.f32.mrf.mxu0
      %v8617 = vadd.f32 0.0, %v8616
      %8618 = vmatmul.bf16.gmra.mxu0 %v8578
      %v8619 = vpop.f32.mrf.mxu0
      %v8620 = vadd.f32 0.0, %v8619
      %v8621 = vpop.f32.mrf.mxu0
      %8622 = vdwg.mxu0
      %v8623 = vadd.f32 %v8510, %v8590
      %v8624 = vadd.f32 %v8511, %v8592
      %v8625 = vadd.f32 %v8512, %v8595
      %v8626 = vadd.f32 %v8513, %v8597
      %v8627 = vadd.f32 %v8514, %v8600
      %v8628 = vadd.f32 %v8515, %v8602
      %v8629 = vadd.f32 %v8516, %v8605
      %v8630 = vadd.f32 %v8517, %v8607
      %v8631 = vadd.f32 %v8518, %v8610
      %v8632 = vadd.f32 %v8519, %v8612
      %v8633 = vadd.f32 %v8520, %v8615
      %v8634 = vadd.f32 %v8521, %v8617
      %v8635 = vadd.f32 %v8522, %v8620
      %v8636 = vld [vmem:[#allocation4 + $0x1b] sm:$0xff]
      %v8637 = vld [vmem:[#allocation4 + $0x23] sm:$0xff]
      %v8638 = vld [vmem:[#allocation4 + $0x2b] sm:$0xff]
      %v8639 = vld [vmem:[#allocation4 + $0x33] sm:$0xff]
      %v8640 = vld [vmem:[#allocation4 + $0x3b] sm:$0xff]
      %v8641 = vld [vmem:[#allocation4 + $0x43] sm:$0xff]
      %v8642 = vld [vmem:[#allocation4 + $0x4b] sm:$0xff]
      %v8643 = vld [vmem:[#allocation4 + $0x53] sm:$0xff]
      %v8644 = vld [vmem:[#allocation4 + $0x5b] sm:$0xff]
      %v8645 = vld [vmem:[#allocation4 + $0x63] sm:$0xff]
      %v8646 = vld [vmem:[#allocation4 + $0x6b] sm:$0xff]
      %v8647 = vld [vmem:[#allocation4 + $0x73] sm:$0xff]
      %v8648 = vld [vmem:[#allocation4 + $0x7b] sm:$0xf]
      %v8649 = vpack.c.bf16 %v8637, %v8636
      %v8650 = vpack.c.bf16 %v8639, %v8638
      %v8651 = vpack.c.bf16 %v8641, %v8640
      %v8652 = vpack.c.bf16 %v8643, %v8642
      %v8653 = vpack.c.bf16 %v8645, %v8644
      %v8654 = vpack.c.bf16 %v8647, %v8646
      %v8655 = vpack.c.bf16 %v8648, %v8648
      %v8656 = vld [vmem:[%s5179] sm:$0xf]
      %v8657 = vld [vmem:[%s5179 + $0x4] sm:$0xf]
      %v8658 = vld [vmem:[%s5179 + $0x8] sm:$0xf]
      %v8659 = vld [vmem:[%s5179 + $0xc] sm:$0xf]
      %v8664 = vunpack.c.l.b16 %v8656
      %v8665 = vunpack.c.l.b16 %v8657
      %v8666 = vunpack.c.l.b16 %v8658
      %v8667 = vunpack.c.l.b16 %v8659
      %v8668 = vpack.c.b16 %v8665, %v8664
      %v8669 = vpack.c.b16 %v8667, %v8666
      %v8673 = vsel %vm498, %v8649, 0
      %v8676 = vsel %vm498, %v8650, 0
      %v8679 = vsel %vm498, %v8651, 0
      %v8682 = vsel %vm498, %v8652, 0
      %v8685 = vsel %vm498, %v8653, 0
      %v8688 = vsel %vm498, %v8654, 0
      %v8691 = vsel %vm498, %v8655, 0
      %8693 = vmatpush.bf16.msra.mxu0 0
      %8694 = vmatpush.bf16.msra.mxu0 0
      %8695 = vmatpush.bf16.msra.mxu0 0
      %8696 = vmatpush.bf16.msra.mxu0 0
      %8697 = vmatpush.bf16.msra.mxu0 0
      %8698 = vmatpush.bf16.msra.mxu0 0
      %8699 = vmatpush.bf16.msra.mxu0 %v8669
      %8700 = vmatpush.bf16.msra.mxu0 %v8668
      %8701 = vmatmul.bf16.gmra.mxu0 %v8673
      %v8702 = vpop.f32.mrf.mxu0
      %v8703 = vadd.f32 0.0, %v8702
      %v8704 = vpop.f32.mrf.mxu0
      %v8705 = vadd.f32 0.0, %v8704
      %8706 = vmatmul.bf16.gmra.mxu0 %v8676
      %v8707 = vpop.f32.mrf.mxu0
      %v8708 = vadd.f32 0.0, %v8707
      %v8709 = vpop.f32.mrf.mxu0
      %v8710 = vadd.f32 0.0, %v8709
      %8711 = vmatmul.bf16.gmra.mxu0 %v8679
      %v8712 = vpop.f32.mrf.mxu0
      %v8713 = vadd.f32 0.0, %v8712
      %v8714 = vpop.f32.mrf.mxu0
      %v8715 = vadd.f32 0.0, %v8714
      %8716 = vmatmul.bf16.gmra.mxu0 %v8682
      %v8717 = vpop.f32.mrf.mxu0
      %v8718 = vadd.f32 0.0, %v8717
      %v8719 = vpop.f32.mrf.mxu0
      %v8720 = vadd.f32 0.0, %v8719
      %8721 = vmatmul.bf16.gmra.mxu0 %v8685
      %v8722 = vpop.f32.mrf.mxu0
      %v8723 = vadd.f32 0.0, %v8722
      %v8724 = vpop.f32.mrf.mxu0
      %v8725 = vadd.f32 0.0, %v8724
      %8726 = vmatmul.bf16.gmra.mxu0 %v8688
      %v8727 = vpop.f32.mrf.mxu0
      %v8728 = vadd.f32 0.0, %v8727
      %v8729 = vpop.f32.mrf.mxu0
      %v8730 = vadd.f32 0.0, %v8729
      %8731 = vmatmul.bf16.gmra.mxu0 %v8691
      %v8732 = vpop.f32.mrf.mxu0
      %v8733 = vadd.f32 0.0, %v8732
      %v8734 = vpop.f32.mrf.mxu0
      %8735 = vdwg.mxu0
      %v8736 = vadd.f32 %v8623, %v8703
      %v8737 = vadd.f32 %v8624, %v8705
      %v8738 = vadd.f32 %v8625, %v8708
      %v8739 = vadd.f32 %v8626, %v8710
      %v8740 = vadd.f32 %v8627, %v8713
      %v8741 = vadd.f32 %v8628, %v8715
      %v8742 = vadd.f32 %v8629, %v8718
      %v8743 = vadd.f32 %v8630, %v8720
      %v8744 = vadd.f32 %v8631, %v8723
      %v8745 = vadd.f32 %v8632, %v8725
      %v8746 = vadd.f32 %v8633, %v8728
      %v8747 = vadd.f32 %v8634, %v8730
      %v8748 = vadd.f32 %v8635, %v8733
      %v8749 = vld [vmem:[%s9] sm:$0x1]
      %v8751 = vperm.slane %v8749, 0
      %v8753 = vadd.f32 %v8736, %v8751
      %v8754 = vadd.f32 %v8737, %v8751
      %v8755 = vadd.f32 %v8738, %v8751
      %v8756 = vadd.f32 %v8739, %v8751
      %v8757 = vadd.f32 %v8740, %v8751
      %v8758 = vadd.f32 %v8741, %v8751
      %v8759 = vadd.f32 %v8742, %v8751
      %v8760 = vadd.f32 %v8743, %v8751
      %v8761 = vadd.f32 %v8744, %v8751
      %v8762 = vadd.f32 %v8745, %v8751
      %v8763 = vadd.f32 %v8746, %v8751
      %v8764 = vadd.f32 %v8747, %v8751
      %v8765 = vadd.f32 %v8748, %v8751
      %v8766 = vmax.f32 %v8753, 0.0
      %v8767 = vmax.f32 %v8754, 0.0
      %v8768 = vmax.f32 %v8755, 0.0
      %v8769 = vmax.f32 %v8756, 0.0
      %v8770 = vmax.f32 %v8757, 0.0
      %v8771 = vmax.f32 %v8758, 0.0
      %v8772 = vmax.f32 %v8759, 0.0
      %v8773 = vmax.f32 %v8760, 0.0
      %v8774 = vmax.f32 %v8761, 0.0
      %v8775 = vmax.f32 %v8762, 0.0
      %v8776 = vmax.f32 %v8763, 0.0
      %v8777 = vmax.f32 %v8764, 0.0
      %v8778 = vmax.f32 %v8765, 0.0
      %v8779 = vpack.c.bf16 %v8767, %v8766
      %v8780 = vpack.c.bf16 %v8769, %v8768
      %v8781 = vpack.c.bf16 %v8771, %v8770
      %v8782 = vpack.c.bf16 %v8773, %v8772
      %v8783 = vpack.c.bf16 %v8775, %v8774
      %v8784 = vpack.c.bf16 %v8777, %v8776
      %v8785 = vpack.c.bf16 %v8778, %v8778
      %v8786 = vld [vmem:[%s10] sm:$0xf]
      %v8787 = vld [vmem:[%s10 + $0x4] sm:$0xf]
      %v8788 = vld [vmem:[%s10 + $0x8] sm:$0xf]
      %v8789 = vld [vmem:[%s10 + $0xc] sm:$0xf]
      %v8790 = vld [vmem:[%s10 + $0x10] sm:$0xf]
      %v8791 = vld [vmem:[%s10 + $0x14] sm:$0xf]
      %v8792 = vld [vmem:[%s10 + $0x18] sm:$0xf]
      %v8793 = vld [vmem:[%s10 + $0x1c] sm:$0xf]
      %v8794 = vld [vmem:[%s10 + $0x20] sm:$0xf]
      %v8795 = vld [vmem:[%s10 + $0x24] sm:$0xf]
      %v8796 = vld [vmem:[%s10 + $0x28] sm:$0xf]
      %v8797 = vld [vmem:[%s10 + $0x2c] sm:$0xf]
      %v8798 = vld [vmem:[%s11] sm:$0x1]
      %v8800 = vperm.slane %v8798, 0
      %v8814 = vunpack.c.l.b16 %v8786
      %v8815 = vunpack.c.l.b16 %v8787
      %v8816 = vunpack.c.l.b16 %v8788
      %v8817 = vunpack.c.l.b16 %v8789
      %v8818 = vunpack.c.l.b16 %v8790
      %v8819 = vunpack.c.l.b16 %v8791
      %v8820 = vunpack.c.l.b16 %v8792
      %v8821 = vunpack.c.l.b16 %v8793
      %v8822 = vunpack.c.l.b16 %v8794
      %v8823 = vunpack.c.l.b16 %v8795
      %v8824 = vunpack.c.l.b16 %v8796
      %v8825 = vunpack.c.l.b16 %v8797
      %v8826 = vpack.c.b16 %v8815, %v8814
      %v8827 = vpack.c.b16 %v8817, %v8816
      %v8828 = vpack.c.b16 %v8819, %v8818
      %v8829 = vpack.c.b16 %v8821, %v8820
      %v8830 = vpack.c.b16 %v8823, %v8822
      %v8831 = vpack.c.b16 %v8825, %v8824
      %v8839 = vsel %vm5362, %v8779, 0
      %v8842 = vsel %vm5362, %v8780, 0
      %v8845 = vsel %vm5362, %v8781, 0
      %v8848 = vsel %vm5362, %v8782, 0
      %v8851 = vsel %vm5362, %v8783, 0
      %v8854 = vsel %vm5362, %v8784, 0
      %v8857 = vsel %vm5362, %v8785, 0
      %8859 = vmatpush.bf16.msra.mxu0 0
      %8860 = vmatpush.bf16.msra.mxu0 0
      %8861 = vmatpush.bf16.msra.mxu0 %v8831
      %8862 = vmatpush.bf16.msra.mxu0 %v8830
      %8863 = vmatpush.bf16.msra.mxu0 %v8829
      %8864 = vmatpush.bf16.msra.mxu0 %v8828
      %8865 = vmatpush.bf16.msra.mxu0 %v8827
      %8866 = vmatpush.bf16.msra.mxu0 %v8826
      %8867 = vmatmul.bf16.gmra.mxu0 %v8839
      %v8868 = vpop.f32.mrf.mxu0
      %v8869 = vadd.f32 %v8800, %v8868
      %v8870 = vpop.f32.mrf.mxu0
      %v8871 = vadd.f32 %v8800, %v8870
      %8872 = vmatmul.bf16.gmra.mxu0 %v8842
      %v8873 = vpop.f32.mrf.mxu0
      %v8874 = vadd.f32 %v8800, %v8873
      %v8875 = vpop.f32.mrf.mxu0
      %v8876 = vadd.f32 %v8800, %v8875
      %8877 = vmatmul.bf16.gmra.mxu0 %v8845
      %v8878 = vpop.f32.mrf.mxu0
      %v8879 = vadd.f32 %v8800, %v8878
      %v8880 = vpop.f32.mrf.mxu0
      %v8881 = vadd.f32 %v8800, %v8880
      %8882 = vmatmul.bf16.gmra.mxu0 %v8848
      %v8883 = vpop.f32.mrf.mxu0
      %v8884 = vadd.f32 %v8800, %v8883
      %v8885 = vpop.f32.mrf.mxu0
      %v8886 = vadd.f32 %v8800, %v8885
      %8887 = vmatmul.bf16.gmra.mxu0 %v8851
      %v8888 = vpop.f32.mrf.mxu0
      %v8889 = vadd.f32 %v8800, %v8888
      %v8890 = vpop.f32.mrf.mxu0
      %v8891 = vadd.f32 %v8800, %v8890
      %8892 = vmatmul.bf16.gmra.mxu0 %v8854
      %v8893 = vpop.f32.mrf.mxu0
      %v8894 = vadd.f32 %v8800, %v8893
      %v8895 = vpop.f32.mrf.mxu0
      %v8896 = vadd.f32 %v8800, %v8895
      %8897 = vmatmul.bf16.gmra.mxu0 %v8857
      %v8898 = vpop.f32.mrf.mxu0
      %v8899 = vadd.f32 %v8800, %v8898
      %v8900 = vpop.f32.mrf.mxu0
      %8901 = vdwg.mxu0
      %s8902 = scalar_lea.vmem %s413, 312
      %8903 = vst.msk [vmem:[%s8902] sm:$0xff] %vm5427, %v8869
      %8904 = vst.msk [vmem:[%s8902 + $0x8] sm:$0xff] %vm5427, %v8871
      %8905 = vst.msk [vmem:[%s8902 + $0x10] sm:$0xff] %vm5427, %v8874
      %8906 = vst.msk [vmem:[%s8902 + $0x18] sm:$0xff] %vm5427, %v8876
      %8907 = vst.msk [vmem:[%s8902 + $0x20] sm:$0xff] %vm5427, %v8879
      %8908 = vst.msk [vmem:[%s8902 + $0x28] sm:$0xff] %vm5427, %v8881
      %8909 = vst.msk [vmem:[%s8902 + $0x30] sm:$0xff] %vm5427, %v8884
      %8910 = vst.msk [vmem:[%s8902 + $0x38] sm:$0xff] %vm5427, %v8886
      %8911 = vst.msk [vmem:[%s8902 + $0x40] sm:$0xff] %vm5427, %v8889
      %8912 = vst.msk [vmem:[%s8902 + $0x48] sm:$0xff] %vm5427, %v8891
      %8913 = vst.msk [vmem:[%s8902 + $0x50] sm:$0xff] %vm5427, %v8894
      %8914 = vst.msk [vmem:[%s8902 + $0x58] sm:$0xff] %vm5427, %v8896
      %8915 = vst.msk [vmem:[%s8902 + $0x60] sm:$0xf] %vm5440, %v8899
      %p8916 = scmp.lt.s32.totalorder %s23, 1
      %s8917 = scalar_select %p8916, %s23, 1
      %s8918 = smul.addr %s8917, 52
      %s8919 = smul.addr %s8918, 8
      %s8920 = scalar_lea.vmem %s12, %s8919
      // Predicated region
      $region69: #{_lambda_.1} parent=67 // pred_check
        %p8921 = pneg %p298
      $region70: #{_lambda_.1} parent=67 // pred_check_branch
        %8923 = sbr.rel (%p8921) target = $region72
      $region71: #{_lambda_.1} parent=67 // pred_region
        _
      $region72: #{_lambda_.1} parent=67 // pred_fallthru
        _
    $region68: #{_lambda_.1} parent=5 // pred_fallthru
      _
    %p8924 = scmp.le.s32.totalorder 2, %s18
    // Predicated region
    $region73: #{_lambda_.1} parent=5 // pred_check
      %p8925 = pneg %p8924
    $region74: #{_lambda_.1} parent=5 // pred_check_branch
      %8927 = sbr.rel (%p8925) target = $region76
    $region75: #{_lambda_.1} parent=5 // pred_region
      %s8928 = ssub.s32 %s18, 2
      // Predicated region
      $region77: #{_lambda_.1} parent=75 // pred_check
        %p8929 = pneg %p304
      $region78: #{_lambda_.1} parent=75 // pred_check_branch
        %8931 = sbr.rel (%p8929) target = $region80
      $region79: #{_lambda_.1} parent=75 // pred_region
        %p8932 = scmp.lt.s32.totalorder %s24, 1
        %s8933 = scalar_select %p8932, %s24, 1
        %s8934 = smul.addr %s8933, 52
        %s8935 = smul.addr %s8934, 8
        %s8936 = scalar_lea.vmem %s12, %s8935
      $region80: #{_lambda_.1} parent=75 // pred_fallthru
        _
    $region76: #{_lambda_.1} parent=5 // pred_fallthru
      _
  $region6: #{_lambda_.1} parent=0 // loop_footer
    %s22 = sadd.s32 1, %s18
  $region7: #{_lambda_.1} parent=0 // loop_footer_branch
    %17 = sbr.rel target = $region3
  $region8: #{_lambda_.1} parent=0 // loop_exit
    _

</llo_original>
